<compile_context>
chip_gen: v6e
topology: v6e:2x2x1
jax: 0.10.0
libtpu: 0.0.40
codegen_flags: <defaults>
</compile_context>

<pallas_src>
import jax
import jax.numpy as jnp
from jax import lax
from jax.experimental import pallas as pl
from jax.experimental.pallas import tpu as pltpu

# ----------------------------- configuration --------------------------------
BS = 2              # batch
NPTS = 64           # points per cloud
IMG_FEAT_DIM = 3    # img_feat_dim
IMG = 16            # img_size
PATCH = 4           # img_patch_size
NUM_VIEWS = 3       # rend_three_views=True -> 3 orthographic views
PROPRIO = 4         # proprio_dim
IM_CH = 16          # im_channels
ATTN_DIM = 32       # attn_dim
HEADS = 2           # attn_heads
DIM_HEAD = 16       # attn_dim_head
DEPTH = 2           # depth
MLP_HIDDEN = 4 * ATTN_DIM
HW = IMG * IMG
NPH = IMG // PATCH
NTOK = NUM_VIEWS * NPH * NPH        # 48 tokens
PPIX = PATCH * PATCH                # 16 pixels per patch
VHW = NUM_VIEWS * HW                # 768 pixels over all views
CORR_FEAT = 3 + IMG_FEAT_DIM        # add_corr + norm_corr -> pc/|pc| concat feat (6)
IN_CH = CORR_FEAT + 3               # + add_pixel_loc (3 channels)

FEAT_COLS = 16      # splat feature lanes: 6 feats + 1 count col + 9 zero pad
PROP_PAD = 16       # proprio lanes padded to 16

# ---- packed parameter-bank layout (sublane offsets are multiples of 16 -> bf16 aligned)
WB_PRE, WB_PROP, WB_BEF_A, WB_BEF_B, WB_AFT, WB_DEC = 0, 16, 32, 48, 64, 96
WBANK_ROWS = 112
BB_PATCH, BB_PROP, BB_AFT, BB_DEC = 0, 1, 2, 3
LN1G, LN1B, LN_BO, LN2G, LN2B, LN_B2 = 0, 1, 2, 3, 4, 5

PACKED_ORDER = ("ploc_bias", "w_patch", "wbank", "bbank", "pos_bias",
                "lnbank", "b1", "w_qkv", "w_o", "w1", "w2")


# ------------------------------ fused kernel ---------------------------------
def _mvt_kernel(pix_ref, feat_ref, prop_ref,
                ploc_bias_ref, w_patch_ref, wbank_ref, bbank_ref, pos_ref,
                lnbank_ref, b1_ref, wqkv_ref, wo_ref, w1_ref, w2_ref,
                o_ref):
    f32, bf16 = jnp.float32, jnp.bfloat16

    # ---- render(): mean-splat of the 3 views; per-view bf16 one-hot matmuls ----
    # pixel ids are global (view/patch-pixel encoded), so views never collide.
    pix = pix_ref[0]                                            # (V, N) int32
    feats = feat_ref[0]                                         # (N, 16) bf16, col 6 = count col
    rows = lax.broadcasted_iota(jnp.int32, (VHW, NPTS), 0)      # (VHW, N)
    acc = jnp.zeros((VHW, FEAT_COLS), f32)
    for v in range(NUM_VIEWS):
        oh = (rows == pix[v:v + 1, :]).astype(bf16)             # exact in bf16
        acc = acc + jnp.dot(oh, feats, preferred_element_type=f32)
    cnt = acc[:, CORR_FEAT:CORR_FEAT + 1]                       # per-pixel point count

    # ---- input_preprocess (1x1 conv) + relu -----------------------------------
    # (sum_feats / cnt) @ W == (sum_feats @ W) / cnt; pixel-loc half of the conv
    # (+ bias) is input-independent and was precomputed into ploc_bias on host.
    w_pre = wbank_ref[WB_PRE:WB_PRE + FEAT_COLS, :IM_CH]        # (16,16) bf16, rows>=6 are 0
    y = jnp.dot(acc.astype(bf16), w_pre, preferred_element_type=f32)
    inv_cnt = pl.reciprocal(jnp.maximum(cnt, 1.0), approx=True)
    x = jnp.maximum(y * inv_cnt + ploc_bias_ref[...], 0.0)      # (VHW, IM_CH)

    # ---- patchify conv (kernel=stride=PATCH) -----------------------------------
    # pixel rows are ordered (patch-pixel k, token t): slab k = rows
    # [k*NTOK, (k+1)*NTOK), sublane-aligned; tree-accumulate the PPIX matmuls.
    xb = x.astype(bf16)
    parts = [jnp.dot(xb[k * NTOK:(k + 1) * NTOK, :], w_patch_ref[k],
                     preferred_element_type=f32) for k in range(PPIX)]
    while len(parts) > 1:
        parts = [parts[i] + parts[i + 1] for i in range(0, len(parts), 2)]
    tok = jnp.maximum(parts[0] + bbank_ref[BB_PATCH:BB_PATCH + 1, :IM_CH], 0.0)

    # ---- proprio embedding + fc_bef_attn (token/proprio halves) + pos emb ------
    prop = prop_ref[0].astype(bf16)                             # (1, 16), zero-padded
    pe = (jnp.dot(prop, wbank_ref[WB_PROP:WB_PROP + PROP_PAD, :IM_CH],
                  preferred_element_type=f32)
          + bbank_ref[BB_PROP:BB_PROP + 1, :IM_CH])
    pe = jnp.maximum(pe, 0.0).astype(bf16)                      # (1, IM_CH)
    x = (jnp.dot(tok.astype(bf16), wbank_ref[WB_BEF_A:WB_BEF_A + IM_CH, :],
                 preferred_element_type=f32)
         + jnp.dot(pe, wbank_ref[WB_BEF_B:WB_BEF_B + IM_CH, :],
                   preferred_element_type=f32)
         + pos_ref[...])                                        # (NTOK, ATTN_DIM); pos includes b_bef

    # ---- DEPTH pre-norm transformer blocks (statically unrolled) ---------------
    scale = DIM_HEAD ** -0.5
    for l in range(DEPTH):
        ln = lnbank_ref[l]                                      # (8, ATTN_DIM) f32
        # pre-norm multi-head self-attention
        mu = jnp.mean(x, axis=-1, keepdims=True)
        var = jnp.mean((x - mu) ** 2, axis=-1, keepdims=True)
        xn = ((x - mu) * lax.rsqrt(var + 1e-5) * ln[LN1G:LN1G + 1]
              + ln[LN1B:LN1B + 1]).astype(bf16)
        proj = jnp.zeros((NTOK, ATTN_DIM), f32)
        for h in range(HEADS):
            base = (l * HEADS + h) * 3
            q = jnp.dot(xn, wqkv_ref[base + 0], preferred_element_type=f32)
            k = jnp.dot(xn, wqkv_ref[base + 1], preferred_element_type=f32)
            v = jnp.dot(xn, wqkv_ref[base + 2], preferred_element_type=f32)
            s = lax.dot_general(q.astype(bf16), k.astype(bf16),
                                (((1,), (1,)), ((), ())),
                                preferred_element_type=f32) * scale     # q @ k^T, no transpose
            s = s - jnp.max(s, axis=-1, keepdims=True)
            p = jnp.exp(s)
            p = p * pl.reciprocal(jnp.sum(p, axis=-1, keepdims=True), approx=True)
            o = jnp.dot(p.astype(bf16), v.astype(bf16), preferred_element_type=f32)
            # out-proj decomposed per head: concat_h(o_h) @ Wo == sum_h o_h @ Wo_h
            proj = proj + jnp.dot(o.astype(bf16), wo_ref[l * HEADS + h],
                                  preferred_element_type=f32)
        x = x + proj + ln[LN_BO:LN_BO + 1]
        # pre-norm MLP
        mu2 = jnp.mean(x, axis=-1, keepdims=True)
        var2 = jnp.mean((x - mu2) ** 2, axis=-1, keepdims=True)
        xn2 = ((x - mu2) * lax.rsqrt(var2 + 1e-5) * ln[LN2G:LN2G + 1]
               + ln[LN2B:LN2B + 1]).astype(bf16)
        h1 = jnp.dot(xn2, w1_ref[l], preferred_element_type=f32) + b1_ref[l]
        h1 = jax.nn.gelu(h1, approximate=True)  # TODO(synk): PyTorch GELU default is erf-exact
        x = x + jnp.dot(h1.astype(bf16), w2_ref[l], preferred_element_type=f32) + ln[LN_B2:LN_B2 + 1]

    # ---- fc_aft_attn + per-patch translation decoder ---------------------------
    feat = (jnp.dot(x.astype(bf16), wbank_ref[WB_AFT:WB_AFT + ATTN_DIM, :IM_CH],
                    preferred_element_type=f32)
            + bbank_ref[BB_AFT:BB_AFT + 1, :IM_CH])
    feat = jnp.maximum(feat, 0.0)                               # (NTOK, IM_CH)
    o_ref[0] = (jnp.dot(feat.astype(bf16), wbank_ref[WB_DEC:WB_DEC + IM_CH, :PPIX],
                        preferred_element_type=f32)
                + bbank_ref[BB_DEC:BB_DEC + 1, :PPIX])          # (NTOK, PPIX)


def mvt_fused(pix, feats, proprio16, packed):
    bs = pix.shape[0]

    def full(a):
        return pl.BlockSpec(a.shape, lambda b, _nd=a.ndim: (0,) * _nd)

    ws = [packed[k] for k in PACKED_ORDER]
    return pl.pallas_call(
        _mvt_kernel,
        out_shape=jax.ShapeDtypeStruct((bs, NTOK, PPIX), jnp.float32),
        grid=(bs,),
        in_specs=[
            pl.BlockSpec((1, NUM_VIEWS, NPTS), lambda b: (b, 0, 0)),
            pl.BlockSpec((1, NPTS, FEAT_COLS), lambda b: (b, 0, 0)),
            pl.BlockSpec((1, 1, PROP_PAD), lambda b: (b, 0, 0)),
        ] + [full(w) for w in ws],
        out_specs=pl.BlockSpec((1, NTOK, PPIX), lambda b: (b, 0, 0)),
        compiler_params=pltpu.CompilerParams(dimension_semantics=("parallel",)),
    )(pix, feats, proprio16, *ws)


# --------------------------- parameter construction --------------------------
def init_params(key):
    """Logical (PyTorch-layout-ish) parameters, all float32."""
    def nrm(k, shp, scale=0.02):
        return scale * jax.random.normal(k, shp, dtype=jnp.float32)

    keys = iter(jax.random.split(key, 64))
    inner = HEADS * DIM_HEAD
    params = {
        "w_pre": nrm(next(keys), (IN_CH, IM_CH)),          # input_preprocess 1x1 conv
        "b_pre": jnp.zeros((1, IM_CH), jnp.float32),
        "w_patch": nrm(next(keys), (PPIX, IM_CH, IM_CH)),  # patchify conv, per-pixel-k
        "b_patch": jnp.zeros((1, IM_CH), jnp.float32),
        "w_prop": nrm(next(keys), (PROPRIO, IM_CH)),       # proprio_preprocess
        "b_prop": jnp.zeros((1, IM_CH), jnp.float32),
        "w_bef_a": nrm(next(keys), (IM_CH, ATTN_DIM)),     # fc_bef_attn (token half)
        "w_bef_b": nrm(next(keys), (IM_CH, ATTN_DIM)),     # fc_bef_attn (proprio half)
        "b_bef": jnp.zeros((1, ATTN_DIM), jnp.float32),
        "pos": nrm(next(keys), (NTOK, ATTN_DIM)),          # pe_fix learned pos emb
        "w_aft": nrm(next(keys), (ATTN_DIM, IM_CH)),       # fc_aft_attn
        "b_aft": jnp.zeros((1, IM_CH), jnp.float32),
        "w_dec": nrm(next(keys), (IM_CH, PPIX)),           # trans decoder (per patch)
        "b_dec": jnp.zeros((1, PPIX), jnp.float32),
        # --- stacked (depth-leading) transformer layer params ---
        "ln1g": jnp.ones((DEPTH, 1, ATTN_DIM), jnp.float32),
        "ln1b": jnp.zeros((DEPTH, 1, ATTN_DIM), jnp.float32),
        "wqkv": nrm(next(keys), (DEPTH, ATTN_DIM, 3 * inner)),
        "wo": nrm(next(keys), (DEPTH, inner, ATTN_DIM)),
        "bo": jnp.zeros((DEPTH, 1, ATTN_DIM), jnp.float32),
        "ln2g": jnp.ones((DEPTH, 1, ATTN_DIM), jnp.float32),
        "ln2b": jnp.zeros((DEPTH, 1, ATTN_DIM), jnp.float32),
        "w1": nrm(next(keys), (DEPTH, ATTN_DIM, MLP_HIDDEN)),
        "b1": jnp.zeros((DEPTH, 1, MLP_HIDDEN), jnp.float32),
        "w2": nrm(next(keys), (DEPTH, MLP_HIDDEN, ATTN_DIM)),
        "b2": jnp.zeros((DEPTH, 1, ATTN_DIM), jnp.float32),
    }
    # pixel_loc (add_pixel_loc=True), stored flat in the kernel's pixel order
    # g = (dy*P+dx)*NTOK + (v*NPH*NPH + ph*NPH + pw), channels-last.
    vlin = jnp.linspace(-1.0, 1.0, NUM_VIEWS)
    hlin = jnp.linspace(-1.0, 1.0, IMG)
    pix0 = jnp.broadcast_to(vlin[:, None, None], (NUM_VIEWS, IMG, IMG))
    pix1 = jnp.broadcast_to(hlin[None, :, None], (NUM_VIEWS, IMG, IMG))
    pix2 = jnp.broadcast_to(hlin[None, None, :], (NUM_VIEWS, IMG, IMG))
    ploc = jnp.stack([pix0, pix1, pix2], axis=-1)              # (V, IMG, IMG, 3)
    ploc = ploc.reshape(NUM_VIEWS, NPH, PATCH, NPH, PATCH, 3)  # (v, ph, dy, pw, dx, 3)
    ploc = ploc.transpose(2, 4, 0, 1, 3, 5).reshape(VHW, 3)    # (k, t) flat order
    params["pixel_loc"] = ploc.astype(jnp.float32)
    return params


def pack_params(p):
    """Pack logical params into the kernel's banked / bf16 layout."""
    bf = jnp.bfloat16
    # pixel-loc half of input_preprocess (+ bias) folded into an additive bias
    ploc_bias = p["pixel_loc"] @ p["w_pre"][CORR_FEAT:] + p["b_pre"]   # (VHW, IM_CH)

    wbank = jnp.zeros((WBANK_ROWS, ATTN_DIM), jnp.float32)
    wbank = wbank.at[WB_PRE:WB_PRE + CORR_FEAT, :IM_CH].set(p["w_pre"][:CORR_FEAT])
    wbank = wbank.at[WB_PROP:WB_PROP + PROPRIO, :IM_CH].set(p["w_prop"])
    wbank = wbank.at[WB_BEF_A:WB_BEF_A + IM_CH, :ATTN_DIM].set(p["w_bef_a"])
    wbank = wbank.at[WB_BEF_B:WB_BEF_B + IM_CH, :ATTN_DIM].set(p["w_bef_b"])
    wbank = wbank.at[WB_AFT:WB_AFT + ATTN_DIM, :IM_CH].set(p["w_aft"])
    wbank = wbank.at[WB_DEC:WB_DEC + IM_CH, :PPIX].set(p["w_dec"])

    bbank = jnp.zeros((8, ATTN_DIM), jnp.float32)
    bbank = bbank.at[BB_PATCH, :IM_CH].set(p["b_patch"][0])
    bbank = bbank.at[BB_PROP, :IM_CH].set(p["b_prop"][0])
    bbank = bbank.at[BB_AFT, :IM_CH].set(p["b_aft"][0])
    bbank = bbank.at[BB_DEC, :PPIX].set(p["b_dec"][0])

    lnbank = jnp.zeros((DEPTH, 8, ATTN_DIM), jnp.float32)
    lnbank = lnbank.at[:, LN1G].set(p["ln1g"][:, 0])
    lnbank = lnbank.at[:, LN1B].set(p["ln1b"][:, 0])
    lnbank = lnbank.at[:, LN_BO].set(p["bo"][:, 0])
    lnbank = lnbank.at[:, LN2G].set(p["ln2g"][:, 0])
    lnbank = lnbank.at[:, LN2B].set(p["ln2b"][:, 0])
    lnbank = lnbank.at[:, LN_B2].set(p["b2"][:, 0])

    # per-head qkv / out-proj slabs, flattened along the leading axis:
    #   w_qkv[(l*HEADS + h)*3 + {0:q,1:k,2:v}] : (ATTN_DIM, DIM_HEAD)
    #   w_o[l*HEADS + h]                       : (DIM_HEAD, ATTN_DIM)
    wqkv = p["wqkv"].reshape(DEPTH, ATTN_DIM, 3, HEADS, DIM_HEAD)
    wqkv = jnp.transpose(wqkv, (0, 3, 2, 1, 4)).reshape(DEPTH * HEADS * 3, ATTN_DIM, DIM_HEAD)
    wo = p["wo"].reshape(DEPTH, HEADS, DIM_HEAD, ATTN_DIM).reshape(DEPTH * HEADS, DIM_HEAD, ATTN_DIM)

    return {
        "ploc_bias": ploc_bias.astype(jnp.float32),
        "w_patch": p["w_patch"].astype(bf),
        "wbank": wbank.astype(bf),
        "bbank": bbank,
        "pos_bias": (p["pos"] + p["b_bef"]).astype(jnp.float32),   # pe_fix pos emb + fc_bef bias
        "lnbank": lnbank,
        "b1": p["b1"],
        "w_qkv": wqkv.astype(bf),
        "w_o": wo.astype(bf),
        "w1": p["w1"].astype(bf),
        "w2": p["w2"].astype(bf),
    }


# --------------------------------- forward -----------------------------------
def mvt_forward(packed, pc, img_feat, proprio):
    """pc: (bs, N, 3) in [-1,1]; img_feat: (bs, N, img_feat_dim); proprio: (bs, P)."""
    bs = pc.shape[0]

    # ---- render(): norm_corr point features; ones 'count' col appended here so
    #      the kernel never does a lane concat. Lane-padded to FEAT_COLS.
    max_pc = jnp.max(jnp.abs(pc), axis=(1, 2), keepdims=True)
    max_pc = jnp.where(max_pc == 0.0, 1.0, max_pc)
    feats = jnp.concatenate(
        [pc / max_pc, img_feat,
         jnp.ones((bs, NPTS, 1), jnp.float32),
         jnp.zeros((bs, NPTS, FEAT_COLS - CORR_FEAT - 1), jnp.float32)],
        axis=-1).astype(jnp.bfloat16)                                # (bs, N, 16)

    def to_gid(v, a, b):
        col = jnp.clip(jnp.round((a + 1.0) * 0.5 * (IMG - 1)).astype(jnp.int32), 0, IMG - 1)
        row = jnp.clip(jnp.round((b + 1.0) * 0.5 * (IMG - 1)).astype(jnp.int32), 0, IMG - 1)
        ph, dy = row // PATCH, row % PATCH
        pw, dx = col // PATCH, col % PATCH
        t = v * (NPH * NPH) + ph * NPH + pw          # token index
        k = dy * PATCH + dx                          # within-patch pixel index
        return k * NTOK + t                          # global pixel id

    pix = jnp.stack([to_gid(0, pc[..., 0], pc[..., 1]),
                     to_gid(1, pc[..., 0], pc[..., 2]),
                     to_gid(2, pc[..., 1], pc[..., 2])], axis=1)     # (bs, V, N) int32

    prop16 = jnp.pad(proprio[:, None, :], ((0, 0), (0, 0), (0, PROP_PAD - PROPRIO)))

    # ---- fused kernel: splat + preprocess + patchify + transformer + decoder ----
    hm = mvt_fused(pix, feats, prop16, packed)                       # (bs, T, P*P)

    # ---- patch -> pixel rearrangement (tiny, on 6 KB) ------------------------
    hm = hm.reshape(bs, NUM_VIEWS, NPH, NPH, PATCH, PATCH)
    hm = hm.transpose(0, 1, 2, 4, 3, 5).reshape(bs, NUM_VIEWS, IMG, IMG)

    return {"trans": hm}   # q_trans heatmap, (bs, num_views, H, W)


# ----------------------------------- main -------------------------------------
if __name__ == "__main__":
    key = jax.random.PRNGKey(0)
    kp, k1, k2, k3 = jax.random.split(key, 4)
    params = init_params(kp)
    packed = pack_params(params)

    pc = jax.random.uniform(k1, (BS, NPTS, 3), jnp.float32, minval=-1.0, maxval=1.0)
    img_feat = jax.random.uniform(k2, (BS, NPTS, IMG_FEAT_DIM), jnp.float32)
    proprio = jax.random.normal(k3, (BS, PROPRIO), jnp.float32)

    out = jax.jit(mvt_forward)(packed, pc, img_feat, proprio)
    jax.block_until_ready(out)
    assert out["trans"].shape == (BS, NUM_VIEWS, IMG, IMG)
    assert bool(jnp.all(jnp.isfinite(out["trans"])))
    print("KERNEL_OK")
</pallas_src>

<mosaic_0001>
module attributes {stable_mosaic.version = 11 : i64} {
  func.func @_mvt_kernel(%arg0: i32, %arg1: memref<1x3x64xi32, #tpu.memory_space<vmem>>, %arg2: memref<1x64x16xbf16, #tpu.memory_space<vmem>>, %arg3: memref<1x1x16xf32, #tpu.memory_space<vmem>>, %arg4: memref<768x16xf32, #tpu.memory_space<vmem>>, %arg5: memref<16x16x16xbf16, #tpu.memory_space<vmem>>, %arg6: memref<112x32xbf16, #tpu.memory_space<vmem>>, %arg7: memref<8x32xf32, #tpu.memory_space<vmem>>, %arg8: memref<48x32xf32, #tpu.memory_space<vmem>>, %arg9: memref<2x8x32xf32, #tpu.memory_space<vmem>>, %arg10: memref<2x1x128xf32, #tpu.memory_space<vmem>>, %arg11: memref<12x32x16xbf16, #tpu.memory_space<vmem>>, %arg12: memref<4x16x32xbf16, #tpu.memory_space<vmem>>, %arg13: memref<2x32x128xbf16, #tpu.memory_space<vmem>>, %arg14: memref<2x128x32xbf16, #tpu.memory_space<vmem>>, %arg15: memref<1x48x16xf32, #tpu.memory_space<vmem>>) attributes {dimension_semantics = [#tpu.dimension_semantics<parallel>], iteration_bounds = array<i64: 2>, scalar_prefetch = 0 : i64, scratch_operands = 0 : i64, tpu.core_type = #tpu.core_type<tc>, window_params = [{transform_indices = @transform_0, window_bounds = array<i64: 1, 3, 64>}, {transform_indices = @transform_1, window_bounds = array<i64: 1, 64, 16>}, {transform_indices = @transform_2, window_bounds = array<i64: 1, 1, 16>}, {pipeline_mode = #tpu.pipeline_mode<synchronous>, transform_indices = @transform_3, window_bounds = array<i64: 768, 16>}, {pipeline_mode = #tpu.pipeline_mode<synchronous>, transform_indices = @transform_4, window_bounds = array<i64: 16, 16, 16>}, {pipeline_mode = #tpu.pipeline_mode<synchronous>, transform_indices = @transform_5, window_bounds = array<i64: 112, 32>}, {pipeline_mode = #tpu.pipeline_mode<synchronous>, transform_indices = @transform_6, window_bounds = array<i64: 8, 32>}, {pipeline_mode = #tpu.pipeline_mode<synchronous>, transform_indices = @transform_7, window_bounds = array<i64: 48, 32>}, {pipeline_mode = #tpu.pipeline_mode<synchronous>, transform_indices = @transform_8, window_bounds = array<i64: 2, 8, 32>}, {pipeline_mode = #tpu.pipeline_mode<synchronous>, transform_indices = @transform_9, window_bounds = array<i64: 2, 1, 128>}, {pipeline_mode = #tpu.pipeline_mode<synchronous>, transform_indices = @transform_10, window_bounds = array<i64: 12, 32, 16>}, {pipeline_mode = #tpu.pipeline_mode<synchronous>, transform_indices = @transform_11, window_bounds = array<i64: 4, 16, 32>}, {pipeline_mode = #tpu.pipeline_mode<synchronous>, transform_indices = @transform_12, window_bounds = array<i64: 2, 32, 128>}, {pipeline_mode = #tpu.pipeline_mode<synchronous>, transform_indices = @transform_13, window_bounds = array<i64: 2, 128, 32>}, {transform_indices = @transform_14, window_bounds = array<i64: 1, 48, 16>}]} {
    %c0 = arith.constant 0 : index
    %c0_0 = arith.constant 0 : index
    %c0_1 = arith.constant 0 : index
    %0 = vector.load %arg1[%c0, %c0_0, %c0_1] : memref<1x3x64xi32, #tpu.memory_space<vmem>>, vector<1x3x64xi32>
    %1 = vector.shape_cast %0 : vector<1x3x64xi32> to vector<3x64xi32>
    %c0_2 = arith.constant 0 : index
    %c0_3 = arith.constant 0 : index
    %c0_4 = arith.constant 0 : index
    %2 = vector.load %arg2[%c0_2, %c0_3, %c0_4] : memref<1x64x16xbf16, #tpu.memory_space<vmem>>, vector<1x64x16xbf16>
    %3 = vector.shape_cast %2 : vector<1x64x16xbf16> to vector<64x16xbf16>
    %4 = tpu.iota {dimensions = array<i32: 0>} : vector<768x64xi32>
    %cst = arith.constant 0.000000e+00 : f32
    %5 = vector.broadcast %cst : f32 to vector<768x16xf32>
    %6 = vector.extract_strided_slice %1 {offsets = [0, 0], sizes = [1, 64], strides = [1, 1]} : vector<3x64xi32> to vector<1x64xi32>
    %7 = vector.broadcast %6 : vector<1x64xi32> to vector<768x64xi32>
    %8 = arith.cmpi eq, %4, %7 : vector<768x64xi32>
    %9 = arith.extui %8 : vector<768x64xi1> to vector<768x64xi32>
    %10 = arith.sitofp %9 : vector<768x64xi32> to vector<768x64xf32>
    %11 = arith.truncf %10 : vector<768x64xf32> to vector<768x64xbf16>
    %cst_5 = arith.constant dense<0.000000e+00> : vector<768x16xf32>
    %12 = tpu.matmul %11, %3, %cst_5 {dimension_numbers = #tpu.dot_dimension_numbers<[1], [0], [0], [1], [0, 0, 1, 1], [], []>} : vector<768x64xbf16>, vector<64x16xbf16>, vector<768x16xf32> -> vector<768x16xf32>
    %13 = arith.addf %5, %12 : vector<768x16xf32>
    %14 = vector.extract_strided_slice %1 {offsets = [1, 0], sizes = [1, 64], strides = [1, 1]} : vector<3x64xi32> to vector<1x64xi32>
    %15 = vector.broadcast %14 : vector<1x64xi32> to vector<768x64xi32>
    %16 = arith.cmpi eq, %4, %15 : vector<768x64xi32>
    %17 = arith.extui %16 : vector<768x64xi1> to vector<768x64xi32>
    %18 = arith.sitofp %17 : vector<768x64xi32> to vector<768x64xf32>
    %19 = arith.truncf %18 : vector<768x64xf32> to vector<768x64xbf16>
    %cst_6 = arith.constant dense<0.000000e+00> : vector<768x16xf32>
    %20 = tpu.matmul %19, %3, %cst_6 {dimension_numbers = #tpu.dot_dimension_numbers<[1], [0], [0], [1], [0, 0, 1, 1], [], []>} : vector<768x64xbf16>, vector<64x16xbf16>, vector<768x16xf32> -> vector<768x16xf32>
    %21 = arith.addf %13, %20 : vector<768x16xf32>
    %22 = vector.extract_strided_slice %1 {offsets = [2, 0], sizes = [1, 64], strides = [1, 1]} : vector<3x64xi32> to vector<1x64xi32>
    %23 = vector.broadcast %22 : vector<1x64xi32> to vector<768x64xi32>
    %24 = arith.cmpi eq, %4, %23 : vector<768x64xi32>
    %25 = arith.extui %24 : vector<768x64xi1> to vector<768x64xi32>
    %26 = arith.sitofp %25 : vector<768x64xi32> to vector<768x64xf32>
    %27 = arith.truncf %26 : vector<768x64xf32> to vector<768x64xbf16>
    %cst_7 = arith.constant dense<0.000000e+00> : vector<768x16xf32>
    %28 = tpu.matmul %27, %3, %cst_7 {dimension_numbers = #tpu.dot_dimension_numbers<[1], [0], [0], [1], [0, 0, 1, 1], [], []>} : vector<768x64xbf16>, vector<64x16xbf16>, vector<768x16xf32> -> vector<768x16xf32>
    %29 = arith.addf %21, %28 : vector<768x16xf32>
    %30 = vector.extract_strided_slice %29 {offsets = [0, 6], sizes = [768, 1], strides = [1, 1]} : vector<768x16xf32> to vector<768x1xf32>
    %c0_8 = arith.constant 0 : index
    %c0_9 = arith.constant 0 : index
    %31 = vector.load %arg6[%c0_8, %c0_9] : memref<112x32xbf16, #tpu.memory_space<vmem>>, vector<16x16xbf16>
    %32 = arith.truncf %29 : vector<768x16xf32> to vector<768x16xbf16>
    %cst_10 = arith.constant dense<0.000000e+00> : vector<768x16xf32>
    %33 = tpu.matmul %32, %31, %cst_10 {dimension_numbers = #tpu.dot_dimension_numbers<[1], [0], [0], [1], [0, 0, 1, 1], [], []>} : vector<768x16xbf16>, vector<16x16xbf16>, vector<768x16xf32> -> vector<768x16xf32>
    %cst_11 = arith.constant 1.000000e+00 : f32
    %34 = vector.broadcast %cst_11 : f32 to vector<768x1xf32>
    %35 = arith.maximumf %30, %34 : vector<768x1xf32>
    %36 = tpu.reciprocal %35 {approx = true} : vector<768x1xf32> -> vector<768x1xf32>
    %37 = vector.broadcast %36 : vector<768x1xf32> to vector<768x16xf32>
    %38 = arith.mulf %33, %37 : vector<768x16xf32>
    %c0_12 = arith.constant 0 : index
    %c0_13 = arith.constant 0 : index
    %39 = vector.load %arg4[%c0_12, %c0_13] : memref<768x16xf32, #tpu.memory_space<vmem>>, vector<768x16xf32>
    %40 = arith.addf %38, %39 : vector<768x16xf32>
    %cst_14 = arith.constant 0.000000e+00 : f32
    %41 = vector.broadcast %cst_14 : f32 to vector<768x16xf32>
    %42 = arith.maximumf %40, %41 : vector<768x16xf32>
    %43 = arith.truncf %42 : vector<768x16xf32> to vector<768x16xbf16>
    %44 = vector.extract_strided_slice %43 {offsets = [0, 0], sizes = [48, 16], strides = [1, 1]} : vector<768x16xbf16> to vector<48x16xbf16>
    %c0_15 = arith.constant 0 : index
    %c0_16 = arith.constant 0 : index
    %c0_17 = arith.constant 0 : index
    %45 = vector.load %arg5[%c0_15, %c0_16, %c0_17] : memref<16x16x16xbf16, #tpu.memory_space<vmem>>, vector<1x16x16xbf16>
    %46 = vector.shape_cast %45 : vector<1x16x16xbf16> to vector<16x16xbf16>
    %cst_18 = arith.constant dense<0.000000e+00> : vector<48x16xf32>
    %47 = tpu.matmul %44, %46, %cst_18 {dimension_numbers = #tpu.dot_dimension_numbers<[1], [0], [0], [1], [0, 0, 1, 1], [], []>} : vector<48x16xbf16>, vector<16x16xbf16>, vector<48x16xf32> -> vector<48x16xf32>
    %48 = vector.extract_strided_slice %43 {offsets = [48, 0], sizes = [48, 16], strides = [1, 1]} : vector<768x16xbf16> to vector<48x16xbf16>
    %c1 = arith.constant 1 : index
    %c0_19 = arith.constant 0 : index
    %c0_20 = arith.constant 0 : index
    %49 = vector.load %arg5[%c1, %c0_19, %c0_20] : memref<16x16x16xbf16, #tpu.memory_space<vmem>>, vector<1x16x16xbf16>
    %50 = vector.shape_cast %49 : vector<1x16x16xbf16> to vector<16x16xbf16>
    %cst_21 = arith.constant dense<0.000000e+00> : vector<48x16xf32>
    %51 = tpu.matmul %48, %50, %cst_21 {dimension_numbers = #tpu.dot_dimension_numbers<[1], [0], [0], [1], [0, 0, 1, 1], [], []>} : vector<48x16xbf16>, vector<16x16xbf16>, vector<48x16xf32> -> vector<48x16xf32>
    %52 = vector.extract_strided_slice %43 {offsets = [96, 0], sizes = [48, 16], strides = [1, 1]} : vector<768x16xbf16> to vector<48x16xbf16>
    %c2 = arith.constant 2 : index
    %c0_22 = arith.constant 0 : index
    %c0_23 = arith.constant 0 : index
    %53 = vector.load %arg5[%c2, %c0_22, %c0_23] : memref<16x16x16xbf16, #tpu.memory_space<vmem>>, vector<1x16x16xbf16>
    %54 = vector.shape_cast %53 : vector<1x16x16xbf16> to vector<16x16xbf16>
    %cst_24 = arith.constant dense<0.000000e+00> : vector<48x16xf32>
    %55 = tpu.matmul %52, %54, %cst_24 {dimension_numbers = #tpu.dot_dimension_numbers<[1], [0], [0], [1], [0, 0, 1, 1], [], []>} : vector<48x16xbf16>, vector<16x16xbf16>, vector<48x16xf32> -> vector<48x16xf32>
    %56 = vector.extract_strided_slice %43 {offsets = [144, 0], sizes = [48, 16], strides = [1, 1]} : vector<768x16xbf16> to vector<48x16xbf16>
    %c3 = arith.constant 3 : index
    %c0_25 = arith.constant 0 : index
    %c0_26 = arith.constant 0 : index
    %57 = vector.load %arg5[%c3, %c0_25, %c0_26] : memref<16x16x16xbf16, #tpu.memory_space<vmem>>, vector<1x16x16xbf16>
    %58 = vector.shape_cast %57 : vector<1x16x16xbf16> to vector<16x16xbf16>
    %cst_27 = arith.constant dense<0.000000e+00> : vector<48x16xf32>
    %59 = tpu.matmul %56, %58, %cst_27 {dimension_numbers = #tpu.dot_dimension_numbers<[1], [0], [0], [1], [0, 0, 1, 1], [], []>} : vector<48x16xbf16>, vector<16x16xbf16>, vector<48x16xf32> -> vector<48x16xf32>
    %60 = vector.extract_strided_slice %43 {offsets = [192, 0], sizes = [48, 16], strides = [1, 1]} : vector<768x16xbf16> to vector<48x16xbf16>
    %c4 = arith.constant 4 : index
    %c0_28 = arith.constant 0 : index
    %c0_29 = arith.constant 0 : index
    %61 = vector.load %arg5[%c4, %c0_28, %c0_29] : memref<16x16x16xbf16, #tpu.memory_space<vmem>>, vector<1x16x16xbf16>
    %62 = vector.shape_cast %61 : vector<1x16x16xbf16> to vector<16x16xbf16>
    %cst_30 = arith.constant dense<0.000000e+00> : vector<48x16xf32>
    %63 = tpu.matmul %60, %62, %cst_30 {dimension_numbers = #tpu.dot_dimension_numbers<[1], [0], [0], [1], [0, 0, 1, 1], [], []>} : vector<48x16xbf16>, vector<16x16xbf16>, vector<48x16xf32> -> vector<48x16xf32>
    %64 = vector.extract_strided_slice %43 {offsets = [240, 0], sizes = [48, 16], strides = [1, 1]} : vector<768x16xbf16> to vector<48x16xbf16>
    %c5 = arith.constant 5 : index
    %c0_31 = arith.constant 0 : index
    %c0_32 = arith.constant 0 : index
    %65 = vector.load %arg5[%c5, %c0_31, %c0_32] : memref<16x16x16xbf16, #tpu.memory_space<vmem>>, vector<1x16x16xbf16>
    %66 = vector.shape_cast %65 : vector<1x16x16xbf16> to vector<16x16xbf16>
    %cst_33 = arith.constant dense<0.000000e+00> : vector<48x16xf32>
    %67 = tpu.matmul %64, %66, %cst_33 {dimension_numbers = #tpu.dot_dimension_numbers<[1], [0], [0], [1], [0, 0, 1, 1], [], []>} : vector<48x16xbf16>, vector<16x16xbf16>, vector<48x16xf32> -> vector<48x16xf32>
    %68 = vector.extract_strided_slice %43 {offsets = [288, 0], sizes = [48, 16], strides = [1, 1]} : vector<768x16xbf16> to vector<48x16xbf16>
    %c6 = arith.constant 6 : index
    %c0_34 = arith.constant 0 : index
    %c0_35 = arith.constant 0 : index
    %69 = vector.load %arg5[%c6, %c0_34, %c0_35] : memref<16x16x16xbf16, #tpu.memory_space<vmem>>, vector<1x16x16xbf16>
    %70 = vector.shape_cast %69 : vector<1x16x16xbf16> to vector<16x16xbf16>
    %cst_36 = arith.constant dense<0.000000e+00> : vector<48x16xf32>
    %71 = tpu.matmul %68, %70, %cst_36 {dimension_numbers = #tpu.dot_dimension_numbers<[1], [0], [0], [1], [0, 0, 1, 1], [], []>} : vector<48x16xbf16>, vector<16x16xbf16>, vector<48x16xf32> -> vector<48x16xf32>
    %72 = vector.extract_strided_slice %43 {offsets = [336, 0], sizes = [48, 16], strides = [1, 1]} : vector<768x16xbf16> to vector<48x16xbf16>
    %c7 = arith.constant 7 : index
    %c0_37 = arith.constant 0 : index
    %c0_38 = arith.constant 0 : index
    %73 = vector.load %arg5[%c7, %c0_37, %c0_38] : memref<16x16x16xbf16, #tpu.memory_space<vmem>>, vector<1x16x16xbf16>
    %74 = vector.shape_cast %73 : vector<1x16x16xbf16> to vector<16x16xbf16>
    %cst_39 = arith.constant dense<0.000000e+00> : vector<48x16xf32>
    %75 = tpu.matmul %72, %74, %cst_39 {dimension_numbers = #tpu.dot_dimension_numbers<[1], [0], [0], [1], [0, 0, 1, 1], [], []>} : vector<48x16xbf16>, vector<16x16xbf16>, vector<48x16xf32> -> vector<48x16xf32>
    %76 = vector.extract_strided_slice %43 {offsets = [384, 0], sizes = [48, 16], strides = [1, 1]} : vector<768x16xbf16> to vector<48x16xbf16>
    %c8 = arith.constant 8 : index
    %c0_40 = arith.constant 0 : index
    %c0_41 = arith.constant 0 : index
    %77 = vector.load %arg5[%c8, %c0_40, %c0_41] : memref<16x16x16xbf16, #tpu.memory_space<vmem>>, vector<1x16x16xbf16>
    %78 = vector.shape_cast %77 : vector<1x16x16xbf16> to vector<16x16xbf16>
    %cst_42 = arith.constant dense<0.000000e+00> : vector<48x16xf32>
    %79 = tpu.matmul %76, %78, %cst_42 {dimension_numbers = #tpu.dot_dimension_numbers<[1], [0], [0], [1], [0, 0, 1, 1], [], []>} : vector<48x16xbf16>, vector<16x16xbf16>, vector<48x16xf32> -> vector<48x16xf32>
    %80 = vector.extract_strided_slice %43 {offsets = [432, 0], sizes = [48, 16], strides = [1, 1]} : vector<768x16xbf16> to vector<48x16xbf16>
    %c9 = arith.constant 9 : index
    %c0_43 = arith.constant 0 : index
    %c0_44 = arith.constant 0 : index
    %81 = vector.load %arg5[%c9, %c0_43, %c0_44] : memref<16x16x16xbf16, #tpu.memory_space<vmem>>, vector<1x16x16xbf16>
    %82 = vector.shape_cast %81 : vector<1x16x16xbf16> to vector<16x16xbf16>
    %cst_45 = arith.constant dense<0.000000e+00> : vector<48x16xf32>
    %83 = tpu.matmul %80, %82, %cst_45 {dimension_numbers = #tpu.dot_dimension_numbers<[1], [0], [0], [1], [0, 0, 1, 1], [], []>} : vector<48x16xbf16>, vector<16x16xbf16>, vector<48x16xf32> -> vector<48x16xf32>
    %84 = vector.extract_strided_slice %43 {offsets = [480, 0], sizes = [48, 16], strides = [1, 1]} : vector<768x16xbf16> to vector<48x16xbf16>
    %c10 = arith.constant 10 : index
    %c0_46 = arith.constant 0 : index
    %c0_47 = arith.constant 0 : index
    %85 = vector.load %arg5[%c10, %c0_46, %c0_47] : memref<16x16x16xbf16, #tpu.memory_space<vmem>>, vector<1x16x16xbf16>
    %86 = vector.shape_cast %85 : vector<1x16x16xbf16> to vector<16x16xbf16>
    %cst_48 = arith.constant dense<0.000000e+00> : vector<48x16xf32>
    %87 = tpu.matmul %84, %86, %cst_48 {dimension_numbers = #tpu.dot_dimension_numbers<[1], [0], [0], [1], [0, 0, 1, 1], [], []>} : vector<48x16xbf16>, vector<16x16xbf16>, vector<48x16xf32> -> vector<48x16xf32>
    %88 = vector.extract_strided_slice %43 {offsets = [528, 0], sizes = [48, 16], strides = [1, 1]} : vector<768x16xbf16> to vector<48x16xbf16>
    %c11 = arith.constant 11 : index
    %c0_49 = arith.constant 0 : index
    %c0_50 = arith.constant 0 : index
    %89 = vector.load %arg5[%c11, %c0_49, %c0_50] : memref<16x16x16xbf16, #tpu.memory_space<vmem>>, vector<1x16x16xbf16>
    %90 = vector.shape_cast %89 : vector<1x16x16xbf16> to vector<16x16xbf16>
    %cst_51 = arith.constant dense<0.000000e+00> : vector<48x16xf32>
    %91 = tpu.matmul %88, %90, %cst_51 {dimension_numbers = #tpu.dot_dimension_numbers<[1], [0], [0], [1], [0, 0, 1, 1], [], []>} : vector<48x16xbf16>, vector<16x16xbf16>, vector<48x16xf32> -> vector<48x16xf32>
    %92 = vector.extract_strided_slice %43 {offsets = [576, 0], sizes = [48, 16], strides = [1, 1]} : vector<768x16xbf16> to vector<48x16xbf16>
    %c12 = arith.constant 12 : index
    %c0_52 = arith.constant 0 : index
    %c0_53 = arith.constant 0 : index
    %93 = vector.load %arg5[%c12, %c0_52, %c0_53] : memref<16x16x16xbf16, #tpu.memory_space<vmem>>, vector<1x16x16xbf16>
    %94 = vector.shape_cast %93 : vector<1x16x16xbf16> to vector<16x16xbf16>
    %cst_54 = arith.constant dense<0.000000e+00> : vector<48x16xf32>
    %95 = tpu.matmul %92, %94, %cst_54 {dimension_numbers = #tpu.dot_dimension_numbers<[1], [0], [0], [1], [0, 0, 1, 1], [], []>} : vector<48x16xbf16>, vector<16x16xbf16>, vector<48x16xf32> -> vector<48x16xf32>
    %96 = vector.extract_strided_slice %43 {offsets = [624, 0], sizes = [48, 16], strides = [1, 1]} : vector<768x16xbf16> to vector<48x16xbf16>
    %c13 = arith.constant 13 : index
    %c0_55 = arith.constant 0 : index
    %c0_56 = arith.constant 0 : index
    %97 = vector.load %arg5[%c13, %c0_55, %c0_56] : memref<16x16x16xbf16, #tpu.memory_space<vmem>>, vector<1x16x16xbf16>
    %98 = vector.shape_cast %97 : vector<1x16x16xbf16> to vector<16x16xbf16>
    %cst_57 = arith.constant dense<0.000000e+00> : vector<48x16xf32>
    %99 = tpu.matmul %96, %98, %cst_57 {dimension_numbers = #tpu.dot_dimension_numbers<[1], [0], [0], [1], [0, 0, 1, 1], [], []>} : vector<48x16xbf16>, vector<16x16xbf16>, vector<48x16xf32> -> vector<48x16xf32>
    %100 = vector.extract_strided_slice %43 {offsets = [672, 0], sizes = [48, 16], strides = [1, 1]} : vector<768x16xbf16> to vector<48x16xbf16>
    %c14 = arith.constant 14 : index
    %c0_58 = arith.constant 0 : index
    %c0_59 = arith.constant 0 : index
    %101 = vector.load %arg5[%c14, %c0_58, %c0_59] : memref<16x16x16xbf16, #tpu.memory_space<vmem>>, vector<1x16x16xbf16>
    %102 = vector.shape_cast %101 : vector<1x16x16xbf16> to vector<16x16xbf16>
    %cst_60 = arith.constant dense<0.000000e+00> : vector<48x16xf32>
    %103 = tpu.matmul %100, %102, %cst_60 {dimension_numbers = #tpu.dot_dimension_numbers<[1], [0], [0], [1], [0, 0, 1, 1], [], []>} : vector<48x16xbf16>, vector<16x16xbf16>, vector<48x16xf32> -> vector<48x16xf32>
    %104 = vector.extract_strided_slice %43 {offsets = [720, 0], sizes = [48, 16], strides = [1, 1]} : vector<768x16xbf16> to vector<48x16xbf16>
    %c15 = arith.constant 15 : index
    %c0_61 = arith.constant 0 : index
    %c0_62 = arith.constant 0 : index
    %105 = vector.load %arg5[%c15, %c0_61, %c0_62] : memref<16x16x16xbf16, #tpu.memory_space<vmem>>, vector<1x16x16xbf16>
    %106 = vector.shape_cast %105 : vector<1x16x16xbf16> to vector<16x16xbf16>
    %cst_63 = arith.constant dense<0.000000e+00> : vector<48x16xf32>
    %107 = tpu.matmul %104, %106, %cst_63 {dimension_numbers = #tpu.dot_dimension_numbers<[1], [0], [0], [1], [0, 0, 1, 1], [], []>} : vector<48x16xbf16>, vector<16x16xbf16>, vector<48x16xf32> -> vector<48x16xf32>
    %108 = arith.addf %47, %51 : vector<48x16xf32>
    %109 = arith.addf %55, %59 : vector<48x16xf32>
    %110 = arith.addf %63, %67 : vector<48x16xf32>
    %111 = arith.addf %71, %75 : vector<48x16xf32>
    %112 = arith.addf %79, %83 : vector<48x16xf32>
    %113 = arith.addf %87, %91 : vector<48x16xf32>
    %114 = arith.addf %95, %99 : vector<48x16xf32>
    %115 = arith.addf %103, %107 : vector<48x16xf32>
    %116 = arith.addf %108, %109 : vector<48x16xf32>
    %117 = arith.addf %110, %111 : vector<48x16xf32>
    %118 = arith.addf %112, %113 : vector<48x16xf32>
    %119 = arith.addf %114, %115 : vector<48x16xf32>
    %120 = arith.addf %116, %117 : vector<48x16xf32>
    %121 = arith.addf %118, %119 : vector<48x16xf32>
    %122 = arith.addf %120, %121 : vector<48x16xf32>
    %c0_64 = arith.constant 0 : index
    %c0_65 = arith.constant 0 : index
    %123 = vector.load %arg7[%c0_64, %c0_65] : memref<8x32xf32, #tpu.memory_space<vmem>>, vector<1x16xf32>
    %124 = vector.broadcast %123 : vector<1x16xf32> to vector<48x16xf32>
    %125 = arith.addf %122, %124 : vector<48x16xf32>
    %cst_66 = arith.constant 0.000000e+00 : f32
    %126 = vector.broadcast %cst_66 : f32 to vector<48x16xf32>
    %127 = arith.maximumf %125, %126 : vector<48x16xf32>
    %c0_67 = arith.constant 0 : index
    %c0_68 = arith.constant 0 : index
    %c0_69 = arith.constant 0 : index
    %128 = vector.load %arg3[%c0_67, %c0_68, %c0_69] : memref<1x1x16xf32, #tpu.memory_space<vmem>>, vector<1x1x16xf32>
    %129 = vector.shape_cast %128 : vector<1x1x16xf32> to vector<1x16xf32>
    %130 = arith.truncf %129 : vector<1x16xf32> to vector<1x16xbf16>
    %c16 = arith.constant 16 : index
    %c0_70 = arith.constant 0 : index
    %131 = vector.load %arg6[%c16, %c0_70] : memref<112x32xbf16, #tpu.memory_space<vmem>>, vector<16x16xbf16>
    %cst_71 = arith.constant dense<0.000000e+00> : vector<1x16xf32>
    %132 = tpu.matmul %130, %131, %cst_71 {dimension_numbers = #tpu.dot_dimension_numbers<[1], [0], [0], [1], [0, 0, 1, 1], [], []>} : vector<1x16xbf16>, vector<16x16xbf16>, vector<1x16xf32> -> vector<1x16xf32>
    %c1_72 = arith.constant 1 : index
    %c0_73 = arith.constant 0 : index
    %133 = vector.load %arg7[%c1_72, %c0_73] : memref<8x32xf32, #tpu.memory_space<vmem>>, vector<1x16xf32>
    %134 = arith.addf %132, %133 : vector<1x16xf32>
    %cst_74 = arith.constant 0.000000e+00 : f32
    %135 = vector.broadcast %cst_74 : f32 to vector<1x16xf32>
    %136 = arith.maximumf %134, %135 : vector<1x16xf32>
    %137 = arith.truncf %136 : vector<1x16xf32> to vector<1x16xbf16>
    %138 = arith.truncf %127 : vector<48x16xf32> to vector<48x16xbf16>
    %c32 = arith.constant 32 : index
    %c0_75 = arith.constant 0 : index
    %139 = vector.load %arg6[%c32, %c0_75] : memref<112x32xbf16, #tpu.memory_space<vmem>>, vector<16x32xbf16>
    %cst_76 = arith.constant dense<0.000000e+00> : vector<48x32xf32>
    %140 = tpu.matmul %138, %139, %cst_76 {dimension_numbers = #tpu.dot_dimension_numbers<[1], [0], [0], [1], [0, 0, 1, 1], [], []>} : vector<48x16xbf16>, vector<16x32xbf16>, vector<48x32xf32> -> vector<48x32xf32>
    %c48 = arith.constant 48 : index
    %c0_77 = arith.constant 0 : index
    %141 = vector.load %arg6[%c48, %c0_77] : memref<112x32xbf16, #tpu.memory_space<vmem>>, vector<16x32xbf16>
    %cst_78 = arith.constant dense<0.000000e+00> : vector<1x32xf32>
    %142 = tpu.matmul %137, %141, %cst_78 {dimension_numbers = #tpu.dot_dimension_numbers<[1], [0], [0], [1], [0, 0, 1, 1], [], []>} : vector<1x16xbf16>, vector<16x32xbf16>, vector<1x32xf32> -> vector<1x32xf32>
    %143 = vector.broadcast %142 : vector<1x32xf32> to vector<48x32xf32>
    %144 = arith.addf %140, %143 : vector<48x32xf32>
    %c0_79 = arith.constant 0 : index
    %c0_80 = arith.constant 0 : index
    %145 = vector.load %arg8[%c0_79, %c0_80] : memref<48x32xf32, #tpu.memory_space<vmem>>, vector<48x32xf32>
    %146 = arith.addf %144, %145 : vector<48x32xf32>
    %c0_81 = arith.constant 0 : index
    %c0_82 = arith.constant 0 : index
    %c0_83 = arith.constant 0 : index
    %147 = vector.load %arg9[%c0_81, %c0_82, %c0_83] : memref<2x8x32xf32, #tpu.memory_space<vmem>>, vector<1x8x32xf32>
    %148 = vector.shape_cast %147 : vector<1x8x32xf32> to vector<8x32xf32>
    %cst_84 = arith.constant dense<0.000000e+00> : vector<48xf32>
    %149 = vector.multi_reduction <add>, %146, %cst_84 [1] : vector<48x32xf32> to vector<48xf32>
    %150 = vector.shape_cast %149 : vector<48xf32> to vector<48x1xf32>
    %cst_85 = arith.constant 3.200000e+01 : f32
    %151 = vector.broadcast %cst_85 : f32 to vector<48x1xf32>
    %152 = arith.divf %150, %151 : vector<48x1xf32>
    %153 = vector.broadcast %152 : vector<48x1xf32> to vector<48x32xf32>
    %154 = arith.subf %146, %153 : vector<48x32xf32>
    %155 = arith.mulf %154, %154 : vector<48x32xf32>
    %cst_86 = arith.constant dense<0.000000e+00> : vector<48xf32>
    %156 = vector.multi_reduction <add>, %155, %cst_86 [1] : vector<48x32xf32> to vector<48xf32>
    %157 = vector.shape_cast %156 : vector<48xf32> to vector<48x1xf32>
    %cst_87 = arith.constant 3.200000e+01 : f32
    %158 = vector.broadcast %cst_87 : f32 to vector<48x1xf32>
    %159 = arith.divf %157, %158 : vector<48x1xf32>
    %160 = vector.broadcast %152 : vector<48x1xf32> to vector<48x32xf32>
    %161 = arith.subf %146, %160 : vector<48x32xf32>
    %cst_88 = arith.constant 9.99999974E-6 : f32
    %162 = vector.broadcast %cst_88 : f32 to vector<48x1xf32>
    %163 = arith.addf %159, %162 : vector<48x1xf32>
    %164 = math.rsqrt %163 : vector<48x1xf32>
    %165 = vector.broadcast %164 : vector<48x1xf32> to vector<48x32xf32>
    %166 = arith.mulf %161, %165 : vector<48x32xf32>
    %167 = vector.extract_strided_slice %148 {offsets = [0, 0], sizes = [1, 32], strides = [1, 1]} : vector<8x32xf32> to vector<1x32xf32>
    %168 = vector.broadcast %167 : vector<1x32xf32> to vector<48x32xf32>
    %169 = arith.mulf %166, %168 : vector<48x32xf32>
    %170 = vector.extract_strided_slice %148 {offsets = [1, 0], sizes = [1, 32], strides = [1, 1]} : vector<8x32xf32> to vector<1x32xf32>
    %171 = vector.broadcast %170 : vector<1x32xf32> to vector<48x32xf32>
    %172 = arith.addf %169, %171 : vector<48x32xf32>
    %173 = arith.truncf %172 : vector<48x32xf32> to vector<48x32xbf16>
    %cst_89 = arith.constant 0.000000e+00 : f32
    %174 = vector.broadcast %cst_89 : f32 to vector<48x32xf32>
    %c0_90 = arith.constant 0 : index
    %c0_91 = arith.constant 0 : index
    %c0_92 = arith.constant 0 : index
    %175 = vector.load %arg11[%c0_90, %c0_91, %c0_92] : memref<12x32x16xbf16, #tpu.memory_space<vmem>>, vector<1x32x16xbf16>
    %176 = vector.shape_cast %175 : vector<1x32x16xbf16> to vector<32x16xbf16>
    %cst_93 = arith.constant dense<0.000000e+00> : vector<48x16xf32>
    %177 = tpu.matmul %173, %176, %cst_93 {dimension_numbers = #tpu.dot_dimension_numbers<[1], [0], [0], [1], [0, 0, 1, 1], [], []>} : vector<48x32xbf16>, vector<32x16xbf16>, vector<48x16xf32> -> vector<48x16xf32>
    %c1_94 = arith.constant 1 : index
    %c0_95 = arith.constant 0 : index
    %c0_96 = arith.constant 0 : index
    %178 = vector.load %arg11[%c1_94, %c0_95, %c0_96] : memref<12x32x16xbf16, #tpu.memory_space<vmem>>, vector<1x32x16xbf16>
    %179 = vector.shape_cast %178 : vector<1x32x16xbf16> to vector<32x16xbf16>
    %cst_97 = arith.constant dense<0.000000e+00> : vector<48x16xf32>
    %180 = tpu.matmul %173, %179, %cst_97 {dimension_numbers = #tpu.dot_dimension_numbers<[1], [0], [0], [1], [0, 0, 1, 1], [], []>} : vector<48x32xbf16>, vector<32x16xbf16>, vector<48x16xf32> -> vector<48x16xf32>
    %c2_98 = arith.constant 2 : index
    %c0_99 = arith.constant 0 : index
    %c0_100 = arith.constant 0 : index
    %181 = vector.load %arg11[%c2_98, %c0_99, %c0_100] : memref<12x32x16xbf16, #tpu.memory_space<vmem>>, vector<1x32x16xbf16>
    %182 = vector.shape_cast %181 : vector<1x32x16xbf16> to vector<32x16xbf16>
    %cst_101 = arith.constant dense<0.000000e+00> : vector<48x16xf32>
    %183 = tpu.matmul %173, %182, %cst_101 {dimension_numbers = #tpu.dot_dimension_numbers<[1], [0], [0], [1], [0, 0, 1, 1], [], []>} : vector<48x32xbf16>, vector<32x16xbf16>, vector<48x16xf32> -> vector<48x16xf32>
    %184 = arith.truncf %177 : vector<48x16xf32> to vector<48x16xbf16>
    %185 = arith.truncf %180 : vector<48x16xf32> to vector<48x16xbf16>
    %cst_102 = arith.constant dense<0.000000e+00> : vector<48x48xf32>
    %186 = tpu.matmul %184, %185, %cst_102 {dimension_numbers = #tpu.dot_dimension_numbers<[1], [1], [0], [0], [0, 0, 1, 0], [], []>} : vector<48x16xbf16>, vector<48x16xbf16>, vector<48x48xf32> -> vector<48x48xf32>
    %cst_103 = arith.constant 2.500000e-01 : f32
    %187 = vector.broadcast %cst_103 : f32 to vector<48x48xf32>
    %188 = arith.mulf %186, %187 : vector<48x48xf32>
    %cst_104 = arith.constant dense<0xFF800000> : vector<48xf32>
    %189 = vector.multi_reduction <maximumf>, %188, %cst_104 [1] : vector<48x48xf32> to vector<48xf32>
    %190 = vector.shape_cast %189 : vector<48xf32> to vector<48x1xf32>
    %191 = vector.broadcast %190 : vector<48x1xf32> to vector<48x48xf32>
    %192 = arith.subf %188, %191 : vector<48x48xf32>
    %193 = math.exp %192 : vector<48x48xf32>
    %cst_105 = arith.constant dense<0.000000e+00> : vector<48xf32>
    %194 = vector.multi_reduction <add>, %193, %cst_105 [1] : vector<48x48xf32> to vector<48xf32>
    %195 = vector.shape_cast %194 : vector<48xf32> to vector<48x1xf32>
    %196 = tpu.reciprocal %195 {approx = true} : vector<48x1xf32> -> vector<48x1xf32>
    %197 = vector.broadcast %196 : vector<48x1xf32> to vector<48x48xf32>
    %198 = arith.mulf %193, %197 : vector<48x48xf32>
    %199 = arith.truncf %198 : vector<48x48xf32> to vector<48x48xbf16>
    %200 = arith.truncf %183 : vector<48x16xf32> to vector<48x16xbf16>
    %cst_106 = arith.constant dense<0.000000e+00> : vector<48x16xf32>
    %201 = tpu.matmul %199, %200, %cst_106 {dimension_numbers = #tpu.dot_dimension_numbers<[1], [0], [0], [1], [0, 0, 1, 1], [], []>} : vector<48x48xbf16>, vector<48x16xbf16>, vector<48x16xf32> -> vector<48x16xf32>
    %202 = arith.truncf %201 : vector<48x16xf32> to vector<48x16xbf16>
    %c0_107 = arith.constant 0 : index
    %c0_108 = arith.constant 0 : index
    %c0_109 = arith.constant 0 : index
    %203 = vector.load %arg12[%c0_107, %c0_108, %c0_109] : memref<4x16x32xbf16, #tpu.memory_space<vmem>>, vector<1x16x32xbf16>
    %204 = vector.shape_cast %203 : vector<1x16x32xbf16> to vector<16x32xbf16>
    %cst_110 = arith.constant dense<0.000000e+00> : vector<48x32xf32>
    %205 = tpu.matmul %202, %204, %cst_110 {dimension_numbers = #tpu.dot_dimension_numbers<[1], [0], [0], [1], [0, 0, 1, 1], [], []>} : vector<48x16xbf16>, vector<16x32xbf16>, vector<48x32xf32> -> vector<48x32xf32>
    %206 = arith.addf %174, %205 : vector<48x32xf32>
    %c3_111 = arith.constant 3 : index
    %c0_112 = arith.constant 0 : index
    %c0_113 = arith.constant 0 : index
    %207 = vector.load %arg11[%c3_111, %c0_112, %c0_113] : memref<12x32x16xbf16, #tpu.memory_space<vmem>>, vector<1x32x16xbf16>
    %208 = vector.shape_cast %207 : vector<1x32x16xbf16> to vector<32x16xbf16>
    %cst_114 = arith.constant dense<0.000000e+00> : vector<48x16xf32>
    %209 = tpu.matmul %173, %208, %cst_114 {dimension_numbers = #tpu.dot_dimension_numbers<[1], [0], [0], [1], [0, 0, 1, 1], [], []>} : vector<48x32xbf16>, vector<32x16xbf16>, vector<48x16xf32> -> vector<48x16xf32>
    %c4_115 = arith.constant 4 : index
    %c0_116 = arith.constant 0 : index
    %c0_117 = arith.constant 0 : index
    %210 = vector.load %arg11[%c4_115, %c0_116, %c0_117] : memref<12x32x16xbf16, #tpu.memory_space<vmem>>, vector<1x32x16xbf16>
    %211 = vector.shape_cast %210 : vector<1x32x16xbf16> to vector<32x16xbf16>
    %cst_118 = arith.constant dense<0.000000e+00> : vector<48x16xf32>
    %212 = tpu.matmul %173, %211, %cst_118 {dimension_numbers = #tpu.dot_dimension_numbers<[1], [0], [0], [1], [0, 0, 1, 1], [], []>} : vector<48x32xbf16>, vector<32x16xbf16>, vector<48x16xf32> -> vector<48x16xf32>
    %c5_119 = arith.constant 5 : index
    %c0_120 = arith.constant 0 : index
    %c0_121 = arith.constant 0 : index
    %213 = vector.load %arg11[%c5_119, %c0_120, %c0_121] : memref<12x32x16xbf16, #tpu.memory_space<vmem>>, vector<1x32x16xbf16>
    %214 = vector.shape_cast %213 : vector<1x32x16xbf16> to vector<32x16xbf16>
    %cst_122 = arith.constant dense<0.000000e+00> : vector<48x16xf32>
    %215 = tpu.matmul %173, %214, %cst_122 {dimension_numbers = #tpu.dot_dimension_numbers<[1], [0], [0], [1], [0, 0, 1, 1], [], []>} : vector<48x32xbf16>, vector<32x16xbf16>, vector<48x16xf32> -> vector<48x16xf32>
    %216 = arith.truncf %209 : vector<48x16xf32> to vector<48x16xbf16>
    %217 = arith.truncf %212 : vector<48x16xf32> to vector<48x16xbf16>
    %cst_123 = arith.constant dense<0.000000e+00> : vector<48x48xf32>
    %218 = tpu.matmul %216, %217, %cst_123 {dimension_numbers = #tpu.dot_dimension_numbers<[1], [1], [0], [0], [0, 0, 1, 0], [], []>} : vector<48x16xbf16>, vector<48x16xbf16>, vector<48x48xf32> -> vector<48x48xf32>
    %cst_124 = arith.constant 2.500000e-01 : f32
    %219 = vector.broadcast %cst_124 : f32 to vector<48x48xf32>
    %220 = arith.mulf %218, %219 : vector<48x48xf32>
    %cst_125 = arith.constant dense<0xFF800000> : vector<48xf32>
    %221 = vector.multi_reduction <maximumf>, %220, %cst_125 [1] : vector<48x48xf32> to vector<48xf32>
    %222 = vector.shape_cast %221 : vector<48xf32> to vector<48x1xf32>
    %223 = vector.broadcast %222 : vector<48x1xf32> to vector<48x48xf32>
    %224 = arith.subf %220, %223 : vector<48x48xf32>
    %225 = math.exp %224 : vector<48x48xf32>
    %cst_126 = arith.constant dense<0.000000e+00> : vector<48xf32>
    %226 = vector.multi_reduction <add>, %225, %cst_126 [1] : vector<48x48xf32> to vector<48xf32>
    %227 = vector.shape_cast %226 : vector<48xf32> to vector<48x1xf32>
    %228 = tpu.reciprocal %227 {approx = true} : vector<48x1xf32> -> vector<48x1xf32>
    %229 = vector.broadcast %228 : vector<48x1xf32> to vector<48x48xf32>
    %230 = arith.mulf %225, %229 : vector<48x48xf32>
    %231 = arith.truncf %230 : vector<48x48xf32> to vector<48x48xbf16>
    %232 = arith.truncf %215 : vector<48x16xf32> to vector<48x16xbf16>
    %cst_127 = arith.constant dense<0.000000e+00> : vector<48x16xf32>
    %233 = tpu.matmul %231, %232, %cst_127 {dimension_numbers = #tpu.dot_dimension_numbers<[1], [0], [0], [1], [0, 0, 1, 1], [], []>} : vector<48x48xbf16>, vector<48x16xbf16>, vector<48x16xf32> -> vector<48x16xf32>
    %234 = arith.truncf %233 : vector<48x16xf32> to vector<48x16xbf16>
    %c1_128 = arith.constant 1 : index
    %c0_129 = arith.constant 0 : index
    %c0_130 = arith.constant 0 : index
    %235 = vector.load %arg12[%c1_128, %c0_129, %c0_130] : memref<4x16x32xbf16, #tpu.memory_space<vmem>>, vector<1x16x32xbf16>
    %236 = vector.shape_cast %235 : vector<1x16x32xbf16> to vector<16x32xbf16>
    %cst_131 = arith.constant dense<0.000000e+00> : vector<48x32xf32>
    %237 = tpu.matmul %234, %236, %cst_131 {dimension_numbers = #tpu.dot_dimension_numbers<[1], [0], [0], [1], [0, 0, 1, 1], [], []>} : vector<48x16xbf16>, vector<16x32xbf16>, vector<48x32xf32> -> vector<48x32xf32>
    %238 = arith.addf %206, %237 : vector<48x32xf32>
    %239 = arith.addf %146, %238 : vector<48x32xf32>
    %240 = vector.extract_strided_slice %148 {offsets = [2, 0], sizes = [1, 32], strides = [1, 1]} : vector<8x32xf32> to vector<1x32xf32>
    %241 = vector.broadcast %240 : vector<1x32xf32> to vector<48x32xf32>
    %242 = arith.addf %239, %241 : vector<48x32xf32>
    %cst_132 = arith.constant dense<0.000000e+00> : vector<48xf32>
    %243 = vector.multi_reduction <add>, %242, %cst_132 [1] : vector<48x32xf32> to vector<48xf32>
    %244 = vector.shape_cast %243 : vector<48xf32> to vector<48x1xf32>
    %cst_133 = arith.constant 3.200000e+01 : f32
    %245 = vector.broadcast %cst_133 : f32 to vector<48x1xf32>
    %246 = arith.divf %244, %245 : vector<48x1xf32>
    %247 = vector.broadcast %246 : vector<48x1xf32> to vector<48x32xf32>
    %248 = arith.subf %242, %247 : vector<48x32xf32>
    %249 = arith.mulf %248, %248 : vector<48x32xf32>
    %cst_134 = arith.constant dense<0.000000e+00> : vector<48xf32>
    %250 = vector.multi_reduction <add>, %249, %cst_134 [1] : vector<48x32xf32> to vector<48xf32>
    %251 = vector.shape_cast %250 : vector<48xf32> to vector<48x1xf32>
    %cst_135 = arith.constant 3.200000e+01 : f32
    %252 = vector.broadcast %cst_135 : f32 to vector<48x1xf32>
    %253 = arith.divf %251, %252 : vector<48x1xf32>
    %254 = vector.broadcast %246 : vector<48x1xf32> to vector<48x32xf32>
    %255 = arith.subf %242, %254 : vector<48x32xf32>
    %cst_136 = arith.constant 9.99999974E-6 : f32
    %256 = vector.broadcast %cst_136 : f32 to vector<48x1xf32>
    %257 = arith.addf %253, %256 : vector<48x1xf32>
    %258 = math.rsqrt %257 : vector<48x1xf32>
    %259 = vector.broadcast %258 : vector<48x1xf32> to vector<48x32xf32>
    %260 = arith.mulf %255, %259 : vector<48x32xf32>
    %261 = vector.extract_strided_slice %148 {offsets = [3, 0], sizes = [1, 32], strides = [1, 1]} : vector<8x32xf32> to vector<1x32xf32>
    %262 = vector.broadcast %261 : vector<1x32xf32> to vector<48x32xf32>
    %263 = arith.mulf %260, %262 : vector<48x32xf32>
    %264 = vector.extract_strided_slice %148 {offsets = [4, 0], sizes = [1, 32], strides = [1, 1]} : vector<8x32xf32> to vector<1x32xf32>
    %265 = vector.broadcast %264 : vector<1x32xf32> to vector<48x32xf32>
    %266 = arith.addf %263, %265 : vector<48x32xf32>
    %267 = arith.truncf %266 : vector<48x32xf32> to vector<48x32xbf16>
    %c0_137 = arith.constant 0 : index
    %c0_138 = arith.constant 0 : index
    %c0_139 = arith.constant 0 : index
    %268 = vector.load %arg13[%c0_137, %c0_138, %c0_139] : memref<2x32x128xbf16, #tpu.memory_space<vmem>>, vector<1x32x128xbf16>
    %269 = vector.shape_cast %268 : vector<1x32x128xbf16> to vector<32x128xbf16>
    %cst_140 = arith.constant dense<0.000000e+00> : vector<48x128xf32>
    %270 = tpu.matmul %267, %269, %cst_140 {dimension_numbers = #tpu.dot_dimension_numbers<[1], [0], [0], [1], [0, 0, 1, 1], [], []>} : vector<48x32xbf16>, vector<32x128xbf16>, vector<48x128xf32> -> vector<48x128xf32>
    %c0_141 = arith.constant 0 : index
    %c0_142 = arith.constant 0 : index
    %c0_143 = arith.constant 0 : index
    %271 = vector.load %arg10[%c0_141, %c0_142, %c0_143] : memref<2x1x128xf32, #tpu.memory_space<vmem>>, vector<1x1x128xf32>
    %272 = vector.shape_cast %271 : vector<1x1x128xf32> to vector<1x128xf32>
    %273 = vector.broadcast %272 : vector<1x128xf32> to vector<48x128xf32>
    %274 = arith.addf %270, %273 : vector<48x128xf32>
    %275 = arith.mulf %274, %274 : vector<48x128xf32>
    %276 = arith.mulf %274, %275 : vector<48x128xf32>
    %cst_144 = arith.constant 4.471500e-02 : f32
    %277 = vector.broadcast %cst_144 : f32 to vector<48x128xf32>
    %278 = arith.mulf %277, %276 : vector<48x128xf32>
    %279 = arith.addf %274, %278 : vector<48x128xf32>
    %cst_145 = arith.constant 0.797884583 : f32
    %280 = vector.broadcast %cst_145 : f32 to vector<48x128xf32>
    %281 = arith.mulf %280, %279 : vector<48x128xf32>
    %282 = math.tanh %281 : vector<48x128xf32>
    %cst_146 = arith.constant 1.000000e+00 : f32
    %283 = vector.broadcast %cst_146 : f32 to vector<48x128xf32>
    %284 = arith.addf %283, %282 : vector<48x128xf32>
    %cst_147 = arith.constant 5.000000e-01 : f32
    %285 = vector.broadcast %cst_147 : f32 to vector<48x128xf32>
    %286 = arith.mulf %285, %284 : vector<48x128xf32>
    %287 = arith.mulf %274, %286 : vector<48x128xf32>
    %288 = arith.truncf %287 : vector<48x128xf32> to vector<48x128xbf16>
    %c0_148 = arith.constant 0 : index
    %c0_149 = arith.constant 0 : index
    %c0_150 = arith.constant 0 : index
    %289 = vector.load %arg14[%c0_148, %c0_149, %c0_150] : memref<2x128x32xbf16, #tpu.memory_space<vmem>>, vector<1x128x32xbf16>
    %290 = vector.shape_cast %289 : vector<1x128x32xbf16> to vector<128x32xbf16>
    %cst_151 = arith.constant dense<0.000000e+00> : vector<48x32xf32>
    %291 = tpu.matmul %288, %290, %cst_151 {dimension_numbers = #tpu.dot_dimension_numbers<[1], [0], [0], [1], [0, 0, 1, 1], [], []>} : vector<48x128xbf16>, vector<128x32xbf16>, vector<48x32xf32> -> vector<48x32xf32>
    %292 = arith.addf %242, %291 : vector<48x32xf32>
    %293 = vector.extract_strided_slice %148 {offsets = [5, 0], sizes = [1, 32], strides = [1, 1]} : vector<8x32xf32> to vector<1x32xf32>
    %294 = vector.broadcast %293 : vector<1x32xf32> to vector<48x32xf32>
    %295 = arith.addf %292, %294 : vector<48x32xf32>
    %c1_152 = arith.constant 1 : index
    %c0_153 = arith.constant 0 : index
    %c0_154 = arith.constant 0 : index
    %296 = vector.load %arg9[%c1_152, %c0_153, %c0_154] : memref<2x8x32xf32, #tpu.memory_space<vmem>>, vector<1x8x32xf32>
    %297 = vector.shape_cast %296 : vector<1x8x32xf32> to vector<8x32xf32>
    %cst_155 = arith.constant dense<0.000000e+00> : vector<48xf32>
    %298 = vector.multi_reduction <add>, %295, %cst_155 [1] : vector<48x32xf32> to vector<48xf32>
    %299 = vector.shape_cast %298 : vector<48xf32> to vector<48x1xf32>
    %cst_156 = arith.constant 3.200000e+01 : f32
    %300 = vector.broadcast %cst_156 : f32 to vector<48x1xf32>
    %301 = arith.divf %299, %300 : vector<48x1xf32>
    %302 = vector.broadcast %301 : vector<48x1xf32> to vector<48x32xf32>
    %303 = arith.subf %295, %302 : vector<48x32xf32>
    %304 = arith.mulf %303, %303 : vector<48x32xf32>
    %cst_157 = arith.constant dense<0.000000e+00> : vector<48xf32>
    %305 = vector.multi_reduction <add>, %304, %cst_157 [1] : vector<48x32xf32> to vector<48xf32>
    %306 = vector.shape_cast %305 : vector<48xf32> to vector<48x1xf32>
    %cst_158 = arith.constant 3.200000e+01 : f32
    %307 = vector.broadcast %cst_158 : f32 to vector<48x1xf32>
    %308 = arith.divf %306, %307 : vector<48x1xf32>
    %309 = vector.broadcast %301 : vector<48x1xf32> to vector<48x32xf32>
    %310 = arith.subf %295, %309 : vector<48x32xf32>
    %cst_159 = arith.constant 9.99999974E-6 : f32
    %311 = vector.broadcast %cst_159 : f32 to vector<48x1xf32>
    %312 = arith.addf %308, %311 : vector<48x1xf32>
    %313 = math.rsqrt %312 : vector<48x1xf32>
    %314 = vector.broadcast %313 : vector<48x1xf32> to vector<48x32xf32>
    %315 = arith.mulf %310, %314 : vector<48x32xf32>
    %316 = vector.extract_strided_slice %297 {offsets = [0, 0], sizes = [1, 32], strides = [1, 1]} : vector<8x32xf32> to vector<1x32xf32>
    %317 = vector.broadcast %316 : vector<1x32xf32> to vector<48x32xf32>
    %318 = arith.mulf %315, %317 : vector<48x32xf32>
    %319 = vector.extract_strided_slice %297 {offsets = [1, 0], sizes = [1, 32], strides = [1, 1]} : vector<8x32xf32> to vector<1x32xf32>
    %320 = vector.broadcast %319 : vector<1x32xf32> to vector<48x32xf32>
    %321 = arith.addf %318, %320 : vector<48x32xf32>
    %322 = arith.truncf %321 : vector<48x32xf32> to vector<48x32xbf16>
    %cst_160 = arith.constant 0.000000e+00 : f32
    %323 = vector.broadcast %cst_160 : f32 to vector<48x32xf32>
    %c6_161 = arith.constant 6 : index
    %c0_162 = arith.constant 0 : index
    %c0_163 = arith.constant 0 : index
    %324 = vector.load %arg11[%c6_161, %c0_162, %c0_163] : memref<12x32x16xbf16, #tpu.memory_space<vmem>>, vector<1x32x16xbf16>
    %325 = vector.shape_cast %324 : vector<1x32x16xbf16> to vector<32x16xbf16>
    %cst_164 = arith.constant dense<0.000000e+00> : vector<48x16xf32>
    %326 = tpu.matmul %322, %325, %cst_164 {dimension_numbers = #tpu.dot_dimension_numbers<[1], [0], [0], [1], [0, 0, 1, 1], [], []>} : vector<48x32xbf16>, vector<32x16xbf16>, vector<48x16xf32> -> vector<48x16xf32>
    %c7_165 = arith.constant 7 : index
    %c0_166 = arith.constant 0 : index
    %c0_167 = arith.constant 0 : index
    %327 = vector.load %arg11[%c7_165, %c0_166, %c0_167] : memref<12x32x16xbf16, #tpu.memory_space<vmem>>, vector<1x32x16xbf16>
    %328 = vector.shape_cast %327 : vector<1x32x16xbf16> to vector<32x16xbf16>
    %cst_168 = arith.constant dense<0.000000e+00> : vector<48x16xf32>
    %329 = tpu.matmul %322, %328, %cst_168 {dimension_numbers = #tpu.dot_dimension_numbers<[1], [0], [0], [1], [0, 0, 1, 1], [], []>} : vector<48x32xbf16>, vector<32x16xbf16>, vector<48x16xf32> -> vector<48x16xf32>
    %c8_169 = arith.constant 8 : index
    %c0_170 = arith.constant 0 : index
    %c0_171 = arith.constant 0 : index
    %330 = vector.load %arg11[%c8_169, %c0_170, %c0_171] : memref<12x32x16xbf16, #tpu.memory_space<vmem>>, vector<1x32x16xbf16>
    %331 = vector.shape_cast %330 : vector<1x32x16xbf16> to vector<32x16xbf16>
    %cst_172 = arith.constant dense<0.000000e+00> : vector<48x16xf32>
    %332 = tpu.matmul %322, %331, %cst_172 {dimension_numbers = #tpu.dot_dimension_numbers<[1], [0], [0], [1], [0, 0, 1, 1], [], []>} : vector<48x32xbf16>, vector<32x16xbf16>, vector<48x16xf32> -> vector<48x16xf32>
    %333 = arith.truncf %326 : vector<48x16xf32> to vector<48x16xbf16>
    %334 = arith.truncf %329 : vector<48x16xf32> to vector<48x16xbf16>
    %cst_173 = arith.constant dense<0.000000e+00> : vector<48x48xf32>
    %335 = tpu.matmul %333, %334, %cst_173 {dimension_numbers = #tpu.dot_dimension_numbers<[1], [1], [0], [0], [0, 0, 1, 0], [], []>} : vector<48x16xbf16>, vector<48x16xbf16>, vector<48x48xf32> -> vector<48x48xf32>
    %cst_174 = arith.constant 2.500000e-01 : f32
    %336 = vector.broadcast %cst_174 : f32 to vector<48x48xf32>
    %337 = arith.mulf %335, %336 : vector<48x48xf32>
    %cst_175 = arith.constant dense<0xFF800000> : vector<48xf32>
    %338 = vector.multi_reduction <maximumf>, %337, %cst_175 [1] : vector<48x48xf32> to vector<48xf32>
    %339 = vector.shape_cast %338 : vector<48xf32> to vector<48x1xf32>
    %340 = vector.broadcast %339 : vector<48x1xf32> to vector<48x48xf32>
    %341 = arith.subf %337, %340 : vector<48x48xf32>
    %342 = math.exp %341 : vector<48x48xf32>
    %cst_176 = arith.constant dense<0.000000e+00> : vector<48xf32>
    %343 = vector.multi_reduction <add>, %342, %cst_176 [1] : vector<48x48xf32> to vector<48xf32>
    %344 = vector.shape_cast %343 : vector<48xf32> to vector<48x1xf32>
    %345 = tpu.reciprocal %344 {approx = true} : vector<48x1xf32> -> vector<48x1xf32>
    %346 = vector.broadcast %345 : vector<48x1xf32> to vector<48x48xf32>
    %347 = arith.mulf %342, %346 : vector<48x48xf32>
    %348 = arith.truncf %347 : vector<48x48xf32> to vector<48x48xbf16>
    %349 = arith.truncf %332 : vector<48x16xf32> to vector<48x16xbf16>
    %cst_177 = arith.constant dense<0.000000e+00> : vector<48x16xf32>
    %350 = tpu.matmul %348, %349, %cst_177 {dimension_numbers = #tpu.dot_dimension_numbers<[1], [0], [0], [1], [0, 0, 1, 1], [], []>} : vector<48x48xbf16>, vector<48x16xbf16>, vector<48x16xf32> -> vector<48x16xf32>
    %351 = arith.truncf %350 : vector<48x16xf32> to vector<48x16xbf16>
    %c2_178 = arith.constant 2 : index
    %c0_179 = arith.constant 0 : index
    %c0_180 = arith.constant 0 : index
    %352 = vector.load %arg12[%c2_178, %c0_179, %c0_180] : memref<4x16x32xbf16, #tpu.memory_space<vmem>>, vector<1x16x32xbf16>
    %353 = vector.shape_cast %352 : vector<1x16x32xbf16> to vector<16x32xbf16>
    %cst_181 = arith.constant dense<0.000000e+00> : vector<48x32xf32>
    %354 = tpu.matmul %351, %353, %cst_181 {dimension_numbers = #tpu.dot_dimension_numbers<[1], [0], [0], [1], [0, 0, 1, 1], [], []>} : vector<48x16xbf16>, vector<16x32xbf16>, vector<48x32xf32> -> vector<48x32xf32>
    %355 = arith.addf %323, %354 : vector<48x32xf32>
    %c9_182 = arith.constant 9 : index
    %c0_183 = arith.constant 0 : index
    %c0_184 = arith.constant 0 : index
    %356 = vector.load %arg11[%c9_182, %c0_183, %c0_184] : memref<12x32x16xbf16, #tpu.memory_space<vmem>>, vector<1x32x16xbf16>
    %357 = vector.shape_cast %356 : vector<1x32x16xbf16> to vector<32x16xbf16>
    %cst_185 = arith.constant dense<0.000000e+00> : vector<48x16xf32>
    %358 = tpu.matmul %322, %357, %cst_185 {dimension_numbers = #tpu.dot_dimension_numbers<[1], [0], [0], [1], [0, 0, 1, 1], [], []>} : vector<48x32xbf16>, vector<32x16xbf16>, vector<48x16xf32> -> vector<48x16xf32>
    %c10_186 = arith.constant 10 : index
    %c0_187 = arith.constant 0 : index
    %c0_188 = arith.constant 0 : index
    %359 = vector.load %arg11[%c10_186, %c0_187, %c0_188] : memref<12x32x16xbf16, #tpu.memory_space<vmem>>, vector<1x32x16xbf16>
    %360 = vector.shape_cast %359 : vector<1x32x16xbf16> to vector<32x16xbf16>
    %cst_189 = arith.constant dense<0.000000e+00> : vector<48x16xf32>
    %361 = tpu.matmul %322, %360, %cst_189 {dimension_numbers = #tpu.dot_dimension_numbers<[1], [0], [0], [1], [0, 0, 1, 1], [], []>} : vector<48x32xbf16>, vector<32x16xbf16>, vector<48x16xf32> -> vector<48x16xf32>
    %c11_190 = arith.constant 11 : index
    %c0_191 = arith.constant 0 : index
    %c0_192 = arith.constant 0 : index
    %362 = vector.load %arg11[%c11_190, %c0_191, %c0_192] : memref<12x32x16xbf16, #tpu.memory_space<vmem>>, vector<1x32x16xbf16>
    %363 = vector.shape_cast %362 : vector<1x32x16xbf16> to vector<32x16xbf16>
    %cst_193 = arith.constant dense<0.000000e+00> : vector<48x16xf32>
    %364 = tpu.matmul %322, %363, %cst_193 {dimension_numbers = #tpu.dot_dimension_numbers<[1], [0], [0], [1], [0, 0, 1, 1], [], []>} : vector<48x32xbf16>, vector<32x16xbf16>, vector<48x16xf32> -> vector<48x16xf32>
    %365 = arith.truncf %358 : vector<48x16xf32> to vector<48x16xbf16>
    %366 = arith.truncf %361 : vector<48x16xf32> to vector<48x16xbf16>
    %cst_194 = arith.constant dense<0.000000e+00> : vector<48x48xf32>
    %367 = tpu.matmul %365, %366, %cst_194 {dimension_numbers = #tpu.dot_dimension_numbers<[1], [1], [0], [0], [0, 0, 1, 0], [], []>} : vector<48x16xbf16>, vector<48x16xbf16>, vector<48x48xf32> -> vector<48x48xf32>
    %cst_195 = arith.constant 2.500000e-01 : f32
    %368 = vector.broadcast %cst_195 : f32 to vector<48x48xf32>
    %369 = arith.mulf %367, %368 : vector<48x48xf32>
    %cst_196 = arith.constant dense<0xFF800000> : vector<48xf32>
    %370 = vector.multi_reduction <maximumf>, %369, %cst_196 [1] : vector<48x48xf32> to vector<48xf32>
    %371 = vector.shape_cast %370 : vector<48xf32> to vector<48x1xf32>
    %372 = vector.broadcast %371 : vector<48x1xf32> to vector<48x48xf32>
    %373 = arith.subf %369, %372 : vector<48x48xf32>
    %374 = math.exp %373 : vector<48x48xf32>
    %cst_197 = arith.constant dense<0.000000e+00> : vector<48xf32>
    %375 = vector.multi_reduction <add>, %374, %cst_197 [1] : vector<48x48xf32> to vector<48xf32>
    %376 = vector.shape_cast %375 : vector<48xf32> to vector<48x1xf32>
    %377 = tpu.reciprocal %376 {approx = true} : vector<48x1xf32> -> vector<48x1xf32>
    %378 = vector.broadcast %377 : vector<48x1xf32> to vector<48x48xf32>
    %379 = arith.mulf %374, %378 : vector<48x48xf32>
    %380 = arith.truncf %379 : vector<48x48xf32> to vector<48x48xbf16>
    %381 = arith.truncf %364 : vector<48x16xf32> to vector<48x16xbf16>
    %cst_198 = arith.constant dense<0.000000e+00> : vector<48x16xf32>
    %382 = tpu.matmul %380, %381, %cst_198 {dimension_numbers = #tpu.dot_dimension_numbers<[1], [0], [0], [1], [0, 0, 1, 1], [], []>} : vector<48x48xbf16>, vector<48x16xbf16>, vector<48x16xf32> -> vector<48x16xf32>
    %383 = arith.truncf %382 : vector<48x16xf32> to vector<48x16xbf16>
    %c3_199 = arith.constant 3 : index
    %c0_200 = arith.constant 0 : index
    %c0_201 = arith.constant 0 : index
    %384 = vector.load %arg12[%c3_199, %c0_200, %c0_201] : memref<4x16x32xbf16, #tpu.memory_space<vmem>>, vector<1x16x32xbf16>
    %385 = vector.shape_cast %384 : vector<1x16x32xbf16> to vector<16x32xbf16>
    %cst_202 = arith.constant dense<0.000000e+00> : vector<48x32xf32>
    %386 = tpu.matmul %383, %385, %cst_202 {dimension_numbers = #tpu.dot_dimension_numbers<[1], [0], [0], [1], [0, 0, 1, 1], [], []>} : vector<48x16xbf16>, vector<16x32xbf16>, vector<48x32xf32> -> vector<48x32xf32>
    %387 = arith.addf %355, %386 : vector<48x32xf32>
    %388 = arith.addf %295, %387 : vector<48x32xf32>
    %389 = vector.extract_strided_slice %297 {offsets = [2, 0], sizes = [1, 32], strides = [1, 1]} : vector<8x32xf32> to vector<1x32xf32>
    %390 = vector.broadcast %389 : vector<1x32xf32> to vector<48x32xf32>
    %391 = arith.addf %388, %390 : vector<48x32xf32>
    %cst_203 = arith.constant dense<0.000000e+00> : vector<48xf32>
    %392 = vector.multi_reduction <add>, %391, %cst_203 [1] : vector<48x32xf32> to vector<48xf32>
    %393 = vector.shape_cast %392 : vector<48xf32> to vector<48x1xf32>
    %cst_204 = arith.constant 3.200000e+01 : f32
    %394 = vector.broadcast %cst_204 : f32 to vector<48x1xf32>
    %395 = arith.divf %393, %394 : vector<48x1xf32>
    %396 = vector.broadcast %395 : vector<48x1xf32> to vector<48x32xf32>
    %397 = arith.subf %391, %396 : vector<48x32xf32>
    %398 = arith.mulf %397, %397 : vector<48x32xf32>
    %cst_205 = arith.constant dense<0.000000e+00> : vector<48xf32>
    %399 = vector.multi_reduction <add>, %398, %cst_205 [1] : vector<48x32xf32> to vector<48xf32>
    %400 = vector.shape_cast %399 : vector<48xf32> to vector<48x1xf32>
    %cst_206 = arith.constant 3.200000e+01 : f32
    %401 = vector.broadcast %cst_206 : f32 to vector<48x1xf32>
    %402 = arith.divf %400, %401 : vector<48x1xf32>
    %403 = vector.broadcast %395 : vector<48x1xf32> to vector<48x32xf32>
    %404 = arith.subf %391, %403 : vector<48x32xf32>
    %cst_207 = arith.constant 9.99999974E-6 : f32
    %405 = vector.broadcast %cst_207 : f32 to vector<48x1xf32>
    %406 = arith.addf %402, %405 : vector<48x1xf32>
    %407 = math.rsqrt %406 : vector<48x1xf32>
    %408 = vector.broadcast %407 : vector<48x1xf32> to vector<48x32xf32>
    %409 = arith.mulf %404, %408 : vector<48x32xf32>
    %410 = vector.extract_strided_slice %297 {offsets = [3, 0], sizes = [1, 32], strides = [1, 1]} : vector<8x32xf32> to vector<1x32xf32>
    %411 = vector.broadcast %410 : vector<1x32xf32> to vector<48x32xf32>
    %412 = arith.mulf %409, %411 : vector<48x32xf32>
    %413 = vector.extract_strided_slice %297 {offsets = [4, 0], sizes = [1, 32], strides = [1, 1]} : vector<8x32xf32> to vector<1x32xf32>
    %414 = vector.broadcast %413 : vector<1x32xf32> to vector<48x32xf32>
    %415 = arith.addf %412, %414 : vector<48x32xf32>
    %416 = arith.truncf %415 : vector<48x32xf32> to vector<48x32xbf16>
    %c1_208 = arith.constant 1 : index
    %c0_209 = arith.constant 0 : index
    %c0_210 = arith.constant 0 : index
    %417 = vector.load %arg13[%c1_208, %c0_209, %c0_210] : memref<2x32x128xbf16, #tpu.memory_space<vmem>>, vector<1x32x128xbf16>
    %418 = vector.shape_cast %417 : vector<1x32x128xbf16> to vector<32x128xbf16>
    %cst_211 = arith.constant dense<0.000000e+00> : vector<48x128xf32>
    %419 = tpu.matmul %416, %418, %cst_211 {dimension_numbers = #tpu.dot_dimension_numbers<[1], [0], [0], [1], [0, 0, 1, 1], [], []>} : vector<48x32xbf16>, vector<32x128xbf16>, vector<48x128xf32> -> vector<48x128xf32>
    %c1_212 = arith.constant 1 : index
    %c0_213 = arith.constant 0 : index
    %c0_214 = arith.constant 0 : index
    %420 = vector.load %arg10[%c1_212, %c0_213, %c0_214] : memref<2x1x128xf32, #tpu.memory_space<vmem>>, vector<1x1x128xf32>
    %421 = vector.shape_cast %420 : vector<1x1x128xf32> to vector<1x128xf32>
    %422 = vector.broadcast %421 : vector<1x128xf32> to vector<48x128xf32>
    %423 = arith.addf %419, %422 : vector<48x128xf32>
    %424 = arith.mulf %423, %423 : vector<48x128xf32>
    %425 = arith.mulf %423, %424 : vector<48x128xf32>
    %cst_215 = arith.constant 4.471500e-02 : f32
    %426 = vector.broadcast %cst_215 : f32 to vector<48x128xf32>
    %427 = arith.mulf %426, %425 : vector<48x128xf32>
    %428 = arith.addf %423, %427 : vector<48x128xf32>
    %cst_216 = arith.constant 0.797884583 : f32
    %429 = vector.broadcast %cst_216 : f32 to vector<48x128xf32>
    %430 = arith.mulf %429, %428 : vector<48x128xf32>
    %431 = math.tanh %430 : vector<48x128xf32>
    %cst_217 = arith.constant 1.000000e+00 : f32
    %432 = vector.broadcast %cst_217 : f32 to vector<48x128xf32>
    %433 = arith.addf %432, %431 : vector<48x128xf32>
    %cst_218 = arith.constant 5.000000e-01 : f32
    %434 = vector.broadcast %cst_218 : f32 to vector<48x128xf32>
    %435 = arith.mulf %434, %433 : vector<48x128xf32>
    %436 = arith.mulf %423, %435 : vector<48x128xf32>
    %437 = arith.truncf %436 : vector<48x128xf32> to vector<48x128xbf16>
    %c1_219 = arith.constant 1 : index
    %c0_220 = arith.constant 0 : index
    %c0_221 = arith.constant 0 : index
    %438 = vector.load %arg14[%c1_219, %c0_220, %c0_221] : memref<2x128x32xbf16, #tpu.memory_space<vmem>>, vector<1x128x32xbf16>
    %439 = vector.shape_cast %438 : vector<1x128x32xbf16> to vector<128x32xbf16>
    %cst_222 = arith.constant dense<0.000000e+00> : vector<48x32xf32>
    %440 = tpu.matmul %437, %439, %cst_222 {dimension_numbers = #tpu.dot_dimension_numbers<[1], [0], [0], [1], [0, 0, 1, 1], [], []>} : vector<48x128xbf16>, vector<128x32xbf16>, vector<48x32xf32> -> vector<48x32xf32>
    %441 = arith.addf %391, %440 : vector<48x32xf32>
    %442 = vector.extract_strided_slice %297 {offsets = [5, 0], sizes = [1, 32], strides = [1, 1]} : vector<8x32xf32> to vector<1x32xf32>
    %443 = vector.broadcast %442 : vector<1x32xf32> to vector<48x32xf32>
    %444 = arith.addf %441, %443 : vector<48x32xf32>
    %445 = arith.truncf %444 : vector<48x32xf32> to vector<48x32xbf16>
    %c64 = arith.constant 64 : index
    %c0_223 = arith.constant 0 : index
    %446 = vector.load %arg6[%c64, %c0_223] : memref<112x32xbf16, #tpu.memory_space<vmem>>, vector<32x16xbf16>
    %cst_224 = arith.constant dense<0.000000e+00> : vector<48x16xf32>
    %447 = tpu.matmul %445, %446, %cst_224 {dimension_numbers = #tpu.dot_dimension_numbers<[1], [0], [0], [1], [0, 0, 1, 1], [], []>} : vector<48x32xbf16>, vector<32x16xbf16>, vector<48x16xf32> -> vector<48x16xf32>
    %c2_225 = arith.constant 2 : index
    %c0_226 = arith.constant 0 : index
    %448 = vector.load %arg7[%c2_225, %c0_226] : memref<8x32xf32, #tpu.memory_space<vmem>>, vector<1x16xf32>
    %449 = vector.broadcast %448 : vector<1x16xf32> to vector<48x16xf32>
    %450 = arith.addf %447, %449 : vector<48x16xf32>
    %cst_227 = arith.constant 0.000000e+00 : f32
    %451 = vector.broadcast %cst_227 : f32 to vector<48x16xf32>
    %452 = arith.maximumf %450, %451 : vector<48x16xf32>
    %453 = arith.truncf %452 : vector<48x16xf32> to vector<48x16xbf16>
    %c96 = arith.constant 96 : index
    %c0_228 = arith.constant 0 : index
    %454 = vector.load %arg6[%c96, %c0_228] : memref<112x32xbf16, #tpu.memory_space<vmem>>, vector<16x16xbf16>
    %cst_229 = arith.constant dense<0.000000e+00> : vector<48x16xf32>
    %455 = tpu.matmul %453, %454, %cst_229 {dimension_numbers = #tpu.dot_dimension_numbers<[1], [0], [0], [1], [0, 0, 1, 1], [], []>} : vector<48x16xbf16>, vector<16x16xbf16>, vector<48x16xf32> -> vector<48x16xf32>
    %c3_230 = arith.constant 3 : index
    %c0_231 = arith.constant 0 : index
    %456 = vector.load %arg7[%c3_230, %c0_231] : memref<8x32xf32, #tpu.memory_space<vmem>>, vector<1x16xf32>
    %457 = vector.broadcast %456 : vector<1x16xf32> to vector<48x16xf32>
    %458 = arith.addf %455, %457 : vector<48x16xf32>
    %c0_232 = arith.constant 0 : index
    %c0_233 = arith.constant 0 : index
    %c0_234 = arith.constant 0 : index
    %459 = vector.load %arg15[%c0_232, %c0_233, %c0_234] : memref<1x48x16xf32, #tpu.memory_space<vmem>>, vector<1x48x16xf32>
    %460 = vector.shape_cast %459 : vector<1x48x16xf32> to vector<48x16xf32>
    %461 = vector.shape_cast %458 : vector<48x16xf32> to vector<1x48x16xf32>
    tpu.vector_store %arg15[%c0_232, %c0_233, %c0_234], %461 {strides = array<i32>} : memref<1x48x16xf32, #tpu.memory_space<vmem>>, vector<1x48x16xf32>,
    return
  }
  func.func @transform_0(%arg0: i32) -> (i32, i32, i32) {
    %c0_i32 = arith.constant 0 : i32
    %c0_i32_0 = arith.constant 0 : i32
    %c0_i32_1 = arith.constant 0 : i32
    return %arg0, %c0_i32, %c0_i32_0 : i32, i32, i32
  }
  func.func @transform_1(%arg0: i32) -> (i32, i32, i32) {
    %c0_i32 = arith.constant 0 : i32
    %c0_i32_0 = arith.constant 0 : i32
    %c0_i32_1 = arith.constant 0 : i32
    return %arg0, %c0_i32, %c0_i32_0 : i32, i32, i32
  }
  func.func @transform_2(%arg0: i32) -> (i32, i32, i32) {
    %c0_i32 = arith.constant 0 : i32
    %c0_i32_0 = arith.constant 0 : i32
    %c0_i32_1 = arith.constant 0 : i32
    return %arg0, %c0_i32, %c0_i32_0 : i32, i32, i32
  }
  func.func @transform_3(%arg0: i32) -> (i32, i32) {
    %c0_i32 = arith.constant 0 : i32
    %c0_i32_0 = arith.constant 0 : i32
    %c0_i32_1 = arith.constant 0 : i32
    return %c0_i32, %c0_i32_0 : i32, i32
  }
  func.func @transform_4(%arg0: i32) -> (i32, i32, i32) {
    %c0_i32 = arith.constant 0 : i32
    %c0_i32_0 = arith.constant 0 : i32
    %c0_i32_1 = arith.constant 0 : i32
    %c0_i32_2 = arith.constant 0 : i32
    return %c0_i32, %c0_i32_0, %c0_i32_1 : i32, i32, i32
  }
  func.func @transform_5(%arg0: i32) -> (i32, i32) {
    %c0_i32 = arith.constant 0 : i32
    %c0_i32_0 = arith.constant 0 : i32
    %c0_i32_1 = arith.constant 0 : i32
    return %c0_i32, %c0_i32_0 : i32, i32
  }
  func.func @transform_6(%arg0: i32) -> (i32, i32) {
    %c0_i32 = arith.constant 0 : i32
    %c0_i32_0 = arith.constant 0 : i32
    %c0_i32_1 = arith.constant 0 : i32
    return %c0_i32, %c0_i32_0 : i32, i32
  }
  func.func @transform_7(%arg0: i32) -> (i32, i32) {
    %c0_i32 = arith.constant 0 : i32
    %c0_i32_0 = arith.constant 0 : i32
    %c0_i32_1 = arith.constant 0 : i32
    return %c0_i32, %c0_i32_0 : i32, i32
  }
  func.func @transform_8(%arg0: i32) -> (i32, i32, i32) {
    %c0_i32 = arith.constant 0 : i32
    %c0_i32_0 = arith.constant 0 : i32
    %c0_i32_1 = arith.constant 0 : i32
    %c0_i32_2 = arith.constant 0 : i32
    return %c0_i32, %c0_i32_0, %c0_i32_1 : i32, i32, i32
  }
  func.func @transform_9(%arg0: i32) -> (i32, i32, i32) {
    %c0_i32 = arith.constant 0 : i32
    %c0_i32_0 = arith.constant 0 : i32
    %c0_i32_1 = arith.constant 0 : i32
    %c0_i32_2 = arith.constant 0 : i32
    return %c0_i32, %c0_i32_0, %c0_i32_1 : i32, i32, i32
  }
  func.func @transform_10(%arg0: i32) -> (i32, i32, i32) {
    %c0_i32 = arith.constant 0 : i32
    %c0_i32_0 = arith.constant 0 : i32
    %c0_i32_1 = arith.constant 0 : i32
    %c0_i32_2 = arith.constant 0 : i32
    return %c0_i32, %c0_i32_0, %c0_i32_1 : i32, i32, i32
  }
  func.func @transform_11(%arg0: i32) -> (i32, i32, i32) {
    %c0_i32 = arith.constant 0 : i32
    %c0_i32_0 = arith.constant 0 : i32
    %c0_i32_1 = arith.constant 0 : i32
    %c0_i32_2 = arith.constant 0 : i32
    return %c0_i32, %c0_i32_0, %c0_i32_1 : i32, i32, i32
  }
  func.func @transform_12(%arg0: i32) -> (i32, i32, i32) {
    %c0_i32 = arith.constant 0 : i32
    %c0_i32_0 = arith.constant 0 : i32
    %c0_i32_1 = arith.constant 0 : i32
    %c0_i32_2 = arith.constant 0 : i32
    return %c0_i32, %c0_i32_0, %c0_i32_1 : i32, i32, i32
  }
  func.func @transform_13(%arg0: i32) -> (i32, i32, i32) {
    %c0_i32 = arith.constant 0 : i32
    %c0_i32_0 = arith.constant 0 : i32
    %c0_i32_1 = arith.constant 0 : i32
    %c0_i32_2 = arith.constant 0 : i32
    return %c0_i32, %c0_i32_0, %c0_i32_1 : i32, i32, i32
  }
  func.func @transform_14(%arg0: i32) -> (i32, i32, i32) {
    %c0_i32 = arith.constant 0 : i32
    %c0_i32_0 = arith.constant 0 : i32
    %c0_i32_1 = arith.constant 0 : i32
    return %arg0, %c0_i32, %c0_i32_0 : i32, i32, i32
  }
}

</mosaic_0001>

<llo_original>
// kernel: mvt_forward.1
$region0: #{mvt_forward.1}
  #allocation0 [shape = 'u32[]', space=smem, size = 0x4, offset = 0x4, fixed_abs, tag = 'smem constant byte address 0x4 - core index']
  #allocation1 [shape = 'u32[144,128]{1,0:T(1,128)}', space=vmem, size = 0x12000, scoped, tag = 'internal scratch']
  %s0 = inlined_call_operand.vmem [shape: s32[2,3,64], index: 0, kind: input, shape index: {}]
  %s1 = inlined_call_operand.vmem [shape: bf16[2,64,16], index: 1, kind: input, shape index: {}]
  %s2 = inlined_call_operand.vmem [shape: f32[2,1,16], index: 2, kind: input, shape index: {}]
  %s3 = inlined_call_operand.vmem [shape: f32[768,16], index: 3, kind: input, shape index: {}]
  %s4 = inlined_call_operand.vmem [shape: bf16[16,16,16], index: 4, kind: input, shape index: {}]
  %s5 = inlined_call_operand.vmem [shape: bf16[112,32], index: 5, kind: input, shape index: {}]
  %s6 = inlined_call_operand.vmem [shape: f32[8,32], index: 6, kind: input, shape index: {}]
  %s7 = inlined_call_operand.vmem [shape: f32[48,32], index: 7, kind: input, shape index: {}]
  %s8 = inlined_call_operand.vmem [shape: f32[2,8,32], index: 8, kind: input, shape index: {}]
  %s9 = inlined_call_operand.vmem [shape: f32[2,1,128], index: 9, kind: input, shape index: {}]
  %s10 = inlined_call_operand.vmem [shape: bf16[12,32,16], index: 10, kind: input, shape index: {}]
  %s11 = inlined_call_operand.vmem [shape: bf16[4,16,32], index: 11, kind: input, shape index: {}]
  %s12 = inlined_call_operand.vmem [shape: bf16[2,32,128], index: 12, kind: input, shape index: {}]
  %s13 = inlined_call_operand.vmem [shape: bf16[2,128,32], index: 13, kind: input, shape index: {}]
  %s14 = inlined_call_operand.vmem [shape: f32[2,48,16], index: 14, kind: output, shape index: {}]
  %s15 = sld [smem:[#allocation0]]
  $region89: #{mvt_forward.1} parent=0
    _
  %s17 = ssub.s32 1, %s15
  %s18 = scalar_select 0, %s17, %s15
  loop: start=0, step=1, limit=4
  $region2: #{mvt_forward.1} parent=0 // loop_pre_header
    _
  $region3: #{mvt_forward.1} parent=0 // loop_header
    %s20 = sphi 0, %s24
    %p21 = scmp.ge.s32.totalorder %s20, 4
    %s30 = sphi 0, %s32
    %s33 = sphi 0, %s30
    %s34 = sphi 0, %s33
    %s50 = sphi 0, %s34
    %s56 = sphi 0, %s58
    %s59 = sphi 0, %s56
    %s60 = sphi 0, %s59
    %s76 = sphi 0, %s60
    %s82 = sphi 0, %s84
    %s85 = sphi 0, %s82
    %s86 = sphi 0, %s85
    %s102 = sphi 0, %s86
    %s106 = sphi 0, %s106
    %s108 = sphi 0, %s106
    %s109 = sphi 0, %s108
    %s123 = sphi 0, %s109
    %s127 = sphi 0, %s127
    %s129 = sphi 0, %s127
    %s130 = sphi 0, %s129
    %s144 = sphi 0, %s130
    %s148 = sphi 0, %s148
    %s150 = sphi 0, %s148
    %s151 = sphi 0, %s150
    %s165 = sphi 0, %s151
    %s169 = sphi 0, %s169
    %s171 = sphi 0, %s169
    %s172 = sphi 0, %s171
    %s186 = sphi 0, %s172
    %s190 = sphi 0, %s190
    %s192 = sphi 0, %s190
    %s193 = sphi 0, %s192
    %s207 = sphi 0, %s193
    %s211 = sphi 0, %s211
    %s213 = sphi 0, %s211
    %s214 = sphi 0, %s213
    %s228 = sphi 0, %s214
    %s232 = sphi 0, %s232
    %s234 = sphi 0, %s232
    %s235 = sphi 0, %s234
    %s249 = sphi 0, %s235
    %s253 = sphi 0, %s253
    %s255 = sphi 0, %s253
    %s256 = sphi 0, %s255
    %s270 = sphi 0, %s256
    %s274 = sphi 0, %s274
    %s276 = sphi 0, %s274
    %s277 = sphi 0, %s276
    %s291 = sphi 0, %s277
    %s295 = sphi 0, %s295
    %s297 = sphi 0, %s295
    %s298 = sphi 0, %s297
    %s312 = sphi 0, %s298
    %s316 = sphi 0, %s316
    %s318 = sphi 0, %s316
    %s319 = sphi 0, %s318
    %s333 = sphi 0, %s319
    %s339 = sphi 0, %s341
    %s342 = sphi 0, %s339
    %s343 = sphi 0, %s342
    %s359 = sphi 0, %s343
  $region4: #{mvt_forward.1} parent=0 // loop_header_branch
    %23 = sbr.rel (%p21) target = $region8
  $region5: #{mvt_forward.1} parent=0 // loop_body
    %s25 = ssub.s32 %s20, 1
    %s26 = ssub.s32 %s20, 2
    %s27 = sadd.s32 %s20, 1
    %s28 = ssub.s32 %s20, %s27
    %p29 = scmp.eq.s32.totalorder %s28, 0
    %s31 = sadd.s32 %s30, 1
    %s32 = scalar_select %p29, %s30, %s31
    %p35 = pneg %p29
    %p36 = scmp.eq.s32.totalorder %s20, 1
    %p37 = por %p35, %p36
    %p38 = scmp.ne.s32.totalorder %s30, %s33
    %p39 = scmp.eq.s32.totalorder %s20, 0
    %p40 = por %p38, %p39
    %p41 = scmp.ne.s32.totalorder %s30, %s33
    %p42 = scmp.eq.s32.totalorder %s25, 1
    %p43 = por %p41, %p42
    %p44 = scmp.ne.s32.totalorder %s33, %s34
    %p45 = scmp.eq.s32.totalorder %s25, 0
    %p46 = por %p44, %p45
    %p47 = scmp.ne.s32.totalorder %s33, %s34
    %p48 = scmp.eq.s32.totalorder %s26, 1
    %p49 = por %p47, %p48
    %p51 = scmp.ne.s32.totalorder %s34, %s50
    %p52 = scmp.eq.s32.totalorder %s26, 0
    %p53 = por %p51, %p52
    %s54 = ssub.s32 %s20, %s27
    %p55 = scmp.eq.s32.totalorder %s54, 0
    %s57 = sadd.s32 %s56, 1
    %s58 = scalar_select %p55, %s56, %s57
    %p61 = pneg %p55
    %p62 = scmp.eq.s32.totalorder %s20, 1
    %p63 = por %p61, %p62
    %p64 = scmp.ne.s32.totalorder %s56, %s59
    %p65 = scmp.eq.s32.totalorder %s20, 0
    %p66 = por %p64, %p65
    %p67 = scmp.ne.s32.totalorder %s56, %s59
    %p68 = scmp.eq.s32.totalorder %s25, 1
    %p69 = por %p67, %p68
    %p70 = scmp.ne.s32.totalorder %s59, %s60
    %p71 = scmp.eq.s32.totalorder %s25, 0
    %p72 = por %p70, %p71
    %p73 = scmp.ne.s32.totalorder %s59, %s60
    %p74 = scmp.eq.s32.totalorder %s26, 1
    %p75 = por %p73, %p74
    %p77 = scmp.ne.s32.totalorder %s60, %s76
    %p78 = scmp.eq.s32.totalorder %s26, 0
    %p79 = por %p77, %p78
    %s80 = ssub.s32 %s20, %s27
    %p81 = scmp.eq.s32.totalorder %s80, 0
    %s83 = sadd.s32 %s82, 1
    %s84 = scalar_select %p81, %s82, %s83
    %p87 = pneg %p81
    %p88 = scmp.eq.s32.totalorder %s20, 1
    %p89 = por %p87, %p88
    %p90 = scmp.ne.s32.totalorder %s82, %s85
    %p91 = scmp.eq.s32.totalorder %s20, 0
    %p92 = por %p90, %p91
    %p93 = scmp.ne.s32.totalorder %s82, %s85
    %p94 = scmp.eq.s32.totalorder %s25, 1
    %p95 = por %p93, %p94
    %p96 = scmp.ne.s32.totalorder %s85, %s86
    %p97 = scmp.eq.s32.totalorder %s25, 0
    %p98 = por %p96, %p97
    %p99 = scmp.ne.s32.totalorder %s85, %s86
    %p100 = scmp.eq.s32.totalorder %s26, 1
    %p101 = por %p99, %p100
    %p103 = scmp.ne.s32.totalorder %s86, %s102
    %p104 = scmp.eq.s32.totalorder %s26, 0
    %p105 = por %p103, %p104
    %s107 = sadd.s32 %s106, 1
    %p110 = scmp.eq.s32.totalorder %s20, 1
    %p111 = scmp.ne.s32.totalorder %s106, %s108
    %p112 = scmp.eq.s32.totalorder %s20, 0
    %p113 = por %p111, %p112
    %p114 = scmp.ne.s32.totalorder %s106, %s108
    %p115 = scmp.eq.s32.totalorder %s25, 1
    %p116 = por %p114, %p115
    %p117 = scmp.ne.s32.totalorder %s108, %s109
    %p118 = scmp.eq.s32.totalorder %s25, 0
    %p119 = por %p117, %p118
    %p120 = scmp.ne.s32.totalorder %s108, %s109
    %p121 = scmp.eq.s32.totalorder %s26, 1
    %p122 = por %p120, %p121
    %p124 = scmp.ne.s32.totalorder %s109, %s123
    %p125 = scmp.eq.s32.totalorder %s26, 0
    %p126 = por %p124, %p125
    %s128 = sadd.s32 %s127, 1
    %p131 = scmp.eq.s32.totalorder %s20, 1
    %p132 = scmp.ne.s32.totalorder %s127, %s129
    %p133 = scmp.eq.s32.totalorder %s20, 0
    %p134 = por %p132, %p133
    %p135 = scmp.ne.s32.totalorder %s127, %s129
    %p136 = scmp.eq.s32.totalorder %s25, 1
    %p137 = por %p135, %p136
    %p138 = scmp.ne.s32.totalorder %s129, %s130
    %p139 = scmp.eq.s32.totalorder %s25, 0
    %p140 = por %p138, %p139
    %p141 = scmp.ne.s32.totalorder %s129, %s130
    %p142 = scmp.eq.s32.totalorder %s26, 1
    %p143 = por %p141, %p142
    %p145 = scmp.ne.s32.totalorder %s130, %s144
    %p146 = scmp.eq.s32.totalorder %s26, 0
    %p147 = por %p145, %p146
    %s149 = sadd.s32 %s148, 1
    %p152 = scmp.eq.s32.totalorder %s20, 1
    %p153 = scmp.ne.s32.totalorder %s148, %s150
    %p154 = scmp.eq.s32.totalorder %s20, 0
    %p155 = por %p153, %p154
    %p156 = scmp.ne.s32.totalorder %s148, %s150
    %p157 = scmp.eq.s32.totalorder %s25, 1
    %p158 = por %p156, %p157
    %p159 = scmp.ne.s32.totalorder %s150, %s151
    %p160 = scmp.eq.s32.totalorder %s25, 0
    %p161 = por %p159, %p160
    %p162 = scmp.ne.s32.totalorder %s150, %s151
    %p163 = scmp.eq.s32.totalorder %s26, 1
    %p164 = por %p162, %p163
    %p166 = scmp.ne.s32.totalorder %s151, %s165
    %p167 = scmp.eq.s32.totalorder %s26, 0
    %p168 = por %p166, %p167
    %s170 = sadd.s32 %s169, 1
    %p173 = scmp.eq.s32.totalorder %s20, 1
    %p174 = scmp.ne.s32.totalorder %s169, %s171
    %p175 = scmp.eq.s32.totalorder %s20, 0
    %p176 = por %p174, %p175
    %p177 = scmp.ne.s32.totalorder %s169, %s171
    %p178 = scmp.eq.s32.totalorder %s25, 1
    %p179 = por %p177, %p178
    %p180 = scmp.ne.s32.totalorder %s171, %s172
    %p181 = scmp.eq.s32.totalorder %s25, 0
    %p182 = por %p180, %p181
    %p183 = scmp.ne.s32.totalorder %s171, %s172
    %p184 = scmp.eq.s32.totalorder %s26, 1
    %p185 = por %p183, %p184
    %p187 = scmp.ne.s32.totalorder %s172, %s186
    %p188 = scmp.eq.s32.totalorder %s26, 0
    %p189 = por %p187, %p188
    %s191 = sadd.s32 %s190, 1
    %p194 = scmp.eq.s32.totalorder %s20, 1
    %p195 = scmp.ne.s32.totalorder %s190, %s192
    %p196 = scmp.eq.s32.totalorder %s20, 0
    %p197 = por %p195, %p196
    %p198 = scmp.ne.s32.totalorder %s190, %s192
    %p199 = scmp.eq.s32.totalorder %s25, 1
    %p200 = por %p198, %p199
    %p201 = scmp.ne.s32.totalorder %s192, %s193
    %p202 = scmp.eq.s32.totalorder %s25, 0
    %p203 = por %p201, %p202
    %p204 = scmp.ne.s32.totalorder %s192, %s193
    %p205 = scmp.eq.s32.totalorder %s26, 1
    %p206 = por %p204, %p205
    %p208 = scmp.ne.s32.totalorder %s193, %s207
    %p209 = scmp.eq.s32.totalorder %s26, 0
    %p210 = por %p208, %p209
    %s212 = sadd.s32 %s211, 1
    %p215 = scmp.eq.s32.totalorder %s20, 1
    %p216 = scmp.ne.s32.totalorder %s211, %s213
    %p217 = scmp.eq.s32.totalorder %s20, 0
    %p218 = por %p216, %p217
    %p219 = scmp.ne.s32.totalorder %s211, %s213
    %p220 = scmp.eq.s32.totalorder %s25, 1
    %p221 = por %p219, %p220
    %p222 = scmp.ne.s32.totalorder %s213, %s214
    %p223 = scmp.eq.s32.totalorder %s25, 0
    %p224 = por %p222, %p223
    %p225 = scmp.ne.s32.totalorder %s213, %s214
    %p226 = scmp.eq.s32.totalorder %s26, 1
    %p227 = por %p225, %p226
    %p229 = scmp.ne.s32.totalorder %s214, %s228
    %p230 = scmp.eq.s32.totalorder %s26, 0
    %p231 = por %p229, %p230
    %s233 = sadd.s32 %s232, 1
    %p236 = scmp.eq.s32.totalorder %s20, 1
    %p237 = scmp.ne.s32.totalorder %s232, %s234
    %p238 = scmp.eq.s32.totalorder %s20, 0
    %p239 = por %p237, %p238
    %p240 = scmp.ne.s32.totalorder %s232, %s234
    %p241 = scmp.eq.s32.totalorder %s25, 1
    %p242 = por %p240, %p241
    %p243 = scmp.ne.s32.totalorder %s234, %s235
    %p244 = scmp.eq.s32.totalorder %s25, 0
    %p245 = por %p243, %p244
    %p246 = scmp.ne.s32.totalorder %s234, %s235
    %p247 = scmp.eq.s32.totalorder %s26, 1
    %p248 = por %p246, %p247
    %p250 = scmp.ne.s32.totalorder %s235, %s249
    %p251 = scmp.eq.s32.totalorder %s26, 0
    %p252 = por %p250, %p251
    %s254 = sadd.s32 %s253, 1
    %p257 = scmp.eq.s32.totalorder %s20, 1
    %p258 = scmp.ne.s32.totalorder %s253, %s255
    %p259 = scmp.eq.s32.totalorder %s20, 0
    %p260 = por %p258, %p259
    %p261 = scmp.ne.s32.totalorder %s253, %s255
    %p262 = scmp.eq.s32.totalorder %s25, 1
    %p263 = por %p261, %p262
    %p264 = scmp.ne.s32.totalorder %s255, %s256
    %p265 = scmp.eq.s32.totalorder %s25, 0
    %p266 = por %p264, %p265
    %p267 = scmp.ne.s32.totalorder %s255, %s256
    %p268 = scmp.eq.s32.totalorder %s26, 1
    %p269 = por %p267, %p268
    %p271 = scmp.ne.s32.totalorder %s256, %s270
    %p272 = scmp.eq.s32.totalorder %s26, 0
    %p273 = por %p271, %p272
    %s275 = sadd.s32 %s274, 1
    %p278 = scmp.eq.s32.totalorder %s20, 1
    %p279 = scmp.ne.s32.totalorder %s274, %s276
    %p280 = scmp.eq.s32.totalorder %s20, 0
    %p281 = por %p279, %p280
    %p282 = scmp.ne.s32.totalorder %s274, %s276
    %p283 = scmp.eq.s32.totalorder %s25, 1
    %p284 = por %p282, %p283
    %p285 = scmp.ne.s32.totalorder %s276, %s277
    %p286 = scmp.eq.s32.totalorder %s25, 0
    %p287 = por %p285, %p286
    %p288 = scmp.ne.s32.totalorder %s276, %s277
    %p289 = scmp.eq.s32.totalorder %s26, 1
    %p290 = por %p288, %p289
    %p292 = scmp.ne.s32.totalorder %s277, %s291
    %p293 = scmp.eq.s32.totalorder %s26, 0
    %p294 = por %p292, %p293
    %s296 = sadd.s32 %s295, 1
    %p299 = scmp.eq.s32.totalorder %s20, 1
    %p300 = scmp.ne.s32.totalorder %s295, %s297
    %p301 = scmp.eq.s32.totalorder %s20, 0
    %p302 = por %p300, %p301
    %p303 = scmp.ne.s32.totalorder %s295, %s297
    %p304 = scmp.eq.s32.totalorder %s25, 1
    %p305 = por %p303, %p304
    %p306 = scmp.ne.s32.totalorder %s297, %s298
    %p307 = scmp.eq.s32.totalorder %s25, 0
    %p308 = por %p306, %p307
    %p309 = scmp.ne.s32.totalorder %s297, %s298
    %p310 = scmp.eq.s32.totalorder %s26, 1
    %p311 = por %p309, %p310
    %p313 = scmp.ne.s32.totalorder %s298, %s312
    %p314 = scmp.eq.s32.totalorder %s26, 0
    %p315 = por %p313, %p314
    %s317 = sadd.s32 %s316, 1
    %p320 = scmp.eq.s32.totalorder %s20, 1
    %p321 = scmp.ne.s32.totalorder %s316, %s318
    %p322 = scmp.eq.s32.totalorder %s20, 0
    %p323 = por %p321, %p322
    %p324 = scmp.ne.s32.totalorder %s316, %s318
    %p325 = scmp.eq.s32.totalorder %s25, 1
    %p326 = por %p324, %p325
    %p327 = scmp.ne.s32.totalorder %s318, %s319
    %p328 = scmp.eq.s32.totalorder %s25, 0
    %p329 = por %p327, %p328
    %p330 = scmp.ne.s32.totalorder %s318, %s319
    %p331 = scmp.eq.s32.totalorder %s26, 1
    %p332 = por %p330, %p331
    %p334 = scmp.ne.s32.totalorder %s319, %s333
    %p335 = scmp.eq.s32.totalorder %s26, 0
    %p336 = por %p334, %p335
    %s337 = ssub.s32 %s20, %s27
    %p338 = scmp.eq.s32.totalorder %s337, 0
    %s340 = sadd.s32 %s339, 1
    %s341 = scalar_select %p338, %s339, %s340
    %p344 = pneg %p338
    %p345 = scmp.eq.s32.totalorder %s20, 1
    %p346 = por %p344, %p345
    %p347 = scmp.ne.s32.totalorder %s339, %s342
    %p348 = scmp.eq.s32.totalorder %s20, 0
    %p349 = por %p347, %p348
    %p350 = scmp.ne.s32.totalorder %s339, %s342
    %p351 = scmp.eq.s32.totalorder %s25, 1
    %p352 = por %p350, %p351
    %p353 = scmp.ne.s32.totalorder %s342, %s343
    %p354 = scmp.eq.s32.totalorder %s25, 0
    %p355 = por %p353, %p354
    %p356 = scmp.ne.s32.totalorder %s342, %s343
    %p357 = scmp.eq.s32.totalorder %s26, 1
    %p358 = por %p356, %p357
    %p360 = scmp.ne.s32.totalorder %s343, %s359
    %p361 = scmp.eq.s32.totalorder %s26, 0
    %p362 = por %p360, %p361
    %p363 = scmp.le.s32.totalorder 1, %s20
    %p364 = scmp.lt.s32.totalorder %s20, 3
    %p365 = pnand %p363, %p364
    %p366 = pneg %p365
    // Predicated region
    $region9: #{mvt_forward.1} parent=5 // pred_check
      _
    $region10: #{mvt_forward.1} parent=5 // pred_check_branch
      %368 = sbr.rel (%p365) target = $region12
    $region11: #{mvt_forward.1} parent=5 // pred_region
      %s369 = ssub.s32 %s20, 1
      // Predicated region
      $region13: #{mvt_forward.1} parent=11 // pred_check
        %p370 = pneg %p119
      $region14: #{mvt_forward.1} parent=11 // pred_check_branch
        %372 = sbr.rel (%p370) target = $region16
      $region15: #{mvt_forward.1} parent=11 // pred_region
        _
      $region16: #{mvt_forward.1} parent=11 // pred_fallthru
        _
      // Predicated region
      $region17: #{mvt_forward.1} parent=11 // pred_check
        %p373 = pneg %p140
      $region18: #{mvt_forward.1} parent=11 // pred_check_branch
        %375 = sbr.rel (%p373) target = $region20
      $region19: #{mvt_forward.1} parent=11 // pred_region
        _
      $region20: #{mvt_forward.1} parent=11 // pred_fallthru
        _
      // Predicated region
      $region21: #{mvt_forward.1} parent=11 // pred_check
        %p376 = pneg %p161
      $region22: #{mvt_forward.1} parent=11 // pred_check_branch
        %378 = sbr.rel (%p376) target = $region24
      $region23: #{mvt_forward.1} parent=11 // pred_region
        _
      $region24: #{mvt_forward.1} parent=11 // pred_fallthru
        _
      // Predicated region
      $region25: #{mvt_forward.1} parent=11 // pred_check
        %p379 = pneg %p182
      $region26: #{mvt_forward.1} parent=11 // pred_check_branch
        %381 = sbr.rel (%p379) target = $region28
      $region27: #{mvt_forward.1} parent=11 // pred_region
        _
      $region28: #{mvt_forward.1} parent=11 // pred_fallthru
        _
      // Predicated region
      $region29: #{mvt_forward.1} parent=11 // pred_check
        %p382 = pneg %p203
      $region30: #{mvt_forward.1} parent=11 // pred_check_branch
        %384 = sbr.rel (%p382) target = $region32
      $region31: #{mvt_forward.1} parent=11 // pred_region
        _
      $region32: #{mvt_forward.1} parent=11 // pred_fallthru
        _
      // Predicated region
      $region33: #{mvt_forward.1} parent=11 // pred_check
        %p385 = pneg %p224
      $region34: #{mvt_forward.1} parent=11 // pred_check_branch
        %387 = sbr.rel (%p385) target = $region36
      $region35: #{mvt_forward.1} parent=11 // pred_region
        _
      $region36: #{mvt_forward.1} parent=11 // pred_fallthru
        _
      // Predicated region
      $region37: #{mvt_forward.1} parent=11 // pred_check
        %p388 = pneg %p245
      $region38: #{mvt_forward.1} parent=11 // pred_check_branch
        %390 = sbr.rel (%p388) target = $region40
      $region39: #{mvt_forward.1} parent=11 // pred_region
        _
      $region40: #{mvt_forward.1} parent=11 // pred_fallthru
        _
      // Predicated region
      $region41: #{mvt_forward.1} parent=11 // pred_check
        %p391 = pneg %p266
      $region42: #{mvt_forward.1} parent=11 // pred_check_branch
        %393 = sbr.rel (%p391) target = $region44
      $region43: #{mvt_forward.1} parent=11 // pred_region
        _
      $region44: #{mvt_forward.1} parent=11 // pred_fallthru
        _
      // Predicated region
      $region45: #{mvt_forward.1} parent=11 // pred_check
        %p394 = pneg %p287
      $region46: #{mvt_forward.1} parent=11 // pred_check_branch
        %396 = sbr.rel (%p394) target = $region48
      $region47: #{mvt_forward.1} parent=11 // pred_region
        _
      $region48: #{mvt_forward.1} parent=11 // pred_fallthru
        _
      // Predicated region
      $region49: #{mvt_forward.1} parent=11 // pred_check
        %p397 = pneg %p308
      $region50: #{mvt_forward.1} parent=11 // pred_check_branch
        %399 = sbr.rel (%p397) target = $region52
      $region51: #{mvt_forward.1} parent=11 // pred_region
        _
      $region52: #{mvt_forward.1} parent=11 // pred_fallthru
        _
      // Predicated region
      $region53: #{mvt_forward.1} parent=11 // pred_check
        %p400 = pneg %p329
      $region54: #{mvt_forward.1} parent=11 // pred_check_branch
        %402 = sbr.rel (%p400) target = $region56
      $region55: #{mvt_forward.1} parent=11 // pred_region
        _
      $region56: #{mvt_forward.1} parent=11 // pred_fallthru
        _
    $region12: #{mvt_forward.1} parent=5 // pred_fallthru
      _
    %p403 = scmp.lt.s32.totalorder %s20, 2
    // Predicated region
    $region57: #{mvt_forward.1} parent=5 // pred_check
      %p404 = pneg %p403
    $region58: #{mvt_forward.1} parent=5 // pred_check_branch
      %406 = sbr.rel (%p404) target = $region60
    $region59: #{mvt_forward.1} parent=5 // pred_region
      // Predicated region
      $region61: #{mvt_forward.1} parent=59 // pred_check
        %p407 = pneg %p40
      $region62: #{mvt_forward.1} parent=59 // pred_check_branch
        %409 = sbr.rel (%p407) target = $region64
      $region63: #{mvt_forward.1} parent=59 // pred_region
        %p410 = scmp.lt.s32.totalorder %s20, 1
        %s411 = scalar_select %p410, %s20, 1
        %s412 = smul.addr %s411, 4
        %s413 = scalar_lea.vmem %s0, %s412
      $region64: #{mvt_forward.1} parent=59 // pred_fallthru
        _
      // Predicated region
      $region65: #{mvt_forward.1} parent=59 // pred_check
        %p414 = pneg %p66
      $region66: #{mvt_forward.1} parent=59 // pred_check_branch
        %416 = sbr.rel (%p414) target = $region68
      $region67: #{mvt_forward.1} parent=59 // pred_region
        %p417 = scmp.lt.s32.totalorder %s20, 1
        %s418 = scalar_select %p417, %s20, 1
        %s419 = smul.addr %s418, 8
        %s420 = smul.addr %s419, 4
        %s421 = scalar_lea.vmem %s1, %s420
      $region68: #{mvt_forward.1} parent=59 // pred_fallthru
        _
      // Predicated region
      $region69: #{mvt_forward.1} parent=59 // pred_check
        %p422 = pneg %p92
      $region70: #{mvt_forward.1} parent=59 // pred_check_branch
        %424 = sbr.rel (%p422) target = $region72
      $region71: #{mvt_forward.1} parent=59 // pred_region
        %p425 = scmp.lt.s32.totalorder %s20, 1
        %s426 = scalar_select %p425, %s20, 1
        %s427 = scalar_lea.vmem %s2, %s426
      $region72: #{mvt_forward.1} parent=59 // pred_fallthru
        _
    $region60: #{mvt_forward.1} parent=5 // pred_fallthru
      _
    %p428 = scmp.le.s32.totalorder 1, %s20
    %p429 = scmp.lt.s32.totalorder %s20, 3
    %p430 = pnand %p428, %p429
    %p431 = pneg %p430
    // Predicated region
    $region73: #{mvt_forward.1} parent=5 // pred_check
      _
    $region74: #{mvt_forward.1} parent=5 // pred_check_branch
      %433 = sbr.rel (%p430) target = $region76
    $region75: #{mvt_forward.1} parent=5 // pred_region
      %s434 = ssub.s32 %s20, 1
      %p435 = scmp.lt.s32.totalorder %s25, 1
      %s436 = scalar_select %p435, %s25, 1
      %s437 = smul.addr %s436, 4
      %s438 = scalar_lea.vmem %s0, %s437
      %p439 = pneg %p46
      %p440 = pneg %p43
      %p441 = scmp.lt.s32.totalorder %s25, 1
      %s442 = scalar_select %p441, %s25, 1
      %s443 = smul.addr %s442, 8
      %s444 = smul.addr %s443, 4
      %s445 = scalar_lea.vmem %s1, %s444
      %p446 = pneg %p72
      %p447 = pneg %p69
      %p448 = scmp.lt.s32.totalorder %s25, 1
      %s449 = scalar_select %p448, %s25, 1
      %s450 = scalar_lea.vmem %s2, %s449
      %p451 = pneg %p98
      %p452 = pneg %p95
      %p453 = pneg %p119
      %p454 = pneg %p116
      %p455 = pneg %p140
      %p456 = pneg %p137
      %p457 = pneg %p161
      %p458 = pneg %p158
      %p459 = pneg %p182
      %p460 = pneg %p179
      %p461 = pneg %p203
      %p462 = pneg %p200
      %p463 = pneg %p224
      %p464 = pneg %p221
      %p465 = pneg %p245
      %p466 = pneg %p242
      %p467 = pneg %p266
      %p468 = pneg %p263
      %p469 = pneg %p287
      %p470 = pneg %p284
      %p471 = pneg %p308
      %p472 = pneg %p305
      %p473 = pneg %p329
      %p474 = pneg %p326
      %p475 = pneg %p355
      %p476 = pneg %p352
      %p477 = scmp.lt.s32.totalorder %s25, 1
      %s478 = scalar_select %p477, %s25, 1
      %s479 = smul.addr %s478, 6
      %s480 = smul.addr %s479, 8
      %s481 = scalar_lea.vmem %s14, %s480
      %p482 = scmp.lt.s32.totalorder %s25, 1
      %s483 = scalar_select %p482, %s25, 1
      %s484 = smul.addr %s483, 4
      %s485 = scalar_lea.vmem %s0, %s484
      %p486 = scmp.lt.s32.totalorder %s25, 1
      %s487 = scalar_select %p486, %s25, 1
      %s488 = smul.addr %s487, 8
      %s489 = smul.addr %s488, 4
      %s490 = scalar_lea.vmem %s1, %s489
      %p491 = scmp.lt.s32.totalorder %s25, 1
      %s492 = scalar_select %p491, %s25, 1
      %s493 = scalar_lea.vmem %s2, %s492
      %p494 = scmp.lt.s32.totalorder %s25, 1
      %s495 = scalar_select %p494, %s25, 1
      %s496 = smul.addr %s495, 6
      %s497 = smul.addr %s496, 8
      %s498 = scalar_lea.vmem %s14, %s497
      %v500 = vld [vmem:[%s485] sm:$0x7]
      %v501 = vld [vmem:[%s490] sm:$0xf]
      %v502 = vld [vmem:[%s490 + $0x4] sm:$0xf]
      %v503 = vld [vmem:[%s490 + $0x8] sm:$0xf]
      %v504 = vld [vmem:[%s490 + $0xc] sm:$0xf]
      %v505 = vld [vmem:[%s490 + $0x10] sm:$0xf]
      %v506 = vld [vmem:[%s490 + $0x14] sm:$0xf]
      %v507 = vld [vmem:[%s490 + $0x18] sm:$0xf]
      %v508 = vld [vmem:[%s490 + $0x1c] sm:$0xf]
      %v509 = vlaneseq
      %v510 = vshrl.u32 %v509, 7
      %v511 = vadd.s32 %v510, 8
      %v512 = vadd.s32 %v510, 16
      %v513 = vadd.s32 %v510, 24
      %v514 = vadd.s32 %v510, 32
      %v515 = vadd.s32 %v510, 40
      %v516 = vadd.s32 %v510, 48
      %v517 = vadd.s32 %v510, 56
      %v518 = vadd.s32 %v510, 64
      %v519 = vadd.s32 %v510, 72
      %v520 = vadd.s32 %v510, 80
      %v521 = vadd.s32 %v510, 88
      %v522 = vadd.s32 %v510, 96
      %v523 = vadd.s32 %v510, 104
      %v524 = vadd.s32 %v510, 112
      %v525 = vadd.s32 %v510, 120
      %v526 = vadd.s32 %v510, 128
      %v527 = vadd.s32 %v510, 136
      %v528 = vadd.s32 %v510, 144
      %v529 = vadd.s32 %v510, 152
      %v530 = vadd.s32 %v510, 160
      %v531 = vadd.s32 %v510, 168
      %v532 = vadd.s32 %v510, 176
      %v533 = vadd.s32 %v510, 184
      %v534 = vadd.s32 %v510, 192
      %v535 = vadd.s32 %v510, 200
      %v536 = vadd.s32 %v510, 208
      %v537 = vadd.s32 %v510, 216
      %v538 = vadd.s32 %v510, 224
      %v539 = vadd.s32 %v510, 232
      %v540 = vadd.s32 %v510, 240
      %v541 = vadd.s32 %v510, 248
      %v542 = vadd.s32 %v510, 256
      %v543 = vadd.s32 %v510, 264
      %v544 = vadd.s32 %v510, 272
      %v545 = vadd.s32 %v510, 280
      %v546 = vadd.s32 %v510, 288
      %v547 = vadd.s32 %v510, 296
      %v548 = vadd.s32 %v510, 304
      %v549 = vadd.s32 %v510, 312
      %v550 = vadd.s32 %v510, 320
      %v551 = vadd.s32 %v510, 328
      %v552 = vadd.s32 %v510, 336
      %v553 = vadd.s32 %v510, 344
      %v554 = vadd.s32 %v510, 352
      %v555 = vadd.s32 %v510, 360
      %v556 = vadd.s32 %v510, 368
      %v557 = vadd.s32 %v510, 376
      %v558 = vadd.s32 %v510, 384
      %v559 = vadd.s32 %v510, 392
      %v560 = vadd.s32 %v510, 400
      %v561 = vadd.s32 %v510, 408
      %v562 = vadd.s32 %v510, 416
      %v563 = vadd.s32 %v510, 424
      %v564 = vadd.s32 %v510, 432
      %v565 = vadd.s32 %v510, 440
      %v566 = vadd.s32 %v510, 448
      %v567 = vadd.s32 %v510, 456
      %v568 = vadd.s32 %v510, 464
      %v569 = vadd.s32 %v510, 472
      %v570 = vadd.s32 %v510, 480
      %v571 = vadd.s32 %v510, 488
      %v572 = vadd.s32 %v510, 496
      %v573 = vadd.s32 %v510, 504
      %v574 = vadd.s32 %v510, 512
      %v575 = vadd.s32 %v510, 520
      %v576 = vadd.s32 %v510, 528
      %v577 = vadd.s32 %v510, 536
      %v578 = vadd.s32 %v510, 544
      %v579 = vadd.s32 %v510, 552
      %v580 = vadd.s32 %v510, 560
      %v581 = vadd.s32 %v510, 568
      %v582 = vadd.s32 %v510, 576
      %v583 = vadd.s32 %v510, 584
      %v584 = vadd.s32 %v510, 592
      %v585 = vadd.s32 %v510, 600
      %v586 = vadd.s32 %v510, 608
      %v587 = vadd.s32 %v510, 616
      %v588 = vadd.s32 %v510, 624
      %v589 = vadd.s32 %v510, 632
      %v590 = vadd.s32 %v510, 640
      %v591 = vadd.s32 %v510, 648
      %v592 = vadd.s32 %v510, 656
      %v593 = vadd.s32 %v510, 664
      %v594 = vadd.s32 %v510, 672
      %v595 = vadd.s32 %v510, 680
      %v596 = vadd.s32 %v510, 688
      %v597 = vadd.s32 %v510, 696
      %v598 = vadd.s32 %v510, 704
      %v599 = vadd.s32 %v510, 712
      %v600 = vadd.s32 %v510, 720
      %v601 = vadd.s32 %v510, 728
      %v602 = vadd.s32 %v510, 736
      %v603 = vadd.s32 %v510, 744
      %v604 = vadd.s32 %v510, 752
      %v605 = vadd.s32 %v510, 760
      %v606 = vlaneseq
      %v607 = vshrl.u32 %v606, 7
      %v608 = vsub.s32 0, %v607
      %v609 = vrot.slane %v500, %v608
      %vm610 = vcmp.eq.s32.totalorder %v510, %v609
      %vm611 = vcmp.eq.s32.totalorder %v511, %v609
      %vm612 = vcmp.eq.s32.totalorder %v512, %v609
      %vm613 = vcmp.eq.s32.totalorder %v513, %v609
      %vm614 = vcmp.eq.s32.totalorder %v514, %v609
      %vm615 = vcmp.eq.s32.totalorder %v515, %v609
      %vm616 = vcmp.eq.s32.totalorder %v516, %v609
      %vm617 = vcmp.eq.s32.totalorder %v517, %v609
      %vm618 = vcmp.eq.s32.totalorder %v518, %v609
      %vm619 = vcmp.eq.s32.totalorder %v519, %v609
      %vm620 = vcmp.eq.s32.totalorder %v520, %v609
      %vm621 = vcmp.eq.s32.totalorder %v521, %v609
      %vm622 = vcmp.eq.s32.totalorder %v522, %v609
      %vm623 = vcmp.eq.s32.totalorder %v523, %v609
      %vm624 = vcmp.eq.s32.totalorder %v524, %v609
      %vm625 = vcmp.eq.s32.totalorder %v525, %v609
      %vm626 = vcmp.eq.s32.totalorder %v526, %v609
      %vm627 = vcmp.eq.s32.totalorder %v527, %v609
      %vm628 = vcmp.eq.s32.totalorder %v528, %v609
      %vm629 = vcmp.eq.s32.totalorder %v529, %v609
      %vm630 = vcmp.eq.s32.totalorder %v530, %v609
      %vm631 = vcmp.eq.s32.totalorder %v531, %v609
      %vm632 = vcmp.eq.s32.totalorder %v532, %v609
      %vm633 = vcmp.eq.s32.totalorder %v533, %v609
      %vm634 = vcmp.eq.s32.totalorder %v534, %v609
      %vm635 = vcmp.eq.s32.totalorder %v535, %v609
      %vm636 = vcmp.eq.s32.totalorder %v536, %v609
      %vm637 = vcmp.eq.s32.totalorder %v537, %v609
      %vm638 = vcmp.eq.s32.totalorder %v538, %v609
      %vm639 = vcmp.eq.s32.totalorder %v539, %v609
      %vm640 = vcmp.eq.s32.totalorder %v540, %v609
      %vm641 = vcmp.eq.s32.totalorder %v541, %v609
      %vm642 = vcmp.eq.s32.totalorder %v542, %v609
      %vm643 = vcmp.eq.s32.totalorder %v543, %v609
      %vm644 = vcmp.eq.s32.totalorder %v544, %v609
      %vm645 = vcmp.eq.s32.totalorder %v545, %v609
      %vm646 = vcmp.eq.s32.totalorder %v546, %v609
      %vm647 = vcmp.eq.s32.totalorder %v547, %v609
      %vm648 = vcmp.eq.s32.totalorder %v548, %v609
      %vm649 = vcmp.eq.s32.totalorder %v549, %v609
      %vm650 = vcmp.eq.s32.totalorder %v550, %v609
      %vm651 = vcmp.eq.s32.totalorder %v551, %v609
      %vm652 = vcmp.eq.s32.totalorder %v552, %v609
      %vm653 = vcmp.eq.s32.totalorder %v553, %v609
      %vm654 = vcmp.eq.s32.totalorder %v554, %v609
      %vm655 = vcmp.eq.s32.totalorder %v555, %v609
      %vm656 = vcmp.eq.s32.totalorder %v556, %v609
      %vm657 = vcmp.eq.s32.totalorder %v557, %v609
      %vm658 = vcmp.eq.s32.totalorder %v558, %v609
      %vm659 = vcmp.eq.s32.totalorder %v559, %v609
      %vm660 = vcmp.eq.s32.totalorder %v560, %v609
      %vm661 = vcmp.eq.s32.totalorder %v561, %v609
      %vm662 = vcmp.eq.s32.totalorder %v562, %v609
      %vm663 = vcmp.eq.s32.totalorder %v563, %v609
      %vm664 = vcmp.eq.s32.totalorder %v564, %v609
      %vm665 = vcmp.eq.s32.totalorder %v565, %v609
      %vm666 = vcmp.eq.s32.totalorder %v566, %v609
      %vm667 = vcmp.eq.s32.totalorder %v567, %v609
      %vm668 = vcmp.eq.s32.totalorder %v568, %v609
      %vm669 = vcmp.eq.s32.totalorder %v569, %v609
      %vm670 = vcmp.eq.s32.totalorder %v570, %v609
      %vm671 = vcmp.eq.s32.totalorder %v571, %v609
      %vm672 = vcmp.eq.s32.totalorder %v572, %v609
      %vm673 = vcmp.eq.s32.totalorder %v573, %v609
      %vm674 = vcmp.eq.s32.totalorder %v574, %v609
      %vm675 = vcmp.eq.s32.totalorder %v575, %v609
      %vm676 = vcmp.eq.s32.totalorder %v576, %v609
      %vm677 = vcmp.eq.s32.totalorder %v577, %v609
      %vm678 = vcmp.eq.s32.totalorder %v578, %v609
      %vm679 = vcmp.eq.s32.totalorder %v579, %v609
      %vm680 = vcmp.eq.s32.totalorder %v580, %v609
      %vm681 = vcmp.eq.s32.totalorder %v581, %v609
      %vm682 = vcmp.eq.s32.totalorder %v582, %v609
      %vm683 = vcmp.eq.s32.totalorder %v583, %v609
      %vm684 = vcmp.eq.s32.totalorder %v584, %v609
      %vm685 = vcmp.eq.s32.totalorder %v585, %v609
      %vm686 = vcmp.eq.s32.totalorder %v586, %v609
      %vm687 = vcmp.eq.s32.totalorder %v587, %v609
      %vm688 = vcmp.eq.s32.totalorder %v588, %v609
      %vm689 = vcmp.eq.s32.totalorder %v589, %v609
      %vm690 = vcmp.eq.s32.totalorder %v590, %v609
      %vm691 = vcmp.eq.s32.totalorder %v591, %v609
      %vm692 = vcmp.eq.s32.totalorder %v592, %v609
      %vm693 = vcmp.eq.s32.totalorder %v593, %v609
      %vm694 = vcmp.eq.s32.totalorder %v594, %v609
      %vm695 = vcmp.eq.s32.totalorder %v595, %v609
      %vm696 = vcmp.eq.s32.totalorder %v596, %v609
      %vm697 = vcmp.eq.s32.totalorder %v597, %v609
      %vm698 = vcmp.eq.s32.totalorder %v598, %v609
      %vm699 = vcmp.eq.s32.totalorder %v599, %v609
      %vm700 = vcmp.eq.s32.totalorder %v600, %v609
      %vm701 = vcmp.eq.s32.totalorder %v601, %v609
      %vm702 = vcmp.eq.s32.totalorder %v602, %v609
      %vm703 = vcmp.eq.s32.totalorder %v603, %v609
      %vm704 = vcmp.eq.s32.totalorder %v604, %v609
      %vm705 = vcmp.eq.s32.totalorder %v605, %v609
      %v706 = vsel %vm610, 1, 0
      %v707 = vsel %vm611, 1, 0
      %v708 = vsel %vm612, 1, 0
      %v709 = vsel %vm613, 1, 0
      %v710 = vsel %vm614, 1, 0
      %v711 = vsel %vm615, 1, 0
      %v712 = vsel %vm616, 1, 0
      %v713 = vsel %vm617, 1, 0
      %v714 = vsel %vm618, 1, 0
      %v715 = vsel %vm619, 1, 0
      %v716 = vsel %vm620, 1, 0
      %v717 = vsel %vm621, 1, 0
      %v718 = vsel %vm622, 1, 0
      %v719 = vsel %vm623, 1, 0
      %v720 = vsel %vm624, 1, 0
      %v721 = vsel %vm625, 1, 0
      %v722 = vsel %vm626, 1, 0
      %v723 = vsel %vm627, 1, 0
      %v724 = vsel %vm628, 1, 0
      %v725 = vsel %vm629, 1, 0
      %v726 = vsel %vm630, 1, 0
      %v727 = vsel %vm631, 1, 0
      %v728 = vsel %vm632, 1, 0
      %v729 = vsel %vm633, 1, 0
      %v730 = vsel %vm634, 1, 0
      %v731 = vsel %vm635, 1, 0
      %v732 = vsel %vm636, 1, 0
      %v733 = vsel %vm637, 1, 0
      %v734 = vsel %vm638, 1, 0
      %v735 = vsel %vm639, 1, 0
      %v736 = vsel %vm640, 1, 0
      %v737 = vsel %vm641, 1, 0
      %v738 = vsel %vm642, 1, 0
      %v739 = vsel %vm643, 1, 0
      %v740 = vsel %vm644, 1, 0
      %v741 = vsel %vm645, 1, 0
      %v742 = vsel %vm646, 1, 0
      %v743 = vsel %vm647, 1, 0
      %v744 = vsel %vm648, 1, 0
      %v745 = vsel %vm649, 1, 0
      %v746 = vsel %vm650, 1, 0
      %v747 = vsel %vm651, 1, 0
      %v748 = vsel %vm652, 1, 0
      %v749 = vsel %vm653, 1, 0
      %v750 = vsel %vm654, 1, 0
      %v751 = vsel %vm655, 1, 0
      %v752 = vsel %vm656, 1, 0
      %v753 = vsel %vm657, 1, 0
      %v754 = vsel %vm658, 1, 0
      %v755 = vsel %vm659, 1, 0
      %v756 = vsel %vm660, 1, 0
      %v757 = vsel %vm661, 1, 0
      %v758 = vsel %vm662, 1, 0
      %v759 = vsel %vm663, 1, 0
      %v760 = vsel %vm664, 1, 0
      %v761 = vsel %vm665, 1, 0
      %v762 = vsel %vm666, 1, 0
      %v763 = vsel %vm667, 1, 0
      %v764 = vsel %vm668, 1, 0
      %v765 = vsel %vm669, 1, 0
      %v766 = vsel %vm670, 1, 0
      %v767 = vsel %vm671, 1, 0
      %v768 = vsel %vm672, 1, 0
      %v769 = vsel %vm673, 1, 0
      %v770 = vsel %vm674, 1, 0
      %v771 = vsel %vm675, 1, 0
      %v772 = vsel %vm676, 1, 0
      %v773 = vsel %vm677, 1, 0
      %v774 = vsel %vm678, 1, 0
      %v775 = vsel %vm679, 1, 0
      %v776 = vsel %vm680, 1, 0
      %v777 = vsel %vm681, 1, 0
      %v778 = vsel %vm682, 1, 0
      %v779 = vsel %vm683, 1, 0
      %v780 = vsel %vm684, 1, 0
      %v781 = vsel %vm685, 1, 0
      %v782 = vsel %vm686, 1, 0
      %v783 = vsel %vm687, 1, 0
      %v784 = vsel %vm688, 1, 0
      %v785 = vsel %vm689, 1, 0
      %v786 = vsel %vm690, 1, 0
      %v787 = vsel %vm691, 1, 0
      %v788 = vsel %vm692, 1, 0
      %v789 = vsel %vm693, 1, 0
      %v790 = vsel %vm694, 1, 0
      %v791 = vsel %vm695, 1, 0
      %v792 = vsel %vm696, 1, 0
      %v793 = vsel %vm697, 1, 0
      %v794 = vsel %vm698, 1, 0
      %v795 = vsel %vm699, 1, 0
      %v796 = vsel %vm700, 1, 0
      %v797 = vsel %vm701, 1, 0
      %v798 = vsel %vm702, 1, 0
      %v799 = vsel %vm703, 1, 0
      %v800 = vsel %vm704, 1, 0
      %v801 = vsel %vm705, 1, 0
      %v802 = vcvt.s32.f32 %v706
      %v803 = vcvt.s32.f32 %v707
      %v804 = vcvt.s32.f32 %v708
      %v805 = vcvt.s32.f32 %v709
      %v806 = vcvt.s32.f32 %v710
      %v807 = vcvt.s32.f32 %v711
      %v808 = vcvt.s32.f32 %v712
      %v809 = vcvt.s32.f32 %v713
      %v810 = vcvt.s32.f32 %v714
      %v811 = vcvt.s32.f32 %v715
      %v812 = vcvt.s32.f32 %v716
      %v813 = vcvt.s32.f32 %v717
      %v814 = vcvt.s32.f32 %v718
      %v815 = vcvt.s32.f32 %v719
      %v816 = vcvt.s32.f32 %v720
      %v817 = vcvt.s32.f32 %v721
      %v818 = vcvt.s32.f32 %v722
      %v819 = vcvt.s32.f32 %v723
      %v820 = vcvt.s32.f32 %v724
      %v821 = vcvt.s32.f32 %v725
      %v822 = vcvt.s32.f32 %v726
      %v823 = vcvt.s32.f32 %v727
      %v824 = vcvt.s32.f32 %v728
      %v825 = vcvt.s32.f32 %v729
      %v826 = vcvt.s32.f32 %v730
      %v827 = vcvt.s32.f32 %v731
      %v828 = vcvt.s32.f32 %v732
      %v829 = vcvt.s32.f32 %v733
      %v830 = vcvt.s32.f32 %v734
      %v831 = vcvt.s32.f32 %v735
      %v832 = vcvt.s32.f32 %v736
      %v833 = vcvt.s32.f32 %v737
      %v834 = vcvt.s32.f32 %v738
      %v835 = vcvt.s32.f32 %v739
      %v836 = vcvt.s32.f32 %v740
      %v837 = vcvt.s32.f32 %v741
      %v838 = vcvt.s32.f32 %v742
      %v839 = vcvt.s32.f32 %v743
      %v840 = vcvt.s32.f32 %v744
      %v841 = vcvt.s32.f32 %v745
      %v842 = vcvt.s32.f32 %v746
      %v843 = vcvt.s32.f32 %v747
      %v844 = vcvt.s32.f32 %v748
      %v845 = vcvt.s32.f32 %v749
      %v846 = vcvt.s32.f32 %v750
      %v847 = vcvt.s32.f32 %v751
      %v848 = vcvt.s32.f32 %v752
      %v849 = vcvt.s32.f32 %v753
      %v850 = vcvt.s32.f32 %v754
      %v851 = vcvt.s32.f32 %v755
      %v852 = vcvt.s32.f32 %v756
      %v853 = vcvt.s32.f32 %v757
      %v854 = vcvt.s32.f32 %v758
      %v855 = vcvt.s32.f32 %v759
      %v856 = vcvt.s32.f32 %v760
      %v857 = vcvt.s32.f32 %v761
      %v858 = vcvt.s32.f32 %v762
      %v859 = vcvt.s32.f32 %v763
      %v860 = vcvt.s32.f32 %v764
      %v861 = vcvt.s32.f32 %v765
      %v862 = vcvt.s32.f32 %v766
      %v863 = vcvt.s32.f32 %v767
      %v864 = vcvt.s32.f32 %v768
      %v865 = vcvt.s32.f32 %v769
      %v866 = vcvt.s32.f32 %v770
      %v867 = vcvt.s32.f32 %v771
      %v868 = vcvt.s32.f32 %v772
      %v869 = vcvt.s32.f32 %v773
      %v870 = vcvt.s32.f32 %v774
      %v871 = vcvt.s32.f32 %v775
      %v872 = vcvt.s32.f32 %v776
      %v873 = vcvt.s32.f32 %v777
      %v874 = vcvt.s32.f32 %v778
      %v875 = vcvt.s32.f32 %v779
      %v876 = vcvt.s32.f32 %v780
      %v877 = vcvt.s32.f32 %v781
      %v878 = vcvt.s32.f32 %v782
      %v879 = vcvt.s32.f32 %v783
      %v880 = vcvt.s32.f32 %v784
      %v881 = vcvt.s32.f32 %v785
      %v882 = vcvt.s32.f32 %v786
      %v883 = vcvt.s32.f32 %v787
      %v884 = vcvt.s32.f32 %v788
      %v885 = vcvt.s32.f32 %v789
      %v886 = vcvt.s32.f32 %v790
      %v887 = vcvt.s32.f32 %v791
      %v888 = vcvt.s32.f32 %v792
      %v889 = vcvt.s32.f32 %v793
      %v890 = vcvt.s32.f32 %v794
      %v891 = vcvt.s32.f32 %v795
      %v892 = vcvt.s32.f32 %v796
      %v893 = vcvt.s32.f32 %v797
      %v894 = vcvt.s32.f32 %v798
      %v895 = vcvt.s32.f32 %v799
      %v896 = vcvt.s32.f32 %v800
      %v897 = vcvt.s32.f32 %v801
      %v898 = vpack.c.bf16 %v803, %v802
      %v899 = vpack.c.bf16 %v805, %v804
      %v900 = vpack.c.bf16 %v807, %v806
      %v901 = vpack.c.bf16 %v809, %v808
      %v902 = vpack.c.bf16 %v811, %v810
      %v903 = vpack.c.bf16 %v813, %v812
      %v904 = vpack.c.bf16 %v815, %v814
      %v905 = vpack.c.bf16 %v817, %v816
      %v906 = vpack.c.bf16 %v819, %v818
      %v907 = vpack.c.bf16 %v821, %v820
      %v908 = vpack.c.bf16 %v823, %v822
      %v909 = vpack.c.bf16 %v825, %v824
      %v910 = vpack.c.bf16 %v827, %v826
      %v911 = vpack.c.bf16 %v829, %v828
      %v912 = vpack.c.bf16 %v831, %v830
      %v913 = vpack.c.bf16 %v833, %v832
      %v914 = vpack.c.bf16 %v835, %v834
      %v915 = vpack.c.bf16 %v837, %v836
      %v916 = vpack.c.bf16 %v839, %v838
      %v917 = vpack.c.bf16 %v841, %v840
      %v918 = vpack.c.bf16 %v843, %v842
      %v919 = vpack.c.bf16 %v845, %v844
      %v920 = vpack.c.bf16 %v847, %v846
      %v921 = vpack.c.bf16 %v849, %v848
      %v922 = vpack.c.bf16 %v851, %v850
      %v923 = vpack.c.bf16 %v853, %v852
      %v924 = vpack.c.bf16 %v855, %v854
      %v925 = vpack.c.bf16 %v857, %v856
      %v926 = vpack.c.bf16 %v859, %v858
      %v927 = vpack.c.bf16 %v861, %v860
      %v928 = vpack.c.bf16 %v863, %v862
      %v929 = vpack.c.bf16 %v865, %v864
      %v930 = vpack.c.bf16 %v867, %v866
      %v931 = vpack.c.bf16 %v869, %v868
      %v932 = vpack.c.bf16 %v871, %v870
      %v933 = vpack.c.bf16 %v873, %v872
      %v934 = vpack.c.bf16 %v875, %v874
      %v935 = vpack.c.bf16 %v877, %v876
      %v936 = vpack.c.bf16 %v879, %v878
      %v937 = vpack.c.bf16 %v881, %v880
      %v938 = vpack.c.bf16 %v883, %v882
      %v939 = vpack.c.bf16 %v885, %v884
      %v940 = vpack.c.bf16 %v887, %v886
      %v941 = vpack.c.bf16 %v889, %v888
      %v942 = vpack.c.bf16 %v891, %v890
      %v943 = vpack.c.bf16 %v893, %v892
      %v944 = vpack.c.bf16 %v895, %v894
      %v945 = vpack.c.bf16 %v897, %v896
      %v946 = vlaneseq
      %v947 = vshrl.u32 %v946, 7
      %v948 = vsub.s32 1, %v947
      %v949 = vrot.slane %v500, %v948
      %vm950 = vcmp.eq.s32.totalorder %v510, %v949
      %vm951 = vcmp.eq.s32.totalorder %v511, %v949
      %vm952 = vcmp.eq.s32.totalorder %v512, %v949
      %vm953 = vcmp.eq.s32.totalorder %v513, %v949
      %vm954 = vcmp.eq.s32.totalorder %v514, %v949
      %vm955 = vcmp.eq.s32.totalorder %v515, %v949
      %vm956 = vcmp.eq.s32.totalorder %v516, %v949
      %vm957 = vcmp.eq.s32.totalorder %v517, %v949
      %vm958 = vcmp.eq.s32.totalorder %v518, %v949
      %vm959 = vcmp.eq.s32.totalorder %v519, %v949
      %vm960 = vcmp.eq.s32.totalorder %v520, %v949
      %vm961 = vcmp.eq.s32.totalorder %v521, %v949
      %vm962 = vcmp.eq.s32.totalorder %v522, %v949
      %vm963 = vcmp.eq.s32.totalorder %v523, %v949
      %vm964 = vcmp.eq.s32.totalorder %v524, %v949
      %vm965 = vcmp.eq.s32.totalorder %v525, %v949
      %vm966 = vcmp.eq.s32.totalorder %v526, %v949
      %vm967 = vcmp.eq.s32.totalorder %v527, %v949
      %vm968 = vcmp.eq.s32.totalorder %v528, %v949
      %vm969 = vcmp.eq.s32.totalorder %v529, %v949
      %vm970 = vcmp.eq.s32.totalorder %v530, %v949
      %vm971 = vcmp.eq.s32.totalorder %v531, %v949
      %vm972 = vcmp.eq.s32.totalorder %v532, %v949
      %vm973 = vcmp.eq.s32.totalorder %v533, %v949
      %vm974 = vcmp.eq.s32.totalorder %v534, %v949
      %vm975 = vcmp.eq.s32.totalorder %v535, %v949
      %vm976 = vcmp.eq.s32.totalorder %v536, %v949
      %vm977 = vcmp.eq.s32.totalorder %v537, %v949
      %vm978 = vcmp.eq.s32.totalorder %v538, %v949
      %vm979 = vcmp.eq.s32.totalorder %v539, %v949
      %vm980 = vcmp.eq.s32.totalorder %v540, %v949
      %vm981 = vcmp.eq.s32.totalorder %v541, %v949
      %vm982 = vcmp.eq.s32.totalorder %v542, %v949
      %vm983 = vcmp.eq.s32.totalorder %v543, %v949
      %vm984 = vcmp.eq.s32.totalorder %v544, %v949
      %vm985 = vcmp.eq.s32.totalorder %v545, %v949
      %vm986 = vcmp.eq.s32.totalorder %v546, %v949
      %vm987 = vcmp.eq.s32.totalorder %v547, %v949
      %vm988 = vcmp.eq.s32.totalorder %v548, %v949
      %vm989 = vcmp.eq.s32.totalorder %v549, %v949
      %vm990 = vcmp.eq.s32.totalorder %v550, %v949
      %vm991 = vcmp.eq.s32.totalorder %v551, %v949
      %vm992 = vcmp.eq.s32.totalorder %v552, %v949
      %vm993 = vcmp.eq.s32.totalorder %v553, %v949
      %vm994 = vcmp.eq.s32.totalorder %v554, %v949
      %vm995 = vcmp.eq.s32.totalorder %v555, %v949
      %vm996 = vcmp.eq.s32.totalorder %v556, %v949
      %vm997 = vcmp.eq.s32.totalorder %v557, %v949
      %vm998 = vcmp.eq.s32.totalorder %v558, %v949
      %vm999 = vcmp.eq.s32.totalorder %v559, %v949
      %vm1000 = vcmp.eq.s32.totalorder %v560, %v949
      %vm1001 = vcmp.eq.s32.totalorder %v561, %v949
      %vm1002 = vcmp.eq.s32.totalorder %v562, %v949
      %vm1003 = vcmp.eq.s32.totalorder %v563, %v949
      %vm1004 = vcmp.eq.s32.totalorder %v564, %v949
      %vm1005 = vcmp.eq.s32.totalorder %v565, %v949
      %vm1006 = vcmp.eq.s32.totalorder %v566, %v949
      %vm1007 = vcmp.eq.s32.totalorder %v567, %v949
      %vm1008 = vcmp.eq.s32.totalorder %v568, %v949
      %vm1009 = vcmp.eq.s32.totalorder %v569, %v949
      %vm1010 = vcmp.eq.s32.totalorder %v570, %v949
      %vm1011 = vcmp.eq.s32.totalorder %v571, %v949
      %vm1012 = vcmp.eq.s32.totalorder %v572, %v949
      %vm1013 = vcmp.eq.s32.totalorder %v573, %v949
      %vm1014 = vcmp.eq.s32.totalorder %v574, %v949
      %vm1015 = vcmp.eq.s32.totalorder %v575, %v949
      %vm1016 = vcmp.eq.s32.totalorder %v576, %v949
      %vm1017 = vcmp.eq.s32.totalorder %v577, %v949
      %vm1018 = vcmp.eq.s32.totalorder %v578, %v949
      %vm1019 = vcmp.eq.s32.totalorder %v579, %v949
      %vm1020 = vcmp.eq.s32.totalorder %v580, %v949
      %vm1021 = vcmp.eq.s32.totalorder %v581, %v949
      %vm1022 = vcmp.eq.s32.totalorder %v582, %v949
      %vm1023 = vcmp.eq.s32.totalorder %v583, %v949
      %vm1024 = vcmp.eq.s32.totalorder %v584, %v949
      %vm1025 = vcmp.eq.s32.totalorder %v585, %v949
      %vm1026 = vcmp.eq.s32.totalorder %v586, %v949
      %vm1027 = vcmp.eq.s32.totalorder %v587, %v949
      %vm1028 = vcmp.eq.s32.totalorder %v588, %v949
      %vm1029 = vcmp.eq.s32.totalorder %v589, %v949
      %vm1030 = vcmp.eq.s32.totalorder %v590, %v949
      %vm1031 = vcmp.eq.s32.totalorder %v591, %v949
      %vm1032 = vcmp.eq.s32.totalorder %v592, %v949
      %vm1033 = vcmp.eq.s32.totalorder %v593, %v949
      %vm1034 = vcmp.eq.s32.totalorder %v594, %v949
      %vm1035 = vcmp.eq.s32.totalorder %v595, %v949
      %vm1036 = vcmp.eq.s32.totalorder %v596, %v949
      %vm1037 = vcmp.eq.s32.totalorder %v597, %v949
      %vm1038 = vcmp.eq.s32.totalorder %v598, %v949
      %vm1039 = vcmp.eq.s32.totalorder %v599, %v949
      %vm1040 = vcmp.eq.s32.totalorder %v600, %v949
      %vm1041 = vcmp.eq.s32.totalorder %v601, %v949
      %vm1042 = vcmp.eq.s32.totalorder %v602, %v949
      %vm1043 = vcmp.eq.s32.totalorder %v603, %v949
      %vm1044 = vcmp.eq.s32.totalorder %v604, %v949
      %vm1045 = vcmp.eq.s32.totalorder %v605, %v949
      %v1046 = vsel %vm950, 1, 0
      %v1047 = vsel %vm951, 1, 0
      %v1048 = vsel %vm952, 1, 0
      %v1049 = vsel %vm953, 1, 0
      %v1050 = vsel %vm954, 1, 0
      %v1051 = vsel %vm955, 1, 0
      %v1052 = vsel %vm956, 1, 0
      %v1053 = vsel %vm957, 1, 0
      %v1054 = vsel %vm958, 1, 0
      %v1055 = vsel %vm959, 1, 0
      %v1056 = vsel %vm960, 1, 0
      %v1057 = vsel %vm961, 1, 0
      %v1058 = vsel %vm962, 1, 0
      %v1059 = vsel %vm963, 1, 0
      %v1060 = vsel %vm964, 1, 0
      %v1061 = vsel %vm965, 1, 0
      %v1062 = vsel %vm966, 1, 0
      %v1063 = vsel %vm967, 1, 0
      %v1064 = vsel %vm968, 1, 0
      %v1065 = vsel %vm969, 1, 0
      %v1066 = vsel %vm970, 1, 0
      %v1067 = vsel %vm971, 1, 0
      %v1068 = vsel %vm972, 1, 0
      %v1069 = vsel %vm973, 1, 0
      %v1070 = vsel %vm974, 1, 0
      %v1071 = vsel %vm975, 1, 0
      %v1072 = vsel %vm976, 1, 0
      %v1073 = vsel %vm977, 1, 0
      %v1074 = vsel %vm978, 1, 0
      %v1075 = vsel %vm979, 1, 0
      %v1076 = vsel %vm980, 1, 0
      %v1077 = vsel %vm981, 1, 0
      %v1078 = vsel %vm982, 1, 0
      %v1079 = vsel %vm983, 1, 0
      %v1080 = vsel %vm984, 1, 0
      %v1081 = vsel %vm985, 1, 0
      %v1082 = vsel %vm986, 1, 0
      %v1083 = vsel %vm987, 1, 0
      %v1084 = vsel %vm988, 1, 0
      %v1085 = vsel %vm989, 1, 0
      %v1086 = vsel %vm990, 1, 0
      %v1087 = vsel %vm991, 1, 0
      %v1088 = vsel %vm992, 1, 0
      %v1089 = vsel %vm993, 1, 0
      %v1090 = vsel %vm994, 1, 0
      %v1091 = vsel %vm995, 1, 0
      %v1092 = vsel %vm996, 1, 0
      %v1093 = vsel %vm997, 1, 0
      %v1094 = vsel %vm998, 1, 0
      %v1095 = vsel %vm999, 1, 0
      %v1096 = vsel %vm1000, 1, 0
      %v1097 = vsel %vm1001, 1, 0
      %v1098 = vsel %vm1002, 1, 0
      %v1099 = vsel %vm1003, 1, 0
      %v1100 = vsel %vm1004, 1, 0
      %v1101 = vsel %vm1005, 1, 0
      %v1102 = vsel %vm1006, 1, 0
      %v1103 = vsel %vm1007, 1, 0
      %v1104 = vsel %vm1008, 1, 0
      %v1105 = vsel %vm1009, 1, 0
      %v1106 = vsel %vm1010, 1, 0
      %v1107 = vsel %vm1011, 1, 0
      %v1108 = vsel %vm1012, 1, 0
      %v1109 = vsel %vm1013, 1, 0
      %v1110 = vsel %vm1014, 1, 0
      %v1111 = vsel %vm1015, 1, 0
      %v1112 = vsel %vm1016, 1, 0
      %v1113 = vsel %vm1017, 1, 0
      %v1114 = vsel %vm1018, 1, 0
      %v1115 = vsel %vm1019, 1, 0
      %v1116 = vsel %vm1020, 1, 0
      %v1117 = vsel %vm1021, 1, 0
      %v1118 = vsel %vm1022, 1, 0
      %v1119 = vsel %vm1023, 1, 0
      %v1120 = vsel %vm1024, 1, 0
      %v1121 = vsel %vm1025, 1, 0
      %v1122 = vsel %vm1026, 1, 0
      %v1123 = vsel %vm1027, 1, 0
      %v1124 = vsel %vm1028, 1, 0
      %v1125 = vsel %vm1029, 1, 0
      %v1126 = vsel %vm1030, 1, 0
      %v1127 = vsel %vm1031, 1, 0
      %v1128 = vsel %vm1032, 1, 0
      %v1129 = vsel %vm1033, 1, 0
      %v1130 = vsel %vm1034, 1, 0
      %v1131 = vsel %vm1035, 1, 0
      %v1132 = vsel %vm1036, 1, 0
      %v1133 = vsel %vm1037, 1, 0
      %v1134 = vsel %vm1038, 1, 0
      %v1135 = vsel %vm1039, 1, 0
      %v1136 = vsel %vm1040, 1, 0
      %v1137 = vsel %vm1041, 1, 0
      %v1138 = vsel %vm1042, 1, 0
      %v1139 = vsel %vm1043, 1, 0
      %v1140 = vsel %vm1044, 1, 0
      %v1141 = vsel %vm1045, 1, 0
      %v1142 = vcvt.s32.f32 %v1046
      %v1143 = vcvt.s32.f32 %v1047
      %v1144 = vcvt.s32.f32 %v1048
      %v1145 = vcvt.s32.f32 %v1049
      %v1146 = vcvt.s32.f32 %v1050
      %v1147 = vcvt.s32.f32 %v1051
      %v1148 = vcvt.s32.f32 %v1052
      %v1149 = vcvt.s32.f32 %v1053
      %v1150 = vcvt.s32.f32 %v1054
      %v1151 = vcvt.s32.f32 %v1055
      %v1152 = vcvt.s32.f32 %v1056
      %v1153 = vcvt.s32.f32 %v1057
      %v1154 = vcvt.s32.f32 %v1058
      %v1155 = vcvt.s32.f32 %v1059
      %v1156 = vcvt.s32.f32 %v1060
      %v1157 = vcvt.s32.f32 %v1061
      %v1158 = vcvt.s32.f32 %v1062
      %v1159 = vcvt.s32.f32 %v1063
      %v1160 = vcvt.s32.f32 %v1064
      %v1161 = vcvt.s32.f32 %v1065
      %v1162 = vcvt.s32.f32 %v1066
      %v1163 = vcvt.s32.f32 %v1067
      %v1164 = vcvt.s32.f32 %v1068
      %v1165 = vcvt.s32.f32 %v1069
      %v1166 = vcvt.s32.f32 %v1070
      %v1167 = vcvt.s32.f32 %v1071
      %v1168 = vcvt.s32.f32 %v1072
      %v1169 = vcvt.s32.f32 %v1073
      %v1170 = vcvt.s32.f32 %v1074
      %v1171 = vcvt.s32.f32 %v1075
      %v1172 = vcvt.s32.f32 %v1076
      %v1173 = vcvt.s32.f32 %v1077
      %v1174 = vcvt.s32.f32 %v1078
      %v1175 = vcvt.s32.f32 %v1079
      %v1176 = vcvt.s32.f32 %v1080
      %v1177 = vcvt.s32.f32 %v1081
      %v1178 = vcvt.s32.f32 %v1082
      %v1179 = vcvt.s32.f32 %v1083
      %v1180 = vcvt.s32.f32 %v1084
      %v1181 = vcvt.s32.f32 %v1085
      %v1182 = vcvt.s32.f32 %v1086
      %v1183 = vcvt.s32.f32 %v1087
      %v1184 = vcvt.s32.f32 %v1088
      %v1185 = vcvt.s32.f32 %v1089
      %v1186 = vcvt.s32.f32 %v1090
      %v1187 = vcvt.s32.f32 %v1091
      %v1188 = vcvt.s32.f32 %v1092
      %v1189 = vcvt.s32.f32 %v1093
      %v1190 = vcvt.s32.f32 %v1094
      %v1191 = vcvt.s32.f32 %v1095
      %v1192 = vcvt.s32.f32 %v1096
      %v1193 = vcvt.s32.f32 %v1097
      %v1194 = vcvt.s32.f32 %v1098
      %v1195 = vcvt.s32.f32 %v1099
      %v1196 = vcvt.s32.f32 %v1100
      %v1197 = vcvt.s32.f32 %v1101
      %v1198 = vcvt.s32.f32 %v1102
      %v1199 = vcvt.s32.f32 %v1103
      %v1200 = vcvt.s32.f32 %v1104
      %v1201 = vcvt.s32.f32 %v1105
      %v1202 = vcvt.s32.f32 %v1106
      %v1203 = vcvt.s32.f32 %v1107
      %v1204 = vcvt.s32.f32 %v1108
      %v1205 = vcvt.s32.f32 %v1109
      %v1206 = vcvt.s32.f32 %v1110
      %v1207 = vcvt.s32.f32 %v1111
      %v1208 = vcvt.s32.f32 %v1112
      %v1209 = vcvt.s32.f32 %v1113
      %v1210 = vcvt.s32.f32 %v1114
      %v1211 = vcvt.s32.f32 %v1115
      %v1212 = vcvt.s32.f32 %v1116
      %v1213 = vcvt.s32.f32 %v1117
      %v1214 = vcvt.s32.f32 %v1118
      %v1215 = vcvt.s32.f32 %v1119
      %v1216 = vcvt.s32.f32 %v1120
      %v1217 = vcvt.s32.f32 %v1121
      %v1218 = vcvt.s32.f32 %v1122
      %v1219 = vcvt.s32.f32 %v1123
      %v1220 = vcvt.s32.f32 %v1124
      %v1221 = vcvt.s32.f32 %v1125
      %v1222 = vcvt.s32.f32 %v1126
      %v1223 = vcvt.s32.f32 %v1127
      %v1224 = vcvt.s32.f32 %v1128
      %v1225 = vcvt.s32.f32 %v1129
      %v1226 = vcvt.s32.f32 %v1130
      %v1227 = vcvt.s32.f32 %v1131
      %v1228 = vcvt.s32.f32 %v1132
      %v1229 = vcvt.s32.f32 %v1133
      %v1230 = vcvt.s32.f32 %v1134
      %v1231 = vcvt.s32.f32 %v1135
      %v1232 = vcvt.s32.f32 %v1136
      %v1233 = vcvt.s32.f32 %v1137
      %v1234 = vcvt.s32.f32 %v1138
      %v1235 = vcvt.s32.f32 %v1139
      %v1236 = vcvt.s32.f32 %v1140
      %v1237 = vcvt.s32.f32 %v1141
      %v1238 = vpack.c.bf16 %v1143, %v1142
      %v1239 = vpack.c.bf16 %v1145, %v1144
      %v1240 = vpack.c.bf16 %v1147, %v1146
      %v1241 = vpack.c.bf16 %v1149, %v1148
      %v1242 = vpack.c.bf16 %v1151, %v1150
      %v1243 = vpack.c.bf16 %v1153, %v1152
      %v1244 = vpack.c.bf16 %v1155, %v1154
      %v1245 = vpack.c.bf16 %v1157, %v1156
      %v1246 = vpack.c.bf16 %v1159, %v1158
      %v1247 = vpack.c.bf16 %v1161, %v1160
      %v1248 = vpack.c.bf16 %v1163, %v1162
      %v1249 = vpack.c.bf16 %v1165, %v1164
      %v1250 = vpack.c.bf16 %v1167, %v1166
      %v1251 = vpack.c.bf16 %v1169, %v1168
      %v1252 = vpack.c.bf16 %v1171, %v1170
      %v1253 = vpack.c.bf16 %v1173, %v1172
      %v1254 = vpack.c.bf16 %v1175, %v1174
      %v1255 = vpack.c.bf16 %v1177, %v1176
      %v1256 = vpack.c.bf16 %v1179, %v1178
      %v1257 = vpack.c.bf16 %v1181, %v1180
      %v1258 = vpack.c.bf16 %v1183, %v1182
      %v1259 = vpack.c.bf16 %v1185, %v1184
      %v1260 = vpack.c.bf16 %v1187, %v1186
      %v1261 = vpack.c.bf16 %v1189, %v1188
      %v1262 = vpack.c.bf16 %v1191, %v1190
      %v1263 = vpack.c.bf16 %v1193, %v1192
      %v1264 = vpack.c.bf16 %v1195, %v1194
      %v1265 = vpack.c.bf16 %v1197, %v1196
      %v1266 = vpack.c.bf16 %v1199, %v1198
      %v1267 = vpack.c.bf16 %v1201, %v1200
      %v1268 = vpack.c.bf16 %v1203, %v1202
      %v1269 = vpack.c.bf16 %v1205, %v1204
      %v1270 = vpack.c.bf16 %v1207, %v1206
      %v1271 = vpack.c.bf16 %v1209, %v1208
      %v1272 = vpack.c.bf16 %v1211, %v1210
      %v1273 = vpack.c.bf16 %v1213, %v1212
      %v1274 = vpack.c.bf16 %v1215, %v1214
      %v1275 = vpack.c.bf16 %v1217, %v1216
      %v1276 = vpack.c.bf16 %v1219, %v1218
      %v1277 = vpack.c.bf16 %v1221, %v1220
      %v1278 = vpack.c.bf16 %v1223, %v1222
      %v1279 = vpack.c.bf16 %v1225, %v1224
      %v1280 = vpack.c.bf16 %v1227, %v1226
      %v1281 = vpack.c.bf16 %v1229, %v1228
      %v1282 = vpack.c.bf16 %v1231, %v1230
      %v1283 = vpack.c.bf16 %v1233, %v1232
      %v1284 = vpack.c.bf16 %v1235, %v1234
      %v1285 = vpack.c.bf16 %v1237, %v1236
      %v1294 = vunpack.c.l.b16 %v501
      %v1295 = vunpack.c.l.b16 %v502
      %v1296 = vunpack.c.l.b16 %v503
      %v1297 = vunpack.c.l.b16 %v504
      %v1298 = vunpack.c.l.b16 %v505
      %v1299 = vunpack.c.l.b16 %v506
      %v1300 = vunpack.c.l.b16 %v507
      %v1301 = vunpack.c.l.b16 %v508
      %v1302 = vpack.c.b16 %v1295, %v1294
      %v1303 = vpack.c.b16 %v1297, %v1296
      %v1304 = vpack.c.b16 %v1299, %v1298
      %v1305 = vpack.c.b16 %v1301, %v1300
      %vm1310 = vcmask 523264
      %v1312 = vsel %vm1310, %v1238, 0
      %v1315 = vsel %vm1310, %v1239, 0
      %v1318 = vsel %vm1310, %v1240, 0
      %v1321 = vsel %vm1310, %v1241, 0
      %v1324 = vsel %vm1310, %v1242, 0
      %v1327 = vsel %vm1310, %v1243, 0
      %v1330 = vsel %vm1310, %v1244, 0
      %v1333 = vsel %vm1310, %v1245, 0
      %v1336 = vsel %vm1310, %v1246, 0
      %v1339 = vsel %vm1310, %v1247, 0
      %v1342 = vsel %vm1310, %v1248, 0
      %v1345 = vsel %vm1310, %v1249, 0
      %v1348 = vsel %vm1310, %v1250, 0
      %v1351 = vsel %vm1310, %v1251, 0
      %v1354 = vsel %vm1310, %v1252, 0
      %v1357 = vsel %vm1310, %v1253, 0
      %v1360 = vsel %vm1310, %v1254, 0
      %v1363 = vsel %vm1310, %v1255, 0
      %v1366 = vsel %vm1310, %v1256, 0
      %v1369 = vsel %vm1310, %v1257, 0
      %v1372 = vsel %vm1310, %v1258, 0
      %v1375 = vsel %vm1310, %v1259, 0
      %v1378 = vsel %vm1310, %v1260, 0
      %v1381 = vsel %vm1310, %v1261, 0
      %v1384 = vsel %vm1310, %v1262, 0
      %v1387 = vsel %vm1310, %v1263, 0
      %v1390 = vsel %vm1310, %v1264, 0
      %v1393 = vsel %vm1310, %v1265, 0
      %v1396 = vsel %vm1310, %v1266, 0
      %v1399 = vsel %vm1310, %v1267, 0
      %v1402 = vsel %vm1310, %v1268, 0
      %v1405 = vsel %vm1310, %v1269, 0
      %v1408 = vsel %vm1310, %v1270, 0
      %v1411 = vsel %vm1310, %v1271, 0
      %v1414 = vsel %vm1310, %v1272, 0
      %v1417 = vsel %vm1310, %v1273, 0
      %v1420 = vsel %vm1310, %v1274, 0
      %v1423 = vsel %vm1310, %v1275, 0
      %v1426 = vsel %vm1310, %v1276, 0
      %v1429 = vsel %vm1310, %v1277, 0
      %v1432 = vsel %vm1310, %v1278, 0
      %v1435 = vsel %vm1310, %v1279, 0
      %v1438 = vsel %vm1310, %v1280, 0
      %v1441 = vsel %vm1310, %v1281, 0
      %v1444 = vsel %vm1310, %v1282, 0
      %v1447 = vsel %vm1310, %v1283, 0
      %v1450 = vsel %vm1310, %v1284, 0
      %v1453 = vsel %vm1310, %v1285, 0
      %1455 = vmatprep.subr.bf16.mxu0 0
      %1456 = vmatpush1.bf16.msra.mxu0 0
      %1457 = vmatprep.subr.bf16.mxu0 0
      %1458 = vmatpush1.bf16.msra.mxu0 0
      %1459 = vmatprep.subr.bf16.mxu0 0
      %1460 = vmatpush1.bf16.msra.mxu0 0
      %1461 = vmatprep.subr.bf16.mxu0 0
      %1462 = vmatpush1.bf16.msra.mxu0 0
      %1463 = vmatprep.subr.bf16.mxu0 0
      %1464 = vmatpush1.bf16.msra.mxu0 %v1305
      %1465 = vmatprep.subr.bf16.mxu0 0
      %1466 = vmatpush1.bf16.msra.mxu0 %v1304
      %1467 = vmatprep.subr.bf16.mxu0 0
      %1468 = vmatpush1.bf16.msra.mxu0 %v1303
      %1469 = vmatprep.subr.bf16.mxu0 0
      %1470 = vmatpush1.bf16.msra.mxu0 %v1302
      %1471 = vmatprep.subr.bf16.mxu0 0
      %1472 = vmatpush2.bf16.msra.mxu0 0
      %1473 = vmatprep.subr.bf16.mxu0 0
      %1474 = vmatpush2.bf16.msra.mxu0 0
      %1475 = vmatprep.subr.bf16.mxu0 0
      %1476 = vmatpush2.bf16.msra.mxu0 0
      %1477 = vmatprep.subr.bf16.mxu0 0
      %1478 = vmatpush2.bf16.msra.mxu0 0
      %1479 = vmatprep.subr.bf16.mxu0 0
      %1480 = vmatpush2.bf16.msra.mxu0 0
      %1481 = vmatprep.subr.bf16.mxu0 0
      %1482 = vmatpush2.bf16.msra.mxu0 0
      %1483 = vmatprep.subr.bf16.mxu0 0
      %1484 = vmatpush2.bf16.msra.mxu0 0
      %1485 = vmatprep.subr.bf16.mxu0 0
      %1486 = vmatpush2.bf16.msra.mxu0 0
      %1487 = vmatprep.mubr.bf16.mxu0 0
      %1488 = vmatmul.mubr.bf16.gmra.mxu0 %v1312
      %v1489 = vpop.f32.mrf.mxu0
      %v1490 = vadd.f32 0.0, %v1489
      %v1491 = vpop.f32.mrf.mxu0
      %v1492 = vpop.f32.mrf.mxu0
      %v1493 = vadd.f32 0.0, %v1492
      %v1494 = vpop.f32.mrf.mxu0
      %1495 = vmatprep.mubr.bf16.mxu0 0
      %1496 = vmatmul.mubr.bf16.gmra.mxu0 %v1315
      %v1497 = vpop.f32.mrf.mxu0
      %v1498 = vadd.f32 0.0, %v1497
      %v1499 = vpop.f32.mrf.mxu0
      %v1500 = vpop.f32.mrf.mxu0
      %v1501 = vadd.f32 0.0, %v1500
      %v1502 = vpop.f32.mrf.mxu0
      %1503 = vmatprep.mubr.bf16.mxu0 0
      %1504 = vmatmul.mubr.bf16.gmra.mxu0 %v1318
      %v1505 = vpop.f32.mrf.mxu0
      %v1506 = vadd.f32 0.0, %v1505
      %v1507 = vpop.f32.mrf.mxu0
      %v1508 = vpop.f32.mrf.mxu0
      %v1509 = vadd.f32 0.0, %v1508
      %v1510 = vpop.f32.mrf.mxu0
      %1511 = vmatprep.mubr.bf16.mxu0 0
      %1512 = vmatmul.mubr.bf16.gmra.mxu0 %v1321
      %v1513 = vpop.f32.mrf.mxu0
      %v1514 = vadd.f32 0.0, %v1513
      %v1515 = vpop.f32.mrf.mxu0
      %v1516 = vpop.f32.mrf.mxu0
      %v1517 = vadd.f32 0.0, %v1516
      %v1518 = vpop.f32.mrf.mxu0
      %1519 = vmatprep.mubr.bf16.mxu0 0
      %1520 = vmatmul.mubr.bf16.gmra.mxu0 %v1324
      %v1521 = vpop.f32.mrf.mxu0
      %v1522 = vadd.f32 0.0, %v1521
      %v1523 = vpop.f32.mrf.mxu0
      %v1524 = vpop.f32.mrf.mxu0
      %v1525 = vadd.f32 0.0, %v1524
      %v1526 = vpop.f32.mrf.mxu0
      %1527 = vmatprep.mubr.bf16.mxu0 0
      %1528 = vmatmul.mubr.bf16.gmra.mxu0 %v1327
      %v1529 = vpop.f32.mrf.mxu0
      %v1530 = vadd.f32 0.0, %v1529
      %v1531 = vpop.f32.mrf.mxu0
      %v1532 = vpop.f32.mrf.mxu0
      %v1533 = vadd.f32 0.0, %v1532
      %v1534 = vpop.f32.mrf.mxu0
      %1535 = vmatprep.mubr.bf16.mxu0 0
      %1536 = vmatmul.mubr.bf16.gmra.mxu0 %v1330
      %v1537 = vpop.f32.mrf.mxu0
      %v1538 = vadd.f32 0.0, %v1537
      %v1539 = vpop.f32.mrf.mxu0
      %v1540 = vpop.f32.mrf.mxu0
      %v1541 = vadd.f32 0.0, %v1540
      %v1542 = vpop.f32.mrf.mxu0
      %1543 = vmatprep.mubr.bf16.mxu0 0
      %1544 = vmatmul.mubr.bf16.gmra.mxu0 %v1333
      %v1545 = vpop.f32.mrf.mxu0
      %v1546 = vadd.f32 0.0, %v1545
      %v1547 = vpop.f32.mrf.mxu0
      %v1548 = vpop.f32.mrf.mxu0
      %v1549 = vadd.f32 0.0, %v1548
      %v1550 = vpop.f32.mrf.mxu0
      %1551 = vmatprep.mubr.bf16.mxu0 0
      %1552 = vmatmul.mubr.bf16.gmra.mxu0 %v1336
      %v1553 = vpop.f32.mrf.mxu0
      %v1554 = vadd.f32 0.0, %v1553
      %v1555 = vpop.f32.mrf.mxu0
      %v1556 = vpop.f32.mrf.mxu0
      %v1557 = vadd.f32 0.0, %v1556
      %v1558 = vpop.f32.mrf.mxu0
      %1559 = vmatprep.mubr.bf16.mxu0 0
      %1560 = vmatmul.mubr.bf16.gmra.mxu0 %v1339
      %v1561 = vpop.f32.mrf.mxu0
      %v1562 = vadd.f32 0.0, %v1561
      %v1563 = vpop.f32.mrf.mxu0
      %v1564 = vpop.f32.mrf.mxu0
      %v1565 = vadd.f32 0.0, %v1564
      %v1566 = vpop.f32.mrf.mxu0
      %1567 = vmatprep.mubr.bf16.mxu0 0
      %1568 = vmatmul.mubr.bf16.gmra.mxu0 %v1342
      %v1569 = vpop.f32.mrf.mxu0
      %v1570 = vadd.f32 0.0, %v1569
      %v1571 = vpop.f32.mrf.mxu0
      %v1572 = vpop.f32.mrf.mxu0
      %v1573 = vadd.f32 0.0, %v1572
      %v1574 = vpop.f32.mrf.mxu0
      %1575 = vmatprep.mubr.bf16.mxu0 0
      %1576 = vmatmul.mubr.bf16.gmra.mxu0 %v1345
      %v1577 = vpop.f32.mrf.mxu0
      %v1578 = vadd.f32 0.0, %v1577
      %v1579 = vpop.f32.mrf.mxu0
      %v1580 = vpop.f32.mrf.mxu0
      %v1581 = vadd.f32 0.0, %v1580
      %v1582 = vpop.f32.mrf.mxu0
      %1583 = vmatprep.mubr.bf16.mxu0 0
      %1584 = vmatmul.mubr.bf16.gmra.mxu0 %v1348
      %v1585 = vpop.f32.mrf.mxu0
      %v1586 = vadd.f32 0.0, %v1585
      %v1587 = vpop.f32.mrf.mxu0
      %v1588 = vpop.f32.mrf.mxu0
      %v1589 = vadd.f32 0.0, %v1588
      %v1590 = vpop.f32.mrf.mxu0
      %1591 = vmatprep.mubr.bf16.mxu0 0
      %1592 = vmatmul.mubr.bf16.gmra.mxu0 %v1351
      %v1593 = vpop.f32.mrf.mxu0
      %v1594 = vadd.f32 0.0, %v1593
      %v1595 = vpop.f32.mrf.mxu0
      %v1596 = vpop.f32.mrf.mxu0
      %v1597 = vadd.f32 0.0, %v1596
      %v1598 = vpop.f32.mrf.mxu0
      %1599 = vmatprep.mubr.bf16.mxu0 0
      %1600 = vmatmul.mubr.bf16.gmra.mxu0 %v1354
      %v1601 = vpop.f32.mrf.mxu0
      %v1602 = vadd.f32 0.0, %v1601
      %v1603 = vpop.f32.mrf.mxu0
      %v1604 = vpop.f32.mrf.mxu0
      %v1605 = vadd.f32 0.0, %v1604
      %v1606 = vpop.f32.mrf.mxu0
      %1607 = vmatprep.mubr.bf16.mxu0 0
      %1608 = vmatmul.mubr.bf16.gmra.mxu0 %v1357
      %v1609 = vpop.f32.mrf.mxu0
      %v1610 = vadd.f32 0.0, %v1609
      %v1611 = vpop.f32.mrf.mxu0
      %v1612 = vpop.f32.mrf.mxu0
      %v1613 = vadd.f32 0.0, %v1612
      %v1614 = vpop.f32.mrf.mxu0
      %1615 = vmatprep.mubr.bf16.mxu0 0
      %1616 = vmatmul.mubr.bf16.gmra.mxu0 %v1360
      %v1617 = vpop.f32.mrf.mxu0
      %v1618 = vadd.f32 0.0, %v1617
      %v1619 = vpop.f32.mrf.mxu0
      %v1620 = vpop.f32.mrf.mxu0
      %v1621 = vadd.f32 0.0, %v1620
      %v1622 = vpop.f32.mrf.mxu0
      %1623 = vmatprep.mubr.bf16.mxu0 0
      %1624 = vmatmul.mubr.bf16.gmra.mxu0 %v1363
      %v1625 = vpop.f32.mrf.mxu0
      %v1626 = vadd.f32 0.0, %v1625
      %v1627 = vpop.f32.mrf.mxu0
      %v1628 = vpop.f32.mrf.mxu0
      %v1629 = vadd.f32 0.0, %v1628
      %v1630 = vpop.f32.mrf.mxu0
      %1631 = vmatprep.mubr.bf16.mxu0 0
      %1632 = vmatmul.mubr.bf16.gmra.mxu0 %v1366
      %v1633 = vpop.f32.mrf.mxu0
      %v1634 = vadd.f32 0.0, %v1633
      %v1635 = vpop.f32.mrf.mxu0
      %v1636 = vpop.f32.mrf.mxu0
      %v1637 = vadd.f32 0.0, %v1636
      %v1638 = vpop.f32.mrf.mxu0
      %1639 = vmatprep.mubr.bf16.mxu0 0
      %1640 = vmatmul.mubr.bf16.gmra.mxu0 %v1369
      %v1641 = vpop.f32.mrf.mxu0
      %v1642 = vadd.f32 0.0, %v1641
      %v1643 = vpop.f32.mrf.mxu0
      %v1644 = vpop.f32.mrf.mxu0
      %v1645 = vadd.f32 0.0, %v1644
      %v1646 = vpop.f32.mrf.mxu0
      %1647 = vmatprep.mubr.bf16.mxu0 0
      %1648 = vmatmul.mubr.bf16.gmra.mxu0 %v1372
      %v1649 = vpop.f32.mrf.mxu0
      %v1650 = vadd.f32 0.0, %v1649
      %v1651 = vpop.f32.mrf.mxu0
      %v1652 = vpop.f32.mrf.mxu0
      %v1653 = vadd.f32 0.0, %v1652
      %v1654 = vpop.f32.mrf.mxu0
      %1655 = vmatprep.mubr.bf16.mxu0 0
      %1656 = vmatmul.mubr.bf16.gmra.mxu0 %v1375
      %v1657 = vpop.f32.mrf.mxu0
      %v1658 = vadd.f32 0.0, %v1657
      %v1659 = vpop.f32.mrf.mxu0
      %v1660 = vpop.f32.mrf.mxu0
      %v1661 = vadd.f32 0.0, %v1660
      %v1662 = vpop.f32.mrf.mxu0
      %1663 = vmatprep.mubr.bf16.mxu0 0
      %1664 = vmatmul.mubr.bf16.gmra.mxu0 %v1378
      %v1665 = vpop.f32.mrf.mxu0
      %v1666 = vadd.f32 0.0, %v1665
      %v1667 = vpop.f32.mrf.mxu0
      %v1668 = vpop.f32.mrf.mxu0
      %v1669 = vadd.f32 0.0, %v1668
      %v1670 = vpop.f32.mrf.mxu0
      %1671 = vmatprep.mubr.bf16.mxu0 0
      %1672 = vmatmul.mubr.bf16.gmra.mxu0 %v1381
      %v1673 = vpop.f32.mrf.mxu0
      %v1674 = vadd.f32 0.0, %v1673
      %v1675 = vpop.f32.mrf.mxu0
      %v1676 = vpop.f32.mrf.mxu0
      %v1677 = vadd.f32 0.0, %v1676
      %v1678 = vpop.f32.mrf.mxu0
      %1679 = vmatprep.mubr.bf16.mxu0 0
      %1680 = vmatmul.mubr.bf16.gmra.mxu0 %v1384
      %v1681 = vpop.f32.mrf.mxu0
      %v1682 = vadd.f32 0.0, %v1681
      %v1683 = vpop.f32.mrf.mxu0
      %v1684 = vpop.f32.mrf.mxu0
      %v1685 = vadd.f32 0.0, %v1684
      %v1686 = vpop.f32.mrf.mxu0
      %1687 = vmatprep.mubr.bf16.mxu0 0
      %1688 = vmatmul.mubr.bf16.gmra.mxu0 %v1387
      %v1689 = vpop.f32.mrf.mxu0
      %v1690 = vadd.f32 0.0, %v1689
      %v1691 = vpop.f32.mrf.mxu0
      %v1692 = vpop.f32.mrf.mxu0
      %v1693 = vadd.f32 0.0, %v1692
      %v1694 = vpop.f32.mrf.mxu0
      %1695 = vmatprep.mubr.bf16.mxu0 0
      %1696 = vmatmul.mubr.bf16.gmra.mxu0 %v1390
      %v1697 = vpop.f32.mrf.mxu0
      %v1698 = vadd.f32 0.0, %v1697
      %v1699 = vpop.f32.mrf.mxu0
      %v1700 = vpop.f32.mrf.mxu0
      %v1701 = vadd.f32 0.0, %v1700
      %v1702 = vpop.f32.mrf.mxu0
      %1703 = vmatprep.mubr.bf16.mxu0 0
      %1704 = vmatmul.mubr.bf16.gmra.mxu0 %v1393
      %v1705 = vpop.f32.mrf.mxu0
      %v1706 = vadd.f32 0.0, %v1705
      %v1707 = vpop.f32.mrf.mxu0
      %v1708 = vpop.f32.mrf.mxu0
      %v1709 = vadd.f32 0.0, %v1708
      %v1710 = vpop.f32.mrf.mxu0
      %1711 = vmatprep.mubr.bf16.mxu0 0
      %1712 = vmatmul.mubr.bf16.gmra.mxu0 %v1396
      %v1713 = vpop.f32.mrf.mxu0
      %v1714 = vadd.f32 0.0, %v1713
      %v1715 = vpop.f32.mrf.mxu0
      %v1716 = vpop.f32.mrf.mxu0
      %v1717 = vadd.f32 0.0, %v1716
      %v1718 = vpop.f32.mrf.mxu0
      %1719 = vmatprep.mubr.bf16.mxu0 0
      %1720 = vmatmul.mubr.bf16.gmra.mxu0 %v1399
      %v1721 = vpop.f32.mrf.mxu0
      %v1722 = vadd.f32 0.0, %v1721
      %v1723 = vpop.f32.mrf.mxu0
      %v1724 = vpop.f32.mrf.mxu0
      %v1725 = vadd.f32 0.0, %v1724
      %v1726 = vpop.f32.mrf.mxu0
      %1727 = vmatprep.mubr.bf16.mxu0 0
      %1728 = vmatmul.mubr.bf16.gmra.mxu0 %v1402
      %v1729 = vpop.f32.mrf.mxu0
      %v1730 = vadd.f32 0.0, %v1729
      %v1731 = vpop.f32.mrf.mxu0
      %v1732 = vpop.f32.mrf.mxu0
      %v1733 = vadd.f32 0.0, %v1732
      %v1734 = vpop.f32.mrf.mxu0
      %1735 = vmatprep.mubr.bf16.mxu0 0
      %1736 = vmatmul.mubr.bf16.gmra.mxu0 %v1405
      %v1737 = vpop.f32.mrf.mxu0
      %v1738 = vadd.f32 0.0, %v1737
      %v1739 = vpop.f32.mrf.mxu0
      %v1740 = vpop.f32.mrf.mxu0
      %v1741 = vadd.f32 0.0, %v1740
      %v1742 = vpop.f32.mrf.mxu0
      %1743 = vmatprep.mubr.bf16.mxu0 0
      %1744 = vmatmul.mubr.bf16.gmra.mxu0 %v1408
      %v1745 = vpop.f32.mrf.mxu0
      %v1746 = vadd.f32 0.0, %v1745
      %v1747 = vpop.f32.mrf.mxu0
      %v1748 = vpop.f32.mrf.mxu0
      %v1749 = vadd.f32 0.0, %v1748
      %v1750 = vpop.f32.mrf.mxu0
      %1751 = vmatprep.mubr.bf16.mxu0 0
      %1752 = vmatmul.mubr.bf16.gmra.mxu0 %v1411
      %v1753 = vpop.f32.mrf.mxu0
      %v1754 = vadd.f32 0.0, %v1753
      %v1755 = vpop.f32.mrf.mxu0
      %v1756 = vpop.f32.mrf.mxu0
      %v1757 = vadd.f32 0.0, %v1756
      %v1758 = vpop.f32.mrf.mxu0
      %1759 = vmatprep.mubr.bf16.mxu0 0
      %1760 = vmatmul.mubr.bf16.gmra.mxu0 %v1414
      %v1761 = vpop.f32.mrf.mxu0
      %v1762 = vadd.f32 0.0, %v1761
      %v1763 = vpop.f32.mrf.mxu0
      %v1764 = vpop.f32.mrf.mxu0
      %v1765 = vadd.f32 0.0, %v1764
      %v1766 = vpop.f32.mrf.mxu0
      %1767 = vmatprep.mubr.bf16.mxu0 0
      %1768 = vmatmul.mubr.bf16.gmra.mxu0 %v1417
      %v1769 = vpop.f32.mrf.mxu0
      %v1770 = vadd.f32 0.0, %v1769
      %v1771 = vpop.f32.mrf.mxu0
      %v1772 = vpop.f32.mrf.mxu0
      %v1773 = vadd.f32 0.0, %v1772
      %v1774 = vpop.f32.mrf.mxu0
      %1775 = vmatprep.mubr.bf16.mxu0 0
      %1776 = vmatmul.mubr.bf16.gmra.mxu0 %v1420
      %v1777 = vpop.f32.mrf.mxu0
      %v1778 = vadd.f32 0.0, %v1777
      %v1779 = vpop.f32.mrf.mxu0
      %v1780 = vpop.f32.mrf.mxu0
      %v1781 = vadd.f32 0.0, %v1780
      %v1782 = vpop.f32.mrf.mxu0
      %1783 = vmatprep.mubr.bf16.mxu0 0
      %1784 = vmatmul.mubr.bf16.gmra.mxu0 %v1423
      %v1785 = vpop.f32.mrf.mxu0
      %v1786 = vadd.f32 0.0, %v1785
      %v1787 = vpop.f32.mrf.mxu0
      %v1788 = vpop.f32.mrf.mxu0
      %v1789 = vadd.f32 0.0, %v1788
      %v1790 = vpop.f32.mrf.mxu0
      %1791 = vmatprep.mubr.bf16.mxu0 0
      %1792 = vmatmul.mubr.bf16.gmra.mxu0 %v1426
      %v1793 = vpop.f32.mrf.mxu0
      %v1794 = vadd.f32 0.0, %v1793
      %v1795 = vpop.f32.mrf.mxu0
      %v1796 = vpop.f32.mrf.mxu0
      %v1797 = vadd.f32 0.0, %v1796
      %v1798 = vpop.f32.mrf.mxu0
      %1799 = vmatprep.mubr.bf16.mxu0 0
      %1800 = vmatmul.mubr.bf16.gmra.mxu0 %v1429
      %v1801 = vpop.f32.mrf.mxu0
      %v1802 = vadd.f32 0.0, %v1801
      %v1803 = vpop.f32.mrf.mxu0
      %v1804 = vpop.f32.mrf.mxu0
      %v1805 = vadd.f32 0.0, %v1804
      %v1806 = vpop.f32.mrf.mxu0
      %1807 = vmatprep.mubr.bf16.mxu0 0
      %1808 = vmatmul.mubr.bf16.gmra.mxu0 %v1432
      %v1809 = vpop.f32.mrf.mxu0
      %v1810 = vadd.f32 0.0, %v1809
      %v1811 = vpop.f32.mrf.mxu0
      %v1812 = vpop.f32.mrf.mxu0
      %v1813 = vadd.f32 0.0, %v1812
      %v1814 = vpop.f32.mrf.mxu0
      %1815 = vmatprep.mubr.bf16.mxu0 0
      %1816 = vmatmul.mubr.bf16.gmra.mxu0 %v1435
      %v1817 = vpop.f32.mrf.mxu0
      %v1818 = vadd.f32 0.0, %v1817
      %v1819 = vpop.f32.mrf.mxu0
      %v1820 = vpop.f32.mrf.mxu0
      %v1821 = vadd.f32 0.0, %v1820
      %v1822 = vpop.f32.mrf.mxu0
      %1823 = vmatprep.mubr.bf16.mxu0 0
      %1824 = vmatmul.mubr.bf16.gmra.mxu0 %v1438
      %v1825 = vpop.f32.mrf.mxu0
      %v1826 = vadd.f32 0.0, %v1825
      %v1827 = vpop.f32.mrf.mxu0
      %v1828 = vpop.f32.mrf.mxu0
      %v1829 = vadd.f32 0.0, %v1828
      %v1830 = vpop.f32.mrf.mxu0
      %1831 = vmatprep.mubr.bf16.mxu0 0
      %1832 = vmatmul.mubr.bf16.gmra.mxu0 %v1441
      %v1833 = vpop.f32.mrf.mxu0
      %v1834 = vadd.f32 0.0, %v1833
      %v1835 = vpop.f32.mrf.mxu0
      %v1836 = vpop.f32.mrf.mxu0
      %v1837 = vadd.f32 0.0, %v1836
      %v1838 = vpop.f32.mrf.mxu0
      %1839 = vmatprep.mubr.bf16.mxu0 0
      %1840 = vmatmul.mubr.bf16.gmra.mxu0 %v1444
      %v1841 = vpop.f32.mrf.mxu0
      %v1842 = vadd.f32 0.0, %v1841
      %v1843 = vpop.f32.mrf.mxu0
      %v1844 = vpop.f32.mrf.mxu0
      %v1845 = vadd.f32 0.0, %v1844
      %v1846 = vpop.f32.mrf.mxu0
      %1847 = vmatprep.mubr.bf16.mxu0 0
      %1848 = vmatmul.mubr.bf16.gmra.mxu0 %v1447
      %v1849 = vpop.f32.mrf.mxu0
      %v1850 = vadd.f32 0.0, %v1849
      %v1851 = vpop.f32.mrf.mxu0
      %v1852 = vpop.f32.mrf.mxu0
      %v1853 = vadd.f32 0.0, %v1852
      %v1854 = vpop.f32.mrf.mxu0
      %1855 = vmatprep.mubr.bf16.mxu0 0
      %1856 = vmatmul.mubr.bf16.gmra.mxu0 %v1450
      %v1857 = vpop.f32.mrf.mxu0
      %v1858 = vadd.f32 0.0, %v1857
      %v1859 = vpop.f32.mrf.mxu0
      %v1860 = vpop.f32.mrf.mxu0
      %v1861 = vadd.f32 0.0, %v1860
      %v1862 = vpop.f32.mrf.mxu0
      %1863 = vmatprep.mubr.bf16.mxu0 0
      %1864 = vmatmul.mubr.bf16.gmra.mxu0 %v1453
      %v1865 = vpop.f32.mrf.mxu0
      %v1866 = vadd.f32 0.0, %v1865
      %v1867 = vpop.f32.mrf.mxu0
      %v1868 = vpop.f32.mrf.mxu0
      %v1869 = vadd.f32 0.0, %v1868
      %v1870 = vpop.f32.mrf.mxu0
      %1871 = vdwg.mxu0
      %v1873 = vsel %vm1310, %v898, 0
      %v1876 = vsel %vm1310, %v899, 0
      %v1879 = vsel %vm1310, %v900, 0
      %v1882 = vsel %vm1310, %v901, 0
      %v1885 = vsel %vm1310, %v902, 0
      %v1888 = vsel %vm1310, %v903, 0
      %v1891 = vsel %vm1310, %v904, 0
      %v1894 = vsel %vm1310, %v905, 0
      %v1897 = vsel %vm1310, %v906, 0
      %v1900 = vsel %vm1310, %v907, 0
      %v1903 = vsel %vm1310, %v908, 0
      %v1906 = vsel %vm1310, %v909, 0
      %v1909 = vsel %vm1310, %v910, 0
      %v1912 = vsel %vm1310, %v911, 0
      %v1915 = vsel %vm1310, %v912, 0
      %v1918 = vsel %vm1310, %v913, 0
      %v1921 = vsel %vm1310, %v914, 0
      %v1924 = vsel %vm1310, %v915, 0
      %v1927 = vsel %vm1310, %v916, 0
      %v1930 = vsel %vm1310, %v917, 0
      %v1933 = vsel %vm1310, %v918, 0
      %v1936 = vsel %vm1310, %v919, 0
      %v1939 = vsel %vm1310, %v920, 0
      %v1942 = vsel %vm1310, %v921, 0
      %v1945 = vsel %vm1310, %v922, 0
      %v1948 = vsel %vm1310, %v923, 0
      %v1951 = vsel %vm1310, %v924, 0
      %v1954 = vsel %vm1310, %v925, 0
      %v1957 = vsel %vm1310, %v926, 0
      %v1960 = vsel %vm1310, %v927, 0
      %v1963 = vsel %vm1310, %v928, 0
      %v1966 = vsel %vm1310, %v929, 0
      %v1969 = vsel %vm1310, %v930, 0
      %v1972 = vsel %vm1310, %v931, 0
      %v1975 = vsel %vm1310, %v932, 0
      %v1978 = vsel %vm1310, %v933, 0
      %v1981 = vsel %vm1310, %v934, 0
      %v1984 = vsel %vm1310, %v935, 0
      %v1987 = vsel %vm1310, %v936, 0
      %v1990 = vsel %vm1310, %v937, 0
      %v1993 = vsel %vm1310, %v938, 0
      %v1996 = vsel %vm1310, %v939, 0
      %v1999 = vsel %vm1310, %v940, 0
      %v2002 = vsel %vm1310, %v941, 0
      %v2005 = vsel %vm1310, %v942, 0
      %v2008 = vsel %vm1310, %v943, 0
      %v2011 = vsel %vm1310, %v944, 0
      %v2014 = vsel %vm1310, %v945, 0
      %2016 = vmatprep.subr.bf16.mxu0 0
      %2017 = vmatpush1.bf16.msra.mxu0 0
      %2018 = vmatprep.subr.bf16.mxu0 0
      %2019 = vmatpush1.bf16.msra.mxu0 0
      %2020 = vmatprep.subr.bf16.mxu0 0
      %2021 = vmatpush1.bf16.msra.mxu0 0
      %2022 = vmatprep.subr.bf16.mxu0 0
      %2023 = vmatpush1.bf16.msra.mxu0 0
      %2024 = vmatprep.subr.bf16.mxu0 0
      %2025 = vmatpush1.bf16.msra.mxu0 %v1305
      %2026 = vmatprep.subr.bf16.mxu0 0
      %2027 = vmatpush1.bf16.msra.mxu0 %v1304
      %2028 = vmatprep.subr.bf16.mxu0 0
      %2029 = vmatpush1.bf16.msra.mxu0 %v1303
      %2030 = vmatprep.subr.bf16.mxu0 0
      %2031 = vmatpush1.bf16.msra.mxu0 %v1302
      %2032 = vmatprep.subr.bf16.mxu0 0
      %2033 = vmatpush2.bf16.msra.mxu0 0
      %2034 = vmatprep.subr.bf16.mxu0 0
      %2035 = vmatpush2.bf16.msra.mxu0 0
      %2036 = vmatprep.subr.bf16.mxu0 0
      %2037 = vmatpush2.bf16.msra.mxu0 0
      %2038 = vmatprep.subr.bf16.mxu0 0
      %2039 = vmatpush2.bf16.msra.mxu0 0
      %2040 = vmatprep.subr.bf16.mxu0 0
      %2041 = vmatpush2.bf16.msra.mxu0 0
      %2042 = vmatprep.subr.bf16.mxu0 0
      %2043 = vmatpush2.bf16.msra.mxu0 0
      %2044 = vmatprep.subr.bf16.mxu0 0
      %2045 = vmatpush2.bf16.msra.mxu0 0
      %2046 = vmatprep.subr.bf16.mxu0 0
      %2047 = vmatpush2.bf16.msra.mxu0 0
      %2048 = vmatprep.mubr.bf16.mxu0 0
      %2049 = vmatmul.mubr.bf16.gmra.mxu0 %v1873
      %v2050 = vpop.f32.mrf.mxu0
      %v2051 = vadd.f32 %v1490, %v2050
      %v2052 = vpop.f32.mrf.mxu0
      %v2053 = vpop.f32.mrf.mxu0
      %v2054 = vadd.f32 %v1493, %v2053
      %v2055 = vpop.f32.mrf.mxu0
      %2056 = vmatprep.mubr.bf16.mxu0 0
      %2057 = vmatmul.mubr.bf16.gmra.mxu0 %v1876
      %v2058 = vpop.f32.mrf.mxu0
      %v2059 = vadd.f32 %v1498, %v2058
      %v2060 = vpop.f32.mrf.mxu0
      %v2061 = vpop.f32.mrf.mxu0
      %v2062 = vadd.f32 %v1501, %v2061
      %v2063 = vpop.f32.mrf.mxu0
      %2064 = vmatprep.mubr.bf16.mxu0 0
      %2065 = vmatmul.mubr.bf16.gmra.mxu0 %v1879
      %v2066 = vpop.f32.mrf.mxu0
      %v2067 = vadd.f32 %v1506, %v2066
      %v2068 = vpop.f32.mrf.mxu0
      %v2069 = vpop.f32.mrf.mxu0
      %v2070 = vadd.f32 %v1509, %v2069
      %v2071 = vpop.f32.mrf.mxu0
      %2072 = vmatprep.mubr.bf16.mxu0 0
      %2073 = vmatmul.mubr.bf16.gmra.mxu0 %v1882
      %v2074 = vpop.f32.mrf.mxu0
      %v2075 = vadd.f32 %v1514, %v2074
      %v2076 = vpop.f32.mrf.mxu0
      %v2077 = vpop.f32.mrf.mxu0
      %v2078 = vadd.f32 %v1517, %v2077
      %v2079 = vpop.f32.mrf.mxu0
      %2080 = vmatprep.mubr.bf16.mxu0 0
      %2081 = vmatmul.mubr.bf16.gmra.mxu0 %v1885
      %v2082 = vpop.f32.mrf.mxu0
      %v2083 = vadd.f32 %v1522, %v2082
      %v2084 = vpop.f32.mrf.mxu0
      %v2085 = vpop.f32.mrf.mxu0
      %v2086 = vadd.f32 %v1525, %v2085
      %v2087 = vpop.f32.mrf.mxu0
      %2088 = vmatprep.mubr.bf16.mxu0 0
      %2089 = vmatmul.mubr.bf16.gmra.mxu0 %v1888
      %v2090 = vpop.f32.mrf.mxu0
      %v2091 = vadd.f32 %v1530, %v2090
      %v2092 = vpop.f32.mrf.mxu0
      %v2093 = vpop.f32.mrf.mxu0
      %v2094 = vadd.f32 %v1533, %v2093
      %v2095 = vpop.f32.mrf.mxu0
      %2096 = vmatprep.mubr.bf16.mxu0 0
      %2097 = vmatmul.mubr.bf16.gmra.mxu0 %v1891
      %v2098 = vpop.f32.mrf.mxu0
      %v2099 = vadd.f32 %v1538, %v2098
      %v2100 = vpop.f32.mrf.mxu0
      %v2101 = vpop.f32.mrf.mxu0
      %v2102 = vadd.f32 %v1541, %v2101
      %v2103 = vpop.f32.mrf.mxu0
      %2104 = vmatprep.mubr.bf16.mxu0 0
      %2105 = vmatmul.mubr.bf16.gmra.mxu0 %v1894
      %v2106 = vpop.f32.mrf.mxu0
      %v2107 = vadd.f32 %v1546, %v2106
      %v2108 = vpop.f32.mrf.mxu0
      %v2109 = vpop.f32.mrf.mxu0
      %v2110 = vadd.f32 %v1549, %v2109
      %v2111 = vpop.f32.mrf.mxu0
      %2112 = vmatprep.mubr.bf16.mxu0 0
      %2113 = vmatmul.mubr.bf16.gmra.mxu0 %v1897
      %v2114 = vpop.f32.mrf.mxu0
      %v2115 = vadd.f32 %v1554, %v2114
      %v2116 = vpop.f32.mrf.mxu0
      %v2117 = vpop.f32.mrf.mxu0
      %v2118 = vadd.f32 %v1557, %v2117
      %v2119 = vpop.f32.mrf.mxu0
      %2120 = vmatprep.mubr.bf16.mxu0 0
      %2121 = vmatmul.mubr.bf16.gmra.mxu0 %v1900
      %v2122 = vpop.f32.mrf.mxu0
      %v2123 = vadd.f32 %v1562, %v2122
      %v2124 = vpop.f32.mrf.mxu0
      %v2125 = vpop.f32.mrf.mxu0
      %v2126 = vadd.f32 %v1565, %v2125
      %v2127 = vpop.f32.mrf.mxu0
      %2128 = vmatprep.mubr.bf16.mxu0 0
      %2129 = vmatmul.mubr.bf16.gmra.mxu0 %v1903
      %v2130 = vpop.f32.mrf.mxu0
      %v2131 = vadd.f32 %v1570, %v2130
      %v2132 = vpop.f32.mrf.mxu0
      %v2133 = vpop.f32.mrf.mxu0
      %v2134 = vadd.f32 %v1573, %v2133
      %v2135 = vpop.f32.mrf.mxu0
      %2136 = vmatprep.mubr.bf16.mxu0 0
      %2137 = vmatmul.mubr.bf16.gmra.mxu0 %v1906
      %v2138 = vpop.f32.mrf.mxu0
      %v2139 = vadd.f32 %v1578, %v2138
      %v2140 = vpop.f32.mrf.mxu0
      %v2141 = vpop.f32.mrf.mxu0
      %v2142 = vadd.f32 %v1581, %v2141
      %v2143 = vpop.f32.mrf.mxu0
      %2144 = vmatprep.mubr.bf16.mxu0 0
      %2145 = vmatmul.mubr.bf16.gmra.mxu0 %v1909
      %v2146 = vpop.f32.mrf.mxu0
      %v2147 = vadd.f32 %v1586, %v2146
      %v2148 = vpop.f32.mrf.mxu0
      %v2149 = vpop.f32.mrf.mxu0
      %v2150 = vadd.f32 %v1589, %v2149
      %v2151 = vpop.f32.mrf.mxu0
      %2152 = vmatprep.mubr.bf16.mxu0 0
      %2153 = vmatmul.mubr.bf16.gmra.mxu0 %v1912
      %v2154 = vpop.f32.mrf.mxu0
      %v2155 = vadd.f32 %v1594, %v2154
      %v2156 = vpop.f32.mrf.mxu0
      %v2157 = vpop.f32.mrf.mxu0
      %v2158 = vadd.f32 %v1597, %v2157
      %v2159 = vpop.f32.mrf.mxu0
      %2160 = vmatprep.mubr.bf16.mxu0 0
      %2161 = vmatmul.mubr.bf16.gmra.mxu0 %v1915
      %v2162 = vpop.f32.mrf.mxu0
      %v2163 = vadd.f32 %v1602, %v2162
      %v2164 = vpop.f32.mrf.mxu0
      %v2165 = vpop.f32.mrf.mxu0
      %v2166 = vadd.f32 %v1605, %v2165
      %v2167 = vpop.f32.mrf.mxu0
      %2168 = vmatprep.mubr.bf16.mxu0 0
      %2169 = vmatmul.mubr.bf16.gmra.mxu0 %v1918
      %v2170 = vpop.f32.mrf.mxu0
      %v2171 = vadd.f32 %v1610, %v2170
      %v2172 = vpop.f32.mrf.mxu0
      %v2173 = vpop.f32.mrf.mxu0
      %v2174 = vadd.f32 %v1613, %v2173
      %v2175 = vpop.f32.mrf.mxu0
      %2176 = vmatprep.mubr.bf16.mxu0 0
      %2177 = vmatmul.mubr.bf16.gmra.mxu0 %v1921
      %v2178 = vpop.f32.mrf.mxu0
      %v2179 = vadd.f32 %v1618, %v2178
      %v2180 = vpop.f32.mrf.mxu0
      %v2181 = vpop.f32.mrf.mxu0
      %v2182 = vadd.f32 %v1621, %v2181
      %v2183 = vpop.f32.mrf.mxu0
      %2184 = vmatprep.mubr.bf16.mxu0 0
      %2185 = vmatmul.mubr.bf16.gmra.mxu0 %v1924
      %v2186 = vpop.f32.mrf.mxu0
      %v2187 = vadd.f32 %v1626, %v2186
      %v2188 = vpop.f32.mrf.mxu0
      %v2189 = vpop.f32.mrf.mxu0
      %v2190 = vadd.f32 %v1629, %v2189
      %v2191 = vpop.f32.mrf.mxu0
      %2192 = vmatprep.mubr.bf16.mxu0 0
      %2193 = vmatmul.mubr.bf16.gmra.mxu0 %v1927
      %v2194 = vpop.f32.mrf.mxu0
      %v2195 = vadd.f32 %v1634, %v2194
      %v2196 = vpop.f32.mrf.mxu0
      %v2197 = vpop.f32.mrf.mxu0
      %v2198 = vadd.f32 %v1637, %v2197
      %v2199 = vpop.f32.mrf.mxu0
      %2200 = vmatprep.mubr.bf16.mxu0 0
      %2201 = vmatmul.mubr.bf16.gmra.mxu0 %v1930
      %v2202 = vpop.f32.mrf.mxu0
      %v2203 = vadd.f32 %v1642, %v2202
      %v2204 = vpop.f32.mrf.mxu0
      %v2205 = vpop.f32.mrf.mxu0
      %v2206 = vadd.f32 %v1645, %v2205
      %v2207 = vpop.f32.mrf.mxu0
      %2208 = vmatprep.mubr.bf16.mxu0 0
      %2209 = vmatmul.mubr.bf16.gmra.mxu0 %v1933
      %v2210 = vpop.f32.mrf.mxu0
      %v2211 = vadd.f32 %v1650, %v2210
      %v2212 = vpop.f32.mrf.mxu0
      %v2213 = vpop.f32.mrf.mxu0
      %v2214 = vadd.f32 %v1653, %v2213
      %v2215 = vpop.f32.mrf.mxu0
      %2216 = vmatprep.mubr.bf16.mxu0 0
      %2217 = vmatmul.mubr.bf16.gmra.mxu0 %v1936
      %v2218 = vpop.f32.mrf.mxu0
      %v2219 = vadd.f32 %v1658, %v2218
      %v2220 = vpop.f32.mrf.mxu0
      %v2221 = vpop.f32.mrf.mxu0
      %v2222 = vadd.f32 %v1661, %v2221
      %v2223 = vpop.f32.mrf.mxu0
      %2224 = vmatprep.mubr.bf16.mxu0 0
      %2225 = vmatmul.mubr.bf16.gmra.mxu0 %v1939
      %v2226 = vpop.f32.mrf.mxu0
      %v2227 = vadd.f32 %v1666, %v2226
      %v2228 = vpop.f32.mrf.mxu0
      %v2229 = vpop.f32.mrf.mxu0
      %v2230 = vadd.f32 %v1669, %v2229
      %v2231 = vpop.f32.mrf.mxu0
      %2232 = vmatprep.mubr.bf16.mxu0 0
      %2233 = vmatmul.mubr.bf16.gmra.mxu0 %v1942
      %v2234 = vpop.f32.mrf.mxu0
      %v2235 = vadd.f32 %v1674, %v2234
      %v2236 = vpop.f32.mrf.mxu0
      %v2237 = vpop.f32.mrf.mxu0
      %v2238 = vadd.f32 %v1677, %v2237
      %v2239 = vpop.f32.mrf.mxu0
      %2240 = vmatprep.mubr.bf16.mxu0 0
      %2241 = vmatmul.mubr.bf16.gmra.mxu0 %v1945
      %v2242 = vpop.f32.mrf.mxu0
      %v2243 = vadd.f32 %v1682, %v2242
      %v2244 = vpop.f32.mrf.mxu0
      %v2245 = vpop.f32.mrf.mxu0
      %v2246 = vadd.f32 %v1685, %v2245
      %v2247 = vpop.f32.mrf.mxu0
      %2248 = vmatprep.mubr.bf16.mxu0 0
      %2249 = vmatmul.mubr.bf16.gmra.mxu0 %v1948
      %v2250 = vpop.f32.mrf.mxu0
      %v2251 = vadd.f32 %v1690, %v2250
      %v2252 = vpop.f32.mrf.mxu0
      %v2253 = vpop.f32.mrf.mxu0
      %v2254 = vadd.f32 %v1693, %v2253
      %v2255 = vpop.f32.mrf.mxu0
      %2256 = vmatprep.mubr.bf16.mxu0 0
      %2257 = vmatmul.mubr.bf16.gmra.mxu0 %v1951
      %v2258 = vpop.f32.mrf.mxu0
      %v2259 = vadd.f32 %v1698, %v2258
      %v2260 = vpop.f32.mrf.mxu0
      %v2261 = vpop.f32.mrf.mxu0
      %v2262 = vadd.f32 %v1701, %v2261
      %v2263 = vpop.f32.mrf.mxu0
      %2264 = vmatprep.mubr.bf16.mxu0 0
      %2265 = vmatmul.mubr.bf16.gmra.mxu0 %v1954
      %v2266 = vpop.f32.mrf.mxu0
      %v2267 = vadd.f32 %v1706, %v2266
      %v2268 = vpop.f32.mrf.mxu0
      %v2269 = vpop.f32.mrf.mxu0
      %v2270 = vadd.f32 %v1709, %v2269
      %v2271 = vpop.f32.mrf.mxu0
      %2272 = vmatprep.mubr.bf16.mxu0 0
      %2273 = vmatmul.mubr.bf16.gmra.mxu0 %v1957
      %v2274 = vpop.f32.mrf.mxu0
      %v2275 = vadd.f32 %v1714, %v2274
      %v2276 = vpop.f32.mrf.mxu0
      %v2277 = vpop.f32.mrf.mxu0
      %v2278 = vadd.f32 %v1717, %v2277
      %v2279 = vpop.f32.mrf.mxu0
      %2280 = vmatprep.mubr.bf16.mxu0 0
      %2281 = vmatmul.mubr.bf16.gmra.mxu0 %v1960
      %v2282 = vpop.f32.mrf.mxu0
      %v2283 = vadd.f32 %v1722, %v2282
      %v2284 = vpop.f32.mrf.mxu0
      %v2285 = vpop.f32.mrf.mxu0
      %v2286 = vadd.f32 %v1725, %v2285
      %v2287 = vpop.f32.mrf.mxu0
      %2288 = vmatprep.mubr.bf16.mxu0 0
      %2289 = vmatmul.mubr.bf16.gmra.mxu0 %v1963
      %v2290 = vpop.f32.mrf.mxu0
      %v2291 = vadd.f32 %v1730, %v2290
      %v2292 = vpop.f32.mrf.mxu0
      %v2293 = vpop.f32.mrf.mxu0
      %v2294 = vadd.f32 %v1733, %v2293
      %v2295 = vpop.f32.mrf.mxu0
      %2296 = vmatprep.mubr.bf16.mxu0 0
      %2297 = vmatmul.mubr.bf16.gmra.mxu0 %v1966
      %v2298 = vpop.f32.mrf.mxu0
      %v2299 = vadd.f32 %v1738, %v2298
      %v2300 = vpop.f32.mrf.mxu0
      %v2301 = vpop.f32.mrf.mxu0
      %v2302 = vadd.f32 %v1741, %v2301
      %v2303 = vpop.f32.mrf.mxu0
      %2304 = vmatprep.mubr.bf16.mxu0 0
      %2305 = vmatmul.mubr.bf16.gmra.mxu0 %v1969
      %v2306 = vpop.f32.mrf.mxu0
      %v2307 = vadd.f32 %v1746, %v2306
      %v2308 = vpop.f32.mrf.mxu0
      %v2309 = vpop.f32.mrf.mxu0
      %v2310 = vadd.f32 %v1749, %v2309
      %v2311 = vpop.f32.mrf.mxu0
      %2312 = vmatprep.mubr.bf16.mxu0 0
      %2313 = vmatmul.mubr.bf16.gmra.mxu0 %v1972
      %v2314 = vpop.f32.mrf.mxu0
      %v2315 = vadd.f32 %v1754, %v2314
      %v2316 = vpop.f32.mrf.mxu0
      %v2317 = vpop.f32.mrf.mxu0
      %v2318 = vadd.f32 %v1757, %v2317
      %v2319 = vpop.f32.mrf.mxu0
      %2320 = vmatprep.mubr.bf16.mxu0 0
      %2321 = vmatmul.mubr.bf16.gmra.mxu0 %v1975
      %v2322 = vpop.f32.mrf.mxu0
      %v2323 = vadd.f32 %v1762, %v2322
      %v2324 = vpop.f32.mrf.mxu0
      %v2325 = vpop.f32.mrf.mxu0
      %v2326 = vadd.f32 %v1765, %v2325
      %v2327 = vpop.f32.mrf.mxu0
      %2328 = vmatprep.mubr.bf16.mxu0 0
      %2329 = vmatmul.mubr.bf16.gmra.mxu0 %v1978
      %v2330 = vpop.f32.mrf.mxu0
      %v2331 = vadd.f32 %v1770, %v2330
      %v2332 = vpop.f32.mrf.mxu0
      %v2333 = vpop.f32.mrf.mxu0
      %v2334 = vadd.f32 %v1773, %v2333
      %v2335 = vpop.f32.mrf.mxu0
      %2336 = vmatprep.mubr.bf16.mxu0 0
      %2337 = vmatmul.mubr.bf16.gmra.mxu0 %v1981
      %v2338 = vpop.f32.mrf.mxu0
      %v2339 = vadd.f32 %v1778, %v2338
      %v2340 = vpop.f32.mrf.mxu0
      %v2341 = vpop.f32.mrf.mxu0
      %v2342 = vadd.f32 %v1781, %v2341
      %v2343 = vpop.f32.mrf.mxu0
      %2344 = vmatprep.mubr.bf16.mxu0 0
      %2345 = vmatmul.mubr.bf16.gmra.mxu0 %v1984
      %v2346 = vpop.f32.mrf.mxu0
      %v2347 = vadd.f32 %v1786, %v2346
      %v2348 = vpop.f32.mrf.mxu0
      %v2349 = vpop.f32.mrf.mxu0
      %v2350 = vadd.f32 %v1789, %v2349
      %v2351 = vpop.f32.mrf.mxu0
      %2352 = vmatprep.mubr.bf16.mxu0 0
      %2353 = vmatmul.mubr.bf16.gmra.mxu0 %v1987
      %v2354 = vpop.f32.mrf.mxu0
      %v2355 = vadd.f32 %v1794, %v2354
      %v2356 = vpop.f32.mrf.mxu0
      %v2357 = vpop.f32.mrf.mxu0
      %v2358 = vadd.f32 %v1797, %v2357
      %v2359 = vpop.f32.mrf.mxu0
      %2360 = vmatprep.mubr.bf16.mxu0 0
      %2361 = vmatmul.mubr.bf16.gmra.mxu0 %v1990
      %v2362 = vpop.f32.mrf.mxu0
      %v2363 = vadd.f32 %v1802, %v2362
      %v2364 = vpop.f32.mrf.mxu0
      %v2365 = vpop.f32.mrf.mxu0
      %v2366 = vadd.f32 %v1805, %v2365
      %v2367 = vpop.f32.mrf.mxu0
      %2368 = vmatprep.mubr.bf16.mxu0 0
      %2369 = vmatmul.mubr.bf16.gmra.mxu0 %v1993
      %v2370 = vpop.f32.mrf.mxu0
      %v2371 = vadd.f32 %v1810, %v2370
      %v2372 = vpop.f32.mrf.mxu0
      %v2373 = vpop.f32.mrf.mxu0
      %v2374 = vadd.f32 %v1813, %v2373
      %v2375 = vpop.f32.mrf.mxu0
      %2376 = vmatprep.mubr.bf16.mxu0 0
      %2377 = vmatmul.mubr.bf16.gmra.mxu0 %v1996
      %v2378 = vpop.f32.mrf.mxu0
      %v2379 = vadd.f32 %v1818, %v2378
      %v2380 = vpop.f32.mrf.mxu0
      %v2381 = vpop.f32.mrf.mxu0
      %v2382 = vadd.f32 %v1821, %v2381
      %v2383 = vpop.f32.mrf.mxu0
      %2384 = vmatprep.mubr.bf16.mxu0 0
      %2385 = vmatmul.mubr.bf16.gmra.mxu0 %v1999
      %v2386 = vpop.f32.mrf.mxu0
      %v2387 = vadd.f32 %v1826, %v2386
      %v2388 = vpop.f32.mrf.mxu0
      %v2389 = vpop.f32.mrf.mxu0
      %v2390 = vadd.f32 %v1829, %v2389
      %v2391 = vpop.f32.mrf.mxu0
      %2392 = vmatprep.mubr.bf16.mxu0 0
      %2393 = vmatmul.mubr.bf16.gmra.mxu0 %v2002
      %v2394 = vpop.f32.mrf.mxu0
      %v2395 = vadd.f32 %v1834, %v2394
      %v2396 = vpop.f32.mrf.mxu0
      %v2397 = vpop.f32.mrf.mxu0
      %v2398 = vadd.f32 %v1837, %v2397
      %v2399 = vpop.f32.mrf.mxu0
      %2400 = vmatprep.mubr.bf16.mxu0 0
      %2401 = vmatmul.mubr.bf16.gmra.mxu0 %v2005
      %v2402 = vpop.f32.mrf.mxu0
      %v2403 = vadd.f32 %v1842, %v2402
      %v2404 = vpop.f32.mrf.mxu0
      %v2405 = vpop.f32.mrf.mxu0
      %v2406 = vadd.f32 %v1845, %v2405
      %v2407 = vpop.f32.mrf.mxu0
      %2408 = vmatprep.mubr.bf16.mxu0 0
      %2409 = vmatmul.mubr.bf16.gmra.mxu0 %v2008
      %v2410 = vpop.f32.mrf.mxu0
      %v2411 = vadd.f32 %v1850, %v2410
      %v2412 = vpop.f32.mrf.mxu0
      %v2413 = vpop.f32.mrf.mxu0
      %v2414 = vadd.f32 %v1853, %v2413
      %v2415 = vpop.f32.mrf.mxu0
      %2416 = vmatprep.mubr.bf16.mxu0 0
      %2417 = vmatmul.mubr.bf16.gmra.mxu0 %v2011
      %v2418 = vpop.f32.mrf.mxu0
      %v2419 = vadd.f32 %v1858, %v2418
      %v2420 = vpop.f32.mrf.mxu0
      %v2421 = vpop.f32.mrf.mxu0
      %v2422 = vadd.f32 %v1861, %v2421
      %v2423 = vpop.f32.mrf.mxu0
      %2424 = vmatprep.mubr.bf16.mxu0 0
      %2425 = vmatmul.mubr.bf16.gmra.mxu0 %v2014
      %v2426 = vpop.f32.mrf.mxu0
      %v2427 = vadd.f32 %v1866, %v2426
      %v2428 = vpop.f32.mrf.mxu0
      %v2429 = vpop.f32.mrf.mxu0
      %v2430 = vadd.f32 %v1869, %v2429
      %v2431 = vpop.f32.mrf.mxu0
      %2432 = vdwg.mxu0
      %v2433 = vlaneseq
      %v2434 = vshrl.u32 %v2433, 7
      %v2435 = vsub.s32 2, %v2434
      %v2436 = vrot.slane %v500, %v2435
      %vm2437 = vcmp.eq.s32.totalorder %v510, %v2436
      %vm2438 = vcmp.eq.s32.totalorder %v511, %v2436
      %vm2439 = vcmp.eq.s32.totalorder %v512, %v2436
      %vm2440 = vcmp.eq.s32.totalorder %v513, %v2436
      %vm2441 = vcmp.eq.s32.totalorder %v514, %v2436
      %vm2442 = vcmp.eq.s32.totalorder %v515, %v2436
      %vm2443 = vcmp.eq.s32.totalorder %v516, %v2436
      %vm2444 = vcmp.eq.s32.totalorder %v517, %v2436
      %vm2445 = vcmp.eq.s32.totalorder %v518, %v2436
      %vm2446 = vcmp.eq.s32.totalorder %v519, %v2436
      %vm2447 = vcmp.eq.s32.totalorder %v520, %v2436
      %vm2448 = vcmp.eq.s32.totalorder %v521, %v2436
      %vm2449 = vcmp.eq.s32.totalorder %v522, %v2436
      %vm2450 = vcmp.eq.s32.totalorder %v523, %v2436
      %vm2451 = vcmp.eq.s32.totalorder %v524, %v2436
      %vm2452 = vcmp.eq.s32.totalorder %v525, %v2436
      %vm2453 = vcmp.eq.s32.totalorder %v526, %v2436
      %vm2454 = vcmp.eq.s32.totalorder %v527, %v2436
      %vm2455 = vcmp.eq.s32.totalorder %v528, %v2436
      %vm2456 = vcmp.eq.s32.totalorder %v529, %v2436
      %vm2457 = vcmp.eq.s32.totalorder %v530, %v2436
      %vm2458 = vcmp.eq.s32.totalorder %v531, %v2436
      %vm2459 = vcmp.eq.s32.totalorder %v532, %v2436
      %vm2460 = vcmp.eq.s32.totalorder %v533, %v2436
      %vm2461 = vcmp.eq.s32.totalorder %v534, %v2436
      %vm2462 = vcmp.eq.s32.totalorder %v535, %v2436
      %vm2463 = vcmp.eq.s32.totalorder %v536, %v2436
      %vm2464 = vcmp.eq.s32.totalorder %v537, %v2436
      %vm2465 = vcmp.eq.s32.totalorder %v538, %v2436
      %vm2466 = vcmp.eq.s32.totalorder %v539, %v2436
      %vm2467 = vcmp.eq.s32.totalorder %v540, %v2436
      %vm2468 = vcmp.eq.s32.totalorder %v541, %v2436
      %vm2469 = vcmp.eq.s32.totalorder %v542, %v2436
      %vm2470 = vcmp.eq.s32.totalorder %v543, %v2436
      %vm2471 = vcmp.eq.s32.totalorder %v544, %v2436
      %vm2472 = vcmp.eq.s32.totalorder %v545, %v2436
      %vm2473 = vcmp.eq.s32.totalorder %v546, %v2436
      %vm2474 = vcmp.eq.s32.totalorder %v547, %v2436
      %vm2475 = vcmp.eq.s32.totalorder %v548, %v2436
      %vm2476 = vcmp.eq.s32.totalorder %v549, %v2436
      %vm2477 = vcmp.eq.s32.totalorder %v550, %v2436
      %vm2478 = vcmp.eq.s32.totalorder %v551, %v2436
      %vm2479 = vcmp.eq.s32.totalorder %v552, %v2436
      %vm2480 = vcmp.eq.s32.totalorder %v553, %v2436
      %vm2481 = vcmp.eq.s32.totalorder %v554, %v2436
      %vm2482 = vcmp.eq.s32.totalorder %v555, %v2436
      %vm2483 = vcmp.eq.s32.totalorder %v556, %v2436
      %vm2484 = vcmp.eq.s32.totalorder %v557, %v2436
      %vm2485 = vcmp.eq.s32.totalorder %v558, %v2436
      %vm2486 = vcmp.eq.s32.totalorder %v559, %v2436
      %vm2487 = vcmp.eq.s32.totalorder %v560, %v2436
      %vm2488 = vcmp.eq.s32.totalorder %v561, %v2436
      %vm2489 = vcmp.eq.s32.totalorder %v562, %v2436
      %vm2490 = vcmp.eq.s32.totalorder %v563, %v2436
      %vm2491 = vcmp.eq.s32.totalorder %v564, %v2436
      %vm2492 = vcmp.eq.s32.totalorder %v565, %v2436
      %vm2493 = vcmp.eq.s32.totalorder %v566, %v2436
      %vm2494 = vcmp.eq.s32.totalorder %v567, %v2436
      %vm2495 = vcmp.eq.s32.totalorder %v568, %v2436
      %vm2496 = vcmp.eq.s32.totalorder %v569, %v2436
      %vm2497 = vcmp.eq.s32.totalorder %v570, %v2436
      %vm2498 = vcmp.eq.s32.totalorder %v571, %v2436
      %vm2499 = vcmp.eq.s32.totalorder %v572, %v2436
      %vm2500 = vcmp.eq.s32.totalorder %v573, %v2436
      %vm2501 = vcmp.eq.s32.totalorder %v574, %v2436
      %vm2502 = vcmp.eq.s32.totalorder %v575, %v2436
      %vm2503 = vcmp.eq.s32.totalorder %v576, %v2436
      %vm2504 = vcmp.eq.s32.totalorder %v577, %v2436
      %vm2505 = vcmp.eq.s32.totalorder %v578, %v2436
      %vm2506 = vcmp.eq.s32.totalorder %v579, %v2436
      %vm2507 = vcmp.eq.s32.totalorder %v580, %v2436
      %vm2508 = vcmp.eq.s32.totalorder %v581, %v2436
      %vm2509 = vcmp.eq.s32.totalorder %v582, %v2436
      %vm2510 = vcmp.eq.s32.totalorder %v583, %v2436
      %vm2511 = vcmp.eq.s32.totalorder %v584, %v2436
      %vm2512 = vcmp.eq.s32.totalorder %v585, %v2436
      %vm2513 = vcmp.eq.s32.totalorder %v586, %v2436
      %vm2514 = vcmp.eq.s32.totalorder %v587, %v2436
      %vm2515 = vcmp.eq.s32.totalorder %v588, %v2436
      %vm2516 = vcmp.eq.s32.totalorder %v589, %v2436
      %vm2517 = vcmp.eq.s32.totalorder %v590, %v2436
      %vm2518 = vcmp.eq.s32.totalorder %v591, %v2436
      %vm2519 = vcmp.eq.s32.totalorder %v592, %v2436
      %vm2520 = vcmp.eq.s32.totalorder %v593, %v2436
      %vm2521 = vcmp.eq.s32.totalorder %v594, %v2436
      %vm2522 = vcmp.eq.s32.totalorder %v595, %v2436
      %vm2523 = vcmp.eq.s32.totalorder %v596, %v2436
      %vm2524 = vcmp.eq.s32.totalorder %v597, %v2436
      %vm2525 = vcmp.eq.s32.totalorder %v598, %v2436
      %vm2526 = vcmp.eq.s32.totalorder %v599, %v2436
      %vm2527 = vcmp.eq.s32.totalorder %v600, %v2436
      %vm2528 = vcmp.eq.s32.totalorder %v601, %v2436
      %vm2529 = vcmp.eq.s32.totalorder %v602, %v2436
      %vm2530 = vcmp.eq.s32.totalorder %v603, %v2436
      %vm2531 = vcmp.eq.s32.totalorder %v604, %v2436
      %vm2532 = vcmp.eq.s32.totalorder %v605, %v2436
      %v2533 = vsel %vm2437, 1, 0
      %v2534 = vsel %vm2438, 1, 0
      %v2535 = vsel %vm2439, 1, 0
      %v2536 = vsel %vm2440, 1, 0
      %v2537 = vsel %vm2441, 1, 0
      %v2538 = vsel %vm2442, 1, 0
      %v2539 = vsel %vm2443, 1, 0
      %v2540 = vsel %vm2444, 1, 0
      %v2541 = vsel %vm2445, 1, 0
      %v2542 = vsel %vm2446, 1, 0
      %v2543 = vsel %vm2447, 1, 0
      %v2544 = vsel %vm2448, 1, 0
      %v2545 = vsel %vm2449, 1, 0
      %v2546 = vsel %vm2450, 1, 0
      %v2547 = vsel %vm2451, 1, 0
      %v2548 = vsel %vm2452, 1, 0
      %v2549 = vsel %vm2453, 1, 0
      %v2550 = vsel %vm2454, 1, 0
      %v2551 = vsel %vm2455, 1, 0
      %v2552 = vsel %vm2456, 1, 0
      %v2553 = vsel %vm2457, 1, 0
      %v2554 = vsel %vm2458, 1, 0
      %v2555 = vsel %vm2459, 1, 0
      %v2556 = vsel %vm2460, 1, 0
      %v2557 = vsel %vm2461, 1, 0
      %v2558 = vsel %vm2462, 1, 0
      %v2559 = vsel %vm2463, 1, 0
      %v2560 = vsel %vm2464, 1, 0
      %v2561 = vsel %vm2465, 1, 0
      %v2562 = vsel %vm2466, 1, 0
      %v2563 = vsel %vm2467, 1, 0
      %v2564 = vsel %vm2468, 1, 0
      %v2565 = vsel %vm2469, 1, 0
      %v2566 = vsel %vm2470, 1, 0
      %v2567 = vsel %vm2471, 1, 0
      %v2568 = vsel %vm2472, 1, 0
      %v2569 = vsel %vm2473, 1, 0
      %v2570 = vsel %vm2474, 1, 0
      %v2571 = vsel %vm2475, 1, 0
      %v2572 = vsel %vm2476, 1, 0
      %v2573 = vsel %vm2477, 1, 0
      %v2574 = vsel %vm2478, 1, 0
      %v2575 = vsel %vm2479, 1, 0
      %v2576 = vsel %vm2480, 1, 0
      %v2577 = vsel %vm2481, 1, 0
      %v2578 = vsel %vm2482, 1, 0
      %v2579 = vsel %vm2483, 1, 0
      %v2580 = vsel %vm2484, 1, 0
      %v2581 = vsel %vm2485, 1, 0
      %v2582 = vsel %vm2486, 1, 0
      %v2583 = vsel %vm2487, 1, 0
      %v2584 = vsel %vm2488, 1, 0
      %v2585 = vsel %vm2489, 1, 0
      %v2586 = vsel %vm2490, 1, 0
      %v2587 = vsel %vm2491, 1, 0
      %v2588 = vsel %vm2492, 1, 0
      %v2589 = vsel %vm2493, 1, 0
      %v2590 = vsel %vm2494, 1, 0
      %v2591 = vsel %vm2495, 1, 0
      %v2592 = vsel %vm2496, 1, 0
      %v2593 = vsel %vm2497, 1, 0
      %v2594 = vsel %vm2498, 1, 0
      %v2595 = vsel %vm2499, 1, 0
      %v2596 = vsel %vm2500, 1, 0
      %v2597 = vsel %vm2501, 1, 0
      %v2598 = vsel %vm2502, 1, 0
      %v2599 = vsel %vm2503, 1, 0
      %v2600 = vsel %vm2504, 1, 0
      %v2601 = vsel %vm2505, 1, 0
      %v2602 = vsel %vm2506, 1, 0
      %v2603 = vsel %vm2507, 1, 0
      %v2604 = vsel %vm2508, 1, 0
      %v2605 = vsel %vm2509, 1, 0
      %v2606 = vsel %vm2510, 1, 0
      %v2607 = vsel %vm2511, 1, 0
      %v2608 = vsel %vm2512, 1, 0
      %v2609 = vsel %vm2513, 1, 0
      %v2610 = vsel %vm2514, 1, 0
      %v2611 = vsel %vm2515, 1, 0
      %v2612 = vsel %vm2516, 1, 0
      %v2613 = vsel %vm2517, 1, 0
      %v2614 = vsel %vm2518, 1, 0
      %v2615 = vsel %vm2519, 1, 0
      %v2616 = vsel %vm2520, 1, 0
      %v2617 = vsel %vm2521, 1, 0
      %v2618 = vsel %vm2522, 1, 0
      %v2619 = vsel %vm2523, 1, 0
      %v2620 = vsel %vm2524, 1, 0
      %v2621 = vsel %vm2525, 1, 0
      %v2622 = vsel %vm2526, 1, 0
      %v2623 = vsel %vm2527, 1, 0
      %v2624 = vsel %vm2528, 1, 0
      %v2625 = vsel %vm2529, 1, 0
      %v2626 = vsel %vm2530, 1, 0
      %v2627 = vsel %vm2531, 1, 0
      %v2628 = vsel %vm2532, 1, 0
      %v2629 = vcvt.s32.f32 %v2533
      %v2630 = vcvt.s32.f32 %v2534
      %v2631 = vcvt.s32.f32 %v2535
      %v2632 = vcvt.s32.f32 %v2536
      %v2633 = vcvt.s32.f32 %v2537
      %v2634 = vcvt.s32.f32 %v2538
      %v2635 = vcvt.s32.f32 %v2539
      %v2636 = vcvt.s32.f32 %v2540
      %v2637 = vcvt.s32.f32 %v2541
      %v2638 = vcvt.s32.f32 %v2542
      %v2639 = vcvt.s32.f32 %v2543
      %v2640 = vcvt.s32.f32 %v2544
      %v2641 = vcvt.s32.f32 %v2545
      %v2642 = vcvt.s32.f32 %v2546
      %v2643 = vcvt.s32.f32 %v2547
      %v2644 = vcvt.s32.f32 %v2548
      %v2645 = vcvt.s32.f32 %v2549
      %v2646 = vcvt.s32.f32 %v2550
      %v2647 = vcvt.s32.f32 %v2551
      %v2648 = vcvt.s32.f32 %v2552
      %v2649 = vcvt.s32.f32 %v2553
      %v2650 = vcvt.s32.f32 %v2554
      %v2651 = vcvt.s32.f32 %v2555
      %v2652 = vcvt.s32.f32 %v2556
      %v2653 = vcvt.s32.f32 %v2557
      %v2654 = vcvt.s32.f32 %v2558
      %v2655 = vcvt.s32.f32 %v2559
      %v2656 = vcvt.s32.f32 %v2560
      %v2657 = vcvt.s32.f32 %v2561
      %v2658 = vcvt.s32.f32 %v2562
      %v2659 = vcvt.s32.f32 %v2563
      %v2660 = vcvt.s32.f32 %v2564
      %v2661 = vcvt.s32.f32 %v2565
      %v2662 = vcvt.s32.f32 %v2566
      %v2663 = vcvt.s32.f32 %v2567
      %v2664 = vcvt.s32.f32 %v2568
      %v2665 = vcvt.s32.f32 %v2569
      %v2666 = vcvt.s32.f32 %v2570
      %v2667 = vcvt.s32.f32 %v2571
      %v2668 = vcvt.s32.f32 %v2572
      %v2669 = vcvt.s32.f32 %v2573
      %v2670 = vcvt.s32.f32 %v2574
      %v2671 = vcvt.s32.f32 %v2575
      %v2672 = vcvt.s32.f32 %v2576
      %v2673 = vcvt.s32.f32 %v2577
      %v2674 = vcvt.s32.f32 %v2578
      %v2675 = vcvt.s32.f32 %v2579
      %v2676 = vcvt.s32.f32 %v2580
      %v2677 = vcvt.s32.f32 %v2581
      %v2678 = vcvt.s32.f32 %v2582
      %v2679 = vcvt.s32.f32 %v2583
      %v2680 = vcvt.s32.f32 %v2584
      %v2681 = vcvt.s32.f32 %v2585
      %v2682 = vcvt.s32.f32 %v2586
      %v2683 = vcvt.s32.f32 %v2587
      %v2684 = vcvt.s32.f32 %v2588
      %v2685 = vcvt.s32.f32 %v2589
      %v2686 = vcvt.s32.f32 %v2590
      %v2687 = vcvt.s32.f32 %v2591
      %v2688 = vcvt.s32.f32 %v2592
      %v2689 = vcvt.s32.f32 %v2593
      %v2690 = vcvt.s32.f32 %v2594
      %v2691 = vcvt.s32.f32 %v2595
      %v2692 = vcvt.s32.f32 %v2596
      %v2693 = vcvt.s32.f32 %v2597
      %v2694 = vcvt.s32.f32 %v2598
      %v2695 = vcvt.s32.f32 %v2599
      %v2696 = vcvt.s32.f32 %v2600
      %v2697 = vcvt.s32.f32 %v2601
      %v2698 = vcvt.s32.f32 %v2602
      %v2699 = vcvt.s32.f32 %v2603
      %v2700 = vcvt.s32.f32 %v2604
      %v2701 = vcvt.s32.f32 %v2605
      %v2702 = vcvt.s32.f32 %v2606
      %v2703 = vcvt.s32.f32 %v2607
      %v2704 = vcvt.s32.f32 %v2608
      %v2705 = vcvt.s32.f32 %v2609
      %v2706 = vcvt.s32.f32 %v2610
      %v2707 = vcvt.s32.f32 %v2611
      %v2708 = vcvt.s32.f32 %v2612
      %v2709 = vcvt.s32.f32 %v2613
      %v2710 = vcvt.s32.f32 %v2614
      %v2711 = vcvt.s32.f32 %v2615
      %v2712 = vcvt.s32.f32 %v2616
      %v2713 = vcvt.s32.f32 %v2617
      %v2714 = vcvt.s32.f32 %v2618
      %v2715 = vcvt.s32.f32 %v2619
      %v2716 = vcvt.s32.f32 %v2620
      %v2717 = vcvt.s32.f32 %v2621
      %v2718 = vcvt.s32.f32 %v2622
      %v2719 = vcvt.s32.f32 %v2623
      %v2720 = vcvt.s32.f32 %v2624
      %v2721 = vcvt.s32.f32 %v2625
      %v2722 = vcvt.s32.f32 %v2626
      %v2723 = vcvt.s32.f32 %v2627
      %v2724 = vcvt.s32.f32 %v2628
      %v2725 = vpack.c.bf16 %v2630, %v2629
      %v2726 = vpack.c.bf16 %v2632, %v2631
      %v2727 = vpack.c.bf16 %v2634, %v2633
      %v2728 = vpack.c.bf16 %v2636, %v2635
      %v2729 = vpack.c.bf16 %v2638, %v2637
      %v2730 = vpack.c.bf16 %v2640, %v2639
      %v2731 = vpack.c.bf16 %v2642, %v2641
      %v2732 = vpack.c.bf16 %v2644, %v2643
      %v2733 = vpack.c.bf16 %v2646, %v2645
      %v2734 = vpack.c.bf16 %v2648, %v2647
      %v2735 = vpack.c.bf16 %v2650, %v2649
      %v2736 = vpack.c.bf16 %v2652, %v2651
      %v2737 = vpack.c.bf16 %v2654, %v2653
      %v2738 = vpack.c.bf16 %v2656, %v2655
      %v2739 = vpack.c.bf16 %v2658, %v2657
      %v2740 = vpack.c.bf16 %v2660, %v2659
      %v2741 = vpack.c.bf16 %v2662, %v2661
      %v2742 = vpack.c.bf16 %v2664, %v2663
      %v2743 = vpack.c.bf16 %v2666, %v2665
      %v2744 = vpack.c.bf16 %v2668, %v2667
      %v2745 = vpack.c.bf16 %v2670, %v2669
      %v2746 = vpack.c.bf16 %v2672, %v2671
      %v2747 = vpack.c.bf16 %v2674, %v2673
      %v2748 = vpack.c.bf16 %v2676, %v2675
      %v2749 = vpack.c.bf16 %v2678, %v2677
      %v2750 = vpack.c.bf16 %v2680, %v2679
      %v2751 = vpack.c.bf16 %v2682, %v2681
      %v2752 = vpack.c.bf16 %v2684, %v2683
      %v2753 = vpack.c.bf16 %v2686, %v2685
      %v2754 = vpack.c.bf16 %v2688, %v2687
      %v2755 = vpack.c.bf16 %v2690, %v2689
      %v2756 = vpack.c.bf16 %v2692, %v2691
      %v2757 = vpack.c.bf16 %v2694, %v2693
      %v2758 = vpack.c.bf16 %v2696, %v2695
      %v2759 = vpack.c.bf16 %v2698, %v2697
      %v2760 = vpack.c.bf16 %v2700, %v2699
      %v2761 = vpack.c.bf16 %v2702, %v2701
      %v2762 = vpack.c.bf16 %v2704, %v2703
      %v2763 = vpack.c.bf16 %v2706, %v2705
      %v2764 = vpack.c.bf16 %v2708, %v2707
      %v2765 = vpack.c.bf16 %v2710, %v2709
      %v2766 = vpack.c.bf16 %v2712, %v2711
      %v2767 = vpack.c.bf16 %v2714, %v2713
      %v2768 = vpack.c.bf16 %v2716, %v2715
      %v2769 = vpack.c.bf16 %v2718, %v2717
      %v2770 = vpack.c.bf16 %v2720, %v2719
      %v2771 = vpack.c.bf16 %v2722, %v2721
      %v2772 = vpack.c.bf16 %v2724, %v2723
      %v2774 = vsel %vm1310, %v2725, 0
      %v2777 = vsel %vm1310, %v2726, 0
      %v2780 = vsel %vm1310, %v2727, 0
      %v2783 = vsel %vm1310, %v2728, 0
      %v2786 = vsel %vm1310, %v2729, 0
      %v2789 = vsel %vm1310, %v2730, 0
      %v2792 = vsel %vm1310, %v2731, 0
      %v2795 = vsel %vm1310, %v2732, 0
      %v2798 = vsel %vm1310, %v2733, 0
      %v2801 = vsel %vm1310, %v2734, 0
      %v2804 = vsel %vm1310, %v2735, 0
      %v2807 = vsel %vm1310, %v2736, 0
      %v2810 = vsel %vm1310, %v2737, 0
      %v2813 = vsel %vm1310, %v2738, 0
      %v2816 = vsel %vm1310, %v2739, 0
      %v2819 = vsel %vm1310, %v2740, 0
      %v2822 = vsel %vm1310, %v2741, 0
      %v2825 = vsel %vm1310, %v2742, 0
      %v2828 = vsel %vm1310, %v2743, 0
      %v2831 = vsel %vm1310, %v2744, 0
      %v2834 = vsel %vm1310, %v2745, 0
      %v2837 = vsel %vm1310, %v2746, 0
      %v2840 = vsel %vm1310, %v2747, 0
      %v2843 = vsel %vm1310, %v2748, 0
      %v2846 = vsel %vm1310, %v2749, 0
      %v2849 = vsel %vm1310, %v2750, 0
      %v2852 = vsel %vm1310, %v2751, 0
      %v2855 = vsel %vm1310, %v2752, 0
      %v2858 = vsel %vm1310, %v2753, 0
      %v2861 = vsel %vm1310, %v2754, 0
      %v2864 = vsel %vm1310, %v2755, 0
      %v2867 = vsel %vm1310, %v2756, 0
      %v2870 = vsel %vm1310, %v2757, 0
      %v2873 = vsel %vm1310, %v2758, 0
      %v2876 = vsel %vm1310, %v2759, 0
      %v2879 = vsel %vm1310, %v2760, 0
      %v2882 = vsel %vm1310, %v2761, 0
      %v2885 = vsel %vm1310, %v2762, 0
      %v2888 = vsel %vm1310, %v2763, 0
      %v2891 = vsel %vm1310, %v2764, 0
      %v2894 = vsel %vm1310, %v2765, 0
      %v2897 = vsel %vm1310, %v2766, 0
      %v2900 = vsel %vm1310, %v2767, 0
      %v2903 = vsel %vm1310, %v2768, 0
      %v2906 = vsel %vm1310, %v2769, 0
      %v2909 = vsel %vm1310, %v2770, 0
      %v2912 = vsel %vm1310, %v2771, 0
      %v2915 = vsel %vm1310, %v2772, 0
      %2917 = vmatprep.subr.bf16.mxu0 0
      %2918 = vmatpush1.bf16.msra.mxu0 0
      %2919 = vmatprep.subr.bf16.mxu0 0
      %2920 = vmatpush1.bf16.msra.mxu0 0
      %2921 = vmatprep.subr.bf16.mxu0 0
      %2922 = vmatpush1.bf16.msra.mxu0 0
      %2923 = vmatprep.subr.bf16.mxu0 0
      %2924 = vmatpush1.bf16.msra.mxu0 0
      %2925 = vmatprep.subr.bf16.mxu0 0
      %2926 = vmatpush1.bf16.msra.mxu0 %v1305
      %2927 = vmatprep.subr.bf16.mxu0 0
      %2928 = vmatpush1.bf16.msra.mxu0 %v1304
      %2929 = vmatprep.subr.bf16.mxu0 0
      %2930 = vmatpush1.bf16.msra.mxu0 %v1303
      %2931 = vmatprep.subr.bf16.mxu0 0
      %2932 = vmatpush1.bf16.msra.mxu0 %v1302
      %2933 = vmatprep.subr.bf16.mxu0 0
      %2934 = vmatpush2.bf16.msra.mxu0 0
      %2935 = vmatprep.subr.bf16.mxu0 0
      %2936 = vmatpush2.bf16.msra.mxu0 0
      %2937 = vmatprep.subr.bf16.mxu0 0
      %2938 = vmatpush2.bf16.msra.mxu0 0
      %2939 = vmatprep.subr.bf16.mxu0 0
      %2940 = vmatpush2.bf16.msra.mxu0 0
      %2941 = vmatprep.subr.bf16.mxu0 0
      %2942 = vmatpush2.bf16.msra.mxu0 0
      %2943 = vmatprep.subr.bf16.mxu0 0
      %2944 = vmatpush2.bf16.msra.mxu0 0
      %2945 = vmatprep.subr.bf16.mxu0 0
      %2946 = vmatpush2.bf16.msra.mxu0 0
      %2947 = vmatprep.subr.bf16.mxu0 0
      %2948 = vmatpush2.bf16.msra.mxu0 0
      %2949 = vmatprep.mubr.bf16.mxu0 0
      %2950 = vmatmul.mubr.bf16.gmra.mxu0 %v2774
      %v2951 = vpop.f32.mrf.mxu0
      %v2952 = vadd.f32 0.0, %v2951
      %v2953 = vpop.f32.mrf.mxu0
      %v2954 = vpop.f32.mrf.mxu0
      %v2955 = vadd.f32 0.0, %v2954
      %v2956 = vpop.f32.mrf.mxu0
      %2957 = vmatprep.mubr.bf16.mxu0 0
      %2958 = vmatmul.mubr.bf16.gmra.mxu0 %v2777
      %v2959 = vpop.f32.mrf.mxu0
      %v2960 = vadd.f32 0.0, %v2959
      %v2961 = vpop.f32.mrf.mxu0
      %v2962 = vpop.f32.mrf.mxu0
      %v2963 = vadd.f32 0.0, %v2962
      %v2964 = vpop.f32.mrf.mxu0
      %2965 = vmatprep.mubr.bf16.mxu0 0
      %2966 = vmatmul.mubr.bf16.gmra.mxu0 %v2780
      %v2967 = vpop.f32.mrf.mxu0
      %v2968 = vadd.f32 0.0, %v2967
      %v2969 = vpop.f32.mrf.mxu0
      %v2970 = vpop.f32.mrf.mxu0
      %v2971 = vadd.f32 0.0, %v2970
      %v2972 = vpop.f32.mrf.mxu0
      %2973 = vmatprep.mubr.bf16.mxu0 0
      %2974 = vmatmul.mubr.bf16.gmra.mxu0 %v2783
      %v2975 = vpop.f32.mrf.mxu0
      %v2976 = vadd.f32 0.0, %v2975
      %v2977 = vpop.f32.mrf.mxu0
      %v2978 = vpop.f32.mrf.mxu0
      %v2979 = vadd.f32 0.0, %v2978
      %v2980 = vpop.f32.mrf.mxu0
      %2981 = vmatprep.mubr.bf16.mxu0 0
      %2982 = vmatmul.mubr.bf16.gmra.mxu0 %v2786
      %v2983 = vpop.f32.mrf.mxu0
      %v2984 = vadd.f32 0.0, %v2983
      %v2985 = vpop.f32.mrf.mxu0
      %v2986 = vpop.f32.mrf.mxu0
      %v2987 = vadd.f32 0.0, %v2986
      %v2988 = vpop.f32.mrf.mxu0
      %2989 = vmatprep.mubr.bf16.mxu0 0
      %2990 = vmatmul.mubr.bf16.gmra.mxu0 %v2789
      %v2991 = vpop.f32.mrf.mxu0
      %v2992 = vadd.f32 0.0, %v2991
      %v2993 = vpop.f32.mrf.mxu0
      %v2994 = vpop.f32.mrf.mxu0
      %v2995 = vadd.f32 0.0, %v2994
      %v2996 = vpop.f32.mrf.mxu0
      %2997 = vmatprep.mubr.bf16.mxu0 0
      %2998 = vmatmul.mubr.bf16.gmra.mxu0 %v2792
      %v2999 = vpop.f32.mrf.mxu0
      %v3000 = vadd.f32 0.0, %v2999
      %v3001 = vpop.f32.mrf.mxu0
      %v3002 = vpop.f32.mrf.mxu0
      %v3003 = vadd.f32 0.0, %v3002
      %v3004 = vpop.f32.mrf.mxu0
      %3005 = vmatprep.mubr.bf16.mxu0 0
      %3006 = vmatmul.mubr.bf16.gmra.mxu0 %v2795
      %v3007 = vpop.f32.mrf.mxu0
      %v3008 = vadd.f32 0.0, %v3007
      %v3009 = vpop.f32.mrf.mxu0
      %v3010 = vpop.f32.mrf.mxu0
      %v3011 = vadd.f32 0.0, %v3010
      %v3012 = vpop.f32.mrf.mxu0
      %3013 = vmatprep.mubr.bf16.mxu0 0
      %3014 = vmatmul.mubr.bf16.gmra.mxu0 %v2798
      %v3015 = vpop.f32.mrf.mxu0
      %v3016 = vadd.f32 0.0, %v3015
      %v3017 = vpop.f32.mrf.mxu0
      %v3018 = vpop.f32.mrf.mxu0
      %v3019 = vadd.f32 0.0, %v3018
      %v3020 = vpop.f32.mrf.mxu0
      %3021 = vmatprep.mubr.bf16.mxu0 0
      %3022 = vmatmul.mubr.bf16.gmra.mxu0 %v2801
      %v3023 = vpop.f32.mrf.mxu0
      %v3024 = vadd.f32 0.0, %v3023
      %v3025 = vpop.f32.mrf.mxu0
      %v3026 = vpop.f32.mrf.mxu0
      %v3027 = vadd.f32 0.0, %v3026
      %v3028 = vpop.f32.mrf.mxu0
      %3029 = vmatprep.mubr.bf16.mxu0 0
      %3030 = vmatmul.mubr.bf16.gmra.mxu0 %v2804
      %v3031 = vpop.f32.mrf.mxu0
      %v3032 = vadd.f32 0.0, %v3031
      %v3033 = vpop.f32.mrf.mxu0
      %v3034 = vpop.f32.mrf.mxu0
      %v3035 = vadd.f32 0.0, %v3034
      %v3036 = vpop.f32.mrf.mxu0
      %3037 = vmatprep.mubr.bf16.mxu0 0
      %3038 = vmatmul.mubr.bf16.gmra.mxu0 %v2807
      %v3039 = vpop.f32.mrf.mxu0
      %v3040 = vadd.f32 0.0, %v3039
      %v3041 = vpop.f32.mrf.mxu0
      %v3042 = vpop.f32.mrf.mxu0
      %v3043 = vadd.f32 0.0, %v3042
      %v3044 = vpop.f32.mrf.mxu0
      %3045 = vmatprep.mubr.bf16.mxu0 0
      %3046 = vmatmul.mubr.bf16.gmra.mxu0 %v2810
      %v3047 = vpop.f32.mrf.mxu0
      %v3048 = vadd.f32 0.0, %v3047
      %v3049 = vpop.f32.mrf.mxu0
      %v3050 = vpop.f32.mrf.mxu0
      %v3051 = vadd.f32 0.0, %v3050
      %v3052 = vpop.f32.mrf.mxu0
      %3053 = vmatprep.mubr.bf16.mxu0 0
      %3054 = vmatmul.mubr.bf16.gmra.mxu0 %v2813
      %v3055 = vpop.f32.mrf.mxu0
      %v3056 = vadd.f32 0.0, %v3055
      %v3057 = vpop.f32.mrf.mxu0
      %v3058 = vpop.f32.mrf.mxu0
      %v3059 = vadd.f32 0.0, %v3058
      %v3060 = vpop.f32.mrf.mxu0
      %3061 = vmatprep.mubr.bf16.mxu0 0
      %3062 = vmatmul.mubr.bf16.gmra.mxu0 %v2816
      %v3063 = vpop.f32.mrf.mxu0
      %v3064 = vadd.f32 0.0, %v3063
      %v3065 = vpop.f32.mrf.mxu0
      %v3066 = vpop.f32.mrf.mxu0
      %v3067 = vadd.f32 0.0, %v3066
      %v3068 = vpop.f32.mrf.mxu0
      %3069 = vmatprep.mubr.bf16.mxu0 0
      %3070 = vmatmul.mubr.bf16.gmra.mxu0 %v2819
      %v3071 = vpop.f32.mrf.mxu0
      %v3072 = vadd.f32 0.0, %v3071
      %v3073 = vpop.f32.mrf.mxu0
      %v3074 = vpop.f32.mrf.mxu0
      %v3075 = vadd.f32 0.0, %v3074
      %v3076 = vpop.f32.mrf.mxu0
      %3077 = vmatprep.mubr.bf16.mxu0 0
      %3078 = vmatmul.mubr.bf16.gmra.mxu0 %v2822
      %v3079 = vpop.f32.mrf.mxu0
      %v3080 = vadd.f32 0.0, %v3079
      %v3081 = vpop.f32.mrf.mxu0
      %v3082 = vpop.f32.mrf.mxu0
      %v3083 = vadd.f32 0.0, %v3082
      %v3084 = vpop.f32.mrf.mxu0
      %3085 = vmatprep.mubr.bf16.mxu0 0
      %3086 = vmatmul.mubr.bf16.gmra.mxu0 %v2825
      %v3087 = vpop.f32.mrf.mxu0
      %v3088 = vadd.f32 0.0, %v3087
      %v3089 = vpop.f32.mrf.mxu0
      %v3090 = vpop.f32.mrf.mxu0
      %v3091 = vadd.f32 0.0, %v3090
      %v3092 = vpop.f32.mrf.mxu0
      %3093 = vmatprep.mubr.bf16.mxu0 0
      %3094 = vmatmul.mubr.bf16.gmra.mxu0 %v2828
      %v3095 = vpop.f32.mrf.mxu0
      %v3096 = vadd.f32 0.0, %v3095
      %v3097 = vpop.f32.mrf.mxu0
      %v3098 = vpop.f32.mrf.mxu0
      %v3099 = vadd.f32 0.0, %v3098
      %v3100 = vpop.f32.mrf.mxu0
      %3101 = vmatprep.mubr.bf16.mxu0 0
      %3102 = vmatmul.mubr.bf16.gmra.mxu0 %v2831
      %v3103 = vpop.f32.mrf.mxu0
      %v3104 = vadd.f32 0.0, %v3103
      %v3105 = vpop.f32.mrf.mxu0
      %v3106 = vpop.f32.mrf.mxu0
      %v3107 = vadd.f32 0.0, %v3106
      %v3108 = vpop.f32.mrf.mxu0
      %3109 = vmatprep.mubr.bf16.mxu0 0
      %3110 = vmatmul.mubr.bf16.gmra.mxu0 %v2834
      %v3111 = vpop.f32.mrf.mxu0
      %v3112 = vadd.f32 0.0, %v3111
      %v3113 = vpop.f32.mrf.mxu0
      %v3114 = vpop.f32.mrf.mxu0
      %v3115 = vadd.f32 0.0, %v3114
      %v3116 = vpop.f32.mrf.mxu0
      %3117 = vmatprep.mubr.bf16.mxu0 0
      %3118 = vmatmul.mubr.bf16.gmra.mxu0 %v2837
      %v3119 = vpop.f32.mrf.mxu0
      %v3120 = vadd.f32 0.0, %v3119
      %v3121 = vpop.f32.mrf.mxu0
      %v3122 = vpop.f32.mrf.mxu0
      %v3123 = vadd.f32 0.0, %v3122
      %v3124 = vpop.f32.mrf.mxu0
      %3125 = vmatprep.mubr.bf16.mxu0 0
      %3126 = vmatmul.mubr.bf16.gmra.mxu0 %v2840
      %v3127 = vpop.f32.mrf.mxu0
      %v3128 = vadd.f32 0.0, %v3127
      %v3129 = vpop.f32.mrf.mxu0
      %v3130 = vpop.f32.mrf.mxu0
      %v3131 = vadd.f32 0.0, %v3130
      %v3132 = vpop.f32.mrf.mxu0
      %3133 = vmatprep.mubr.bf16.mxu0 0
      %3134 = vmatmul.mubr.bf16.gmra.mxu0 %v2843
      %v3135 = vpop.f32.mrf.mxu0
      %v3136 = vadd.f32 0.0, %v3135
      %v3137 = vpop.f32.mrf.mxu0
      %v3138 = vpop.f32.mrf.mxu0
      %v3139 = vadd.f32 0.0, %v3138
      %v3140 = vpop.f32.mrf.mxu0
      %3141 = vmatprep.mubr.bf16.mxu0 0
      %3142 = vmatmul.mubr.bf16.gmra.mxu0 %v2846
      %v3143 = vpop.f32.mrf.mxu0
      %v3144 = vadd.f32 0.0, %v3143
      %v3145 = vpop.f32.mrf.mxu0
      %v3146 = vpop.f32.mrf.mxu0
      %v3147 = vadd.f32 0.0, %v3146
      %v3148 = vpop.f32.mrf.mxu0
      %3149 = vmatprep.mubr.bf16.mxu0 0
      %3150 = vmatmul.mubr.bf16.gmra.mxu0 %v2849
      %v3151 = vpop.f32.mrf.mxu0
      %v3152 = vadd.f32 0.0, %v3151
      %v3153 = vpop.f32.mrf.mxu0
      %v3154 = vpop.f32.mrf.mxu0
      %v3155 = vadd.f32 0.0, %v3154
      %v3156 = vpop.f32.mrf.mxu0
      %3157 = vmatprep.mubr.bf16.mxu0 0
      %3158 = vmatmul.mubr.bf16.gmra.mxu0 %v2852
      %v3159 = vpop.f32.mrf.mxu0
      %v3160 = vadd.f32 0.0, %v3159
      %v3161 = vpop.f32.mrf.mxu0
      %v3162 = vpop.f32.mrf.mxu0
      %v3163 = vadd.f32 0.0, %v3162
      %v3164 = vpop.f32.mrf.mxu0
      %3165 = vmatprep.mubr.bf16.mxu0 0
      %3166 = vmatmul.mubr.bf16.gmra.mxu0 %v2855
      %v3167 = vpop.f32.mrf.mxu0
      %v3168 = vadd.f32 0.0, %v3167
      %v3169 = vpop.f32.mrf.mxu0
      %v3170 = vpop.f32.mrf.mxu0
      %v3171 = vadd.f32 0.0, %v3170
      %v3172 = vpop.f32.mrf.mxu0
      %3173 = vmatprep.mubr.bf16.mxu0 0
      %3174 = vmatmul.mubr.bf16.gmra.mxu0 %v2858
      %v3175 = vpop.f32.mrf.mxu0
      %v3176 = vadd.f32 0.0, %v3175
      %v3177 = vpop.f32.mrf.mxu0
      %v3178 = vpop.f32.mrf.mxu0
      %v3179 = vadd.f32 0.0, %v3178
      %v3180 = vpop.f32.mrf.mxu0
      %3181 = vmatprep.mubr.bf16.mxu0 0
      %3182 = vmatmul.mubr.bf16.gmra.mxu0 %v2861
      %v3183 = vpop.f32.mrf.mxu0
      %v3184 = vadd.f32 0.0, %v3183
      %v3185 = vpop.f32.mrf.mxu0
      %v3186 = vpop.f32.mrf.mxu0
      %v3187 = vadd.f32 0.0, %v3186
      %v3188 = vpop.f32.mrf.mxu0
      %3189 = vmatprep.mubr.bf16.mxu0 0
      %3190 = vmatmul.mubr.bf16.gmra.mxu0 %v2864
      %v3191 = vpop.f32.mrf.mxu0
      %v3192 = vadd.f32 0.0, %v3191
      %v3193 = vpop.f32.mrf.mxu0
      %v3194 = vpop.f32.mrf.mxu0
      %v3195 = vadd.f32 0.0, %v3194
      %v3196 = vpop.f32.mrf.mxu0
      %3197 = vmatprep.mubr.bf16.mxu0 0
      %3198 = vmatmul.mubr.bf16.gmra.mxu0 %v2867
      %v3199 = vpop.f32.mrf.mxu0
      %v3200 = vadd.f32 0.0, %v3199
      %v3201 = vpop.f32.mrf.mxu0
      %v3202 = vpop.f32.mrf.mxu0
      %v3203 = vadd.f32 0.0, %v3202
      %v3204 = vpop.f32.mrf.mxu0
      %3205 = vmatprep.mubr.bf16.mxu0 0
      %3206 = vmatmul.mubr.bf16.gmra.mxu0 %v2870
      %v3207 = vpop.f32.mrf.mxu0
      %v3208 = vadd.f32 0.0, %v3207
      %v3209 = vpop.f32.mrf.mxu0
      %v3210 = vpop.f32.mrf.mxu0
      %v3211 = vadd.f32 0.0, %v3210
      %v3212 = vpop.f32.mrf.mxu0
      %3213 = vmatprep.mubr.bf16.mxu0 0
      %3214 = vmatmul.mubr.bf16.gmra.mxu0 %v2873
      %v3215 = vpop.f32.mrf.mxu0
      %v3216 = vadd.f32 0.0, %v3215
      %v3217 = vpop.f32.mrf.mxu0
      %v3218 = vpop.f32.mrf.mxu0
      %v3219 = vadd.f32 0.0, %v3218
      %v3220 = vpop.f32.mrf.mxu0
      %3221 = vmatprep.mubr.bf16.mxu0 0
      %3222 = vmatmul.mubr.bf16.gmra.mxu0 %v2876
      %v3223 = vpop.f32.mrf.mxu0
      %v3224 = vadd.f32 0.0, %v3223
      %v3225 = vpop.f32.mrf.mxu0
      %v3226 = vpop.f32.mrf.mxu0
      %v3227 = vadd.f32 0.0, %v3226
      %v3228 = vpop.f32.mrf.mxu0
      %3229 = vmatprep.mubr.bf16.mxu0 0
      %3230 = vmatmul.mubr.bf16.gmra.mxu0 %v2879
      %v3231 = vpop.f32.mrf.mxu0
      %v3232 = vadd.f32 0.0, %v3231
      %v3233 = vpop.f32.mrf.mxu0
      %v3234 = vpop.f32.mrf.mxu0
      %v3235 = vadd.f32 0.0, %v3234
      %v3236 = vpop.f32.mrf.mxu0
      %3237 = vmatprep.mubr.bf16.mxu0 0
      %3238 = vmatmul.mubr.bf16.gmra.mxu0 %v2882
      %v3239 = vpop.f32.mrf.mxu0
      %v3240 = vadd.f32 0.0, %v3239
      %v3241 = vpop.f32.mrf.mxu0
      %v3242 = vpop.f32.mrf.mxu0
      %v3243 = vadd.f32 0.0, %v3242
      %v3244 = vpop.f32.mrf.mxu0
      %3245 = vmatprep.mubr.bf16.mxu0 0
      %3246 = vmatmul.mubr.bf16.gmra.mxu0 %v2885
      %v3247 = vpop.f32.mrf.mxu0
      %v3248 = vadd.f32 0.0, %v3247
      %v3249 = vpop.f32.mrf.mxu0
      %v3250 = vpop.f32.mrf.mxu0
      %v3251 = vadd.f32 0.0, %v3250
      %v3252 = vpop.f32.mrf.mxu0
      %3253 = vmatprep.mubr.bf16.mxu0 0
      %3254 = vmatmul.mubr.bf16.gmra.mxu0 %v2888
      %v3255 = vpop.f32.mrf.mxu0
      %v3256 = vadd.f32 0.0, %v3255
      %v3257 = vpop.f32.mrf.mxu0
      %v3258 = vpop.f32.mrf.mxu0
      %v3259 = vadd.f32 0.0, %v3258
      %v3260 = vpop.f32.mrf.mxu0
      %3261 = vmatprep.mubr.bf16.mxu0 0
      %3262 = vmatmul.mubr.bf16.gmra.mxu0 %v2891
      %v3263 = vpop.f32.mrf.mxu0
      %v3264 = vadd.f32 0.0, %v3263
      %v3265 = vpop.f32.mrf.mxu0
      %v3266 = vpop.f32.mrf.mxu0
      %v3267 = vadd.f32 0.0, %v3266
      %v3268 = vpop.f32.mrf.mxu0
      %3269 = vmatprep.mubr.bf16.mxu0 0
      %3270 = vmatmul.mubr.bf16.gmra.mxu0 %v2894
      %v3271 = vpop.f32.mrf.mxu0
      %v3272 = vadd.f32 0.0, %v3271
      %v3273 = vpop.f32.mrf.mxu0
      %v3274 = vpop.f32.mrf.mxu0
      %v3275 = vadd.f32 0.0, %v3274
      %v3276 = vpop.f32.mrf.mxu0
      %3277 = vmatprep.mubr.bf16.mxu0 0
      %3278 = vmatmul.mubr.bf16.gmra.mxu0 %v2897
      %v3279 = vpop.f32.mrf.mxu0
      %v3280 = vadd.f32 0.0, %v3279
      %v3281 = vpop.f32.mrf.mxu0
      %v3282 = vpop.f32.mrf.mxu0
      %v3283 = vadd.f32 0.0, %v3282
      %v3284 = vpop.f32.mrf.mxu0
      %3285 = vmatprep.mubr.bf16.mxu0 0
      %3286 = vmatmul.mubr.bf16.gmra.mxu0 %v2900
      %v3287 = vpop.f32.mrf.mxu0
      %v3288 = vadd.f32 0.0, %v3287
      %v3289 = vpop.f32.mrf.mxu0
      %v3290 = vpop.f32.mrf.mxu0
      %v3291 = vadd.f32 0.0, %v3290
      %v3292 = vpop.f32.mrf.mxu0
      %3293 = vmatprep.mubr.bf16.mxu0 0
      %3294 = vmatmul.mubr.bf16.gmra.mxu0 %v2903
      %v3295 = vpop.f32.mrf.mxu0
      %v3296 = vadd.f32 0.0, %v3295
      %v3297 = vpop.f32.mrf.mxu0
      %v3298 = vpop.f32.mrf.mxu0
      %v3299 = vadd.f32 0.0, %v3298
      %v3300 = vpop.f32.mrf.mxu0
      %3301 = vmatprep.mubr.bf16.mxu0 0
      %3302 = vmatmul.mubr.bf16.gmra.mxu0 %v2906
      %v3303 = vpop.f32.mrf.mxu0
      %v3304 = vadd.f32 0.0, %v3303
      %v3305 = vpop.f32.mrf.mxu0
      %v3306 = vpop.f32.mrf.mxu0
      %v3307 = vadd.f32 0.0, %v3306
      %v3308 = vpop.f32.mrf.mxu0
      %3309 = vmatprep.mubr.bf16.mxu0 0
      %3310 = vmatmul.mubr.bf16.gmra.mxu0 %v2909
      %v3311 = vpop.f32.mrf.mxu0
      %v3312 = vadd.f32 0.0, %v3311
      %v3313 = vpop.f32.mrf.mxu0
      %v3314 = vpop.f32.mrf.mxu0
      %v3315 = vadd.f32 0.0, %v3314
      %v3316 = vpop.f32.mrf.mxu0
      %3317 = vmatprep.mubr.bf16.mxu0 0
      %3318 = vmatmul.mubr.bf16.gmra.mxu0 %v2912
      %v3319 = vpop.f32.mrf.mxu0
      %v3320 = vadd.f32 0.0, %v3319
      %v3321 = vpop.f32.mrf.mxu0
      %v3322 = vpop.f32.mrf.mxu0
      %v3323 = vadd.f32 0.0, %v3322
      %v3324 = vpop.f32.mrf.mxu0
      %3325 = vmatprep.mubr.bf16.mxu0 0
      %3326 = vmatmul.mubr.bf16.gmra.mxu0 %v2915
      %v3327 = vpop.f32.mrf.mxu0
      %v3328 = vadd.f32 0.0, %v3327
      %v3329 = vpop.f32.mrf.mxu0
      %v3330 = vpop.f32.mrf.mxu0
      %v3331 = vadd.f32 0.0, %v3330
      %v3332 = vpop.f32.mrf.mxu0
      %3333 = vdwg.mxu0
      %v3334 = vadd.f32 %v2051, %v2952
      %v3335 = vadd.f32 %v2054, %v2955
      %v3336 = vadd.f32 %v2059, %v2960
      %v3337 = vadd.f32 %v2062, %v2963
      %v3338 = vadd.f32 %v2067, %v2968
      %v3339 = vadd.f32 %v2070, %v2971
      %v3340 = vadd.f32 %v2075, %v2976
      %v3341 = vadd.f32 %v2078, %v2979
      %v3342 = vadd.f32 %v2083, %v2984
      %v3343 = vadd.f32 %v2086, %v2987
      %v3344 = vadd.f32 %v2091, %v2992
      %v3345 = vadd.f32 %v2094, %v2995
      %v3346 = vadd.f32 %v2099, %v3000
      %v3347 = vadd.f32 %v2102, %v3003
      %v3348 = vadd.f32 %v2107, %v3008
      %v3349 = vadd.f32 %v2110, %v3011
      %v3350 = vadd.f32 %v2115, %v3016
      %v3351 = vadd.f32 %v2118, %v3019
      %v3352 = vadd.f32 %v2123, %v3024
      %v3353 = vadd.f32 %v2126, %v3027
      %v3354 = vadd.f32 %v2131, %v3032
      %v3355 = vadd.f32 %v2134, %v3035
      %v3356 = vadd.f32 %v2139, %v3040
      %v3357 = vadd.f32 %v2142, %v3043
      %v3358 = vadd.f32 %v2147, %v3048
      %v3359 = vadd.f32 %v2150, %v3051
      %v3360 = vadd.f32 %v2155, %v3056
      %v3361 = vadd.f32 %v2158, %v3059
      %v3362 = vadd.f32 %v2163, %v3064
      %v3363 = vadd.f32 %v2166, %v3067
      %v3364 = vadd.f32 %v2171, %v3072
      %v3365 = vadd.f32 %v2174, %v3075
      %v3366 = vadd.f32 %v2179, %v3080
      %v3367 = vadd.f32 %v2182, %v3083
      %v3368 = vadd.f32 %v2187, %v3088
      %v3369 = vadd.f32 %v2190, %v3091
      %v3370 = vadd.f32 %v2195, %v3096
      %v3371 = vadd.f32 %v2198, %v3099
      %v3372 = vadd.f32 %v2203, %v3104
      %v3373 = vadd.f32 %v2206, %v3107
      %v3374 = vadd.f32 %v2211, %v3112
      %v3375 = vadd.f32 %v2214, %v3115
      %v3376 = vadd.f32 %v2219, %v3120
      %v3377 = vadd.f32 %v2222, %v3123
      %v3378 = vadd.f32 %v2227, %v3128
      %v3379 = vadd.f32 %v2230, %v3131
      %v3380 = vadd.f32 %v2235, %v3136
      %v3381 = vadd.f32 %v2238, %v3139
      %v3382 = vadd.f32 %v2243, %v3144
      %v3383 = vadd.f32 %v2246, %v3147
      %v3384 = vadd.f32 %v2251, %v3152
      %v3385 = vadd.f32 %v2254, %v3155
      %v3386 = vadd.f32 %v2259, %v3160
      %v3387 = vadd.f32 %v2262, %v3163
      %v3388 = vadd.f32 %v2267, %v3168
      %v3389 = vadd.f32 %v2270, %v3171
      %v3390 = vadd.f32 %v2275, %v3176
      %v3391 = vadd.f32 %v2278, %v3179
      %v3392 = vadd.f32 %v2283, %v3184
      %v3393 = vadd.f32 %v2286, %v3187
      %v3394 = vadd.f32 %v2291, %v3192
      %v3395 = vadd.f32 %v2294, %v3195
      %v3396 = vadd.f32 %v2299, %v3200
      %v3397 = vadd.f32 %v2302, %v3203
      %v3398 = vadd.f32 %v2307, %v3208
      %v3399 = vadd.f32 %v2310, %v3211
      %v3400 = vadd.f32 %v2315, %v3216
      %v3401 = vadd.f32 %v2318, %v3219
      %v3402 = vadd.f32 %v2323, %v3224
      %v3403 = vadd.f32 %v2326, %v3227
      %v3404 = vadd.f32 %v2331, %v3232
      %v3405 = vadd.f32 %v2334, %v3235
      %v3406 = vadd.f32 %v2339, %v3240
      %v3407 = vadd.f32 %v2342, %v3243
      %v3408 = vadd.f32 %v2347, %v3248
      %v3409 = vadd.f32 %v2350, %v3251
      %v3410 = vadd.f32 %v2355, %v3256
      %v3411 = vadd.f32 %v2358, %v3259
      %v3412 = vadd.f32 %v2363, %v3264
      %v3413 = vadd.f32 %v2366, %v3267
      %v3414 = vadd.f32 %v2371, %v3272
      %v3415 = vadd.f32 %v2374, %v3275
      %v3416 = vadd.f32 %v2379, %v3280
      %v3417 = vadd.f32 %v2382, %v3283
      %v3418 = vadd.f32 %v2387, %v3288
      %v3419 = vadd.f32 %v2390, %v3291
      %v3420 = vadd.f32 %v2395, %v3296
      %v3421 = vadd.f32 %v2398, %v3299
      %v3422 = vadd.f32 %v2403, %v3304
      %v3423 = vadd.f32 %v2406, %v3307
      %v3424 = vadd.f32 %v2411, %v3312
      %v3425 = vadd.f32 %v2414, %v3315
      %v3426 = vadd.f32 %v2419, %v3320
      %v3427 = vadd.f32 %v2422, %v3323
      %v3428 = vadd.f32 %v2427, %v3328
      %v3429 = vadd.f32 %v2430, %v3331
      %v3430 = vld [vmem:[%s5] sm:$0xf]
      %v3431 = vld [vmem:[%s5 + $0x4] sm:$0xf]
      %v3432 = vpack.c.bf16 %v3335, %v3334
      %v3433 = vpack.c.bf16 %v3337, %v3336
      %v3434 = vpack.c.bf16 %v3339, %v3338
      %v3435 = vpack.c.bf16 %v3341, %v3340
      %v3436 = vpack.c.bf16 %v3343, %v3342
      %v3437 = vpack.c.bf16 %v3345, %v3344
      %v3438 = vpack.c.bf16 %v3347, %v3346
      %v3439 = vpack.c.bf16 %v3349, %v3348
      %v3440 = vpack.c.bf16 %v3351, %v3350
      %v3441 = vpack.c.bf16 %v3353, %v3352
      %v3442 = vpack.c.bf16 %v3355, %v3354
      %v3443 = vpack.c.bf16 %v3357, %v3356
      %v3444 = vpack.c.bf16 %v3359, %v3358
      %v3445 = vpack.c.bf16 %v3361, %v3360
      %v3446 = vpack.c.bf16 %v3363, %v3362
      %v3447 = vpack.c.bf16 %v3365, %v3364
      %v3448 = vpack.c.bf16 %v3367, %v3366
      %v3449 = vpack.c.bf16 %v3369, %v3368
      %v3450 = vpack.c.bf16 %v3371, %v3370
      %v3451 = vpack.c.bf16 %v3373, %v3372
      %v3452 = vpack.c.bf16 %v3375, %v3374
      %v3453 = vpack.c.bf16 %v3377, %v3376
      %v3454 = vpack.c.bf16 %v3379, %v3378
      %v3455 = vpack.c.bf16 %v3381, %v3380
      %v3456 = vpack.c.bf16 %v3383, %v3382
      %v3457 = vpack.c.bf16 %v3385, %v3384
      %v3458 = vpack.c.bf16 %v3387, %v3386
      %v3459 = vpack.c.bf16 %v3389, %v3388
      %v3460 = vpack.c.bf16 %v3391, %v3390
      %v3461 = vpack.c.bf16 %v3393, %v3392
      %v3462 = vpack.c.bf16 %v3395, %v3394
      %v3463 = vpack.c.bf16 %v3397, %v3396
      %v3464 = vpack.c.bf16 %v3399, %v3398
      %v3465 = vpack.c.bf16 %v3401, %v3400
      %v3466 = vpack.c.bf16 %v3403, %v3402
      %v3467 = vpack.c.bf16 %v3405, %v3404
      %v3468 = vpack.c.bf16 %v3407, %v3406
      %v3469 = vpack.c.bf16 %v3409, %v3408
      %v3470 = vpack.c.bf16 %v3411, %v3410
      %v3471 = vpack.c.bf16 %v3413, %v3412
      %v3472 = vpack.c.bf16 %v3415, %v3414
      %v3473 = vpack.c.bf16 %v3417, %v3416
      %v3474 = vpack.c.bf16 %v3419, %v3418
      %v3475 = vpack.c.bf16 %v3421, %v3420
      %v3476 = vpack.c.bf16 %v3423, %v3422
      %v3477 = vpack.c.bf16 %v3425, %v3424
      %v3478 = vpack.c.bf16 %v3427, %v3426
      %v3479 = vpack.c.bf16 %v3429, %v3428
      %v3482 = vunpack.c.l.b16 %v3430
      %v3483 = vunpack.c.l.b16 %v3431
      %v3484 = vpack.c.b16 %v3483, %v3482
      %vm3486 = vcmask 130048
      %v3488 = vsel %vm3486, %v3432, 0
      %v3491 = vsel %vm3486, %v3433, 0
      %v3494 = vsel %vm3486, %v3434, 0
      %v3497 = vsel %vm3486, %v3435, 0
      %v3500 = vsel %vm3486, %v3436, 0
      %v3503 = vsel %vm3486, %v3437, 0
      %v3506 = vsel %vm3486, %v3438, 0
      %v3509 = vsel %vm3486, %v3439, 0
      %v3512 = vsel %vm3486, %v3440, 0
      %v3515 = vsel %vm3486, %v3441, 0
      %v3518 = vsel %vm3486, %v3442, 0
      %v3521 = vsel %vm3486, %v3443, 0
      %v3524 = vsel %vm3486, %v3444, 0
      %v3527 = vsel %vm3486, %v3445, 0
      %v3530 = vsel %vm3486, %v3446, 0
      %v3533 = vsel %vm3486, %v3447, 0
      %v3536 = vsel %vm3486, %v3448, 0
      %v3539 = vsel %vm3486, %v3449, 0
      %v3542 = vsel %vm3486, %v3450, 0
      %v3545 = vsel %vm3486, %v3451, 0
      %v3548 = vsel %vm3486, %v3452, 0
      %v3551 = vsel %vm3486, %v3453, 0
      %v3554 = vsel %vm3486, %v3454, 0
      %v3557 = vsel %vm3486, %v3455, 0
      %v3560 = vsel %vm3486, %v3456, 0
      %v3563 = vsel %vm3486, %v3457, 0
      %v3566 = vsel %vm3486, %v3458, 0
      %v3569 = vsel %vm3486, %v3459, 0
      %v3572 = vsel %vm3486, %v3460, 0
      %v3575 = vsel %vm3486, %v3461, 0
      %v3578 = vsel %vm3486, %v3462, 0
      %v3581 = vsel %vm3486, %v3463, 0
      %v3584 = vsel %vm3486, %v3464, 0
      %v3587 = vsel %vm3486, %v3465, 0
      %v3590 = vsel %vm3486, %v3466, 0
      %v3593 = vsel %vm3486, %v3467, 0
      %v3596 = vsel %vm3486, %v3468, 0
      %v3599 = vsel %vm3486, %v3469, 0
      %v3602 = vsel %vm3486, %v3470, 0
      %v3605 = vsel %vm3486, %v3471, 0
      %v3608 = vsel %vm3486, %v3472, 0
      %v3611 = vsel %vm3486, %v3473, 0
      %v3614 = vsel %vm3486, %v3474, 0
      %v3617 = vsel %vm3486, %v3475, 0
      %v3620 = vsel %vm3486, %v3476, 0
      %v3623 = vsel %vm3486, %v3477, 0
      %v3626 = vsel %vm3486, %v3478, 0
      %v3629 = vsel %vm3486, %v3479, 0
      %3631 = vmatprep.subr.bf16.mxu0 0
      %3632 = vmatpush1.bf16.msra.mxu0 0
      %3633 = vmatprep.subr.bf16.mxu0 0
      %3634 = vmatpush1.bf16.msra.mxu0 0
      %3635 = vmatprep.subr.bf16.mxu0 0
      %3636 = vmatpush1.bf16.msra.mxu0 0
      %3637 = vmatprep.subr.bf16.mxu0 0
      %3638 = vmatpush1.bf16.msra.mxu0 0
      %3639 = vmatprep.subr.bf16.mxu0 0
      %3640 = vmatpush1.bf16.msra.mxu0 0
      %3641 = vmatprep.subr.bf16.mxu0 0
      %3642 = vmatpush1.bf16.msra.mxu0 0
      %3643 = vmatprep.subr.bf16.mxu0 0
      %3644 = vmatpush1.bf16.msra.mxu0 0
      %3645 = vmatprep.subr.bf16.mxu0 0
      %3646 = vmatpush1.bf16.msra.mxu0 %v3484
      %3647 = vmatprep.subr.bf16.mxu0 0
      %3648 = vmatpush2.bf16.msra.mxu0 0
      %3649 = vmatprep.subr.bf16.mxu0 0
      %3650 = vmatpush2.bf16.msra.mxu0 0
      %3651 = vmatprep.subr.bf16.mxu0 0
      %3652 = vmatpush2.bf16.msra.mxu0 0
      %3653 = vmatprep.subr.bf16.mxu0 0
      %3654 = vmatpush2.bf16.msra.mxu0 0
      %3655 = vmatprep.subr.bf16.mxu0 0
      %3656 = vmatpush2.bf16.msra.mxu0 0
      %3657 = vmatprep.subr.bf16.mxu0 0
      %3658 = vmatpush2.bf16.msra.mxu0 0
      %3659 = vmatprep.subr.bf16.mxu0 0
      %3660 = vmatpush2.bf16.msra.mxu0 0
      %3661 = vmatprep.subr.bf16.mxu0 0
      %3662 = vmatpush2.bf16.msra.mxu0 0
      %3663 = vmatprep.mubr.bf16.mxu0 0
      %3664 = vmatmul.mubr.bf16.gmra.mxu0 %v3488
      %v3665 = vpop.f32.mrf.mxu0
      %v3666 = vadd.f32 0.0, %v3665
      %v3667 = vpop.f32.mrf.mxu0
      %v3668 = vpop.f32.mrf.mxu0
      %v3669 = vadd.f32 0.0, %v3668
      %v3670 = vpop.f32.mrf.mxu0
      %3671 = vmatprep.mubr.bf16.mxu0 0
      %3672 = vmatmul.mubr.bf16.gmra.mxu0 %v3491
      %v3673 = vpop.f32.mrf.mxu0
      %v3674 = vadd.f32 0.0, %v3673
      %v3675 = vpop.f32.mrf.mxu0
      %v3676 = vpop.f32.mrf.mxu0
      %v3677 = vadd.f32 0.0, %v3676
      %v3678 = vpop.f32.mrf.mxu0
      %3679 = vmatprep.mubr.bf16.mxu0 0
      %3680 = vmatmul.mubr.bf16.gmra.mxu0 %v3494
      %v3681 = vpop.f32.mrf.mxu0
      %v3682 = vadd.f32 0.0, %v3681
      %v3683 = vpop.f32.mrf.mxu0
      %v3684 = vpop.f32.mrf.mxu0
      %v3685 = vadd.f32 0.0, %v3684
      %v3686 = vpop.f32.mrf.mxu0
      %3687 = vmatprep.mubr.bf16.mxu0 0
      %3688 = vmatmul.mubr.bf16.gmra.mxu0 %v3497
      %v3689 = vpop.f32.mrf.mxu0
      %v3690 = vadd.f32 0.0, %v3689
      %v3691 = vpop.f32.mrf.mxu0
      %v3692 = vpop.f32.mrf.mxu0
      %v3693 = vadd.f32 0.0, %v3692
      %v3694 = vpop.f32.mrf.mxu0
      %3695 = vmatprep.mubr.bf16.mxu0 0
      %3696 = vmatmul.mubr.bf16.gmra.mxu0 %v3500
      %v3697 = vpop.f32.mrf.mxu0
      %v3698 = vadd.f32 0.0, %v3697
      %v3699 = vpop.f32.mrf.mxu0
      %v3700 = vpop.f32.mrf.mxu0
      %v3701 = vadd.f32 0.0, %v3700
      %v3702 = vpop.f32.mrf.mxu0
      %3703 = vmatprep.mubr.bf16.mxu0 0
      %3704 = vmatmul.mubr.bf16.gmra.mxu0 %v3503
      %v3705 = vpop.f32.mrf.mxu0
      %v3706 = vadd.f32 0.0, %v3705
      %v3707 = vpop.f32.mrf.mxu0
      %v3708 = vpop.f32.mrf.mxu0
      %v3709 = vadd.f32 0.0, %v3708
      %v3710 = vpop.f32.mrf.mxu0
      %3711 = vmatprep.mubr.bf16.mxu0 0
      %3712 = vmatmul.mubr.bf16.gmra.mxu0 %v3506
      %v3713 = vpop.f32.mrf.mxu0
      %v3714 = vadd.f32 0.0, %v3713
      %v3715 = vpop.f32.mrf.mxu0
      %v3716 = vpop.f32.mrf.mxu0
      %v3717 = vadd.f32 0.0, %v3716
      %v3718 = vpop.f32.mrf.mxu0
      %3719 = vmatprep.mubr.bf16.mxu0 0
      %3720 = vmatmul.mubr.bf16.gmra.mxu0 %v3509
      %v3721 = vpop.f32.mrf.mxu0
      %v3722 = vadd.f32 0.0, %v3721
      %v3723 = vpop.f32.mrf.mxu0
      %v3724 = vpop.f32.mrf.mxu0
      %v3725 = vadd.f32 0.0, %v3724
      %v3726 = vpop.f32.mrf.mxu0
      %3727 = vmatprep.mubr.bf16.mxu0 0
      %3728 = vmatmul.mubr.bf16.gmra.mxu0 %v3512
      %v3729 = vpop.f32.mrf.mxu0
      %v3730 = vadd.f32 0.0, %v3729
      %v3731 = vpop.f32.mrf.mxu0
      %v3732 = vpop.f32.mrf.mxu0
      %v3733 = vadd.f32 0.0, %v3732
      %v3734 = vpop.f32.mrf.mxu0
      %3735 = vmatprep.mubr.bf16.mxu0 0
      %3736 = vmatmul.mubr.bf16.gmra.mxu0 %v3515
      %v3737 = vpop.f32.mrf.mxu0
      %v3738 = vadd.f32 0.0, %v3737
      %v3739 = vpop.f32.mrf.mxu0
      %v3740 = vpop.f32.mrf.mxu0
      %v3741 = vadd.f32 0.0, %v3740
      %v3742 = vpop.f32.mrf.mxu0
      %3743 = vmatprep.mubr.bf16.mxu0 0
      %3744 = vmatmul.mubr.bf16.gmra.mxu0 %v3518
      %v3745 = vpop.f32.mrf.mxu0
      %v3746 = vadd.f32 0.0, %v3745
      %v3747 = vpop.f32.mrf.mxu0
      %v3748 = vpop.f32.mrf.mxu0
      %v3749 = vadd.f32 0.0, %v3748
      %v3750 = vpop.f32.mrf.mxu0
      %3751 = vmatprep.mubr.bf16.mxu0 0
      %3752 = vmatmul.mubr.bf16.gmra.mxu0 %v3521
      %v3753 = vpop.f32.mrf.mxu0
      %v3754 = vadd.f32 0.0, %v3753
      %v3755 = vpop.f32.mrf.mxu0
      %v3756 = vpop.f32.mrf.mxu0
      %v3757 = vadd.f32 0.0, %v3756
      %v3758 = vpop.f32.mrf.mxu0
      %3759 = vmatprep.mubr.bf16.mxu0 0
      %3760 = vmatmul.mubr.bf16.gmra.mxu0 %v3524
      %v3761 = vpop.f32.mrf.mxu0
      %v3762 = vadd.f32 0.0, %v3761
      %v3763 = vpop.f32.mrf.mxu0
      %v3764 = vpop.f32.mrf.mxu0
      %v3765 = vadd.f32 0.0, %v3764
      %v3766 = vpop.f32.mrf.mxu0
      %3767 = vmatprep.mubr.bf16.mxu0 0
      %3768 = vmatmul.mubr.bf16.gmra.mxu0 %v3527
      %v3769 = vpop.f32.mrf.mxu0
      %v3770 = vadd.f32 0.0, %v3769
      %v3771 = vpop.f32.mrf.mxu0
      %v3772 = vpop.f32.mrf.mxu0
      %v3773 = vadd.f32 0.0, %v3772
      %v3774 = vpop.f32.mrf.mxu0
      %3775 = vmatprep.mubr.bf16.mxu0 0
      %3776 = vmatmul.mubr.bf16.gmra.mxu0 %v3530
      %v3777 = vpop.f32.mrf.mxu0
      %v3778 = vadd.f32 0.0, %v3777
      %v3779 = vpop.f32.mrf.mxu0
      %v3780 = vpop.f32.mrf.mxu0
      %v3781 = vadd.f32 0.0, %v3780
      %v3782 = vpop.f32.mrf.mxu0
      %3783 = vmatprep.mubr.bf16.mxu0 0
      %3784 = vmatmul.mubr.bf16.gmra.mxu0 %v3533
      %v3785 = vpop.f32.mrf.mxu0
      %v3786 = vadd.f32 0.0, %v3785
      %v3787 = vpop.f32.mrf.mxu0
      %v3788 = vpop.f32.mrf.mxu0
      %v3789 = vadd.f32 0.0, %v3788
      %v3790 = vpop.f32.mrf.mxu0
      %3791 = vmatprep.mubr.bf16.mxu0 0
      %3792 = vmatmul.mubr.bf16.gmra.mxu0 %v3536
      %v3793 = vpop.f32.mrf.mxu0
      %v3794 = vadd.f32 0.0, %v3793
      %v3795 = vpop.f32.mrf.mxu0
      %v3796 = vpop.f32.mrf.mxu0
      %v3797 = vadd.f32 0.0, %v3796
      %v3798 = vpop.f32.mrf.mxu0
      %3799 = vmatprep.mubr.bf16.mxu0 0
      %3800 = vmatmul.mubr.bf16.gmra.mxu0 %v3539
      %v3801 = vpop.f32.mrf.mxu0
      %v3802 = vadd.f32 0.0, %v3801
      %v3803 = vpop.f32.mrf.mxu0
      %v3804 = vpop.f32.mrf.mxu0
      %v3805 = vadd.f32 0.0, %v3804
      %v3806 = vpop.f32.mrf.mxu0
      %3807 = vmatprep.mubr.bf16.mxu0 0
      %3808 = vmatmul.mubr.bf16.gmra.mxu0 %v3542
      %v3809 = vpop.f32.mrf.mxu0
      %v3810 = vadd.f32 0.0, %v3809
      %v3811 = vpop.f32.mrf.mxu0
      %v3812 = vpop.f32.mrf.mxu0
      %v3813 = vadd.f32 0.0, %v3812
      %v3814 = vpop.f32.mrf.mxu0
      %3815 = vmatprep.mubr.bf16.mxu0 0
      %3816 = vmatmul.mubr.bf16.gmra.mxu0 %v3545
      %v3817 = vpop.f32.mrf.mxu0
      %v3818 = vadd.f32 0.0, %v3817
      %v3819 = vpop.f32.mrf.mxu0
      %v3820 = vpop.f32.mrf.mxu0
      %v3821 = vadd.f32 0.0, %v3820
      %v3822 = vpop.f32.mrf.mxu0
      %3823 = vmatprep.mubr.bf16.mxu0 0
      %3824 = vmatmul.mubr.bf16.gmra.mxu0 %v3548
      %v3825 = vpop.f32.mrf.mxu0
      %v3826 = vadd.f32 0.0, %v3825
      %v3827 = vpop.f32.mrf.mxu0
      %v3828 = vpop.f32.mrf.mxu0
      %v3829 = vadd.f32 0.0, %v3828
      %v3830 = vpop.f32.mrf.mxu0
      %3831 = vmatprep.mubr.bf16.mxu0 0
      %3832 = vmatmul.mubr.bf16.gmra.mxu0 %v3551
      %v3833 = vpop.f32.mrf.mxu0
      %v3834 = vadd.f32 0.0, %v3833
      %v3835 = vpop.f32.mrf.mxu0
      %v3836 = vpop.f32.mrf.mxu0
      %v3837 = vadd.f32 0.0, %v3836
      %v3838 = vpop.f32.mrf.mxu0
      %3839 = vmatprep.mubr.bf16.mxu0 0
      %3840 = vmatmul.mubr.bf16.gmra.mxu0 %v3554
      %v3841 = vpop.f32.mrf.mxu0
      %v3842 = vadd.f32 0.0, %v3841
      %v3843 = vpop.f32.mrf.mxu0
      %v3844 = vpop.f32.mrf.mxu0
      %v3845 = vadd.f32 0.0, %v3844
      %v3846 = vpop.f32.mrf.mxu0
      %3847 = vmatprep.mubr.bf16.mxu0 0
      %3848 = vmatmul.mubr.bf16.gmra.mxu0 %v3557
      %v3849 = vpop.f32.mrf.mxu0
      %v3850 = vadd.f32 0.0, %v3849
      %v3851 = vpop.f32.mrf.mxu0
      %v3852 = vpop.f32.mrf.mxu0
      %v3853 = vadd.f32 0.0, %v3852
      %v3854 = vpop.f32.mrf.mxu0
      %3855 = vmatprep.mubr.bf16.mxu0 0
      %3856 = vmatmul.mubr.bf16.gmra.mxu0 %v3560
      %v3857 = vpop.f32.mrf.mxu0
      %v3858 = vadd.f32 0.0, %v3857
      %v3859 = vpop.f32.mrf.mxu0
      %v3860 = vpop.f32.mrf.mxu0
      %v3861 = vadd.f32 0.0, %v3860
      %v3862 = vpop.f32.mrf.mxu0
      %3863 = vmatprep.mubr.bf16.mxu0 0
      %3864 = vmatmul.mubr.bf16.gmra.mxu0 %v3563
      %v3865 = vpop.f32.mrf.mxu0
      %v3866 = vadd.f32 0.0, %v3865
      %v3867 = vpop.f32.mrf.mxu0
      %v3868 = vpop.f32.mrf.mxu0
      %v3869 = vadd.f32 0.0, %v3868
      %v3870 = vpop.f32.mrf.mxu0
      %3871 = vmatprep.mubr.bf16.mxu0 0
      %3872 = vmatmul.mubr.bf16.gmra.mxu0 %v3566
      %v3873 = vpop.f32.mrf.mxu0
      %v3874 = vadd.f32 0.0, %v3873
      %v3875 = vpop.f32.mrf.mxu0
      %v3876 = vpop.f32.mrf.mxu0
      %v3877 = vadd.f32 0.0, %v3876
      %v3878 = vpop.f32.mrf.mxu0
      %3879 = vmatprep.mubr.bf16.mxu0 0
      %3880 = vmatmul.mubr.bf16.gmra.mxu0 %v3569
      %v3881 = vpop.f32.mrf.mxu0
      %v3882 = vadd.f32 0.0, %v3881
      %v3883 = vpop.f32.mrf.mxu0
      %v3884 = vpop.f32.mrf.mxu0
      %v3885 = vadd.f32 0.0, %v3884
      %v3886 = vpop.f32.mrf.mxu0
      %3887 = vmatprep.mubr.bf16.mxu0 0
      %3888 = vmatmul.mubr.bf16.gmra.mxu0 %v3572
      %v3889 = vpop.f32.mrf.mxu0
      %v3890 = vadd.f32 0.0, %v3889
      %v3891 = vpop.f32.mrf.mxu0
      %v3892 = vpop.f32.mrf.mxu0
      %v3893 = vadd.f32 0.0, %v3892
      %v3894 = vpop.f32.mrf.mxu0
      %3895 = vmatprep.mubr.bf16.mxu0 0
      %3896 = vmatmul.mubr.bf16.gmra.mxu0 %v3575
      %v3897 = vpop.f32.mrf.mxu0
      %v3898 = vadd.f32 0.0, %v3897
      %v3899 = vpop.f32.mrf.mxu0
      %v3900 = vpop.f32.mrf.mxu0
      %v3901 = vadd.f32 0.0, %v3900
      %v3902 = vpop.f32.mrf.mxu0
      %3903 = vmatprep.mubr.bf16.mxu0 0
      %3904 = vmatmul.mubr.bf16.gmra.mxu0 %v3578
      %v3905 = vpop.f32.mrf.mxu0
      %v3906 = vadd.f32 0.0, %v3905
      %v3907 = vpop.f32.mrf.mxu0
      %v3908 = vpop.f32.mrf.mxu0
      %v3909 = vadd.f32 0.0, %v3908
      %v3910 = vpop.f32.mrf.mxu0
      %3911 = vmatprep.mubr.bf16.mxu0 0
      %3912 = vmatmul.mubr.bf16.gmra.mxu0 %v3581
      %v3913 = vpop.f32.mrf.mxu0
      %v3914 = vadd.f32 0.0, %v3913
      %v3915 = vpop.f32.mrf.mxu0
      %v3916 = vpop.f32.mrf.mxu0
      %v3917 = vadd.f32 0.0, %v3916
      %v3918 = vpop.f32.mrf.mxu0
      %3919 = vmatprep.mubr.bf16.mxu0 0
      %3920 = vmatmul.mubr.bf16.gmra.mxu0 %v3584
      %v3921 = vpop.f32.mrf.mxu0
      %v3922 = vadd.f32 0.0, %v3921
      %v3923 = vpop.f32.mrf.mxu0
      %v3924 = vpop.f32.mrf.mxu0
      %v3925 = vadd.f32 0.0, %v3924
      %v3926 = vpop.f32.mrf.mxu0
      %3927 = vmatprep.mubr.bf16.mxu0 0
      %3928 = vmatmul.mubr.bf16.gmra.mxu0 %v3587
      %v3929 = vpop.f32.mrf.mxu0
      %v3930 = vadd.f32 0.0, %v3929
      %v3931 = vpop.f32.mrf.mxu0
      %v3932 = vpop.f32.mrf.mxu0
      %v3933 = vadd.f32 0.0, %v3932
      %v3934 = vpop.f32.mrf.mxu0
      %3935 = vmatprep.mubr.bf16.mxu0 0
      %3936 = vmatmul.mubr.bf16.gmra.mxu0 %v3590
      %v3937 = vpop.f32.mrf.mxu0
      %v3938 = vadd.f32 0.0, %v3937
      %v3939 = vpop.f32.mrf.mxu0
      %v3940 = vpop.f32.mrf.mxu0
      %v3941 = vadd.f32 0.0, %v3940
      %v3942 = vpop.f32.mrf.mxu0
      %3943 = vmatprep.mubr.bf16.mxu0 0
      %3944 = vmatmul.mubr.bf16.gmra.mxu0 %v3593
      %v3945 = vpop.f32.mrf.mxu0
      %v3946 = vadd.f32 0.0, %v3945
      %v3947 = vpop.f32.mrf.mxu0
      %v3948 = vpop.f32.mrf.mxu0
      %v3949 = vadd.f32 0.0, %v3948
      %v3950 = vpop.f32.mrf.mxu0
      %3951 = vmatprep.mubr.bf16.mxu0 0
      %3952 = vmatmul.mubr.bf16.gmra.mxu0 %v3596
      %v3953 = vpop.f32.mrf.mxu0
      %v3954 = vadd.f32 0.0, %v3953
      %v3955 = vpop.f32.mrf.mxu0
      %v3956 = vpop.f32.mrf.mxu0
      %v3957 = vadd.f32 0.0, %v3956
      %v3958 = vpop.f32.mrf.mxu0
      %3959 = vmatprep.mubr.bf16.mxu0 0
      %3960 = vmatmul.mubr.bf16.gmra.mxu0 %v3599
      %v3961 = vpop.f32.mrf.mxu0
      %v3962 = vadd.f32 0.0, %v3961
      %v3963 = vpop.f32.mrf.mxu0
      %v3964 = vpop.f32.mrf.mxu0
      %v3965 = vadd.f32 0.0, %v3964
      %v3966 = vpop.f32.mrf.mxu0
      %3967 = vmatprep.mubr.bf16.mxu0 0
      %3968 = vmatmul.mubr.bf16.gmra.mxu0 %v3602
      %v3969 = vpop.f32.mrf.mxu0
      %v3970 = vadd.f32 0.0, %v3969
      %v3971 = vpop.f32.mrf.mxu0
      %v3972 = vpop.f32.mrf.mxu0
      %v3973 = vadd.f32 0.0, %v3972
      %v3974 = vpop.f32.mrf.mxu0
      %3975 = vmatprep.mubr.bf16.mxu0 0
      %3976 = vmatmul.mubr.bf16.gmra.mxu0 %v3605
      %v3977 = vpop.f32.mrf.mxu0
      %v3978 = vadd.f32 0.0, %v3977
      %v3979 = vpop.f32.mrf.mxu0
      %v3980 = vpop.f32.mrf.mxu0
      %v3981 = vadd.f32 0.0, %v3980
      %v3982 = vpop.f32.mrf.mxu0
      %3983 = vmatprep.mubr.bf16.mxu0 0
      %3984 = vmatmul.mubr.bf16.gmra.mxu0 %v3608
      %v3985 = vpop.f32.mrf.mxu0
      %v3986 = vadd.f32 0.0, %v3985
      %v3987 = vpop.f32.mrf.mxu0
      %v3988 = vpop.f32.mrf.mxu0
      %v3989 = vadd.f32 0.0, %v3988
      %v3990 = vpop.f32.mrf.mxu0
      %3991 = vmatprep.mubr.bf16.mxu0 0
      %3992 = vmatmul.mubr.bf16.gmra.mxu0 %v3611
      %v3993 = vpop.f32.mrf.mxu0
      %v3994 = vadd.f32 0.0, %v3993
      %v3995 = vpop.f32.mrf.mxu0
      %v3996 = vpop.f32.mrf.mxu0
      %v3997 = vadd.f32 0.0, %v3996
      %v3998 = vpop.f32.mrf.mxu0
      %3999 = vmatprep.mubr.bf16.mxu0 0
      %4000 = vmatmul.mubr.bf16.gmra.mxu0 %v3614
      %v4001 = vpop.f32.mrf.mxu0
      %v4002 = vadd.f32 0.0, %v4001
      %v4003 = vpop.f32.mrf.mxu0
      %v4004 = vpop.f32.mrf.mxu0
      %v4005 = vadd.f32 0.0, %v4004
      %v4006 = vpop.f32.mrf.mxu0
      %4007 = vmatprep.mubr.bf16.mxu0 0
      %4008 = vmatmul.mubr.bf16.gmra.mxu0 %v3617
      %v4009 = vpop.f32.mrf.mxu0
      %v4010 = vadd.f32 0.0, %v4009
      %v4011 = vpop.f32.mrf.mxu0
      %v4012 = vpop.f32.mrf.mxu0
      %v4013 = vadd.f32 0.0, %v4012
      %v4014 = vpop.f32.mrf.mxu0
      %4015 = vmatprep.mubr.bf16.mxu0 0
      %4016 = vmatmul.mubr.bf16.gmra.mxu0 %v3620
      %v4017 = vpop.f32.mrf.mxu0
      %v4018 = vadd.f32 0.0, %v4017
      %v4019 = vpop.f32.mrf.mxu0
      %v4020 = vpop.f32.mrf.mxu0
      %v4021 = vadd.f32 0.0, %v4020
      %v4022 = vpop.f32.mrf.mxu0
      %4023 = vmatprep.mubr.bf16.mxu0 0
      %4024 = vmatmul.mubr.bf16.gmra.mxu0 %v3623
      %v4025 = vpop.f32.mrf.mxu0
      %v4026 = vadd.f32 0.0, %v4025
      %v4027 = vpop.f32.mrf.mxu0
      %v4028 = vpop.f32.mrf.mxu0
      %v4029 = vadd.f32 0.0, %v4028
      %v4030 = vpop.f32.mrf.mxu0
      %4031 = vmatprep.mubr.bf16.mxu0 0
      %4032 = vmatmul.mubr.bf16.gmra.mxu0 %v3626
      %v4033 = vpop.f32.mrf.mxu0
      %v4034 = vadd.f32 0.0, %v4033
      %v4035 = vpop.f32.mrf.mxu0
      %v4036 = vpop.f32.mrf.mxu0
      %v4037 = vadd.f32 0.0, %v4036
      %v4038 = vpop.f32.mrf.mxu0
      %4039 = vmatprep.mubr.bf16.mxu0 0
      %4040 = vmatmul.mubr.bf16.gmra.mxu0 %v3629
      %v4041 = vpop.f32.mrf.mxu0
      %v4042 = vadd.f32 0.0, %v4041
      %v4043 = vpop.f32.mrf.mxu0
      %v4044 = vpop.f32.mrf.mxu0
      %v4045 = vadd.f32 0.0, %v4044
      %v4046 = vpop.f32.mrf.mxu0
      %4047 = vdwg.mxu0
      %v4048 = vmax.f32 %v3334, 1.0
      %v4049 = vmax.f32 %v3335, 1.0
      %v4050 = vmax.f32 %v3336, 1.0
      %v4051 = vmax.f32 %v3337, 1.0
      %v4052 = vmax.f32 %v3338, 1.0
      %v4053 = vmax.f32 %v3339, 1.0
      %v4054 = vmax.f32 %v3340, 1.0
      %v4055 = vmax.f32 %v3341, 1.0
      %v4056 = vmax.f32 %v3342, 1.0
      %v4057 = vmax.f32 %v3343, 1.0
      %v4058 = vmax.f32 %v3344, 1.0
      %v4059 = vmax.f32 %v3345, 1.0
      %v4060 = vmax.f32 %v3346, 1.0
      %v4061 = vmax.f32 %v3347, 1.0
      %v4062 = vmax.f32 %v3348, 1.0
      %v4063 = vmax.f32 %v3349, 1.0
      %v4064 = vmax.f32 %v3350, 1.0
      %v4065 = vmax.f32 %v3351, 1.0
      %v4066 = vmax.f32 %v3352, 1.0
      %v4067 = vmax.f32 %v3353, 1.0
      %v4068 = vmax.f32 %v3354, 1.0
      %v4069 = vmax.f32 %v3355, 1.0
      %v4070 = vmax.f32 %v3356, 1.0
      %v4071 = vmax.f32 %v3357, 1.0
      %v4072 = vmax.f32 %v3358, 1.0
      %v4073 = vmax.f32 %v3359, 1.0
      %v4074 = vmax.f32 %v3360, 1.0
      %v4075 = vmax.f32 %v3361, 1.0
      %v4076 = vmax.f32 %v3362, 1.0
      %v4077 = vmax.f32 %v3363, 1.0
      %v4078 = vmax.f32 %v3364, 1.0
      %v4079 = vmax.f32 %v3365, 1.0
      %v4080 = vmax.f32 %v3366, 1.0
      %v4081 = vmax.f32 %v3367, 1.0
      %v4082 = vmax.f32 %v3368, 1.0
      %v4083 = vmax.f32 %v3369, 1.0
      %v4084 = vmax.f32 %v3370, 1.0
      %v4085 = vmax.f32 %v3371, 1.0
      %v4086 = vmax.f32 %v3372, 1.0
      %v4087 = vmax.f32 %v3373, 1.0
      %v4088 = vmax.f32 %v3374, 1.0
      %v4089 = vmax.f32 %v3375, 1.0
      %v4090 = vmax.f32 %v3376, 1.0
      %v4091 = vmax.f32 %v3377, 1.0
      %v4092 = vmax.f32 %v3378, 1.0
      %v4093 = vmax.f32 %v3379, 1.0
      %v4094 = vmax.f32 %v3380, 1.0
      %v4095 = vmax.f32 %v3381, 1.0
      %v4096 = vmax.f32 %v3382, 1.0
      %v4097 = vmax.f32 %v3383, 1.0
      %v4098 = vmax.f32 %v3384, 1.0
      %v4099 = vmax.f32 %v3385, 1.0
      %v4100 = vmax.f32 %v3386, 1.0
      %v4101 = vmax.f32 %v3387, 1.0
      %v4102 = vmax.f32 %v3388, 1.0
      %v4103 = vmax.f32 %v3389, 1.0
      %v4104 = vmax.f32 %v3390, 1.0
      %v4105 = vmax.f32 %v3391, 1.0
      %v4106 = vmax.f32 %v3392, 1.0
      %v4107 = vmax.f32 %v3393, 1.0
      %v4108 = vmax.f32 %v3394, 1.0
      %v4109 = vmax.f32 %v3395, 1.0
      %v4110 = vmax.f32 %v3396, 1.0
      %v4111 = vmax.f32 %v3397, 1.0
      %v4112 = vmax.f32 %v3398, 1.0
      %v4113 = vmax.f32 %v3399, 1.0
      %v4114 = vmax.f32 %v3400, 1.0
      %v4115 = vmax.f32 %v3401, 1.0
      %v4116 = vmax.f32 %v3402, 1.0
      %v4117 = vmax.f32 %v3403, 1.0
      %v4118 = vmax.f32 %v3404, 1.0
      %v4119 = vmax.f32 %v3405, 1.0
      %v4120 = vmax.f32 %v3406, 1.0
      %v4121 = vmax.f32 %v3407, 1.0
      %v4122 = vmax.f32 %v3408, 1.0
      %v4123 = vmax.f32 %v3409, 1.0
      %v4124 = vmax.f32 %v3410, 1.0
      %v4125 = vmax.f32 %v3411, 1.0
      %v4126 = vmax.f32 %v3412, 1.0
      %v4127 = vmax.f32 %v3413, 1.0
      %v4128 = vmax.f32 %v3414, 1.0
      %v4129 = vmax.f32 %v3415, 1.0
      %v4130 = vmax.f32 %v3416, 1.0
      %v4131 = vmax.f32 %v3417, 1.0
      %v4132 = vmax.f32 %v3418, 1.0
      %v4133 = vmax.f32 %v3419, 1.0
      %v4134 = vmax.f32 %v3420, 1.0
      %v4135 = vmax.f32 %v3421, 1.0
      %v4136 = vmax.f32 %v3422, 1.0
      %v4137 = vmax.f32 %v3423, 1.0
      %v4138 = vmax.f32 %v3424, 1.0
      %v4139 = vmax.f32 %v3425, 1.0
      %v4140 = vmax.f32 %v3426, 1.0
      %v4141 = vmax.f32 %v3427, 1.0
      %v4142 = vmax.f32 %v3428, 1.0
      %v4143 = vmax.f32 %v3429, 1.0
      %v4144 = vrcp.pop %v4048
      %v4145 = vrcp.pop %v4049
      %v4146 = vrcp.pop %v4050
      %v4147 = vrcp.pop %v4051
      %v4148 = vrcp.pop %v4052
      %v4149 = vrcp.pop %v4053
      %v4150 = vrcp.pop %v4054
      %v4151 = vrcp.pop %v4055
      %v4152 = vrcp.pop %v4056
      %v4153 = vrcp.pop %v4057
      %v4154 = vrcp.pop %v4058
      %v4155 = vrcp.pop %v4059
      %v4156 = vrcp.pop %v4060
      %v4157 = vrcp.pop %v4061
      %v4158 = vrcp.pop %v4062
      %v4159 = vrcp.pop %v4063
      %v4160 = vrcp.pop %v4064
      %v4161 = vrcp.pop %v4065
      %v4162 = vrcp.pop %v4066
      %v4163 = vrcp.pop %v4067
      %v4164 = vrcp.pop %v4068
      %v4165 = vrcp.pop %v4069
      %v4166 = vrcp.pop %v4070
      %v4167 = vrcp.pop %v4071
      %v4168 = vrcp.pop %v4072
      %v4169 = vrcp.pop %v4073
      %v4170 = vrcp.pop %v4074
      %v4171 = vrcp.pop %v4075
      %v4172 = vrcp.pop %v4076
      %v4173 = vrcp.pop %v4077
      %v4174 = vrcp.pop %v4078
      %v4175 = vrcp.pop %v4079
      %v4176 = vrcp.pop %v4080
      %v4177 = vrcp.pop %v4081
      %v4178 = vrcp.pop %v4082
      %v4179 = vrcp.pop %v4083
      %v4180 = vrcp.pop %v4084
      %v4181 = vrcp.pop %v4085
      %v4182 = vrcp.pop %v4086
      %v4183 = vrcp.pop %v4087
      %v4184 = vrcp.pop %v4088
      %v4185 = vrcp.pop %v4089
      %v4186 = vrcp.pop %v4090
      %v4187 = vrcp.pop %v4091
      %v4188 = vrcp.pop %v4092
      %v4189 = vrcp.pop %v4093
      %v4190 = vrcp.pop %v4094
      %v4191 = vrcp.pop %v4095
      %v4192 = vrcp.pop %v4096
      %v4193 = vrcp.pop %v4097
      %v4194 = vrcp.pop %v4098
      %v4195 = vrcp.pop %v4099
      %v4196 = vrcp.pop %v4100
      %v4197 = vrcp.pop %v4101
      %v4198 = vrcp.pop %v4102
      %v4199 = vrcp.pop %v4103
      %v4200 = vrcp.pop %v4104
      %v4201 = vrcp.pop %v4105
      %v4202 = vrcp.pop %v4106
      %v4203 = vrcp.pop %v4107
      %v4204 = vrcp.pop %v4108
      %v4205 = vrcp.pop %v4109
      %v4206 = vrcp.pop %v4110
      %v4207 = vrcp.pop %v4111
      %v4208 = vrcp.pop %v4112
      %v4209 = vrcp.pop %v4113
      %v4210 = vrcp.pop %v4114
      %v4211 = vrcp.pop %v4115
      %v4212 = vrcp.pop %v4116
      %v4213 = vrcp.pop %v4117
      %v4214 = vrcp.pop %v4118
      %v4215 = vrcp.pop %v4119
      %v4216 = vrcp.pop %v4120
      %v4217 = vrcp.pop %v4121
      %v4218 = vrcp.pop %v4122
      %v4219 = vrcp.pop %v4123
      %v4220 = vrcp.pop %v4124
      %v4221 = vrcp.pop %v4125
      %v4222 = vrcp.pop %v4126
      %v4223 = vrcp.pop %v4127
      %v4224 = vrcp.pop %v4128
      %v4225 = vrcp.pop %v4129
      %v4226 = vrcp.pop %v4130
      %v4227 = vrcp.pop %v4131
      %v4228 = vrcp.pop %v4132
      %v4229 = vrcp.pop %v4133
      %v4230 = vrcp.pop %v4134
      %v4231 = vrcp.pop %v4135
      %v4232 = vrcp.pop %v4136
      %v4233 = vrcp.pop %v4137
      %v4234 = vrcp.pop %v4138
      %v4235 = vrcp.pop %v4139
      %v4236 = vrcp.pop %v4140
      %v4237 = vrcp.pop %v4141
      %v4238 = vrcp.pop %v4142
      %v4239 = vrcp.pop %v4143
      %4241 = vset.pattern.permute.xlu0 6
      %4242 = vperm.xlu0 %4241, %v4144
      %v4243 = vpop.permute.xlu0 %4242
      %4246 = vset.pattern.permute.xlu0 6
      %4247 = vperm.xlu0 %4246, %v4145
      %v4248 = vpop.permute.xlu0 %4247
      %4251 = vset.pattern.permute.xlu0 6
      %4252 = vperm.xlu0 %4251, %v4146
      %v4253 = vpop.permute.xlu0 %4252
      %4256 = vset.pattern.permute.xlu0 6
      %4257 = vperm.xlu0 %4256, %v4147
      %v4258 = vpop.permute.xlu0 %4257
      %4261 = vset.pattern.permute.xlu0 6
      %4262 = vperm.xlu0 %4261, %v4148
      %v4263 = vpop.permute.xlu0 %4262
      %4266 = vset.pattern.permute.xlu0 6
      %4267 = vperm.xlu0 %4266, %v4149
      %v4268 = vpop.permute.xlu0 %4267
      %4271 = vset.pattern.permute.xlu0 6
      %4272 = vperm.xlu0 %4271, %v4150
      %v4273 = vpop.permute.xlu0 %4272
      %4276 = vset.pattern.permute.xlu0 6
      %4277 = vperm.xlu0 %4276, %v4151
      %v4278 = vpop.permute.xlu0 %4277
      %4281 = vset.pattern.permute.xlu0 6
      %4282 = vperm.xlu0 %4281, %v4152
      %v4283 = vpop.permute.xlu0 %4282
      %4286 = vset.pattern.permute.xlu0 6
      %4287 = vperm.xlu0 %4286, %v4153
      %v4288 = vpop.permute.xlu0 %4287
      %4291 = vset.pattern.permute.xlu0 6
      %4292 = vperm.xlu0 %4291, %v4154
      %v4293 = vpop.permute.xlu0 %4292
      %4296 = vset.pattern.permute.xlu0 6
      %4297 = vperm.xlu0 %4296, %v4155
      %v4298 = vpop.permute.xlu0 %4297
      %4301 = vset.pattern.permute.xlu0 6
      %4302 = vperm.xlu0 %4301, %v4156
      %v4303 = vpop.permute.xlu0 %4302
      %4306 = vset.pattern.permute.xlu0 6
      %4307 = vperm.xlu0 %4306, %v4157
      %v4308 = vpop.permute.xlu0 %4307
      %4311 = vset.pattern.permute.xlu0 6
      %4312 = vperm.xlu0 %4311, %v4158
      %v4313 = vpop.permute.xlu0 %4312
      %4316 = vset.pattern.permute.xlu0 6
      %4317 = vperm.xlu0 %4316, %v4159
      %v4318 = vpop.permute.xlu0 %4317
      %4321 = vset.pattern.permute.xlu0 6
      %4322 = vperm.xlu0 %4321, %v4160
      %v4323 = vpop.permute.xlu0 %4322
      %4326 = vset.pattern.permute.xlu0 6
      %4327 = vperm.xlu0 %4326, %v4161
      %v4328 = vpop.permute.xlu0 %4327
      %4331 = vset.pattern.permute.xlu0 6
      %4332 = vperm.xlu0 %4331, %v4162
      %v4333 = vpop.permute.xlu0 %4332
      %4336 = vset.pattern.permute.xlu0 6
      %4337 = vperm.xlu0 %4336, %v4163
      %v4338 = vpop.permute.xlu0 %4337
      %4341 = vset.pattern.permute.xlu0 6
      %4342 = vperm.xlu0 %4341, %v4164
      %v4343 = vpop.permute.xlu0 %4342
      %4346 = vset.pattern.permute.xlu0 6
      %4347 = vperm.xlu0 %4346, %v4165
      %v4348 = vpop.permute.xlu0 %4347
      %4351 = vset.pattern.permute.xlu0 6
      %4352 = vperm.xlu0 %4351, %v4166
      %v4353 = vpop.permute.xlu0 %4352
      %4356 = vset.pattern.permute.xlu0 6
      %4357 = vperm.xlu0 %4356, %v4167
      %v4358 = vpop.permute.xlu0 %4357
      %4361 = vset.pattern.permute.xlu0 6
      %4362 = vperm.xlu0 %4361, %v4168
      %v4363 = vpop.permute.xlu0 %4362
      %4366 = vset.pattern.permute.xlu0 6
      %4367 = vperm.xlu0 %4366, %v4169
      %v4368 = vpop.permute.xlu0 %4367
      %4371 = vset.pattern.permute.xlu0 6
      %4372 = vperm.xlu0 %4371, %v4170
      %v4373 = vpop.permute.xlu0 %4372
      %4376 = vset.pattern.permute.xlu0 6
      %4377 = vperm.xlu0 %4376, %v4171
      %v4378 = vpop.permute.xlu0 %4377
      %4381 = vset.pattern.permute.xlu0 6
      %4382 = vperm.xlu0 %4381, %v4172
      %v4383 = vpop.permute.xlu0 %4382
      %4386 = vset.pattern.permute.xlu0 6
      %4387 = vperm.xlu0 %4386, %v4173
      %v4388 = vpop.permute.xlu0 %4387
      %4391 = vset.pattern.permute.xlu0 6
      %4392 = vperm.xlu0 %4391, %v4174
      %v4393 = vpop.permute.xlu0 %4392
      %4396 = vset.pattern.permute.xlu0 6
      %4397 = vperm.xlu0 %4396, %v4175
      %v4398 = vpop.permute.xlu0 %4397
      %4401 = vset.pattern.permute.xlu0 6
      %4402 = vperm.xlu0 %4401, %v4176
      %v4403 = vpop.permute.xlu0 %4402
      %4406 = vset.pattern.permute.xlu0 6
      %4407 = vperm.xlu0 %4406, %v4177
      %v4408 = vpop.permute.xlu0 %4407
      %4411 = vset.pattern.permute.xlu0 6
      %4412 = vperm.xlu0 %4411, %v4178
      %v4413 = vpop.permute.xlu0 %4412
      %4416 = vset.pattern.permute.xlu0 6
      %4417 = vperm.xlu0 %4416, %v4179
      %v4418 = vpop.permute.xlu0 %4417
      %4421 = vset.pattern.permute.xlu0 6
      %4422 = vperm.xlu0 %4421, %v4180
      %v4423 = vpop.permute.xlu0 %4422
      %4426 = vset.pattern.permute.xlu0 6
      %4427 = vperm.xlu0 %4426, %v4181
      %v4428 = vpop.permute.xlu0 %4427
      %4431 = vset.pattern.permute.xlu0 6
      %4432 = vperm.xlu0 %4431, %v4182
      %v4433 = vpop.permute.xlu0 %4432
      %4436 = vset.pattern.permute.xlu0 6
      %4437 = vperm.xlu0 %4436, %v4183
      %v4438 = vpop.permute.xlu0 %4437
      %4441 = vset.pattern.permute.xlu0 6
      %4442 = vperm.xlu0 %4441, %v4184
      %v4443 = vpop.permute.xlu0 %4442
      %4446 = vset.pattern.permute.xlu0 6
      %4447 = vperm.xlu0 %4446, %v4185
      %v4448 = vpop.permute.xlu0 %4447
      %4451 = vset.pattern.permute.xlu0 6
      %4452 = vperm.xlu0 %4451, %v4186
      %v4453 = vpop.permute.xlu0 %4452
      %4456 = vset.pattern.permute.xlu0 6
      %4457 = vperm.xlu0 %4456, %v4187
      %v4458 = vpop.permute.xlu0 %4457
      %4461 = vset.pattern.permute.xlu0 6
      %4462 = vperm.xlu0 %4461, %v4188
      %v4463 = vpop.permute.xlu0 %4462
      %4466 = vset.pattern.permute.xlu0 6
      %4467 = vperm.xlu0 %4466, %v4189
      %v4468 = vpop.permute.xlu0 %4467
      %4471 = vset.pattern.permute.xlu0 6
      %4472 = vperm.xlu0 %4471, %v4190
      %v4473 = vpop.permute.xlu0 %4472
      %4476 = vset.pattern.permute.xlu0 6
      %4477 = vperm.xlu0 %4476, %v4191
      %v4478 = vpop.permute.xlu0 %4477
      %4481 = vset.pattern.permute.xlu0 6
      %4482 = vperm.xlu0 %4481, %v4192
      %v4483 = vpop.permute.xlu0 %4482
      %4486 = vset.pattern.permute.xlu0 6
      %4487 = vperm.xlu0 %4486, %v4193
      %v4488 = vpop.permute.xlu0 %4487
      %4491 = vset.pattern.permute.xlu0 6
      %4492 = vperm.xlu0 %4491, %v4194
      %v4493 = vpop.permute.xlu0 %4492
      %4496 = vset.pattern.permute.xlu0 6
      %4497 = vperm.xlu0 %4496, %v4195
      %v4498 = vpop.permute.xlu0 %4497
      %4501 = vset.pattern.permute.xlu0 6
      %4502 = vperm.xlu0 %4501, %v4196
      %v4503 = vpop.permute.xlu0 %4502
      %4506 = vset.pattern.permute.xlu0 6
      %4507 = vperm.xlu0 %4506, %v4197
      %v4508 = vpop.permute.xlu0 %4507
      %4511 = vset.pattern.permute.xlu0 6
      %4512 = vperm.xlu0 %4511, %v4198
      %v4513 = vpop.permute.xlu0 %4512
      %4516 = vset.pattern.permute.xlu0 6
      %4517 = vperm.xlu0 %4516, %v4199
      %v4518 = vpop.permute.xlu0 %4517
      %4521 = vset.pattern.permute.xlu0 6
      %4522 = vperm.xlu0 %4521, %v4200
      %v4523 = vpop.permute.xlu0 %4522
      %4526 = vset.pattern.permute.xlu0 6
      %4527 = vperm.xlu0 %4526, %v4201
      %v4528 = vpop.permute.xlu0 %4527
      %4531 = vset.pattern.permute.xlu0 6
      %4532 = vperm.xlu0 %4531, %v4202
      %v4533 = vpop.permute.xlu0 %4532
      %4536 = vset.pattern.permute.xlu0 6
      %4537 = vperm.xlu0 %4536, %v4203
      %v4538 = vpop.permute.xlu0 %4537
      %4541 = vset.pattern.permute.xlu0 6
      %4542 = vperm.xlu0 %4541, %v4204
      %v4543 = vpop.permute.xlu0 %4542
      %4546 = vset.pattern.permute.xlu0 6
      %4547 = vperm.xlu0 %4546, %v4205
      %v4548 = vpop.permute.xlu0 %4547
      %4551 = vset.pattern.permute.xlu0 6
      %4552 = vperm.xlu0 %4551, %v4206
      %v4553 = vpop.permute.xlu0 %4552
      %4556 = vset.pattern.permute.xlu0 6
      %4557 = vperm.xlu0 %4556, %v4207
      %v4558 = vpop.permute.xlu0 %4557
      %4561 = vset.pattern.permute.xlu0 6
      %4562 = vperm.xlu0 %4561, %v4208
      %v4563 = vpop.permute.xlu0 %4562
      %4566 = vset.pattern.permute.xlu0 6
      %4567 = vperm.xlu0 %4566, %v4209
      %v4568 = vpop.permute.xlu0 %4567
      %4571 = vset.pattern.permute.xlu0 6
      %4572 = vperm.xlu0 %4571, %v4210
      %v4573 = vpop.permute.xlu0 %4572
      %4576 = vset.pattern.permute.xlu0 6
      %4577 = vperm.xlu0 %4576, %v4211
      %v4578 = vpop.permute.xlu0 %4577
      %4581 = vset.pattern.permute.xlu0 6
      %4582 = vperm.xlu0 %4581, %v4212
      %v4583 = vpop.permute.xlu0 %4582
      %4586 = vset.pattern.permute.xlu0 6
      %4587 = vperm.xlu0 %4586, %v4213
      %v4588 = vpop.permute.xlu0 %4587
      %4591 = vset.pattern.permute.xlu0 6
      %4592 = vperm.xlu0 %4591, %v4214
      %v4593 = vpop.permute.xlu0 %4592
      %4596 = vset.pattern.permute.xlu0 6
      %4597 = vperm.xlu0 %4596, %v4215
      %v4598 = vpop.permute.xlu0 %4597
      %4601 = vset.pattern.permute.xlu0 6
      %4602 = vperm.xlu0 %4601, %v4216
      %v4603 = vpop.permute.xlu0 %4602
      %4606 = vset.pattern.permute.xlu0 6
      %4607 = vperm.xlu0 %4606, %v4217
      %v4608 = vpop.permute.xlu0 %4607
      %4611 = vset.pattern.permute.xlu0 6
      %4612 = vperm.xlu0 %4611, %v4218
      %v4613 = vpop.permute.xlu0 %4612
      %4616 = vset.pattern.permute.xlu0 6
      %4617 = vperm.xlu0 %4616, %v4219
      %v4618 = vpop.permute.xlu0 %4617
      %4621 = vset.pattern.permute.xlu0 6
      %4622 = vperm.xlu0 %4621, %v4220
      %v4623 = vpop.permute.xlu0 %4622
      %4626 = vset.pattern.permute.xlu0 6
      %4627 = vperm.xlu0 %4626, %v4221
      %v4628 = vpop.permute.xlu0 %4627
      %4631 = vset.pattern.permute.xlu0 6
      %4632 = vperm.xlu0 %4631, %v4222
      %v4633 = vpop.permute.xlu0 %4632
      %4636 = vset.pattern.permute.xlu0 6
      %4637 = vperm.xlu0 %4636, %v4223
      %v4638 = vpop.permute.xlu0 %4637
      %4641 = vset.pattern.permute.xlu0 6
      %4642 = vperm.xlu0 %4641, %v4224
      %v4643 = vpop.permute.xlu0 %4642
      %4646 = vset.pattern.permute.xlu0 6
      %4647 = vperm.xlu0 %4646, %v4225
      %v4648 = vpop.permute.xlu0 %4647
      %4651 = vset.pattern.permute.xlu0 6
      %4652 = vperm.xlu0 %4651, %v4226
      %v4653 = vpop.permute.xlu0 %4652
      %4656 = vset.pattern.permute.xlu0 6
      %4657 = vperm.xlu0 %4656, %v4227
      %v4658 = vpop.permute.xlu0 %4657
      %4661 = vset.pattern.permute.xlu0 6
      %4662 = vperm.xlu0 %4661, %v4228
      %v4663 = vpop.permute.xlu0 %4662
      %4666 = vset.pattern.permute.xlu0 6
      %4667 = vperm.xlu0 %4666, %v4229
      %v4668 = vpop.permute.xlu0 %4667
      %4671 = vset.pattern.permute.xlu0 6
      %4672 = vperm.xlu0 %4671, %v4230
      %v4673 = vpop.permute.xlu0 %4672
      %4676 = vset.pattern.permute.xlu0 6
      %4677 = vperm.xlu0 %4676, %v4231
      %v4678 = vpop.permute.xlu0 %4677
      %4681 = vset.pattern.permute.xlu0 6
      %4682 = vperm.xlu0 %4681, %v4232
      %v4683 = vpop.permute.xlu0 %4682
      %4686 = vset.pattern.permute.xlu0 6
      %4687 = vperm.xlu0 %4686, %v4233
      %v4688 = vpop.permute.xlu0 %4687
      %4691 = vset.pattern.permute.xlu0 6
      %4692 = vperm.xlu0 %4691, %v4234
      %v4693 = vpop.permute.xlu0 %4692
      %4696 = vset.pattern.permute.xlu0 6
      %4697 = vperm.xlu0 %4696, %v4235
      %v4698 = vpop.permute.xlu0 %4697
      %4701 = vset.pattern.permute.xlu0 6
      %4702 = vperm.xlu0 %4701, %v4236
      %v4703 = vpop.permute.xlu0 %4702
      %4706 = vset.pattern.permute.xlu0 6
      %4707 = vperm.xlu0 %4706, %v4237
      %v4708 = vpop.permute.xlu0 %4707
      %4711 = vset.pattern.permute.xlu0 6
      %4712 = vperm.xlu0 %4711, %v4238
      %v4713 = vpop.permute.xlu0 %4712
      %4716 = vset.pattern.permute.xlu0 6
      %4717 = vperm.xlu0 %4716, %v4239
      %v4718 = vpop.permute.xlu0 %4717
      %v4720 = vmul.f32 %v3666, %v4243
      %v4721 = vmul.f32 %v3669, %v4248
      %v4722 = vmul.f32 %v3674, %v4253
      %v4723 = vmul.f32 %v3677, %v4258
      %v4724 = vmul.f32 %v3682, %v4263
      %v4725 = vmul.f32 %v3685, %v4268
      %v4726 = vmul.f32 %v3690, %v4273
      %v4727 = vmul.f32 %v3693, %v4278
      %v4728 = vmul.f32 %v3698, %v4283
      %v4729 = vmul.f32 %v3701, %v4288
      %v4730 = vmul.f32 %v3706, %v4293
      %v4731 = vmul.f32 %v3709, %v4298
      %v4732 = vmul.f32 %v3714, %v4303
      %v4733 = vmul.f32 %v3717, %v4308
      %v4734 = vmul.f32 %v3722, %v4313
      %v4735 = vmul.f32 %v3725, %v4318
      %v4736 = vmul.f32 %v3730, %v4323
      %v4737 = vmul.f32 %v3733, %v4328
      %v4738 = vmul.f32 %v3738, %v4333
      %v4739 = vmul.f32 %v3741, %v4338
      %v4740 = vmul.f32 %v3746, %v4343
      %v4741 = vmul.f32 %v3749, %v4348
      %v4742 = vmul.f32 %v3754, %v4353
      %v4743 = vmul.f32 %v3757, %v4358
      %v4744 = vmul.f32 %v3762, %v4363
      %v4745 = vmul.f32 %v3765, %v4368
      %v4746 = vmul.f32 %v3770, %v4373
      %v4747 = vmul.f32 %v3773, %v4378
      %v4748 = vmul.f32 %v3778, %v4383
      %v4749 = vmul.f32 %v3781, %v4388
      %v4750 = vmul.f32 %v3786, %v4393
      %v4751 = vmul.f32 %v3789, %v4398
      %v4752 = vmul.f32 %v3794, %v4403
      %v4753 = vmul.f32 %v3797, %v4408
      %v4754 = vmul.f32 %v3802, %v4413
      %v4755 = vmul.f32 %v3805, %v4418
      %v4756 = vmul.f32 %v3810, %v4423
      %v4757 = vmul.f32 %v3813, %v4428
      %v4758 = vmul.f32 %v3818, %v4433
      %v4759 = vmul.f32 %v3821, %v4438
      %v4760 = vmul.f32 %v3826, %v4443
      %v4761 = vmul.f32 %v3829, %v4448
      %v4762 = vmul.f32 %v3834, %v4453
      %v4763 = vmul.f32 %v3837, %v4458
      %v4764 = vmul.f32 %v3842, %v4463
      %v4765 = vmul.f32 %v3845, %v4468
      %v4766 = vmul.f32 %v3850, %v4473
      %v4767 = vmul.f32 %v3853, %v4478
      %v4768 = vmul.f32 %v3858, %v4483
      %v4769 = vmul.f32 %v3861, %v4488
      %v4770 = vmul.f32 %v3866, %v4493
      %v4771 = vmul.f32 %v3869, %v4498
      %v4772 = vmul.f32 %v3874, %v4503
      %v4773 = vmul.f32 %v3877, %v4508
      %v4774 = vmul.f32 %v3882, %v4513
      %v4775 = vmul.f32 %v3885, %v4518
      %v4776 = vmul.f32 %v3890, %v4523
      %v4777 = vmul.f32 %v3893, %v4528
      %v4778 = vmul.f32 %v3898, %v4533
      %v4779 = vmul.f32 %v3901, %v4538
      %v4780 = vmul.f32 %v3906, %v4543
      %v4781 = vmul.f32 %v3909, %v4548
      %v4782 = vmul.f32 %v3914, %v4553
      %v4783 = vmul.f32 %v3917, %v4558
      %v4784 = vmul.f32 %v3922, %v4563
      %v4785 = vmul.f32 %v3925, %v4568
      %v4786 = vmul.f32 %v3930, %v4573
      %v4787 = vmul.f32 %v3933, %v4578
      %v4788 = vmul.f32 %v3938, %v4583
      %v4789 = vmul.f32 %v3941, %v4588
      %v4790 = vmul.f32 %v3946, %v4593
      %v4791 = vmul.f32 %v3949, %v4598
      %v4792 = vmul.f32 %v3954, %v4603
      %v4793 = vmul.f32 %v3957, %v4608
      %v4794 = vmul.f32 %v3962, %v4613
      %v4795 = vmul.f32 %v3965, %v4618
      %v4796 = vmul.f32 %v3970, %v4623
      %v4797 = vmul.f32 %v3973, %v4628
      %v4798 = vmul.f32 %v3978, %v4633
      %v4799 = vmul.f32 %v3981, %v4638
      %v4800 = vmul.f32 %v3986, %v4643
      %v4801 = vmul.f32 %v3989, %v4648
      %v4802 = vmul.f32 %v3994, %v4653
      %v4803 = vmul.f32 %v3997, %v4658
      %v4804 = vmul.f32 %v4002, %v4663
      %v4805 = vmul.f32 %v4005, %v4668
      %v4806 = vmul.f32 %v4010, %v4673
      %v4807 = vmul.f32 %v4013, %v4678
      %v4808 = vmul.f32 %v4018, %v4683
      %v4809 = vmul.f32 %v4021, %v4688
      %v4810 = vmul.f32 %v4026, %v4693
      %v4811 = vmul.f32 %v4029, %v4698
      %v4812 = vmul.f32 %v4034, %v4703
      %v4813 = vmul.f32 %v4037, %v4708
      %v4814 = vmul.f32 %v4042, %v4713
      %v4815 = vmul.f32 %v4045, %v4718
      %v4816 = vld [vmem:[%s3] sm:$0xff]
      %v4817 = vld [vmem:[%s3 + $0x8] sm:$0xff]
      %v4818 = vld [vmem:[%s3 + $0x10] sm:$0xff]
      %v4819 = vld [vmem:[%s3 + $0x18] sm:$0xff]
      %v4820 = vld [vmem:[%s3 + $0x20] sm:$0xff]
      %v4821 = vld [vmem:[%s3 + $0x28] sm:$0xff]
      %v4822 = vld [vmem:[%s3 + $0x30] sm:$0xff]
      %v4823 = vld [vmem:[%s3 + $0x38] sm:$0xff]
      %v4824 = vld [vmem:[%s3 + $0x40] sm:$0xff]
      %v4825 = vld [vmem:[%s3 + $0x48] sm:$0xff]
      %v4826 = vld [vmem:[%s3 + $0x50] sm:$0xff]
      %v4827 = vld [vmem:[%s3 + $0x58] sm:$0xff]
      %v4828 = vld [vmem:[%s3 + $0x60] sm:$0xff]
      %v4829 = vld [vmem:[%s3 + $0x68] sm:$0xff]
      %v4830 = vld [vmem:[%s3 + $0x70] sm:$0xff]
      %v4831 = vld [vmem:[%s3 + $0x78] sm:$0xff]
      %v4832 = vld [vmem:[%s3 + $0x80] sm:$0xff]
      %v4833 = vld [vmem:[%s3 + $0x88] sm:$0xff]
      %v4834 = vld [vmem:[%s3 + $0x90] sm:$0xff]
      %v4835 = vld [vmem:[%s3 + $0x98] sm:$0xff]
      %v4836 = vld [vmem:[%s3 + $0xa0] sm:$0xff]
      %v4837 = vld [vmem:[%s3 + $0xa8] sm:$0xff]
      %v4838 = vld [vmem:[%s3 + $0xb0] sm:$0xff]
      %v4839 = vld [vmem:[%s3 + $0xb8] sm:$0xff]
      %v4840 = vld [vmem:[%s3 + $0xc0] sm:$0xff]
      %v4841 = vld [vmem:[%s3 + $0xc8] sm:$0xff]
      %v4842 = vld [vmem:[%s3 + $0xd0] sm:$0xff]
      %v4843 = vld [vmem:[%s3 + $0xd8] sm:$0xff]
      %v4844 = vld [vmem:[%s3 + $0xe0] sm:$0xff]
      %v4845 = vld [vmem:[%s3 + $0xe8] sm:$0xff]
      %v4846 = vld [vmem:[%s3 + $0xf0] sm:$0xff]
      %v4847 = vld [vmem:[%s3 + $0xf8] sm:$0xff]
      %v4848 = vld [vmem:[%s3 + $0x100] sm:$0xff]
      %v4849 = vld [vmem:[%s3 + $0x108] sm:$0xff]
      %v4850 = vld [vmem:[%s3 + $0x110] sm:$0xff]
      %v4851 = vld [vmem:[%s3 + $0x118] sm:$0xff]
      %v4852 = vld [vmem:[%s3 + $0x120] sm:$0xff]
      %v4853 = vld [vmem:[%s3 + $0x128] sm:$0xff]
      %v4854 = vld [vmem:[%s3 + $0x130] sm:$0xff]
      %v4855 = vld [vmem:[%s3 + $0x138] sm:$0xff]
      %v4856 = vld [vmem:[%s3 + $0x140] sm:$0xff]
      %v4857 = vld [vmem:[%s3 + $0x148] sm:$0xff]
      %v4858 = vld [vmem:[%s3 + $0x150] sm:$0xff]
      %v4859 = vld [vmem:[%s3 + $0x158] sm:$0xff]
      %v4860 = vld [vmem:[%s3 + $0x160] sm:$0xff]
      %v4861 = vld [vmem:[%s3 + $0x168] sm:$0xff]
      %v4862 = vld [vmem:[%s3 + $0x170] sm:$0xff]
      %v4863 = vld [vmem:[%s3 + $0x178] sm:$0xff]
      %v4864 = vld [vmem:[%s3 + $0x180] sm:$0xff]
      %v4865 = vld [vmem:[%s3 + $0x188] sm:$0xff]
      %v4866 = vld [vmem:[%s3 + $0x190] sm:$0xff]
      %v4867 = vld [vmem:[%s3 + $0x198] sm:$0xff]
      %v4868 = vld [vmem:[%s3 + $0x1a0] sm:$0xff]
      %v4869 = vld [vmem:[%s3 + $0x1a8] sm:$0xff]
      %v4870 = vld [vmem:[%s3 + $0x1b0] sm:$0xff]
      %v4871 = vld [vmem:[%s3 + $0x1b8] sm:$0xff]
      %v4872 = vld [vmem:[%s3 + $0x1c0] sm:$0xff]
      %v4873 = vld [vmem:[%s3 + $0x1c8] sm:$0xff]
      %v4874 = vld [vmem:[%s3 + $0x1d0] sm:$0xff]
      %v4875 = vld [vmem:[%s3 + $0x1d8] sm:$0xff]
      %v4876 = vld [vmem:[%s3 + $0x1e0] sm:$0xff]
      %v4877 = vld [vmem:[%s3 + $0x1e8] sm:$0xff]
      %v4878 = vld [vmem:[%s3 + $0x1f0] sm:$0xff]
      %v4879 = vld [vmem:[%s3 + $0x1f8] sm:$0xff]
      %v4880 = vld [vmem:[%s3 + $0x200] sm:$0xff]
      %v4881 = vld [vmem:[%s3 + $0x208] sm:$0xff]
      %v4882 = vld [vmem:[%s3 + $0x210] sm:$0xff]
      %v4883 = vld [vmem:[%s3 + $0x218] sm:$0xff]
      %v4884 = vld [vmem:[%s3 + $0x220] sm:$0xff]
      %v4885 = vld [vmem:[%s3 + $0x228] sm:$0xff]
      %v4886 = vld [vmem:[%s3 + $0x230] sm:$0xff]
      %v4887 = vld [vmem:[%s3 + $0x238] sm:$0xff]
      %v4888 = vld [vmem:[%s3 + $0x240] sm:$0xff]
      %v4889 = vld [vmem:[%s3 + $0x248] sm:$0xff]
      %v4890 = vld [vmem:[%s3 + $0x250] sm:$0xff]
      %v4891 = vld [vmem:[%s3 + $0x258] sm:$0xff]
      %v4892 = vld [vmem:[%s3 + $0x260] sm:$0xff]
      %v4893 = vld [vmem:[%s3 + $0x268] sm:$0xff]
      %v4894 = vld [vmem:[%s3 + $0x270] sm:$0xff]
      %v4895 = vld [vmem:[%s3 + $0x278] sm:$0xff]
      %v4896 = vld [vmem:[%s3 + $0x280] sm:$0xff]
      %v4897 = vld [vmem:[%s3 + $0x288] sm:$0xff]
      %v4898 = vld [vmem:[%s3 + $0x290] sm:$0xff]
      %v4899 = vld [vmem:[%s3 + $0x298] sm:$0xff]
      %v4900 = vld [vmem:[%s3 + $0x2a0] sm:$0xff]
      %v4901 = vld [vmem:[%s3 + $0x2a8] sm:$0xff]
      %v4902 = vld [vmem:[%s3 + $0x2b0] sm:$0xff]
      %v4903 = vld [vmem:[%s3 + $0x2b8] sm:$0xff]
      %v4904 = vld [vmem:[%s3 + $0x2c0] sm:$0xff]
      %v4905 = vld [vmem:[%s3 + $0x2c8] sm:$0xff]
      %v4906 = vld [vmem:[%s3 + $0x2d0] sm:$0xff]
      %v4907 = vld [vmem:[%s3 + $0x2d8] sm:$0xff]
      %v4908 = vld [vmem:[%s3 + $0x2e0] sm:$0xff]
      %v4909 = vld [vmem:[%s3 + $0x2e8] sm:$0xff]
      %v4910 = vld [vmem:[%s3 + $0x2f0] sm:$0xff]
      %v4911 = vld [vmem:[%s3 + $0x2f8] sm:$0xff]
      %v4912 = vadd.f32 %v4720, %v4816
      %v4913 = vadd.f32 %v4721, %v4817
      %v4914 = vadd.f32 %v4722, %v4818
      %v4915 = vadd.f32 %v4723, %v4819
      %v4916 = vadd.f32 %v4724, %v4820
      %v4917 = vadd.f32 %v4725, %v4821
      %v4918 = vadd.f32 %v4726, %v4822
      %v4919 = vadd.f32 %v4727, %v4823
      %v4920 = vadd.f32 %v4728, %v4824
      %v4921 = vadd.f32 %v4729, %v4825
      %v4922 = vadd.f32 %v4730, %v4826
      %v4923 = vadd.f32 %v4731, %v4827
      %v4924 = vadd.f32 %v4732, %v4828
      %v4925 = vadd.f32 %v4733, %v4829
      %v4926 = vadd.f32 %v4734, %v4830
      %v4927 = vadd.f32 %v4735, %v4831
      %v4928 = vadd.f32 %v4736, %v4832
      %v4929 = vadd.f32 %v4737, %v4833
      %v4930 = vadd.f32 %v4738, %v4834
      %v4931 = vadd.f32 %v4739, %v4835
      %v4932 = vadd.f32 %v4740, %v4836
      %v4933 = vadd.f32 %v4741, %v4837
      %v4934 = vadd.f32 %v4742, %v4838
      %v4935 = vadd.f32 %v4743, %v4839
      %v4936 = vadd.f32 %v4744, %v4840
      %v4937 = vadd.f32 %v4745, %v4841
      %v4938 = vadd.f32 %v4746, %v4842
      %v4939 = vadd.f32 %v4747, %v4843
      %v4940 = vadd.f32 %v4748, %v4844
      %v4941 = vadd.f32 %v4749, %v4845
      %v4942 = vadd.f32 %v4750, %v4846
      %v4943 = vadd.f32 %v4751, %v4847
      %v4944 = vadd.f32 %v4752, %v4848
      %v4945 = vadd.f32 %v4753, %v4849
      %v4946 = vadd.f32 %v4754, %v4850
      %v4947 = vadd.f32 %v4755, %v4851
      %v4948 = vadd.f32 %v4756, %v4852
      %v4949 = vadd.f32 %v4757, %v4853
      %v4950 = vadd.f32 %v4758, %v4854
      %v4951 = vadd.f32 %v4759, %v4855
      %v4952 = vadd.f32 %v4760, %v4856
      %v4953 = vadd.f32 %v4761, %v4857
      %v4954 = vadd.f32 %v4762, %v4858
      %v4955 = vadd.f32 %v4763, %v4859
      %v4956 = vadd.f32 %v4764, %v4860
      %v4957 = vadd.f32 %v4765, %v4861
      %v4958 = vadd.f32 %v4766, %v4862
      %v4959 = vadd.f32 %v4767, %v4863
      %v4960 = vadd.f32 %v4768, %v4864
      %v4961 = vadd.f32 %v4769, %v4865
      %v4962 = vadd.f32 %v4770, %v4866
      %v4963 = vadd.f32 %v4771, %v4867
      %v4964 = vadd.f32 %v4772, %v4868
      %v4965 = vadd.f32 %v4773, %v4869
      %v4966 = vadd.f32 %v4774, %v4870
      %v4967 = vadd.f32 %v4775, %v4871
      %v4968 = vadd.f32 %v4776, %v4872
      %v4969 = vadd.f32 %v4777, %v4873
      %v4970 = vadd.f32 %v4778, %v4874
      %v4971 = vadd.f32 %v4779, %v4875
      %v4972 = vadd.f32 %v4780, %v4876
      %v4973 = vadd.f32 %v4781, %v4877
      %v4974 = vadd.f32 %v4782, %v4878
      %v4975 = vadd.f32 %v4783, %v4879
      %v4976 = vadd.f32 %v4784, %v4880
      %v4977 = vadd.f32 %v4785, %v4881
      %v4978 = vadd.f32 %v4786, %v4882
      %v4979 = vadd.f32 %v4787, %v4883
      %v4980 = vadd.f32 %v4788, %v4884
      %v4981 = vadd.f32 %v4789, %v4885
      %v4982 = vadd.f32 %v4790, %v4886
      %v4983 = vadd.f32 %v4791, %v4887
      %v4984 = vadd.f32 %v4792, %v4888
      %v4985 = vadd.f32 %v4793, %v4889
      %v4986 = vadd.f32 %v4794, %v4890
      %v4987 = vadd.f32 %v4795, %v4891
      %v4988 = vadd.f32 %v4796, %v4892
      %v4989 = vadd.f32 %v4797, %v4893
      %v4990 = vadd.f32 %v4798, %v4894
      %v4991 = vadd.f32 %v4799, %v4895
      %v4992 = vadd.f32 %v4800, %v4896
      %v4993 = vadd.f32 %v4801, %v4897
      %v4994 = vadd.f32 %v4802, %v4898
      %v4995 = vadd.f32 %v4803, %v4899
      %v4996 = vadd.f32 %v4804, %v4900
      %v4997 = vadd.f32 %v4805, %v4901
      %v4998 = vadd.f32 %v4806, %v4902
      %v4999 = vadd.f32 %v4807, %v4903
      %v5000 = vadd.f32 %v4808, %v4904
      %v5001 = vadd.f32 %v4809, %v4905
      %v5002 = vadd.f32 %v4810, %v4906
      %v5003 = vadd.f32 %v4811, %v4907
      %v5004 = vadd.f32 %v4812, %v4908
      %v5005 = vadd.f32 %v4813, %v4909
      %v5006 = vadd.f32 %v4814, %v4910
      %v5007 = vadd.f32 %v4815, %v4911
      %v5008 = vmax.f32 %v4912, 0.0
      %v5009 = vmax.f32 %v4913, 0.0
      %v5010 = vmax.f32 %v4914, 0.0
      %v5011 = vmax.f32 %v4915, 0.0
      %v5012 = vmax.f32 %v4916, 0.0
      %v5013 = vmax.f32 %v4917, 0.0
      %v5014 = vmax.f32 %v4918, 0.0
      %v5015 = vmax.f32 %v4919, 0.0
      %v5016 = vmax.f32 %v4920, 0.0
      %v5017 = vmax.f32 %v4921, 0.0
      %v5018 = vmax.f32 %v4922, 0.0
      %v5019 = vmax.f32 %v4923, 0.0
      %v5020 = vmax.f32 %v4924, 0.0
      %v5021 = vmax.f32 %v4925, 0.0
      %v5022 = vmax.f32 %v4926, 0.0
      %v5023 = vmax.f32 %v4927, 0.0
      %v5024 = vmax.f32 %v4928, 0.0
      %v5025 = vmax.f32 %v4929, 0.0
      %v5026 = vmax.f32 %v4930, 0.0
      %v5027 = vmax.f32 %v4931, 0.0
      %v5028 = vmax.f32 %v4932, 0.0
      %v5029 = vmax.f32 %v4933, 0.0
      %v5030 = vmax.f32 %v4934, 0.0
      %v5031 = vmax.f32 %v4935, 0.0
      %v5032 = vmax.f32 %v4936, 0.0
      %v5033 = vmax.f32 %v4937, 0.0
      %v5034 = vmax.f32 %v4938, 0.0
      %v5035 = vmax.f32 %v4939, 0.0
      %v5036 = vmax.f32 %v4940, 0.0
      %v5037 = vmax.f32 %v4941, 0.0
      %v5038 = vmax.f32 %v4942, 0.0
      %v5039 = vmax.f32 %v4943, 0.0
      %v5040 = vmax.f32 %v4944, 0.0
      %v5041 = vmax.f32 %v4945, 0.0
      %v5042 = vmax.f32 %v4946, 0.0
      %v5043 = vmax.f32 %v4947, 0.0
      %v5044 = vmax.f32 %v4948, 0.0
      %v5045 = vmax.f32 %v4949, 0.0
      %v5046 = vmax.f32 %v4950, 0.0
      %v5047 = vmax.f32 %v4951, 0.0
      %v5048 = vmax.f32 %v4952, 0.0
      %v5049 = vmax.f32 %v4953, 0.0
      %v5050 = vmax.f32 %v4954, 0.0
      %v5051 = vmax.f32 %v4955, 0.0
      %v5052 = vmax.f32 %v4956, 0.0
      %v5053 = vmax.f32 %v4957, 0.0
      %v5054 = vmax.f32 %v4958, 0.0
      %v5055 = vmax.f32 %v4959, 0.0
      %v5056 = vmax.f32 %v4960, 0.0
      %v5057 = vmax.f32 %v4961, 0.0
      %v5058 = vmax.f32 %v4962, 0.0
      %v5059 = vmax.f32 %v4963, 0.0
      %v5060 = vmax.f32 %v4964, 0.0
      %v5061 = vmax.f32 %v4965, 0.0
      %v5062 = vmax.f32 %v4966, 0.0
      %v5063 = vmax.f32 %v4967, 0.0
      %v5064 = vmax.f32 %v4968, 0.0
      %v5065 = vmax.f32 %v4969, 0.0
      %v5066 = vmax.f32 %v4970, 0.0
      %v5067 = vmax.f32 %v4971, 0.0
      %v5068 = vmax.f32 %v4972, 0.0
      %v5069 = vmax.f32 %v4973, 0.0
      %v5070 = vmax.f32 %v4974, 0.0
      %v5071 = vmax.f32 %v4975, 0.0
      %v5072 = vmax.f32 %v4976, 0.0
      %v5073 = vmax.f32 %v4977, 0.0
      %v5074 = vmax.f32 %v4978, 0.0
      %v5075 = vmax.f32 %v4979, 0.0
      %v5076 = vmax.f32 %v4980, 0.0
      %v5077 = vmax.f32 %v4981, 0.0
      %v5078 = vmax.f32 %v4982, 0.0
      %v5079 = vmax.f32 %v4983, 0.0
      %v5080 = vmax.f32 %v4984, 0.0
      %v5081 = vmax.f32 %v4985, 0.0
      %v5082 = vmax.f32 %v4986, 0.0
      %v5083 = vmax.f32 %v4987, 0.0
      %v5084 = vmax.f32 %v4988, 0.0
      %v5085 = vmax.f32 %v4989, 0.0
      %v5086 = vmax.f32 %v4990, 0.0
      %v5087 = vmax.f32 %v4991, 0.0
      %v5088 = vmax.f32 %v4992, 0.0
      %v5089 = vmax.f32 %v4993, 0.0
      %v5090 = vmax.f32 %v4994, 0.0
      %v5091 = vmax.f32 %v4995, 0.0
      %v5092 = vmax.f32 %v4996, 0.0
      %v5093 = vmax.f32 %v4997, 0.0
      %v5094 = vmax.f32 %v4998, 0.0
      %v5095 = vmax.f32 %v4999, 0.0
      %v5096 = vmax.f32 %v5000, 0.0
      %v5097 = vmax.f32 %v5001, 0.0
      %v5098 = vmax.f32 %v5002, 0.0
      %v5099 = vmax.f32 %v5003, 0.0
      %v5100 = vmax.f32 %v5004, 0.0
      %v5101 = vmax.f32 %v5005, 0.0
      %v5102 = vmax.f32 %v5006, 0.0
      %v5103 = vmax.f32 %v5007, 0.0
      %v5104 = vpack.c.bf16 %v5009, %v5008
      %v5105 = vpack.c.bf16 %v5011, %v5010
      %v5106 = vpack.c.bf16 %v5013, %v5012
      %v5107 = vpack.c.bf16 %v5015, %v5014
      %v5108 = vpack.c.bf16 %v5017, %v5016
      %v5109 = vpack.c.bf16 %v5019, %v5018
      %v5110 = vpack.c.bf16 %v5021, %v5020
      %v5111 = vpack.c.bf16 %v5023, %v5022
      %v5112 = vpack.c.bf16 %v5025, %v5024
      %v5113 = vpack.c.bf16 %v5027, %v5026
      %v5114 = vpack.c.bf16 %v5029, %v5028
      %v5115 = vpack.c.bf16 %v5031, %v5030
      %v5116 = vpack.c.bf16 %v5033, %v5032
      %v5117 = vpack.c.bf16 %v5035, %v5034
      %v5118 = vpack.c.bf16 %v5037, %v5036
      %v5119 = vpack.c.bf16 %v5039, %v5038
      %v5120 = vpack.c.bf16 %v5041, %v5040
      %v5121 = vpack.c.bf16 %v5043, %v5042
      %v5122 = vpack.c.bf16 %v5045, %v5044
      %v5123 = vpack.c.bf16 %v5047, %v5046
      %v5124 = vpack.c.bf16 %v5049, %v5048
      %v5125 = vpack.c.bf16 %v5051, %v5050
      %v5126 = vpack.c.bf16 %v5053, %v5052
      %v5127 = vpack.c.bf16 %v5055, %v5054
      %v5128 = vpack.c.bf16 %v5057, %v5056
      %v5129 = vpack.c.bf16 %v5059, %v5058
      %v5130 = vpack.c.bf16 %v5061, %v5060
      %v5131 = vpack.c.bf16 %v5063, %v5062
      %v5132 = vpack.c.bf16 %v5065, %v5064
      %v5133 = vpack.c.bf16 %v5067, %v5066
      %v5134 = vpack.c.bf16 %v5069, %v5068
      %v5135 = vpack.c.bf16 %v5071, %v5070
      %v5136 = vpack.c.bf16 %v5073, %v5072
      %v5137 = vpack.c.bf16 %v5075, %v5074
      %v5138 = vpack.c.bf16 %v5077, %v5076
      %v5139 = vpack.c.bf16 %v5079, %v5078
      %v5140 = vpack.c.bf16 %v5081, %v5080
      %v5141 = vpack.c.bf16 %v5083, %v5082
      %v5142 = vpack.c.bf16 %v5085, %v5084
      %v5143 = vpack.c.bf16 %v5087, %v5086
      %v5144 = vpack.c.bf16 %v5089, %v5088
      %v5145 = vpack.c.bf16 %v5091, %v5090
      %v5146 = vpack.c.bf16 %v5093, %v5092
      %v5147 = vpack.c.bf16 %v5095, %v5094
      %v5148 = vpack.c.bf16 %v5097, %v5096
      %v5149 = vpack.c.bf16 %v5099, %v5098
      %v5150 = vpack.c.bf16 %v5101, %v5100
      %v5151 = vpack.c.bf16 %v5103, %v5102
      %v5152 = vld [vmem:[%s4] sm:$0xf]
      %v5153 = vld [vmem:[%s4 + $0x4] sm:$0xf]
      %s5154 = scalar_lea.vmem %s4, 8
      %v5155 = vld [vmem:[%s5154] sm:$0xf]
      %v5156 = vld [vmem:[%s5154 + $0x4] sm:$0xf]
      %v5159 = vunpack.c.l.b16 %v5155
      %v5160 = vunpack.c.l.b16 %v5156
      %v5161 = vpack.c.b16 %v5160, %v5159
      %v5164 = vsel %vm3486, %v5107, 0
      %v5167 = vsel %vm3486, %v5108, 0
      %v5170 = vsel %vm3486, %v5109, 0
      %5172 = vmatprep.subr.bf16.mxu0 0
      %5173 = vmatpush1.bf16.msra.mxu0 0
      %5174 = vmatprep.subr.bf16.mxu0 0
      %5175 = vmatpush1.bf16.msra.mxu0 0
      %5176 = vmatprep.subr.bf16.mxu0 0
      %5177 = vmatpush1.bf16.msra.mxu0 0
      %5178 = vmatprep.subr.bf16.mxu0 0
      %5179 = vmatpush1.bf16.msra.mxu0 0
      %5180 = vmatprep.subr.bf16.mxu0 0
      %5181 = vmatpush1.bf16.msra.mxu0 0
      %5182 = vmatprep.subr.bf16.mxu0 0
      %5183 = vmatpush1.bf16.msra.mxu0 0
      %5184 = vmatprep.subr.bf16.mxu0 0
      %5185 = vmatpush1.bf16.msra.mxu0 0
      %5186 = vmatprep.subr.bf16.mxu0 0
      %5187 = vmatpush1.bf16.msra.mxu0 %v5161
      %5188 = vmatprep.subr.bf16.mxu0 0
      %5189 = vmatpush2.bf16.msra.mxu0 0
      %5190 = vmatprep.subr.bf16.mxu0 0
      %5191 = vmatpush2.bf16.msra.mxu0 0
      %5192 = vmatprep.subr.bf16.mxu0 0
      %5193 = vmatpush2.bf16.msra.mxu0 0
      %5194 = vmatprep.subr.bf16.mxu0 0
      %5195 = vmatpush2.bf16.msra.mxu0 0
      %5196 = vmatprep.subr.bf16.mxu0 0
      %5197 = vmatpush2.bf16.msra.mxu0 0
      %5198 = vmatprep.subr.bf16.mxu0 0
      %5199 = vmatpush2.bf16.msra.mxu0 0
      %5200 = vmatprep.subr.bf16.mxu0 0
      %5201 = vmatpush2.bf16.msra.mxu0 0
      %5202 = vmatprep.subr.bf16.mxu0 0
      %5203 = vmatpush2.bf16.msra.mxu0 0
      %5204 = vmatprep.mubr.bf16.mxu0 0
      %5205 = vmatmul.mubr.bf16.gmra.mxu0 %v5164
      %v5206 = vpop.f32.mrf.mxu0
      %v5207 = vadd.f32 0.0, %v5206
      %v5208 = vpop.f32.mrf.mxu0
      %v5209 = vpop.f32.mrf.mxu0
      %v5210 = vadd.f32 0.0, %v5209
      %v5211 = vpop.f32.mrf.mxu0
      %5212 = vmatprep.mubr.bf16.mxu0 0
      %5213 = vmatmul.mubr.bf16.gmra.mxu0 %v5167
      %v5214 = vpop.f32.mrf.mxu0
      %v5215 = vadd.f32 0.0, %v5214
      %v5216 = vpop.f32.mrf.mxu0
      %v5217 = vpop.f32.mrf.mxu0
      %v5218 = vadd.f32 0.0, %v5217
      %v5219 = vpop.f32.mrf.mxu0
      %5220 = vmatprep.mubr.bf16.mxu0 0
      %5221 = vmatmul.mubr.bf16.gmra.mxu0 %v5170
      %v5222 = vpop.f32.mrf.mxu0
      %v5223 = vadd.f32 0.0, %v5222
      %v5224 = vpop.f32.mrf.mxu0
      %v5225 = vpop.f32.mrf.mxu0
      %v5226 = vadd.f32 0.0, %v5225
      %v5227 = vpop.f32.mrf.mxu0
      %5228 = vdwg.mxu0
      %s5229 = scalar_lea.vmem %s4, 16
      %v5230 = vld [vmem:[%s5229] sm:$0xf]
      %v5231 = vld [vmem:[%s5229 + $0x4] sm:$0xf]
      %s5232 = scalar_lea.vmem %s4, 24
      %v5233 = vld [vmem:[%s5232] sm:$0xf]
      %v5234 = vld [vmem:[%s5232 + $0x4] sm:$0xf]
      %v5237 = vunpack.c.l.b16 %v5233
      %v5238 = vunpack.c.l.b16 %v5234
      %v5239 = vpack.c.b16 %v5238, %v5237
      %v5242 = vsel %vm3486, %v5113, 0
      %v5245 = vsel %vm3486, %v5114, 0
      %v5248 = vsel %vm3486, %v5115, 0
      %5250 = vmatprep.subr.bf16.mxu0 0
      %5251 = vmatpush1.bf16.msra.mxu0 0
      %5252 = vmatprep.subr.bf16.mxu0 0
      %5253 = vmatpush1.bf16.msra.mxu0 0
      %5254 = vmatprep.subr.bf16.mxu0 0
      %5255 = vmatpush1.bf16.msra.mxu0 0
      %5256 = vmatprep.subr.bf16.mxu0 0
      %5257 = vmatpush1.bf16.msra.mxu0 0
      %5258 = vmatprep.subr.bf16.mxu0 0
      %5259 = vmatpush1.bf16.msra.mxu0 0
      %5260 = vmatprep.subr.bf16.mxu0 0
      %5261 = vmatpush1.bf16.msra.mxu0 0
      %5262 = vmatprep.subr.bf16.mxu0 0
      %5263 = vmatpush1.bf16.msra.mxu0 0
      %5264 = vmatprep.subr.bf16.mxu0 0
      %5265 = vmatpush1.bf16.msra.mxu0 %v5239
      %5266 = vmatprep.subr.bf16.mxu0 0
      %5267 = vmatpush2.bf16.msra.mxu0 0
      %5268 = vmatprep.subr.bf16.mxu0 0
      %5269 = vmatpush2.bf16.msra.mxu0 0
      %5270 = vmatprep.subr.bf16.mxu0 0
      %5271 = vmatpush2.bf16.msra.mxu0 0
      %5272 = vmatprep.subr.bf16.mxu0 0
      %5273 = vmatpush2.bf16.msra.mxu0 0
      %5274 = vmatprep.subr.bf16.mxu0 0
      %5275 = vmatpush2.bf16.msra.mxu0 0
      %5276 = vmatprep.subr.bf16.mxu0 0
      %5277 = vmatpush2.bf16.msra.mxu0 0
      %5278 = vmatprep.subr.bf16.mxu0 0
      %5279 = vmatpush2.bf16.msra.mxu0 0
      %5280 = vmatprep.subr.bf16.mxu0 0
      %5281 = vmatpush2.bf16.msra.mxu0 0
      %5282 = vmatprep.mubr.bf16.mxu0 0
      %5283 = vmatmul.mubr.bf16.gmra.mxu0 %v5242
      %v5284 = vpop.f32.mrf.mxu0
      %v5285 = vadd.f32 0.0, %v5284
      %v5286 = vpop.f32.mrf.mxu0
      %v5287 = vpop.f32.mrf.mxu0
      %v5288 = vadd.f32 0.0, %v5287
      %v5289 = vpop.f32.mrf.mxu0
      %5290 = vmatprep.mubr.bf16.mxu0 0
      %5291 = vmatmul.mubr.bf16.gmra.mxu0 %v5245
      %v5292 = vpop.f32.mrf.mxu0
      %v5293 = vadd.f32 0.0, %v5292
      %v5294 = vpop.f32.mrf.mxu0
      %v5295 = vpop.f32.mrf.mxu0
      %v5296 = vadd.f32 0.0, %v5295
      %v5297 = vpop.f32.mrf.mxu0
      %5298 = vmatprep.mubr.bf16.mxu0 0
      %5299 = vmatmul.mubr.bf16.gmra.mxu0 %v5248
      %v5300 = vpop.f32.mrf.mxu0
      %v5301 = vadd.f32 0.0, %v5300
      %v5302 = vpop.f32.mrf.mxu0
      %v5303 = vpop.f32.mrf.mxu0
      %v5304 = vadd.f32 0.0, %v5303
      %v5305 = vpop.f32.mrf.mxu0
      %5306 = vdwg.mxu0
      %s5307 = scalar_lea.vmem %s4, 32
      %v5308 = vld [vmem:[%s5307] sm:$0xf]
      %v5309 = vld [vmem:[%s5307 + $0x4] sm:$0xf]
      %s5310 = scalar_lea.vmem %s4, 40
      %v5311 = vld [vmem:[%s5310] sm:$0xf]
      %v5312 = vld [vmem:[%s5310 + $0x4] sm:$0xf]
      %v5315 = vunpack.c.l.b16 %v5311
      %v5316 = vunpack.c.l.b16 %v5312
      %v5317 = vpack.c.b16 %v5316, %v5315
      %v5320 = vsel %vm3486, %v5119, 0
      %v5323 = vsel %vm3486, %v5120, 0
      %v5326 = vsel %vm3486, %v5121, 0
      %5328 = vmatprep.subr.bf16.mxu0 0
      %5329 = vmatpush1.bf16.msra.mxu0 0
      %5330 = vmatprep.subr.bf16.mxu0 0
      %5331 = vmatpush1.bf16.msra.mxu0 0
      %5332 = vmatprep.subr.bf16.mxu0 0
      %5333 = vmatpush1.bf16.msra.mxu0 0
      %5334 = vmatprep.subr.bf16.mxu0 0
      %5335 = vmatpush1.bf16.msra.mxu0 0
      %5336 = vmatprep.subr.bf16.mxu0 0
      %5337 = vmatpush1.bf16.msra.mxu0 0
      %5338 = vmatprep.subr.bf16.mxu0 0
      %5339 = vmatpush1.bf16.msra.mxu0 0
      %5340 = vmatprep.subr.bf16.mxu0 0
      %5341 = vmatpush1.bf16.msra.mxu0 0
      %5342 = vmatprep.subr.bf16.mxu0 0
      %5343 = vmatpush1.bf16.msra.mxu0 %v5317
      %5344 = vmatprep.subr.bf16.mxu0 0
      %5345 = vmatpush2.bf16.msra.mxu0 0
      %5346 = vmatprep.subr.bf16.mxu0 0
      %5347 = vmatpush2.bf16.msra.mxu0 0
      %5348 = vmatprep.subr.bf16.mxu0 0
      %5349 = vmatpush2.bf16.msra.mxu0 0
      %5350 = vmatprep.subr.bf16.mxu0 0
      %5351 = vmatpush2.bf16.msra.mxu0 0
      %5352 = vmatprep.subr.bf16.mxu0 0
      %5353 = vmatpush2.bf16.msra.mxu0 0
      %5354 = vmatprep.subr.bf16.mxu0 0
      %5355 = vmatpush2.bf16.msra.mxu0 0
      %5356 = vmatprep.subr.bf16.mxu0 0
      %5357 = vmatpush2.bf16.msra.mxu0 0
      %5358 = vmatprep.subr.bf16.mxu0 0
      %5359 = vmatpush2.bf16.msra.mxu0 0
      %5360 = vmatprep.mubr.bf16.mxu0 0
      %5361 = vmatmul.mubr.bf16.gmra.mxu0 %v5320
      %v5362 = vpop.f32.mrf.mxu0
      %v5363 = vadd.f32 0.0, %v5362
      %v5364 = vpop.f32.mrf.mxu0
      %v5365 = vpop.f32.mrf.mxu0
      %v5366 = vadd.f32 0.0, %v5365
      %v5367 = vpop.f32.mrf.mxu0
      %5368 = vmatprep.mubr.bf16.mxu0 0
      %5369 = vmatmul.mubr.bf16.gmra.mxu0 %v5323
      %v5370 = vpop.f32.mrf.mxu0
      %v5371 = vadd.f32 0.0, %v5370
      %v5372 = vpop.f32.mrf.mxu0
      %v5373 = vpop.f32.mrf.mxu0
      %v5374 = vadd.f32 0.0, %v5373
      %v5375 = vpop.f32.mrf.mxu0
      %5376 = vmatprep.mubr.bf16.mxu0 0
      %5377 = vmatmul.mubr.bf16.gmra.mxu0 %v5326
      %v5378 = vpop.f32.mrf.mxu0
      %v5379 = vadd.f32 0.0, %v5378
      %v5380 = vpop.f32.mrf.mxu0
      %v5381 = vpop.f32.mrf.mxu0
      %v5382 = vadd.f32 0.0, %v5381
      %v5383 = vpop.f32.mrf.mxu0
      %5384 = vdwg.mxu0
      %s5385 = scalar_lea.vmem %s4, 48
      %v5386 = vld [vmem:[%s5385] sm:$0xf]
      %v5387 = vld [vmem:[%s5385 + $0x4] sm:$0xf]
      %s5388 = scalar_lea.vmem %s4, 56
      %v5389 = vld [vmem:[%s5388] sm:$0xf]
      %v5390 = vld [vmem:[%s5388 + $0x4] sm:$0xf]
      %v5393 = vunpack.c.l.b16 %v5389
      %v5394 = vunpack.c.l.b16 %v5390
      %v5395 = vpack.c.b16 %v5394, %v5393
      %v5398 = vsel %vm3486, %v5125, 0
      %v5401 = vsel %vm3486, %v5126, 0
      %v5404 = vsel %vm3486, %v5127, 0
      %5406 = vmatprep.subr.bf16.mxu0 0
      %5407 = vmatpush1.bf16.msra.mxu0 0
      %5408 = vmatprep.subr.bf16.mxu0 0
      %5409 = vmatpush1.bf16.msra.mxu0 0
      %5410 = vmatprep.subr.bf16.mxu0 0
      %5411 = vmatpush1.bf16.msra.mxu0 0
      %5412 = vmatprep.subr.bf16.mxu0 0
      %5413 = vmatpush1.bf16.msra.mxu0 0
      %5414 = vmatprep.subr.bf16.mxu0 0
      %5415 = vmatpush1.bf16.msra.mxu0 0
      %5416 = vmatprep.subr.bf16.mxu0 0
      %5417 = vmatpush1.bf16.msra.mxu0 0
      %5418 = vmatprep.subr.bf16.mxu0 0
      %5419 = vmatpush1.bf16.msra.mxu0 0
      %5420 = vmatprep.subr.bf16.mxu0 0
      %5421 = vmatpush1.bf16.msra.mxu0 %v5395
      %5422 = vmatprep.subr.bf16.mxu0 0
      %5423 = vmatpush2.bf16.msra.mxu0 0
      %5424 = vmatprep.subr.bf16.mxu0 0
      %5425 = vmatpush2.bf16.msra.mxu0 0
      %5426 = vmatprep.subr.bf16.mxu0 0
      %5427 = vmatpush2.bf16.msra.mxu0 0
      %5428 = vmatprep.subr.bf16.mxu0 0
      %5429 = vmatpush2.bf16.msra.mxu0 0
      %5430 = vmatprep.subr.bf16.mxu0 0
      %5431 = vmatpush2.bf16.msra.mxu0 0
      %5432 = vmatprep.subr.bf16.mxu0 0
      %5433 = vmatpush2.bf16.msra.mxu0 0
      %5434 = vmatprep.subr.bf16.mxu0 0
      %5435 = vmatpush2.bf16.msra.mxu0 0
      %5436 = vmatprep.subr.bf16.mxu0 0
      %5437 = vmatpush2.bf16.msra.mxu0 0
      %5438 = vmatprep.mubr.bf16.mxu0 0
      %5439 = vmatmul.mubr.bf16.gmra.mxu0 %v5398
      %v5440 = vpop.f32.mrf.mxu0
      %v5441 = vadd.f32 0.0, %v5440
      %v5442 = vpop.f32.mrf.mxu0
      %v5443 = vpop.f32.mrf.mxu0
      %v5444 = vadd.f32 0.0, %v5443
      %v5445 = vpop.f32.mrf.mxu0
      %5446 = vmatprep.mubr.bf16.mxu0 0
      %5447 = vmatmul.mubr.bf16.gmra.mxu0 %v5401
      %v5448 = vpop.f32.mrf.mxu0
      %v5449 = vadd.f32 0.0, %v5448
      %v5450 = vpop.f32.mrf.mxu0
      %v5451 = vpop.f32.mrf.mxu0
      %v5452 = vadd.f32 0.0, %v5451
      %v5453 = vpop.f32.mrf.mxu0
      %5454 = vmatprep.mubr.bf16.mxu0 0
      %5455 = vmatmul.mubr.bf16.gmra.mxu0 %v5404
      %v5456 = vpop.f32.mrf.mxu0
      %v5457 = vadd.f32 0.0, %v5456
      %v5458 = vpop.f32.mrf.mxu0
      %v5459 = vpop.f32.mrf.mxu0
      %v5460 = vadd.f32 0.0, %v5459
      %v5461 = vpop.f32.mrf.mxu0
      %5462 = vdwg.mxu0
      %s5463 = scalar_lea.vmem %s4, 64
      %v5464 = vld [vmem:[%s5463] sm:$0xf]
      %v5465 = vld [vmem:[%s5463 + $0x4] sm:$0xf]
      %s5466 = scalar_lea.vmem %s4, 72
      %v5467 = vld [vmem:[%s5466] sm:$0xf]
      %v5468 = vld [vmem:[%s5466 + $0x4] sm:$0xf]
      %v5471 = vunpack.c.l.b16 %v5467
      %v5472 = vunpack.c.l.b16 %v5468
      %v5473 = vpack.c.b16 %v5472, %v5471
      %v5476 = vsel %vm3486, %v5131, 0
      %v5479 = vsel %vm3486, %v5132, 0
      %v5482 = vsel %vm3486, %v5133, 0
      %5484 = vmatprep.subr.bf16.mxu0 0
      %5485 = vmatpush1.bf16.msra.mxu0 0
      %5486 = vmatprep.subr.bf16.mxu0 0
      %5487 = vmatpush1.bf16.msra.mxu0 0
      %5488 = vmatprep.subr.bf16.mxu0 0
      %5489 = vmatpush1.bf16.msra.mxu0 0
      %5490 = vmatprep.subr.bf16.mxu0 0
      %5491 = vmatpush1.bf16.msra.mxu0 0
      %5492 = vmatprep.subr.bf16.mxu0 0
      %5493 = vmatpush1.bf16.msra.mxu0 0
      %5494 = vmatprep.subr.bf16.mxu0 0
      %5495 = vmatpush1.bf16.msra.mxu0 0
      %5496 = vmatprep.subr.bf16.mxu0 0
      %5497 = vmatpush1.bf16.msra.mxu0 0
      %5498 = vmatprep.subr.bf16.mxu0 0
      %5499 = vmatpush1.bf16.msra.mxu0 %v5473
      %5500 = vmatprep.subr.bf16.mxu0 0
      %5501 = vmatpush2.bf16.msra.mxu0 0
      %5502 = vmatprep.subr.bf16.mxu0 0
      %5503 = vmatpush2.bf16.msra.mxu0 0
      %5504 = vmatprep.subr.bf16.mxu0 0
      %5505 = vmatpush2.bf16.msra.mxu0 0
      %5506 = vmatprep.subr.bf16.mxu0 0
      %5507 = vmatpush2.bf16.msra.mxu0 0
      %5508 = vmatprep.subr.bf16.mxu0 0
      %5509 = vmatpush2.bf16.msra.mxu0 0
      %5510 = vmatprep.subr.bf16.mxu0 0
      %5511 = vmatpush2.bf16.msra.mxu0 0
      %5512 = vmatprep.subr.bf16.mxu0 0
      %5513 = vmatpush2.bf16.msra.mxu0 0
      %5514 = vmatprep.subr.bf16.mxu0 0
      %5515 = vmatpush2.bf16.msra.mxu0 0
      %5516 = vmatprep.mubr.bf16.mxu0 0
      %5517 = vmatmul.mubr.bf16.gmra.mxu0 %v5476
      %v5518 = vpop.f32.mrf.mxu0
      %v5519 = vadd.f32 0.0, %v5518
      %v5520 = vpop.f32.mrf.mxu0
      %v5521 = vpop.f32.mrf.mxu0
      %v5522 = vadd.f32 0.0, %v5521
      %v5523 = vpop.f32.mrf.mxu0
      %5524 = vmatprep.mubr.bf16.mxu0 0
      %5525 = vmatmul.mubr.bf16.gmra.mxu0 %v5479
      %v5526 = vpop.f32.mrf.mxu0
      %v5527 = vadd.f32 0.0, %v5526
      %v5528 = vpop.f32.mrf.mxu0
      %v5529 = vpop.f32.mrf.mxu0
      %v5530 = vadd.f32 0.0, %v5529
      %v5531 = vpop.f32.mrf.mxu0
      %5532 = vmatprep.mubr.bf16.mxu0 0
      %5533 = vmatmul.mubr.bf16.gmra.mxu0 %v5482
      %v5534 = vpop.f32.mrf.mxu0
      %v5535 = vadd.f32 0.0, %v5534
      %v5536 = vpop.f32.mrf.mxu0
      %v5537 = vpop.f32.mrf.mxu0
      %v5538 = vadd.f32 0.0, %v5537
      %v5539 = vpop.f32.mrf.mxu0
      %5540 = vdwg.mxu0
      %s5541 = scalar_lea.vmem %s4, 80
      %v5542 = vld [vmem:[%s5541] sm:$0xf]
      %v5543 = vld [vmem:[%s5541 + $0x4] sm:$0xf]
      %s5544 = scalar_lea.vmem %s4, 88
      %v5545 = vld [vmem:[%s5544] sm:$0xf]
      %v5546 = vld [vmem:[%s5544 + $0x4] sm:$0xf]
      %v5549 = vunpack.c.l.b16 %v5545
      %v5550 = vunpack.c.l.b16 %v5546
      %v5551 = vpack.c.b16 %v5550, %v5549
      %v5554 = vsel %vm3486, %v5137, 0
      %v5557 = vsel %vm3486, %v5138, 0
      %v5560 = vsel %vm3486, %v5139, 0
      %5562 = vmatprep.subr.bf16.mxu0 0
      %5563 = vmatpush1.bf16.msra.mxu0 0
      %5564 = vmatprep.subr.bf16.mxu0 0
      %5565 = vmatpush1.bf16.msra.mxu0 0
      %5566 = vmatprep.subr.bf16.mxu0 0
      %5567 = vmatpush1.bf16.msra.mxu0 0
      %5568 = vmatprep.subr.bf16.mxu0 0
      %5569 = vmatpush1.bf16.msra.mxu0 0
      %5570 = vmatprep.subr.bf16.mxu0 0
      %5571 = vmatpush1.bf16.msra.mxu0 0
      %5572 = vmatprep.subr.bf16.mxu0 0
      %5573 = vmatpush1.bf16.msra.mxu0 0
      %5574 = vmatprep.subr.bf16.mxu0 0
      %5575 = vmatpush1.bf16.msra.mxu0 0
      %5576 = vmatprep.subr.bf16.mxu0 0
      %5577 = vmatpush1.bf16.msra.mxu0 %v5551
      %5578 = vmatprep.subr.bf16.mxu0 0
      %5579 = vmatpush2.bf16.msra.mxu0 0
      %5580 = vmatprep.subr.bf16.mxu0 0
      %5581 = vmatpush2.bf16.msra.mxu0 0
      %5582 = vmatprep.subr.bf16.mxu0 0
      %5583 = vmatpush2.bf16.msra.mxu0 0
      %5584 = vmatprep.subr.bf16.mxu0 0
      %5585 = vmatpush2.bf16.msra.mxu0 0
      %5586 = vmatprep.subr.bf16.mxu0 0
      %5587 = vmatpush2.bf16.msra.mxu0 0
      %5588 = vmatprep.subr.bf16.mxu0 0
      %5589 = vmatpush2.bf16.msra.mxu0 0
      %5590 = vmatprep.subr.bf16.mxu0 0
      %5591 = vmatpush2.bf16.msra.mxu0 0
      %5592 = vmatprep.subr.bf16.mxu0 0
      %5593 = vmatpush2.bf16.msra.mxu0 0
      %5594 = vmatprep.mubr.bf16.mxu0 0
      %5595 = vmatmul.mubr.bf16.gmra.mxu0 %v5554
      %v5596 = vpop.f32.mrf.mxu0
      %v5597 = vadd.f32 0.0, %v5596
      %v5598 = vpop.f32.mrf.mxu0
      %v5599 = vpop.f32.mrf.mxu0
      %v5600 = vadd.f32 0.0, %v5599
      %v5601 = vpop.f32.mrf.mxu0
      %5602 = vmatprep.mubr.bf16.mxu0 0
      %5603 = vmatmul.mubr.bf16.gmra.mxu0 %v5557
      %v5604 = vpop.f32.mrf.mxu0
      %v5605 = vadd.f32 0.0, %v5604
      %v5606 = vpop.f32.mrf.mxu0
      %v5607 = vpop.f32.mrf.mxu0
      %v5608 = vadd.f32 0.0, %v5607
      %v5609 = vpop.f32.mrf.mxu0
      %5610 = vmatprep.mubr.bf16.mxu0 0
      %5611 = vmatmul.mubr.bf16.gmra.mxu0 %v5560
      %v5612 = vpop.f32.mrf.mxu0
      %v5613 = vadd.f32 0.0, %v5612
      %v5614 = vpop.f32.mrf.mxu0
      %v5615 = vpop.f32.mrf.mxu0
      %v5616 = vadd.f32 0.0, %v5615
      %v5617 = vpop.f32.mrf.mxu0
      %5618 = vdwg.mxu0
      %s5619 = scalar_lea.vmem %s4, 96
      %v5620 = vld [vmem:[%s5619] sm:$0xf]
      %v5621 = vld [vmem:[%s5619 + $0x4] sm:$0xf]
      %s5622 = scalar_lea.vmem %s4, 104
      %v5623 = vld [vmem:[%s5622] sm:$0xf]
      %v5624 = vld [vmem:[%s5622 + $0x4] sm:$0xf]
      %v5627 = vunpack.c.l.b16 %v5623
      %v5628 = vunpack.c.l.b16 %v5624
      %v5629 = vpack.c.b16 %v5628, %v5627
      %v5632 = vsel %vm3486, %v5143, 0
      %v5635 = vsel %vm3486, %v5144, 0
      %v5638 = vsel %vm3486, %v5145, 0
      %5640 = vmatprep.subr.bf16.mxu0 0
      %5641 = vmatpush1.bf16.msra.mxu0 0
      %5642 = vmatprep.subr.bf16.mxu0 0
      %5643 = vmatpush1.bf16.msra.mxu0 0
      %5644 = vmatprep.subr.bf16.mxu0 0
      %5645 = vmatpush1.bf16.msra.mxu0 0
      %5646 = vmatprep.subr.bf16.mxu0 0
      %5647 = vmatpush1.bf16.msra.mxu0 0
      %5648 = vmatprep.subr.bf16.mxu0 0
      %5649 = vmatpush1.bf16.msra.mxu0 0
      %5650 = vmatprep.subr.bf16.mxu0 0
      %5651 = vmatpush1.bf16.msra.mxu0 0
      %5652 = vmatprep.subr.bf16.mxu0 0
      %5653 = vmatpush1.bf16.msra.mxu0 0
      %5654 = vmatprep.subr.bf16.mxu0 0
      %5655 = vmatpush1.bf16.msra.mxu0 %v5629
      %5656 = vmatprep.subr.bf16.mxu0 0
      %5657 = vmatpush2.bf16.msra.mxu0 0
      %5658 = vmatprep.subr.bf16.mxu0 0
      %5659 = vmatpush2.bf16.msra.mxu0 0
      %5660 = vmatprep.subr.bf16.mxu0 0
      %5661 = vmatpush2.bf16.msra.mxu0 0
      %5662 = vmatprep.subr.bf16.mxu0 0
      %5663 = vmatpush2.bf16.msra.mxu0 0
      %5664 = vmatprep.subr.bf16.mxu0 0
      %5665 = vmatpush2.bf16.msra.mxu0 0
      %5666 = vmatprep.subr.bf16.mxu0 0
      %5667 = vmatpush2.bf16.msra.mxu0 0
      %5668 = vmatprep.subr.bf16.mxu0 0
      %5669 = vmatpush2.bf16.msra.mxu0 0
      %5670 = vmatprep.subr.bf16.mxu0 0
      %5671 = vmatpush2.bf16.msra.mxu0 0
      %5672 = vmatprep.mubr.bf16.mxu0 0
      %5673 = vmatmul.mubr.bf16.gmra.mxu0 %v5632
      %v5674 = vpop.f32.mrf.mxu0
      %v5675 = vadd.f32 0.0, %v5674
      %v5676 = vpop.f32.mrf.mxu0
      %v5677 = vpop.f32.mrf.mxu0
      %v5678 = vadd.f32 0.0, %v5677
      %v5679 = vpop.f32.mrf.mxu0
      %5680 = vmatprep.mubr.bf16.mxu0 0
      %5681 = vmatmul.mubr.bf16.gmra.mxu0 %v5635
      %v5682 = vpop.f32.mrf.mxu0
      %v5683 = vadd.f32 0.0, %v5682
      %v5684 = vpop.f32.mrf.mxu0
      %v5685 = vpop.f32.mrf.mxu0
      %v5686 = vadd.f32 0.0, %v5685
      %v5687 = vpop.f32.mrf.mxu0
      %5688 = vmatprep.mubr.bf16.mxu0 0
      %5689 = vmatmul.mubr.bf16.gmra.mxu0 %v5638
      %v5690 = vpop.f32.mrf.mxu0
      %v5691 = vadd.f32 0.0, %v5690
      %v5692 = vpop.f32.mrf.mxu0
      %v5693 = vpop.f32.mrf.mxu0
      %v5694 = vadd.f32 0.0, %v5693
      %v5695 = vpop.f32.mrf.mxu0
      %5696 = vdwg.mxu0
      %s5697 = scalar_lea.vmem %s4, 112
      %v5698 = vld [vmem:[%s5697] sm:$0xf]
      %v5699 = vld [vmem:[%s5697 + $0x4] sm:$0xf]
      %s5700 = scalar_lea.vmem %s4, 120
      %v5701 = vld [vmem:[%s5700] sm:$0xf]
      %v5702 = vld [vmem:[%s5700 + $0x4] sm:$0xf]
      %v5705 = vunpack.c.l.b16 %v5701
      %v5706 = vunpack.c.l.b16 %v5702
      %v5707 = vpack.c.b16 %v5706, %v5705
      %v5710 = vsel %vm3486, %v5149, 0
      %v5713 = vsel %vm3486, %v5150, 0
      %v5716 = vsel %vm3486, %v5151, 0
      %5718 = vmatprep.subr.bf16.mxu0 0
      %5719 = vmatpush1.bf16.msra.mxu0 0
      %5720 = vmatprep.subr.bf16.mxu0 0
      %5721 = vmatpush1.bf16.msra.mxu0 0
      %5722 = vmatprep.subr.bf16.mxu0 0
      %5723 = vmatpush1.bf16.msra.mxu0 0
      %5724 = vmatprep.subr.bf16.mxu0 0
      %5725 = vmatpush1.bf16.msra.mxu0 0
      %5726 = vmatprep.subr.bf16.mxu0 0
      %5727 = vmatpush1.bf16.msra.mxu0 0
      %5728 = vmatprep.subr.bf16.mxu0 0
      %5729 = vmatpush1.bf16.msra.mxu0 0
      %5730 = vmatprep.subr.bf16.mxu0 0
      %5731 = vmatpush1.bf16.msra.mxu0 0
      %5732 = vmatprep.subr.bf16.mxu0 0
      %5733 = vmatpush1.bf16.msra.mxu0 %v5707
      %5734 = vmatprep.subr.bf16.mxu0 0
      %5735 = vmatpush2.bf16.msra.mxu0 0
      %5736 = vmatprep.subr.bf16.mxu0 0
      %5737 = vmatpush2.bf16.msra.mxu0 0
      %5738 = vmatprep.subr.bf16.mxu0 0
      %5739 = vmatpush2.bf16.msra.mxu0 0
      %5740 = vmatprep.subr.bf16.mxu0 0
      %5741 = vmatpush2.bf16.msra.mxu0 0
      %5742 = vmatprep.subr.bf16.mxu0 0
      %5743 = vmatpush2.bf16.msra.mxu0 0
      %5744 = vmatprep.subr.bf16.mxu0 0
      %5745 = vmatpush2.bf16.msra.mxu0 0
      %5746 = vmatprep.subr.bf16.mxu0 0
      %5747 = vmatpush2.bf16.msra.mxu0 0
      %5748 = vmatprep.subr.bf16.mxu0 0
      %5749 = vmatpush2.bf16.msra.mxu0 0
      %5750 = vmatprep.mubr.bf16.mxu0 0
      %5751 = vmatmul.mubr.bf16.gmra.mxu0 %v5710
      %v5752 = vpop.f32.mrf.mxu0
      %v5753 = vadd.f32 0.0, %v5752
      %v5754 = vpop.f32.mrf.mxu0
      %v5755 = vpop.f32.mrf.mxu0
      %v5756 = vadd.f32 0.0, %v5755
      %v5757 = vpop.f32.mrf.mxu0
      %5758 = vmatprep.mubr.bf16.mxu0 0
      %5759 = vmatmul.mubr.bf16.gmra.mxu0 %v5713
      %v5760 = vpop.f32.mrf.mxu0
      %v5761 = vadd.f32 0.0, %v5760
      %v5762 = vpop.f32.mrf.mxu0
      %v5763 = vpop.f32.mrf.mxu0
      %v5764 = vadd.f32 0.0, %v5763
      %v5765 = vpop.f32.mrf.mxu0
      %5766 = vmatprep.mubr.bf16.mxu0 0
      %5767 = vmatmul.mubr.bf16.gmra.mxu0 %v5716
      %v5768 = vpop.f32.mrf.mxu0
      %v5769 = vadd.f32 0.0, %v5768
      %v5770 = vpop.f32.mrf.mxu0
      %v5771 = vpop.f32.mrf.mxu0
      %v5772 = vadd.f32 0.0, %v5771
      %v5773 = vpop.f32.mrf.mxu0
      %5774 = vdwg.mxu0
      %v5777 = vunpack.c.l.b16 %v5152
      %v5778 = vunpack.c.l.b16 %v5153
      %v5779 = vpack.c.b16 %v5778, %v5777
      %v5782 = vsel %vm3486, %v5104, 0
      %v5785 = vsel %vm3486, %v5105, 0
      %v5788 = vsel %vm3486, %v5106, 0
      %5790 = vmatprep.subr.bf16.mxu0 0
      %5791 = vmatpush1.bf16.msra.mxu0 0
      %5792 = vmatprep.subr.bf16.mxu0 0
      %5793 = vmatpush1.bf16.msra.mxu0 0
      %5794 = vmatprep.subr.bf16.mxu0 0
      %5795 = vmatpush1.bf16.msra.mxu0 0
      %5796 = vmatprep.subr.bf16.mxu0 0
      %5797 = vmatpush1.bf16.msra.mxu0 0
      %5798 = vmatprep.subr.bf16.mxu0 0
      %5799 = vmatpush1.bf16.msra.mxu0 0
      %5800 = vmatprep.subr.bf16.mxu0 0
      %5801 = vmatpush1.bf16.msra.mxu0 0
      %5802 = vmatprep.subr.bf16.mxu0 0
      %5803 = vmatpush1.bf16.msra.mxu0 0
      %5804 = vmatprep.subr.bf16.mxu0 0
      %5805 = vmatpush1.bf16.msra.mxu0 %v5779
      %5806 = vmatprep.subr.bf16.mxu0 0
      %5807 = vmatpush2.bf16.msra.mxu0 0
      %5808 = vmatprep.subr.bf16.mxu0 0
      %5809 = vmatpush2.bf16.msra.mxu0 0
      %5810 = vmatprep.subr.bf16.mxu0 0
      %5811 = vmatpush2.bf16.msra.mxu0 0
      %5812 = vmatprep.subr.bf16.mxu0 0
      %5813 = vmatpush2.bf16.msra.mxu0 0
      %5814 = vmatprep.subr.bf16.mxu0 0
      %5815 = vmatpush2.bf16.msra.mxu0 0
      %5816 = vmatprep.subr.bf16.mxu0 0
      %5817 = vmatpush2.bf16.msra.mxu0 0
      %5818 = vmatprep.subr.bf16.mxu0 0
      %5819 = vmatpush2.bf16.msra.mxu0 0
      %5820 = vmatprep.subr.bf16.mxu0 0
      %5821 = vmatpush2.bf16.msra.mxu0 0
      %5822 = vmatprep.mubr.bf16.mxu0 0
      %5823 = vmatmul.mubr.bf16.gmra.mxu0 %v5782
      %v5824 = vpop.f32.mrf.mxu0
      %v5825 = vadd.f32 %v5207, %v5824
      %v5826 = vpop.f32.mrf.mxu0
      %v5827 = vpop.f32.mrf.mxu0
      %v5828 = vadd.f32 %v5210, %v5827
      %v5829 = vpop.f32.mrf.mxu0
      %5830 = vmatprep.mubr.bf16.mxu0 0
      %5831 = vmatmul.mubr.bf16.gmra.mxu0 %v5785
      %v5832 = vpop.f32.mrf.mxu0
      %v5833 = vadd.f32 %v5215, %v5832
      %v5834 = vpop.f32.mrf.mxu0
      %v5835 = vpop.f32.mrf.mxu0
      %v5836 = vadd.f32 %v5218, %v5835
      %v5837 = vpop.f32.mrf.mxu0
      %5838 = vmatprep.mubr.bf16.mxu0 0
      %5839 = vmatmul.mubr.bf16.gmra.mxu0 %v5788
      %v5840 = vpop.f32.mrf.mxu0
      %v5841 = vadd.f32 %v5223, %v5840
      %v5842 = vpop.f32.mrf.mxu0
      %v5843 = vpop.f32.mrf.mxu0
      %v5844 = vadd.f32 %v5226, %v5843
      %v5845 = vpop.f32.mrf.mxu0
      %5846 = vdwg.mxu0
      %v5849 = vunpack.c.l.b16 %v5230
      %v5850 = vunpack.c.l.b16 %v5231
      %v5851 = vpack.c.b16 %v5850, %v5849
      %v5854 = vsel %vm3486, %v5110, 0
      %v5857 = vsel %vm3486, %v5111, 0
      %v5860 = vsel %vm3486, %v5112, 0
      %5862 = vmatprep.subr.bf16.mxu0 0
      %5863 = vmatpush1.bf16.msra.mxu0 0
      %5864 = vmatprep.subr.bf16.mxu0 0
      %5865 = vmatpush1.bf16.msra.mxu0 0
      %5866 = vmatprep.subr.bf16.mxu0 0
      %5867 = vmatpush1.bf16.msra.mxu0 0
      %5868 = vmatprep.subr.bf16.mxu0 0
      %5869 = vmatpush1.bf16.msra.mxu0 0
      %5870 = vmatprep.subr.bf16.mxu0 0
      %5871 = vmatpush1.bf16.msra.mxu0 0
      %5872 = vmatprep.subr.bf16.mxu0 0
      %5873 = vmatpush1.bf16.msra.mxu0 0
      %5874 = vmatprep.subr.bf16.mxu0 0
      %5875 = vmatpush1.bf16.msra.mxu0 0
      %5876 = vmatprep.subr.bf16.mxu0 0
      %5877 = vmatpush1.bf16.msra.mxu0 %v5851
      %5878 = vmatprep.subr.bf16.mxu0 0
      %5879 = vmatpush2.bf16.msra.mxu0 0
      %5880 = vmatprep.subr.bf16.mxu0 0
      %5881 = vmatpush2.bf16.msra.mxu0 0
      %5882 = vmatprep.subr.bf16.mxu0 0
      %5883 = vmatpush2.bf16.msra.mxu0 0
      %5884 = vmatprep.subr.bf16.mxu0 0
      %5885 = vmatpush2.bf16.msra.mxu0 0
      %5886 = vmatprep.subr.bf16.mxu0 0
      %5887 = vmatpush2.bf16.msra.mxu0 0
      %5888 = vmatprep.subr.bf16.mxu0 0
      %5889 = vmatpush2.bf16.msra.mxu0 0
      %5890 = vmatprep.subr.bf16.mxu0 0
      %5891 = vmatpush2.bf16.msra.mxu0 0
      %5892 = vmatprep.subr.bf16.mxu0 0
      %5893 = vmatpush2.bf16.msra.mxu0 0
      %5894 = vmatprep.mubr.bf16.mxu0 0
      %5895 = vmatmul.mubr.bf16.gmra.mxu0 %v5854
      %v5896 = vpop.f32.mrf.mxu0
      %v5897 = vadd.f32 %v5285, %v5896
      %v5898 = vpop.f32.mrf.mxu0
      %v5899 = vpop.f32.mrf.mxu0
      %v5900 = vadd.f32 %v5288, %v5899
      %v5901 = vpop.f32.mrf.mxu0
      %5902 = vmatprep.mubr.bf16.mxu0 0
      %5903 = vmatmul.mubr.bf16.gmra.mxu0 %v5857
      %v5904 = vpop.f32.mrf.mxu0
      %v5905 = vadd.f32 %v5293, %v5904
      %v5906 = vpop.f32.mrf.mxu0
      %v5907 = vpop.f32.mrf.mxu0
      %v5908 = vadd.f32 %v5296, %v5907
      %v5909 = vpop.f32.mrf.mxu0
      %5910 = vmatprep.mubr.bf16.mxu0 0
      %5911 = vmatmul.mubr.bf16.gmra.mxu0 %v5860
      %v5912 = vpop.f32.mrf.mxu0
      %v5913 = vadd.f32 %v5301, %v5912
      %v5914 = vpop.f32.mrf.mxu0
      %v5915 = vpop.f32.mrf.mxu0
      %v5916 = vadd.f32 %v5304, %v5915
      %v5917 = vpop.f32.mrf.mxu0
      %5918 = vdwg.mxu0
      %v5921 = vunpack.c.l.b16 %v5308
      %v5922 = vunpack.c.l.b16 %v5309
      %v5923 = vpack.c.b16 %v5922, %v5921
      %v5926 = vsel %vm3486, %v5116, 0
      %v5929 = vsel %vm3486, %v5117, 0
      %v5932 = vsel %vm3486, %v5118, 0
      %5934 = vmatprep.subr.bf16.mxu0 0
      %5935 = vmatpush1.bf16.msra.mxu0 0
      %5936 = vmatprep.subr.bf16.mxu0 0
      %5937 = vmatpush1.bf16.msra.mxu0 0
      %5938 = vmatprep.subr.bf16.mxu0 0
      %5939 = vmatpush1.bf16.msra.mxu0 0
      %5940 = vmatprep.subr.bf16.mxu0 0
      %5941 = vmatpush1.bf16.msra.mxu0 0
      %5942 = vmatprep.subr.bf16.mxu0 0
      %5943 = vmatpush1.bf16.msra.mxu0 0
      %5944 = vmatprep.subr.bf16.mxu0 0
      %5945 = vmatpush1.bf16.msra.mxu0 0
      %5946 = vmatprep.subr.bf16.mxu0 0
      %5947 = vmatpush1.bf16.msra.mxu0 0
      %5948 = vmatprep.subr.bf16.mxu0 0
      %5949 = vmatpush1.bf16.msra.mxu0 %v5923
      %5950 = vmatprep.subr.bf16.mxu0 0
      %5951 = vmatpush2.bf16.msra.mxu0 0
      %5952 = vmatprep.subr.bf16.mxu0 0
      %5953 = vmatpush2.bf16.msra.mxu0 0
      %5954 = vmatprep.subr.bf16.mxu0 0
      %5955 = vmatpush2.bf16.msra.mxu0 0
      %5956 = vmatprep.subr.bf16.mxu0 0
      %5957 = vmatpush2.bf16.msra.mxu0 0
      %5958 = vmatprep.subr.bf16.mxu0 0
      %5959 = vmatpush2.bf16.msra.mxu0 0
      %5960 = vmatprep.subr.bf16.mxu0 0
      %5961 = vmatpush2.bf16.msra.mxu0 0
      %5962 = vmatprep.subr.bf16.mxu0 0
      %5963 = vmatpush2.bf16.msra.mxu0 0
      %5964 = vmatprep.subr.bf16.mxu0 0
      %5965 = vmatpush2.bf16.msra.mxu0 0
      %5966 = vmatprep.mubr.bf16.mxu0 0
      %5967 = vmatmul.mubr.bf16.gmra.mxu0 %v5926
      %v5968 = vpop.f32.mrf.mxu0
      %v5969 = vadd.f32 %v5363, %v5968
      %v5970 = vpop.f32.mrf.mxu0
      %v5971 = vpop.f32.mrf.mxu0
      %v5972 = vadd.f32 %v5366, %v5971
      %v5973 = vpop.f32.mrf.mxu0
      %5974 = vmatprep.mubr.bf16.mxu0 0
      %5975 = vmatmul.mubr.bf16.gmra.mxu0 %v5929
      %v5976 = vpop.f32.mrf.mxu0
      %v5977 = vadd.f32 %v5371, %v5976
      %v5978 = vpop.f32.mrf.mxu0
      %v5979 = vpop.f32.mrf.mxu0
      %v5980 = vadd.f32 %v5374, %v5979
      %v5981 = vpop.f32.mrf.mxu0
      %5982 = vmatprep.mubr.bf16.mxu0 0
      %5983 = vmatmul.mubr.bf16.gmra.mxu0 %v5932
      %v5984 = vpop.f32.mrf.mxu0
      %v5985 = vadd.f32 %v5379, %v5984
      %v5986 = vpop.f32.mrf.mxu0
      %v5987 = vpop.f32.mrf.mxu0
      %v5988 = vadd.f32 %v5382, %v5987
      %v5989 = vpop.f32.mrf.mxu0
      %5990 = vdwg.mxu0
      %v5993 = vunpack.c.l.b16 %v5386
      %v5994 = vunpack.c.l.b16 %v5387
      %v5995 = vpack.c.b16 %v5994, %v5993
      %v5998 = vsel %vm3486, %v5122, 0
      %v6001 = vsel %vm3486, %v5123, 0
      %v6004 = vsel %vm3486, %v5124, 0
      %6006 = vmatprep.subr.bf16.mxu0 0
      %6007 = vmatpush1.bf16.msra.mxu0 0
      %6008 = vmatprep.subr.bf16.mxu0 0
      %6009 = vmatpush1.bf16.msra.mxu0 0
      %6010 = vmatprep.subr.bf16.mxu0 0
      %6011 = vmatpush1.bf16.msra.mxu0 0
      %6012 = vmatprep.subr.bf16.mxu0 0
      %6013 = vmatpush1.bf16.msra.mxu0 0
      %6014 = vmatprep.subr.bf16.mxu0 0
      %6015 = vmatpush1.bf16.msra.mxu0 0
      %6016 = vmatprep.subr.bf16.mxu0 0
      %6017 = vmatpush1.bf16.msra.mxu0 0
      %6018 = vmatprep.subr.bf16.mxu0 0
      %6019 = vmatpush1.bf16.msra.mxu0 0
      %6020 = vmatprep.subr.bf16.mxu0 0
      %6021 = vmatpush1.bf16.msra.mxu0 %v5995
      %6022 = vmatprep.subr.bf16.mxu0 0
      %6023 = vmatpush2.bf16.msra.mxu0 0
      %6024 = vmatprep.subr.bf16.mxu0 0
      %6025 = vmatpush2.bf16.msra.mxu0 0
      %6026 = vmatprep.subr.bf16.mxu0 0
      %6027 = vmatpush2.bf16.msra.mxu0 0
      %6028 = vmatprep.subr.bf16.mxu0 0
      %6029 = vmatpush2.bf16.msra.mxu0 0
      %6030 = vmatprep.subr.bf16.mxu0 0
      %6031 = vmatpush2.bf16.msra.mxu0 0
      %6032 = vmatprep.subr.bf16.mxu0 0
      %6033 = vmatpush2.bf16.msra.mxu0 0
      %6034 = vmatprep.subr.bf16.mxu0 0
      %6035 = vmatpush2.bf16.msra.mxu0 0
      %6036 = vmatprep.subr.bf16.mxu0 0
      %6037 = vmatpush2.bf16.msra.mxu0 0
      %6038 = vmatprep.mubr.bf16.mxu0 0
      %6039 = vmatmul.mubr.bf16.gmra.mxu0 %v5998
      %v6040 = vpop.f32.mrf.mxu0
      %v6041 = vadd.f32 %v5441, %v6040
      %v6042 = vpop.f32.mrf.mxu0
      %v6043 = vpop.f32.mrf.mxu0
      %v6044 = vadd.f32 %v5444, %v6043
      %v6045 = vpop.f32.mrf.mxu0
      %6046 = vmatprep.mubr.bf16.mxu0 0
      %6047 = vmatmul.mubr.bf16.gmra.mxu0 %v6001
      %v6048 = vpop.f32.mrf.mxu0
      %v6049 = vadd.f32 %v5449, %v6048
      %v6050 = vpop.f32.mrf.mxu0
      %v6051 = vpop.f32.mrf.mxu0
      %v6052 = vadd.f32 %v5452, %v6051
      %v6053 = vpop.f32.mrf.mxu0
      %6054 = vmatprep.mubr.bf16.mxu0 0
      %6055 = vmatmul.mubr.bf16.gmra.mxu0 %v6004
      %v6056 = vpop.f32.mrf.mxu0
      %v6057 = vadd.f32 %v5457, %v6056
      %v6058 = vpop.f32.mrf.mxu0
      %v6059 = vpop.f32.mrf.mxu0
      %v6060 = vadd.f32 %v5460, %v6059
      %v6061 = vpop.f32.mrf.mxu0
      %6062 = vdwg.mxu0
      %v6065 = vunpack.c.l.b16 %v5464
      %v6066 = vunpack.c.l.b16 %v5465
      %v6067 = vpack.c.b16 %v6066, %v6065
      %v6070 = vsel %vm3486, %v5128, 0
      %v6073 = vsel %vm3486, %v5129, 0
      %v6076 = vsel %vm3486, %v5130, 0
      %6078 = vmatprep.subr.bf16.mxu0 0
      %6079 = vmatpush1.bf16.msra.mxu0 0
      %6080 = vmatprep.subr.bf16.mxu0 0
      %6081 = vmatpush1.bf16.msra.mxu0 0
      %6082 = vmatprep.subr.bf16.mxu0 0
      %6083 = vmatpush1.bf16.msra.mxu0 0
      %6084 = vmatprep.subr.bf16.mxu0 0
      %6085 = vmatpush1.bf16.msra.mxu0 0
      %6086 = vmatprep.subr.bf16.mxu0 0
      %6087 = vmatpush1.bf16.msra.mxu0 0
      %6088 = vmatprep.subr.bf16.mxu0 0
      %6089 = vmatpush1.bf16.msra.mxu0 0
      %6090 = vmatprep.subr.bf16.mxu0 0
      %6091 = vmatpush1.bf16.msra.mxu0 0
      %6092 = vmatprep.subr.bf16.mxu0 0
      %6093 = vmatpush1.bf16.msra.mxu0 %v6067
      %6094 = vmatprep.subr.bf16.mxu0 0
      %6095 = vmatpush2.bf16.msra.mxu0 0
      %6096 = vmatprep.subr.bf16.mxu0 0
      %6097 = vmatpush2.bf16.msra.mxu0 0
      %6098 = vmatprep.subr.bf16.mxu0 0
      %6099 = vmatpush2.bf16.msra.mxu0 0
      %6100 = vmatprep.subr.bf16.mxu0 0
      %6101 = vmatpush2.bf16.msra.mxu0 0
      %6102 = vmatprep.subr.bf16.mxu0 0
      %6103 = vmatpush2.bf16.msra.mxu0 0
      %6104 = vmatprep.subr.bf16.mxu0 0
      %6105 = vmatpush2.bf16.msra.mxu0 0
      %6106 = vmatprep.subr.bf16.mxu0 0
      %6107 = vmatpush2.bf16.msra.mxu0 0
      %6108 = vmatprep.subr.bf16.mxu0 0
      %6109 = vmatpush2.bf16.msra.mxu0 0
      %6110 = vmatprep.mubr.bf16.mxu0 0
      %6111 = vmatmul.mubr.bf16.gmra.mxu0 %v6070
      %v6112 = vpop.f32.mrf.mxu0
      %v6113 = vadd.f32 %v5519, %v6112
      %v6114 = vpop.f32.mrf.mxu0
      %v6115 = vpop.f32.mrf.mxu0
      %v6116 = vadd.f32 %v5522, %v6115
      %v6117 = vpop.f32.mrf.mxu0
      %6118 = vmatprep.mubr.bf16.mxu0 0
      %6119 = vmatmul.mubr.bf16.gmra.mxu0 %v6073
      %v6120 = vpop.f32.mrf.mxu0
      %v6121 = vadd.f32 %v5527, %v6120
      %v6122 = vpop.f32.mrf.mxu0
      %v6123 = vpop.f32.mrf.mxu0
      %v6124 = vadd.f32 %v5530, %v6123
      %v6125 = vpop.f32.mrf.mxu0
      %6126 = vmatprep.mubr.bf16.mxu0 0
      %6127 = vmatmul.mubr.bf16.gmra.mxu0 %v6076
      %v6128 = vpop.f32.mrf.mxu0
      %v6129 = vadd.f32 %v5535, %v6128
      %v6130 = vpop.f32.mrf.mxu0
      %v6131 = vpop.f32.mrf.mxu0
      %v6132 = vadd.f32 %v5538, %v6131
      %v6133 = vpop.f32.mrf.mxu0
      %6134 = vdwg.mxu0
      %v6137 = vunpack.c.l.b16 %v5542
      %v6138 = vunpack.c.l.b16 %v5543
      %v6139 = vpack.c.b16 %v6138, %v6137
      %v6142 = vsel %vm3486, %v5134, 0
      %v6145 = vsel %vm3486, %v5135, 0
      %v6148 = vsel %vm3486, %v5136, 0
      %6150 = vmatprep.subr.bf16.mxu0 0
      %6151 = vmatpush1.bf16.msra.mxu0 0
      %6152 = vmatprep.subr.bf16.mxu0 0
      %6153 = vmatpush1.bf16.msra.mxu0 0
      %6154 = vmatprep.subr.bf16.mxu0 0
      %6155 = vmatpush1.bf16.msra.mxu0 0
      %6156 = vmatprep.subr.bf16.mxu0 0
      %6157 = vmatpush1.bf16.msra.mxu0 0
      %6158 = vmatprep.subr.bf16.mxu0 0
      %6159 = vmatpush1.bf16.msra.mxu0 0
      %6160 = vmatprep.subr.bf16.mxu0 0
      %6161 = vmatpush1.bf16.msra.mxu0 0
      %6162 = vmatprep.subr.bf16.mxu0 0
      %6163 = vmatpush1.bf16.msra.mxu0 0
      %6164 = vmatprep.subr.bf16.mxu0 0
      %6165 = vmatpush1.bf16.msra.mxu0 %v6139
      %6166 = vmatprep.subr.bf16.mxu0 0
      %6167 = vmatpush2.bf16.msra.mxu0 0
      %6168 = vmatprep.subr.bf16.mxu0 0
      %6169 = vmatpush2.bf16.msra.mxu0 0
      %6170 = vmatprep.subr.bf16.mxu0 0
      %6171 = vmatpush2.bf16.msra.mxu0 0
      %6172 = vmatprep.subr.bf16.mxu0 0
      %6173 = vmatpush2.bf16.msra.mxu0 0
      %6174 = vmatprep.subr.bf16.mxu0 0
      %6175 = vmatpush2.bf16.msra.mxu0 0
      %6176 = vmatprep.subr.bf16.mxu0 0
      %6177 = vmatpush2.bf16.msra.mxu0 0
      %6178 = vmatprep.subr.bf16.mxu0 0
      %6179 = vmatpush2.bf16.msra.mxu0 0
      %6180 = vmatprep.subr.bf16.mxu0 0
      %6181 = vmatpush2.bf16.msra.mxu0 0
      %6182 = vmatprep.mubr.bf16.mxu0 0
      %6183 = vmatmul.mubr.bf16.gmra.mxu0 %v6142
      %v6184 = vpop.f32.mrf.mxu0
      %v6185 = vadd.f32 %v5597, %v6184
      %v6186 = vpop.f32.mrf.mxu0
      %v6187 = vpop.f32.mrf.mxu0
      %v6188 = vadd.f32 %v5600, %v6187
      %v6189 = vpop.f32.mrf.mxu0
      %6190 = vmatprep.mubr.bf16.mxu0 0
      %6191 = vmatmul.mubr.bf16.gmra.mxu0 %v6145
      %v6192 = vpop.f32.mrf.mxu0
      %v6193 = vadd.f32 %v5605, %v6192
      %v6194 = vpop.f32.mrf.mxu0
      %v6195 = vpop.f32.mrf.mxu0
      %v6196 = vadd.f32 %v5608, %v6195
      %v6197 = vpop.f32.mrf.mxu0
      %6198 = vmatprep.mubr.bf16.mxu0 0
      %6199 = vmatmul.mubr.bf16.gmra.mxu0 %v6148
      %v6200 = vpop.f32.mrf.mxu0
      %v6201 = vadd.f32 %v5613, %v6200
      %v6202 = vpop.f32.mrf.mxu0
      %v6203 = vpop.f32.mrf.mxu0
      %v6204 = vadd.f32 %v5616, %v6203
      %v6205 = vpop.f32.mrf.mxu0
      %6206 = vdwg.mxu0
      %v6209 = vunpack.c.l.b16 %v5620
      %v6210 = vunpack.c.l.b16 %v5621
      %v6211 = vpack.c.b16 %v6210, %v6209
      %v6214 = vsel %vm3486, %v5140, 0
      %v6217 = vsel %vm3486, %v5141, 0
      %v6220 = vsel %vm3486, %v5142, 0
      %6222 = vmatprep.subr.bf16.mxu0 0
      %6223 = vmatpush1.bf16.msra.mxu0 0
      %6224 = vmatprep.subr.bf16.mxu0 0
      %6225 = vmatpush1.bf16.msra.mxu0 0
      %6226 = vmatprep.subr.bf16.mxu0 0
      %6227 = vmatpush1.bf16.msra.mxu0 0
      %6228 = vmatprep.subr.bf16.mxu0 0
      %6229 = vmatpush1.bf16.msra.mxu0 0
      %6230 = vmatprep.subr.bf16.mxu0 0
      %6231 = vmatpush1.bf16.msra.mxu0 0
      %6232 = vmatprep.subr.bf16.mxu0 0
      %6233 = vmatpush1.bf16.msra.mxu0 0
      %6234 = vmatprep.subr.bf16.mxu0 0
      %6235 = vmatpush1.bf16.msra.mxu0 0
      %6236 = vmatprep.subr.bf16.mxu0 0
      %6237 = vmatpush1.bf16.msra.mxu0 %v6211
      %6238 = vmatprep.subr.bf16.mxu0 0
      %6239 = vmatpush2.bf16.msra.mxu0 0
      %6240 = vmatprep.subr.bf16.mxu0 0
      %6241 = vmatpush2.bf16.msra.mxu0 0
      %6242 = vmatprep.subr.bf16.mxu0 0
      %6243 = vmatpush2.bf16.msra.mxu0 0
      %6244 = vmatprep.subr.bf16.mxu0 0
      %6245 = vmatpush2.bf16.msra.mxu0 0
      %6246 = vmatprep.subr.bf16.mxu0 0
      %6247 = vmatpush2.bf16.msra.mxu0 0
      %6248 = vmatprep.subr.bf16.mxu0 0
      %6249 = vmatpush2.bf16.msra.mxu0 0
      %6250 = vmatprep.subr.bf16.mxu0 0
      %6251 = vmatpush2.bf16.msra.mxu0 0
      %6252 = vmatprep.subr.bf16.mxu0 0
      %6253 = vmatpush2.bf16.msra.mxu0 0
      %6254 = vmatprep.mubr.bf16.mxu0 0
      %6255 = vmatmul.mubr.bf16.gmra.mxu0 %v6214
      %v6256 = vpop.f32.mrf.mxu0
      %v6257 = vadd.f32 %v5675, %v6256
      %v6258 = vpop.f32.mrf.mxu0
      %v6259 = vpop.f32.mrf.mxu0
      %v6260 = vadd.f32 %v5678, %v6259
      %v6261 = vpop.f32.mrf.mxu0
      %6262 = vmatprep.mubr.bf16.mxu0 0
      %6263 = vmatmul.mubr.bf16.gmra.mxu0 %v6217
      %v6264 = vpop.f32.mrf.mxu0
      %v6265 = vadd.f32 %v5683, %v6264
      %v6266 = vpop.f32.mrf.mxu0
      %v6267 = vpop.f32.mrf.mxu0
      %v6268 = vadd.f32 %v5686, %v6267
      %v6269 = vpop.f32.mrf.mxu0
      %6270 = vmatprep.mubr.bf16.mxu0 0
      %6271 = vmatmul.mubr.bf16.gmra.mxu0 %v6220
      %v6272 = vpop.f32.mrf.mxu0
      %v6273 = vadd.f32 %v5691, %v6272
      %v6274 = vpop.f32.mrf.mxu0
      %v6275 = vpop.f32.mrf.mxu0
      %v6276 = vadd.f32 %v5694, %v6275
      %v6277 = vpop.f32.mrf.mxu0
      %6278 = vdwg.mxu0
      %v6281 = vunpack.c.l.b16 %v5698
      %v6282 = vunpack.c.l.b16 %v5699
      %v6283 = vpack.c.b16 %v6282, %v6281
      %v6286 = vsel %vm3486, %v5146, 0
      %v6289 = vsel %vm3486, %v5147, 0
      %v6292 = vsel %vm3486, %v5148, 0
      %6294 = vmatprep.subr.bf16.mxu0 0
      %6295 = vmatpush1.bf16.msra.mxu0 0
      %6296 = vmatprep.subr.bf16.mxu0 0
      %6297 = vmatpush1.bf16.msra.mxu0 0
      %6298 = vmatprep.subr.bf16.mxu0 0
      %6299 = vmatpush1.bf16.msra.mxu0 0
      %6300 = vmatprep.subr.bf16.mxu0 0
      %6301 = vmatpush1.bf16.msra.mxu0 0
      %6302 = vmatprep.subr.bf16.mxu0 0
      %6303 = vmatpush1.bf16.msra.mxu0 0
      %6304 = vmatprep.subr.bf16.mxu0 0
      %6305 = vmatpush1.bf16.msra.mxu0 0
      %6306 = vmatprep.subr.bf16.mxu0 0
      %6307 = vmatpush1.bf16.msra.mxu0 0
      %6308 = vmatprep.subr.bf16.mxu0 0
      %6309 = vmatpush1.bf16.msra.mxu0 %v6283
      %6310 = vmatprep.subr.bf16.mxu0 0
      %6311 = vmatpush2.bf16.msra.mxu0 0
      %6312 = vmatprep.subr.bf16.mxu0 0
      %6313 = vmatpush2.bf16.msra.mxu0 0
      %6314 = vmatprep.subr.bf16.mxu0 0
      %6315 = vmatpush2.bf16.msra.mxu0 0
      %6316 = vmatprep.subr.bf16.mxu0 0
      %6317 = vmatpush2.bf16.msra.mxu0 0
      %6318 = vmatprep.subr.bf16.mxu0 0
      %6319 = vmatpush2.bf16.msra.mxu0 0
      %6320 = vmatprep.subr.bf16.mxu0 0
      %6321 = vmatpush2.bf16.msra.mxu0 0
      %6322 = vmatprep.subr.bf16.mxu0 0
      %6323 = vmatpush2.bf16.msra.mxu0 0
      %6324 = vmatprep.subr.bf16.mxu0 0
      %6325 = vmatpush2.bf16.msra.mxu0 0
      %6326 = vmatprep.mubr.bf16.mxu0 0
      %6327 = vmatmul.mubr.bf16.gmra.mxu0 %v6286
      %v6328 = vpop.f32.mrf.mxu0
      %v6329 = vadd.f32 %v5753, %v6328
      %v6330 = vpop.f32.mrf.mxu0
      %v6331 = vpop.f32.mrf.mxu0
      %v6332 = vadd.f32 %v5756, %v6331
      %v6333 = vpop.f32.mrf.mxu0
      %6334 = vmatprep.mubr.bf16.mxu0 0
      %6335 = vmatmul.mubr.bf16.gmra.mxu0 %v6289
      %v6336 = vpop.f32.mrf.mxu0
      %v6337 = vadd.f32 %v5761, %v6336
      %v6338 = vpop.f32.mrf.mxu0
      %v6339 = vpop.f32.mrf.mxu0
      %v6340 = vadd.f32 %v5764, %v6339
      %v6341 = vpop.f32.mrf.mxu0
      %6342 = vmatprep.mubr.bf16.mxu0 0
      %6343 = vmatmul.mubr.bf16.gmra.mxu0 %v6292
      %v6344 = vpop.f32.mrf.mxu0
      %v6345 = vadd.f32 %v5769, %v6344
      %v6346 = vpop.f32.mrf.mxu0
      %v6347 = vpop.f32.mrf.mxu0
      %v6348 = vadd.f32 %v5772, %v6347
      %v6349 = vpop.f32.mrf.mxu0
      %6350 = vdwg.mxu0
      %v6351 = vadd.f32 %v5825, %v5897
      %v6352 = vadd.f32 %v5828, %v5900
      %v6353 = vadd.f32 %v5833, %v5905
      %v6354 = vadd.f32 %v5836, %v5908
      %v6355 = vadd.f32 %v5841, %v5913
      %v6356 = vadd.f32 %v5844, %v5916
      %v6357 = vadd.f32 %v5969, %v6041
      %v6358 = vadd.f32 %v5972, %v6044
      %v6359 = vadd.f32 %v5977, %v6049
      %v6360 = vadd.f32 %v5980, %v6052
      %v6361 = vadd.f32 %v5985, %v6057
      %v6362 = vadd.f32 %v5988, %v6060
      %v6363 = vadd.f32 %v6113, %v6185
      %v6364 = vadd.f32 %v6116, %v6188
      %v6365 = vadd.f32 %v6121, %v6193
      %v6366 = vadd.f32 %v6124, %v6196
      %v6367 = vadd.f32 %v6129, %v6201
      %v6368 = vadd.f32 %v6132, %v6204
      %v6369 = vadd.f32 %v6257, %v6329
      %v6370 = vadd.f32 %v6260, %v6332
      %v6371 = vadd.f32 %v6265, %v6337
      %v6372 = vadd.f32 %v6268, %v6340
      %v6373 = vadd.f32 %v6273, %v6345
      %v6374 = vadd.f32 %v6276, %v6348
      %v6375 = vadd.f32 %v6351, %v6357
      %v6376 = vadd.f32 %v6352, %v6358
      %v6377 = vadd.f32 %v6353, %v6359
      %v6378 = vadd.f32 %v6354, %v6360
      %v6379 = vadd.f32 %v6355, %v6361
      %v6380 = vadd.f32 %v6356, %v6362
      %v6381 = vadd.f32 %v6363, %v6369
      %v6382 = vadd.f32 %v6364, %v6370
      %v6383 = vadd.f32 %v6365, %v6371
      %v6384 = vadd.f32 %v6366, %v6372
      %v6385 = vadd.f32 %v6367, %v6373
      %v6386 = vadd.f32 %v6368, %v6374
      %v6387 = vadd.f32 %v6375, %v6381
      %v6388 = vadd.f32 %v6376, %v6382
      %v6389 = vadd.f32 %v6377, %v6383
      %v6390 = vadd.f32 %v6378, %v6384
      %v6391 = vadd.f32 %v6379, %v6385
      %v6392 = vadd.f32 %v6380, %v6386
      %v6393 = vld [vmem:[%s6] sm:$0x1]
      %v6394 = vlaneseq
      %v6395 = vshrl.u32 %v6394, 7
      %v6396 = vsub.s32 0, %v6395
      %v6397 = vrot.slane %v6393, %v6396
      %v6398 = vadd.f32 %v6387, %v6397
      %v6399 = vadd.f32 %v6388, %v6397
      %v6400 = vadd.f32 %v6389, %v6397
      %v6401 = vadd.f32 %v6390, %v6397
      %v6402 = vadd.f32 %v6391, %v6397
      %v6403 = vadd.f32 %v6392, %v6397
      %v6404 = vmax.f32 %v6398, 0.0
      %v6405 = vmax.f32 %v6399, 0.0
      %v6406 = vmax.f32 %v6400, 0.0
      %v6407 = vmax.f32 %v6401, 0.0
      %v6408 = vmax.f32 %v6402, 0.0
      %v6409 = vmax.f32 %v6403, 0.0
      %v6410 = vld [vmem:[%s493] sm:$0x1]
      %v6411 = vpack.c.bf16 %v6410, %v6410
      %v6412 = vld [vmem:[%s5 + $0x8] sm:$0xf]
      %v6413 = vld [vmem:[%s5 + $0xc] sm:$0xf]
      %v6414 = vld [vmem:[%s6 + $0x1] sm:$0x1]
      %v6417 = vunpack.c.l.b16 %v6412
      %v6418 = vunpack.c.l.b16 %v6413
      %v6419 = vpack.c.b16 %v6418, %v6417
      %v6422 = vsel %vm3486, %v6411, 0
      %6424 = vmatprep.subr.bf16.mxu0 0
      %6425 = vmatpush1.bf16.msra.mxu0 0
      %6426 = vmatprep.subr.bf16.mxu0 0
      %6427 = vmatpush1.bf16.msra.mxu0 0
      %6428 = vmatprep.subr.bf16.mxu0 0
      %6429 = vmatpush1.bf16.msra.mxu0 0
      %6430 = vmatprep.subr.bf16.mxu0 0
      %6431 = vmatpush1.bf16.msra.mxu0 0
      %6432 = vmatprep.subr.bf16.mxu0 0
      %6433 = vmatpush1.bf16.msra.mxu0 0
      %6434 = vmatprep.subr.bf16.mxu0 0
      %6435 = vmatpush1.bf16.msra.mxu0 0
      %6436 = vmatprep.subr.bf16.mxu0 0
      %6437 = vmatpush1.bf16.msra.mxu0 0
      %6438 = vmatprep.subr.bf16.mxu0 0
      %6439 = vmatpush1.bf16.msra.mxu0 %v6419
      %6440 = vmatprep.subr.bf16.mxu0 0
      %6441 = vmatpush2.bf16.msra.mxu0 0
      %6442 = vmatprep.subr.bf16.mxu0 0
      %6443 = vmatpush2.bf16.msra.mxu0 0
      %6444 = vmatprep.subr.bf16.mxu0 0
      %6445 = vmatpush2.bf16.msra.mxu0 0
      %6446 = vmatprep.subr.bf16.mxu0 0
      %6447 = vmatpush2.bf16.msra.mxu0 0
      %6448 = vmatprep.subr.bf16.mxu0 0
      %6449 = vmatpush2.bf16.msra.mxu0 0
      %6450 = vmatprep.subr.bf16.mxu0 0
      %6451 = vmatpush2.bf16.msra.mxu0 0
      %6452 = vmatprep.subr.bf16.mxu0 0
      %6453 = vmatpush2.bf16.msra.mxu0 0
      %6454 = vmatprep.subr.bf16.mxu0 0
      %6455 = vmatpush2.bf16.msra.mxu0 0
      %6456 = vmatprep.mubr.bf16.mxu0 0
      %6457 = vmatmul.mubr.bf16.gmra.mxu0 %v6422
      %v6458 = vpop.f32.mrf.mxu0
      %v6459 = vadd.f32 %v6414, %v6458
      %v6460 = vpop.f32.mrf.mxu0
      %v6461 = vpop.f32.mrf.mxu0
      %v6462 = vpop.f32.mrf.mxu0
      %6463 = vdwg.mxu0
      %v6464 = vmax.f32 %v6459, 0.0
      %v6465 = vpack.c.bf16 %v6464, %v6464
      %v6466 = vpack.c.bf16 %v6405, %v6404
      %v6467 = vpack.c.bf16 %v6407, %v6406
      %v6468 = vpack.c.bf16 %v6409, %v6408
      %v6469 = vld [vmem:[%s5 + $0x10] sm:$0xf]
      %v6470 = vld [vmem:[%s5 + $0x14] sm:$0xf]
      %v6471 = vld [vmem:[%s5 + $0x18] sm:$0xf]
      %v6472 = vld [vmem:[%s5 + $0x1c] sm:$0xf]
      %v6475 = vunpack.c.l.b16 %v6471
      %v6476 = vunpack.c.l.b16 %v6472
      %v6477 = vpack.c.b16 %v6476, %v6475
      %v6480 = vsel %vm3486, %v6465, 0
      %6482 = vmatprep.subr.bf16.mxu0 0
      %6483 = vmatpush1.bf16.msra.mxu0 0
      %6484 = vmatprep.subr.bf16.mxu0 0
      %6485 = vmatpush1.bf16.msra.mxu0 0
      %6486 = vmatprep.subr.bf16.mxu0 0
      %6487 = vmatpush1.bf16.msra.mxu0 0
      %6488 = vmatprep.subr.bf16.mxu0 0
      %6489 = vmatpush1.bf16.msra.mxu0 0
      %6490 = vmatprep.subr.bf16.mxu0 0
      %6491 = vmatpush1.bf16.msra.mxu0 0
      %6492 = vmatprep.subr.bf16.mxu0 0
      %6493 = vmatpush1.bf16.msra.mxu0 0
      %6494 = vmatprep.subr.bf16.mxu0 0
      %6495 = vmatpush1.bf16.msra.mxu0 0
      %6496 = vmatprep.subr.bf16.mxu0 0
      %6497 = vmatpush1.bf16.msra.mxu0 %v6477
      %6498 = vmatprep.subr.bf16.mxu0 0
      %6499 = vmatpush2.bf16.msra.mxu0 0
      %6500 = vmatprep.subr.bf16.mxu0 0
      %6501 = vmatpush2.bf16.msra.mxu0 0
      %6502 = vmatprep.subr.bf16.mxu0 0
      %6503 = vmatpush2.bf16.msra.mxu0 0
      %6504 = vmatprep.subr.bf16.mxu0 0
      %6505 = vmatpush2.bf16.msra.mxu0 0
      %6506 = vmatprep.subr.bf16.mxu0 0
      %6507 = vmatpush2.bf16.msra.mxu0 0
      %6508 = vmatprep.subr.bf16.mxu0 0
      %6509 = vmatpush2.bf16.msra.mxu0 0
      %6510 = vmatprep.subr.bf16.mxu0 0
      %6511 = vmatpush2.bf16.msra.mxu0 0
      %6512 = vmatprep.subr.bf16.mxu0 0
      %6513 = vmatpush2.bf16.msra.mxu0 0
      %6514 = vmatprep.mubr.bf16.mxu0 0
      %6515 = vmatmul.mubr.bf16.gmra.mxu0 %v6480
      %v6516 = vpop.f32.mrf.mxu0
      %v6517 = vadd.f32 0.0, %v6516
      %v6518 = vpop.f32.mrf.mxu0
      %v6519 = vpop.f32.mrf.mxu0
      %v6520 = vpop.f32.mrf.mxu0
      %6521 = vdwg.mxu0
      %v6522 = vlaneseq
      %v6523 = vshrl.u32 %v6522, 7
      %v6524 = vsub.s32 0, %v6523
      %v6525 = vrot.slane %v6517, %v6524
      %v6528 = vunpack.c.l.b16 %v6469
      %v6529 = vunpack.c.l.b16 %v6470
      %v6530 = vpack.c.b16 %v6529, %v6528
      %v6533 = vsel %vm3486, %v6466, 0
      %v6536 = vsel %vm3486, %v6467, 0
      %v6539 = vsel %vm3486, %v6468, 0
      %6541 = vmatprep.subr.bf16.mxu0 0
      %6542 = vmatpush1.bf16.msra.mxu0 0
      %6543 = vmatprep.subr.bf16.mxu0 0
      %6544 = vmatpush1.bf16.msra.mxu0 0
      %6545 = vmatprep.subr.bf16.mxu0 0
      %6546 = vmatpush1.bf16.msra.mxu0 0
      %6547 = vmatprep.subr.bf16.mxu0 0
      %6548 = vmatpush1.bf16.msra.mxu0 0
      %6549 = vmatprep.subr.bf16.mxu0 0
      %6550 = vmatpush1.bf16.msra.mxu0 0
      %6551 = vmatprep.subr.bf16.mxu0 0
      %6552 = vmatpush1.bf16.msra.mxu0 0
      %6553 = vmatprep.subr.bf16.mxu0 0
      %6554 = vmatpush1.bf16.msra.mxu0 0
      %6555 = vmatprep.subr.bf16.mxu0 0
      %6556 = vmatpush1.bf16.msra.mxu0 %v6530
      %6557 = vmatprep.subr.bf16.mxu0 0
      %6558 = vmatpush2.bf16.msra.mxu0 0
      %6559 = vmatprep.subr.bf16.mxu0 0
      %6560 = vmatpush2.bf16.msra.mxu0 0
      %6561 = vmatprep.subr.bf16.mxu0 0
      %6562 = vmatpush2.bf16.msra.mxu0 0
      %6563 = vmatprep.subr.bf16.mxu0 0
      %6564 = vmatpush2.bf16.msra.mxu0 0
      %6565 = vmatprep.subr.bf16.mxu0 0
      %6566 = vmatpush2.bf16.msra.mxu0 0
      %6567 = vmatprep.subr.bf16.mxu0 0
      %6568 = vmatpush2.bf16.msra.mxu0 0
      %6569 = vmatprep.subr.bf16.mxu0 0
      %6570 = vmatpush2.bf16.msra.mxu0 0
      %6571 = vmatprep.subr.bf16.mxu0 0
      %6572 = vmatpush2.bf16.msra.mxu0 0
      %6573 = vmatprep.mubr.bf16.mxu0 0
      %6574 = vmatmul.mubr.bf16.gmra.mxu0 %v6533
      %v6575 = vpop.f32.mrf.mxu0
      %v6576 = vadd.f32 %v6525, %v6575
      %v6577 = vpop.f32.mrf.mxu0
      %v6578 = vpop.f32.mrf.mxu0
      %v6579 = vadd.f32 %v6525, %v6578
      %v6580 = vpop.f32.mrf.mxu0
      %6581 = vmatprep.mubr.bf16.mxu0 0
      %6582 = vmatmul.mubr.bf16.gmra.mxu0 %v6536
      %v6583 = vpop.f32.mrf.mxu0
      %v6584 = vadd.f32 %v6525, %v6583
      %v6585 = vpop.f32.mrf.mxu0
      %v6586 = vpop.f32.mrf.mxu0
      %v6587 = vadd.f32 %v6525, %v6586
      %v6588 = vpop.f32.mrf.mxu0
      %6589 = vmatprep.mubr.bf16.mxu0 0
      %6590 = vmatmul.mubr.bf16.gmra.mxu0 %v6539
      %v6591 = vpop.f32.mrf.mxu0
      %v6592 = vadd.f32 %v6525, %v6591
      %v6593 = vpop.f32.mrf.mxu0
      %v6594 = vpop.f32.mrf.mxu0
      %v6595 = vadd.f32 %v6525, %v6594
      %v6596 = vpop.f32.mrf.mxu0
      %6597 = vdwg.mxu0
      %v6598 = vld [vmem:[%s7] sm:$0xff]
      %v6599 = vld [vmem:[%s7 + $0x8] sm:$0xff]
      %v6600 = vld [vmem:[%s7 + $0x10] sm:$0xff]
      %v6601 = vld [vmem:[%s7 + $0x18] sm:$0xff]
      %v6602 = vld [vmem:[%s7 + $0x20] sm:$0xff]
      %v6603 = vld [vmem:[%s7 + $0x28] sm:$0xff]
      %v6604 = vadd.f32 %v6576, %v6598
      %v6605 = vadd.f32 %v6579, %v6599
      %v6606 = vadd.f32 %v6584, %v6600
      %v6607 = vadd.f32 %v6587, %v6601
      %v6608 = vadd.f32 %v6592, %v6602
      %v6609 = vadd.f32 %v6595, %v6603
      %v6610 = vld [vmem:[%s8] sm:$0xff]
      %vm6611 = vcmask 261120
      %v6612 = vsel %vm6611, %v6604, 0.0
      %6613 = vadd.xlane.f32.xlu0 %v6612
      %v6614 = vpop.xlane.xlu0 %6613
      %v6615 = vsel %vm6611, %v6605, 0.0
      %6616 = vadd.xlane.f32.xlu0 %v6615
      %v6617 = vpop.xlane.xlu0 %6616
      %v6618 = vsel %vm6611, %v6606, 0.0
      %6619 = vadd.xlane.f32.xlu0 %v6618
      %v6620 = vpop.xlane.xlu0 %6619
      %v6621 = vsel %vm6611, %v6607, 0.0
      %6622 = vadd.xlane.f32.xlu0 %v6621
      %v6623 = vpop.xlane.xlu0 %6622
      %v6624 = vsel %vm6611, %v6608, 0.0
      %6625 = vadd.xlane.f32.xlu0 %v6624
      %v6626 = vpop.xlane.xlu0 %6625
      %v6627 = vsel %vm6611, %v6609, 0.0
      %6628 = vadd.xlane.f32.xlu0 %v6627
      %v6629 = vpop.xlane.xlu0 %6628
      %v6630 = vrcp.pop 32.0
      %v6631 = vmul.f32 %v6614, %v6630
      %v6632 = vmul.f32 %v6617, %v6630
      %v6633 = vmul.f32 %v6620, %v6630
      %v6634 = vmul.f32 %v6623, %v6630
      %v6635 = vmul.f32 %v6626, %v6630
      %v6636 = vmul.f32 %v6629, %v6630
      %v6637 = vsub.f32 %v6604, %v6631
      %v6638 = vsub.f32 %v6605, %v6632
      %v6639 = vsub.f32 %v6606, %v6633
      %v6640 = vsub.f32 %v6607, %v6634
      %v6641 = vsub.f32 %v6608, %v6635
      %v6642 = vsub.f32 %v6609, %v6636
      %v6643 = vmul.f32 %v6637, %v6637
      %v6644 = vmul.f32 %v6638, %v6638
      %v6645 = vmul.f32 %v6639, %v6639
      %v6646 = vmul.f32 %v6640, %v6640
      %v6647 = vmul.f32 %v6641, %v6641
      %v6648 = vmul.f32 %v6642, %v6642
      %v6649 = vsel %vm6611, %v6643, 0.0
      %6650 = vadd.xlane.f32.xlu0 %v6649
      %v6651 = vpop.xlane.xlu0 %6650
      %v6652 = vsel %vm6611, %v6644, 0.0
      %6653 = vadd.xlane.f32.xlu0 %v6652
      %v6654 = vpop.xlane.xlu0 %6653
      %v6655 = vsel %vm6611, %v6645, 0.0
      %6656 = vadd.xlane.f32.xlu0 %v6655
      %v6657 = vpop.xlane.xlu0 %6656
      %v6658 = vsel %vm6611, %v6646, 0.0
      %6659 = vadd.xlane.f32.xlu0 %v6658
      %v6660 = vpop.xlane.xlu0 %6659
      %v6661 = vsel %vm6611, %v6647, 0.0
      %6662 = vadd.xlane.f32.xlu0 %v6661
      %v6663 = vpop.xlane.xlu0 %6662
      %v6664 = vsel %vm6611, %v6648, 0.0
      %6665 = vadd.xlane.f32.xlu0 %v6664
      %v6666 = vpop.xlane.xlu0 %6665
      %v6667 = vmul.f32 %v6651, %v6630
      %v6668 = vmul.f32 %v6654, %v6630
      %v6669 = vmul.f32 %v6657, %v6630
      %v6670 = vmul.f32 %v6660, %v6630
      %v6671 = vmul.f32 %v6663, %v6630
      %v6672 = vmul.f32 %v6666, %v6630
      %v6673 = vadd.f32 %v6667, 1e-05
      %v6674 = vadd.f32 %v6668, 1e-05
      %v6675 = vadd.f32 %v6669, 1e-05
      %v6676 = vadd.f32 %v6670, 1e-05
      %v6677 = vadd.f32 %v6671, 1e-05
      %v6678 = vadd.f32 %v6672, 1e-05
      %v6679 = vrsqrt.pop %v6673
      %v6680 = vrsqrt.pop %v6674
      %v6681 = vrsqrt.pop %v6675
      %v6682 = vrsqrt.pop %v6676
      %v6683 = vrsqrt.pop %v6677
      %v6684 = vrsqrt.pop %v6678
      %v6685 = vmul.f32 %v6637, %v6679
      %v6686 = vmul.f32 %v6638, %v6680
      %v6687 = vmul.f32 %v6639, %v6681
      %v6688 = vmul.f32 %v6640, %v6682
      %v6689 = vmul.f32 %v6641, %v6683
      %v6690 = vmul.f32 %v6642, %v6684
      %v6691 = vlaneseq
      %v6692 = vshrl.u32 %v6691, 7
      %v6693 = vsub.s32 0, %v6692
      %v6694 = vrot.slane %v6610, %v6693
      %v6695 = vmul.f32 %v6685, %v6694
      %v6696 = vmul.f32 %v6686, %v6694
      %v6697 = vmul.f32 %v6687, %v6694
      %v6698 = vmul.f32 %v6688, %v6694
      %v6699 = vmul.f32 %v6689, %v6694
      %v6700 = vmul.f32 %v6690, %v6694
      %v6701 = vlaneseq
      %v6702 = vshrl.u32 %v6701, 7
      %v6703 = vsub.s32 1, %v6702
      %v6704 = vrot.slane %v6610, %v6703
      %v6705 = vadd.f32 %v6695, %v6704
      %v6706 = vadd.f32 %v6696, %v6704
      %v6707 = vadd.f32 %v6697, %v6704
      %v6708 = vadd.f32 %v6698, %v6704
      %v6709 = vadd.f32 %v6699, %v6704
      %v6710 = vadd.f32 %v6700, %v6704
      %v6711 = vpack.c.bf16 %v6706, %v6705
      %v6712 = vpack.c.bf16 %v6708, %v6707
      %v6713 = vpack.c.bf16 %v6710, %v6709
      %v6714 = vld [vmem:[%s10] sm:$0xf]
      %v6715 = vld [vmem:[%s10 + $0x4] sm:$0xf]
      %v6716 = vld [vmem:[%s10 + $0x8] sm:$0xf]
      %v6717 = vld [vmem:[%s10 + $0xc] sm:$0xf]
      %v6722 = vunpack.c.l.b16 %v6714
      %v6723 = vunpack.c.l.b16 %v6715
      %v6724 = vunpack.c.l.b16 %v6716
      %v6725 = vunpack.c.l.b16 %v6717
      %v6726 = vpack.c.b16 %v6723, %v6722
      %v6727 = vpack.c.b16 %v6725, %v6724
      %v6731 = vsel %vm6611, %v6711, 0
      %v6734 = vsel %vm6611, %v6712, 0
      %v6737 = vsel %vm6611, %v6713, 0
      %6739 = vmatprep.subr.bf16.mxu0 0
      %6740 = vmatpush1.bf16.msra.mxu0 0
      %6741 = vmatprep.subr.bf16.mxu0 0
      %6742 = vmatpush1.bf16.msra.mxu0 0
      %6743 = vmatprep.subr.bf16.mxu0 0
      %6744 = vmatpush1.bf16.msra.mxu0 0
      %6745 = vmatprep.subr.bf16.mxu0 0
      %6746 = vmatpush1.bf16.msra.mxu0 0
      %6747 = vmatprep.subr.bf16.mxu0 0
      %6748 = vmatpush1.bf16.msra.mxu0 0
      %6749 = vmatprep.subr.bf16.mxu0 0
      %6750 = vmatpush1.bf16.msra.mxu0 0
      %6751 = vmatprep.subr.bf16.mxu0 0
      %6752 = vmatpush1.bf16.msra.mxu0 %v6727
      %6753 = vmatprep.subr.bf16.mxu0 0
      %6754 = vmatpush1.bf16.msra.mxu0 %v6726
      %6755 = vmatprep.subr.bf16.mxu0 0
      %6756 = vmatpush2.bf16.msra.mxu0 0
      %6757 = vmatprep.subr.bf16.mxu0 0
      %6758 = vmatpush2.bf16.msra.mxu0 0
      %6759 = vmatprep.subr.bf16.mxu0 0
      %6760 = vmatpush2.bf16.msra.mxu0 0
      %6761 = vmatprep.subr.bf16.mxu0 0
      %6762 = vmatpush2.bf16.msra.mxu0 0
      %6763 = vmatprep.subr.bf16.mxu0 0
      %6764 = vmatpush2.bf16.msra.mxu0 0
      %6765 = vmatprep.subr.bf16.mxu0 0
      %6766 = vmatpush2.bf16.msra.mxu0 0
      %6767 = vmatprep.subr.bf16.mxu0 0
      %6768 = vmatpush2.bf16.msra.mxu0 0
      %6769 = vmatprep.subr.bf16.mxu0 0
      %6770 = vmatpush2.bf16.msra.mxu0 0
      %6771 = vmatprep.mubr.bf16.mxu0 0
      %6772 = vmatmul.mubr.bf16.gmra.mxu0 %v6731
      %v6773 = vpop.f32.mrf.mxu0
      %v6774 = vadd.f32 0.0, %v6773
      %v6775 = vpop.f32.mrf.mxu0
      %v6776 = vpop.f32.mrf.mxu0
      %v6777 = vadd.f32 0.0, %v6776
      %v6778 = vpop.f32.mrf.mxu0
      %6779 = vmatprep.mubr.bf16.mxu0 0
      %6780 = vmatmul.mubr.bf16.gmra.mxu0 %v6734
      %v6781 = vpop.f32.mrf.mxu0
      %v6782 = vadd.f32 0.0, %v6781
      %v6783 = vpop.f32.mrf.mxu0
      %v6784 = vpop.f32.mrf.mxu0
      %v6785 = vadd.f32 0.0, %v6784
      %v6786 = vpop.f32.mrf.mxu0
      %6787 = vmatprep.mubr.bf16.mxu0 0
      %6788 = vmatmul.mubr.bf16.gmra.mxu0 %v6737
      %v6789 = vpop.f32.mrf.mxu0
      %v6790 = vadd.f32 0.0, %v6789
      %v6791 = vpop.f32.mrf.mxu0
      %v6792 = vpop.f32.mrf.mxu0
      %v6793 = vadd.f32 0.0, %v6792
      %v6794 = vpop.f32.mrf.mxu0
      %6795 = vdwg.mxu0
      %s6796 = scalar_lea.vmem %s10, 16
      %v6797 = vld [vmem:[%s6796] sm:$0xf]
      %v6798 = vld [vmem:[%s6796 + $0x4] sm:$0xf]
      %v6799 = vld [vmem:[%s6796 + $0x8] sm:$0xf]
      %v6800 = vld [vmem:[%s6796 + $0xc] sm:$0xf]
      %v6805 = vunpack.c.l.b16 %v6797
      %v6806 = vunpack.c.l.b16 %v6798
      %v6807 = vunpack.c.l.b16 %v6799
      %v6808 = vunpack.c.l.b16 %v6800
      %v6809 = vpack.c.b16 %v6806, %v6805
      %v6810 = vpack.c.b16 %v6808, %v6807
      %6813 = vmatprep.subr.bf16.mxu0 0
      %6814 = vmatpush1.bf16.msra.mxu0 0
      %6815 = vmatprep.subr.bf16.mxu0 0
      %6816 = vmatpush1.bf16.msra.mxu0 0
      %6817 = vmatprep.subr.bf16.mxu0 0
      %6818 = vmatpush1.bf16.msra.mxu0 0
      %6819 = vmatprep.subr.bf16.mxu0 0
      %6820 = vmatpush1.bf16.msra.mxu0 0
      %6821 = vmatprep.subr.bf16.mxu0 0
      %6822 = vmatpush1.bf16.msra.mxu0 0
      %6823 = vmatprep.subr.bf16.mxu0 0
      %6824 = vmatpush1.bf16.msra.mxu0 0
      %6825 = vmatprep.subr.bf16.mxu0 0
      %6826 = vmatpush1.bf16.msra.mxu0 %v6810
      %6827 = vmatprep.subr.bf16.mxu0 0
      %6828 = vmatpush1.bf16.msra.mxu0 %v6809
      %6829 = vmatprep.subr.bf16.mxu0 0
      %6830 = vmatpush2.bf16.msra.mxu0 0
      %6831 = vmatprep.subr.bf16.mxu0 0
      %6832 = vmatpush2.bf16.msra.mxu0 0
      %6833 = vmatprep.subr.bf16.mxu0 0
      %6834 = vmatpush2.bf16.msra.mxu0 0
      %6835 = vmatprep.subr.bf16.mxu0 0
      %6836 = vmatpush2.bf16.msra.mxu0 0
      %6837 = vmatprep.subr.bf16.mxu0 0
      %6838 = vmatpush2.bf16.msra.mxu0 0
      %6839 = vmatprep.subr.bf16.mxu0 0
      %6840 = vmatpush2.bf16.msra.mxu0 0
      %6841 = vmatprep.subr.bf16.mxu0 0
      %6842 = vmatpush2.bf16.msra.mxu0 0
      %6843 = vmatprep.subr.bf16.mxu0 0
      %6844 = vmatpush2.bf16.msra.mxu0 0
      %6845 = vmatprep.mubr.bf16.mxu0 0
      %6846 = vmatmul.mubr.bf16.gmra.mxu0 %v6731
      %v6847 = vpop.f32.mrf.mxu0
      %v6848 = vadd.f32 0.0, %v6847
      %v6849 = vpop.f32.mrf.mxu0
      %v6850 = vpop.f32.mrf.mxu0
      %v6851 = vadd.f32 0.0, %v6850
      %v6852 = vpop.f32.mrf.mxu0
      %6853 = vmatprep.mubr.bf16.mxu0 0
      %6854 = vmatmul.mubr.bf16.gmra.mxu0 %v6734
      %v6855 = vpop.f32.mrf.mxu0
      %v6856 = vadd.f32 0.0, %v6855
      %v6857 = vpop.f32.mrf.mxu0
      %v6858 = vpop.f32.mrf.mxu0
      %v6859 = vadd.f32 0.0, %v6858
      %v6860 = vpop.f32.mrf.mxu0
      %6861 = vmatprep.mubr.bf16.mxu0 0
      %6862 = vmatmul.mubr.bf16.gmra.mxu0 %v6737
      %v6863 = vpop.f32.mrf.mxu0
      %v6864 = vadd.f32 0.0, %v6863
      %v6865 = vpop.f32.mrf.mxu0
      %v6866 = vpop.f32.mrf.mxu0
      %v6867 = vadd.f32 0.0, %v6866
      %v6868 = vpop.f32.mrf.mxu0
      %6869 = vdwg.mxu0
      %s6870 = scalar_lea.vmem %s10, 32
      %v6871 = vld [vmem:[%s6870] sm:$0xf]
      %v6872 = vld [vmem:[%s6870 + $0x4] sm:$0xf]
      %v6873 = vld [vmem:[%s6870 + $0x8] sm:$0xf]
      %v6874 = vld [vmem:[%s6870 + $0xc] sm:$0xf]
      %v6879 = vunpack.c.l.b16 %v6871
      %v6880 = vunpack.c.l.b16 %v6872
      %v6881 = vunpack.c.l.b16 %v6873
      %v6882 = vunpack.c.l.b16 %v6874
      %v6883 = vpack.c.b16 %v6880, %v6879
      %v6884 = vpack.c.b16 %v6882, %v6881
      %6887 = vmatprep.subr.bf16.mxu0 0
      %6888 = vmatpush1.bf16.msra.mxu0 0
      %6889 = vmatprep.subr.bf16.mxu0 0
      %6890 = vmatpush1.bf16.msra.mxu0 0
      %6891 = vmatprep.subr.bf16.mxu0 0
      %6892 = vmatpush1.bf16.msra.mxu0 0
      %6893 = vmatprep.subr.bf16.mxu0 0
      %6894 = vmatpush1.bf16.msra.mxu0 0
      %6895 = vmatprep.subr.bf16.mxu0 0
      %6896 = vmatpush1.bf16.msra.mxu0 0
      %6897 = vmatprep.subr.bf16.mxu0 0
      %6898 = vmatpush1.bf16.msra.mxu0 0
      %6899 = vmatprep.subr.bf16.mxu0 0
      %6900 = vmatpush1.bf16.msra.mxu0 %v6884
      %6901 = vmatprep.subr.bf16.mxu0 0
      %6902 = vmatpush1.bf16.msra.mxu0 %v6883
      %6903 = vmatprep.subr.bf16.mxu0 0
      %6904 = vmatpush2.bf16.msra.mxu0 0
      %6905 = vmatprep.subr.bf16.mxu0 0
      %6906 = vmatpush2.bf16.msra.mxu0 0
      %6907 = vmatprep.subr.bf16.mxu0 0
      %6908 = vmatpush2.bf16.msra.mxu0 0
      %6909 = vmatprep.subr.bf16.mxu0 0
      %6910 = vmatpush2.bf16.msra.mxu0 0
      %6911 = vmatprep.subr.bf16.mxu0 0
      %6912 = vmatpush2.bf16.msra.mxu0 0
      %6913 = vmatprep.subr.bf16.mxu0 0
      %6914 = vmatpush2.bf16.msra.mxu0 0
      %6915 = vmatprep.subr.bf16.mxu0 0
      %6916 = vmatpush2.bf16.msra.mxu0 0
      %6917 = vmatprep.subr.bf16.mxu0 0
      %6918 = vmatpush2.bf16.msra.mxu0 0
      %6919 = vmatprep.mubr.bf16.mxu0 0
      %6920 = vmatmul.mubr.bf16.gmra.mxu0 %v6731
      %v6921 = vpop.f32.mrf.mxu0
      %v6922 = vadd.f32 0.0, %v6921
      %v6923 = vpop.f32.mrf.mxu0
      %v6924 = vpop.f32.mrf.mxu0
      %v6925 = vadd.f32 0.0, %v6924
      %v6926 = vpop.f32.mrf.mxu0
      %6927 = vmatprep.mubr.bf16.mxu0 0
      %6928 = vmatmul.mubr.bf16.gmra.mxu0 %v6734
      %v6929 = vpop.f32.mrf.mxu0
      %v6930 = vadd.f32 0.0, %v6929
      %v6931 = vpop.f32.mrf.mxu0
      %v6932 = vpop.f32.mrf.mxu0
      %v6933 = vadd.f32 0.0, %v6932
      %v6934 = vpop.f32.mrf.mxu0
      %6935 = vmatprep.mubr.bf16.mxu0 0
      %6936 = vmatmul.mubr.bf16.gmra.mxu0 %v6737
      %v6937 = vpop.f32.mrf.mxu0
      %v6938 = vadd.f32 0.0, %v6937
      %v6939 = vpop.f32.mrf.mxu0
      %v6940 = vpop.f32.mrf.mxu0
      %v6941 = vadd.f32 0.0, %v6940
      %v6942 = vpop.f32.mrf.mxu0
      %6943 = vdwg.mxu0
      %v6944 = vpack.c.bf16 %v6777, %v6774
      %v6945 = vpack.c.bf16 %v6785, %v6782
      %v6946 = vpack.c.bf16 %v6793, %v6790
      %v6947 = vpack.c.bf16 %v6851, %v6848
      %v6948 = vpack.c.bf16 %v6859, %v6856
      %v6949 = vpack.c.bf16 %v6867, %v6864
      %v6951 = vsel %vm3486, %v6944, 0
      %v6954 = vsel %vm3486, %v6945, 0
      %v6957 = vsel %vm3486, %v6946, 0
      %v6960 = vsel %vm3486, %v6947, 0
      %v6963 = vsel %vm3486, %v6948, 0
      %v6966 = vsel %vm3486, %v6949, 0
      %6968 = vmatprep.subr.bf16.mxu0 0
      %6969 = vmatpush1.bf16.xpose.msra.mxu0 0
      %6970 = vmatprep.subr.bf16.mxu0 0
      %6971 = vmatpush1.bf16.xpose.msra.mxu0 0
      %6972 = vmatprep.subr.bf16.mxu0 0
      %6973 = vmatpush1.bf16.xpose.msra.mxu0 0
      %6974 = vmatprep.subr.bf16.mxu0 0
      %6975 = vmatpush1.bf16.xpose.msra.mxu0 0
      %6976 = vmatprep.subr.bf16.mxu0 0
      %6977 = vmatpush1.bf16.xpose.msra.mxu0 0
      %6978 = vmatprep.subr.bf16.mxu0 0
      %6979 = vmatpush1.bf16.xpose.msra.mxu0 %v6966
      %6980 = vmatprep.subr.bf16.mxu0 0
      %6981 = vmatpush1.bf16.xpose.msra.mxu0 %v6963
      %6982 = vmatprep.subr.bf16.mxu0 0
      %6983 = vmatpush1.bf16.xpose.msra.mxu0 %v6960
      %6984 = vmatprep.subr.bf16.mxu0 0
      %6985 = vmatpush2.bf16.xpose.msra.mxu0 0
      %6986 = vmatprep.subr.bf16.mxu0 0
      %6987 = vmatpush2.bf16.xpose.msra.mxu0 0
      %6988 = vmatprep.subr.bf16.mxu0 0
      %6989 = vmatpush2.bf16.xpose.msra.mxu0 0
      %6990 = vmatprep.subr.bf16.mxu0 0
      %6991 = vmatpush2.bf16.xpose.msra.mxu0 0
      %6992 = vmatprep.subr.bf16.mxu0 0
      %6993 = vmatpush2.bf16.xpose.msra.mxu0 0
      %6994 = vmatprep.subr.bf16.mxu0 0
      %6995 = vmatpush2.bf16.xpose.msra.mxu0 0
      %6996 = vmatprep.subr.bf16.mxu0 0
      %6997 = vmatpush2.bf16.xpose.msra.mxu0 0
      %6998 = vmatprep.subr.bf16.mxu0 0
      %6999 = vmatpush2.bf16.xpose.msra.mxu0 0
      %7000 = vmatprep.mubr.bf16.mxu0 0
      %7001 = vmatmul.mubr.bf16.gmra.mxu0 %v6951
      %v7002 = vpop.f32.mrf.mxu0
      %v7003 = vadd.f32 0.0, %v7002
      %v7004 = vpop.f32.mrf.mxu0
      %v7005 = vpop.f32.mrf.mxu0
      %v7006 = vadd.f32 0.0, %v7005
      %v7007 = vpop.f32.mrf.mxu0
      %7008 = vmatprep.mubr.bf16.mxu0 0
      %7009 = vmatmul.mubr.bf16.gmra.mxu0 %v6954
      %v7010 = vpop.f32.mrf.mxu0
      %v7011 = vadd.f32 0.0, %v7010
      %v7012 = vpop.f32.mrf.mxu0
      %v7013 = vpop.f32.mrf.mxu0
      %v7014 = vadd.f32 0.0, %v7013
      %v7015 = vpop.f32.mrf.mxu0
      %7016 = vmatprep.mubr.bf16.mxu0 0
      %7017 = vmatmul.mubr.bf16.gmra.mxu0 %v6957
      %v7018 = vpop.f32.mrf.mxu0
      %v7019 = vadd.f32 0.0, %v7018
      %v7020 = vpop.f32.mrf.mxu0
      %v7021 = vpop.f32.mrf.mxu0
      %v7022 = vadd.f32 0.0, %v7021
      %v7023 = vpop.f32.mrf.mxu0
      %7024 = vdwg.mxu0
      %v7025 = vmul.f32 %v7003, 0.25
      %v7026 = vmul.f32 %v7006, 0.25
      %v7027 = vmul.f32 %v7011, 0.25
      %v7028 = vmul.f32 %v7014, 0.25
      %v7029 = vmul.f32 %v7019, 0.25
      %v7030 = vmul.f32 %v7022, 0.25
      %vm7031 = vcmask 392192
      %v7032 = vsel %vm7031, %v7025, -inf
      %7033 = vmax.xlane.f32.xlu0 %v7032
      %v7034 = vpop.xlane.xlu0 %7033
      %v7035 = vsel %vm7031, %v7026, -inf
      %7036 = vmax.xlane.f32.xlu0 %v7035
      %v7037 = vpop.xlane.xlu0 %7036
      %v7038 = vsel %vm7031, %v7027, -inf
      %7039 = vmax.xlane.f32.xlu0 %v7038
      %v7040 = vpop.xlane.xlu0 %7039
      %v7041 = vsel %vm7031, %v7028, -inf
      %7042 = vmax.xlane.f32.xlu0 %v7041
      %v7043 = vpop.xlane.xlu0 %7042
      %v7044 = vsel %vm7031, %v7029, -inf
      %7045 = vmax.xlane.f32.xlu0 %v7044
      %v7046 = vpop.xlane.xlu0 %7045
      %v7047 = vsel %vm7031, %v7030, -inf
      %7048 = vmax.xlane.f32.xlu0 %v7047
      %v7049 = vpop.xlane.xlu0 %7048
      %v7050 = vsub.f32 %v7025, %v7034
      %v7051 = vsub.f32 %v7026, %v7037
      %v7052 = vsub.f32 %v7027, %v7040
      %v7053 = vsub.f32 %v7028, %v7043
      %v7054 = vsub.f32 %v7029, %v7046
      %v7055 = vsub.f32 %v7030, %v7049
      %v7056 = vmul.f32 %v7050, 1.442695
      %v7057 = vpow.pop %v7056
      %v7058 = vmul.f32 %v7051, 1.442695
      %v7059 = vpow.pop %v7058
      %v7060 = vmul.f32 %v7052, 1.442695
      %v7061 = vpow.pop %v7060
      %v7062 = vmul.f32 %v7053, 1.442695
      %v7063 = vpow.pop %v7062
      %v7064 = vmul.f32 %v7054, 1.442695
      %v7065 = vpow.pop %v7064
      %v7066 = vmul.f32 %v7055, 1.442695
      %v7067 = vpow.pop %v7066
      %v7068 = vsel %vm7031, %v7057, 0.0
      %7069 = vadd.xlane.f32.xlu0 %v7068
      %v7070 = vpop.xlane.xlu0 %7069
      %v7071 = vsel %vm7031, %v7059, 0.0
      %7072 = vadd.xlane.f32.xlu0 %v7071
      %v7073 = vpop.xlane.xlu0 %7072
      %v7074 = vsel %vm7031, %v7061, 0.0
      %7075 = vadd.xlane.f32.xlu0 %v7074
      %v7076 = vpop.xlane.xlu0 %7075
      %v7077 = vsel %vm7031, %v7063, 0.0
      %7078 = vadd.xlane.f32.xlu0 %v7077
      %v7079 = vpop.xlane.xlu0 %7078
      %v7080 = vsel %vm7031, %v7065, 0.0
      %7081 = vadd.xlane.f32.xlu0 %v7080
      %v7082 = vpop.xlane.xlu0 %7081
      %v7083 = vsel %vm7031, %v7067, 0.0
      %7084 = vadd.xlane.f32.xlu0 %v7083
      %v7085 = vpop.xlane.xlu0 %7084
      %v7086 = vrcp.pop %v7070
      %v7087 = vrcp.pop %v7073
      %v7088 = vrcp.pop %v7076
      %v7089 = vrcp.pop %v7079
      %v7090 = vrcp.pop %v7082
      %v7091 = vrcp.pop %v7085
      %v7092 = vmul.f32 %v7057, %v7086
      %v7093 = vmul.f32 %v7059, %v7087
      %v7094 = vmul.f32 %v7061, %v7088
      %v7095 = vmul.f32 %v7063, %v7089
      %v7096 = vmul.f32 %v7065, %v7090
      %v7097 = vmul.f32 %v7067, %v7091
      %v7098 = vpack.c.bf16 %v7093, %v7092
      %v7099 = vpack.c.bf16 %v7095, %v7094
      %v7100 = vpack.c.bf16 %v7097, %v7096
      %v7101 = vpack.c.bf16 %v6925, %v6922
      %v7102 = vpack.c.bf16 %v6933, %v6930
      %v7103 = vpack.c.bf16 %v6941, %v6938
      %v7105 = vsel %vm7031, %v7098, 0
      %v7108 = vsel %vm7031, %v7099, 0
      %v7111 = vsel %vm7031, %v7100, 0
      %7113 = vmatprep.subr.bf16.mxu0 0
      %7114 = vmatpush1.bf16.msra.mxu0 0
      %7115 = vmatprep.subr.bf16.mxu0 0
      %7116 = vmatpush1.bf16.msra.mxu0 0
      %7117 = vmatprep.subr.bf16.mxu0 0
      %7118 = vmatpush1.bf16.msra.mxu0 0
      %7119 = vmatprep.subr.bf16.mxu0 0
      %7120 = vmatpush1.bf16.msra.mxu0 0
      %7121 = vmatprep.subr.bf16.mxu0 0
      %7122 = vmatpush1.bf16.msra.mxu0 0
      %7123 = vmatprep.subr.bf16.mxu0 0
      %7124 = vmatpush1.bf16.msra.mxu0 %v7103
      %7125 = vmatprep.subr.bf16.mxu0 0
      %7126 = vmatpush1.bf16.msra.mxu0 %v7102
      %7127 = vmatprep.subr.bf16.mxu0 0
      %7128 = vmatpush1.bf16.msra.mxu0 %v7101
      %7129 = vmatprep.subr.bf16.mxu0 0
      %7130 = vmatpush2.bf16.msra.mxu0 0
      %7131 = vmatprep.subr.bf16.mxu0 0
      %7132 = vmatpush2.bf16.msra.mxu0 0
      %7133 = vmatprep.subr.bf16.mxu0 0
      %7134 = vmatpush2.bf16.msra.mxu0 0
      %7135 = vmatprep.subr.bf16.mxu0 0
      %7136 = vmatpush2.bf16.msra.mxu0 0
      %7137 = vmatprep.subr.bf16.mxu0 0
      %7138 = vmatpush2.bf16.msra.mxu0 0
      %7139 = vmatprep.subr.bf16.mxu0 0
      %7140 = vmatpush2.bf16.msra.mxu0 0
      %7141 = vmatprep.subr.bf16.mxu0 0
      %7142 = vmatpush2.bf16.msra.mxu0 0
      %7143 = vmatprep.subr.bf16.mxu0 0
      %7144 = vmatpush2.bf16.msra.mxu0 0
      %7145 = vmatprep.mubr.bf16.mxu0 0
      %7146 = vmatmul.mubr.bf16.gmra.mxu0 %v7105
      %v7147 = vpop.f32.mrf.mxu0
      %v7148 = vadd.f32 0.0, %v7147
      %v7149 = vpop.f32.mrf.mxu0
      %v7150 = vpop.f32.mrf.mxu0
      %v7151 = vadd.f32 0.0, %v7150
      %v7152 = vpop.f32.mrf.mxu0
      %7153 = vmatprep.mubr.bf16.mxu0 0
      %7154 = vmatmul.mubr.bf16.gmra.mxu0 %v7108
      %v7155 = vpop.f32.mrf.mxu0
      %v7156 = vadd.f32 0.0, %v7155
      %v7157 = vpop.f32.mrf.mxu0
      %v7158 = vpop.f32.mrf.mxu0
      %v7159 = vadd.f32 0.0, %v7158
      %v7160 = vpop.f32.mrf.mxu0
      %7161 = vmatprep.mubr.bf16.mxu0 0
      %7162 = vmatmul.mubr.bf16.gmra.mxu0 %v7111
      %v7163 = vpop.f32.mrf.mxu0
      %v7164 = vadd.f32 0.0, %v7163
      %v7165 = vpop.f32.mrf.mxu0
      %v7166 = vpop.f32.mrf.mxu0
      %v7167 = vadd.f32 0.0, %v7166
      %v7168 = vpop.f32.mrf.mxu0
      %7169 = vdwg.mxu0
      %v7170 = vpack.c.bf16 %v7151, %v7148
      %v7171 = vpack.c.bf16 %v7159, %v7156
      %v7172 = vpack.c.bf16 %v7167, %v7164
      %v7173 = vld [vmem:[%s11] sm:$0xf]
      %v7174 = vld [vmem:[%s11 + $0x4] sm:$0xf]
      %s7175 = scalar_lea.vmem %s10, 48
      %v7176 = vld [vmem:[%s7175] sm:$0xf]
      %v7177 = vld [vmem:[%s7175 + $0x4] sm:$0xf]
      %v7178 = vld [vmem:[%s7175 + $0x8] sm:$0xf]
      %v7179 = vld [vmem:[%s7175 + $0xc] sm:$0xf]
      %v7184 = vunpack.c.l.b16 %v7176
      %v7185 = vunpack.c.l.b16 %v7177
      %v7186 = vunpack.c.l.b16 %v7178
      %v7187 = vunpack.c.l.b16 %v7179
      %v7188 = vpack.c.b16 %v7185, %v7184
      %v7189 = vpack.c.b16 %v7187, %v7186
      %7192 = vmatprep.subr.bf16.mxu0 0
      %7193 = vmatpush1.bf16.msra.mxu0 0
      %7194 = vmatprep.subr.bf16.mxu0 0
      %7195 = vmatpush1.bf16.msra.mxu0 0
      %7196 = vmatprep.subr.bf16.mxu0 0
      %7197 = vmatpush1.bf16.msra.mxu0 0
      %7198 = vmatprep.subr.bf16.mxu0 0
      %7199 = vmatpush1.bf16.msra.mxu0 0
      %7200 = vmatprep.subr.bf16.mxu0 0
      %7201 = vmatpush1.bf16.msra.mxu0 0
      %7202 = vmatprep.subr.bf16.mxu0 0
      %7203 = vmatpush1.bf16.msra.mxu0 0
      %7204 = vmatprep.subr.bf16.mxu0 0
      %7205 = vmatpush1.bf16.msra.mxu0 %v7189
      %7206 = vmatprep.subr.bf16.mxu0 0
      %7207 = vmatpush1.bf16.msra.mxu0 %v7188
      %7208 = vmatprep.subr.bf16.mxu0 0
      %7209 = vmatpush2.bf16.msra.mxu0 0
      %7210 = vmatprep.subr.bf16.mxu0 0
      %7211 = vmatpush2.bf16.msra.mxu0 0
      %7212 = vmatprep.subr.bf16.mxu0 0
      %7213 = vmatpush2.bf16.msra.mxu0 0
      %7214 = vmatprep.subr.bf16.mxu0 0
      %7215 = vmatpush2.bf16.msra.mxu0 0
      %7216 = vmatprep.subr.bf16.mxu0 0
      %7217 = vmatpush2.bf16.msra.mxu0 0
      %7218 = vmatprep.subr.bf16.mxu0 0
      %7219 = vmatpush2.bf16.msra.mxu0 0
      %7220 = vmatprep.subr.bf16.mxu0 0
      %7221 = vmatpush2.bf16.msra.mxu0 0
      %7222 = vmatprep.subr.bf16.mxu0 0
      %7223 = vmatpush2.bf16.msra.mxu0 0
      %7224 = vmatprep.mubr.bf16.mxu0 0
      %7225 = vmatmul.mubr.bf16.gmra.mxu0 %v6731
      %v7226 = vpop.f32.mrf.mxu0
      %v7227 = vadd.f32 0.0, %v7226
      %v7228 = vpop.f32.mrf.mxu0
      %v7229 = vpop.f32.mrf.mxu0
      %v7230 = vadd.f32 0.0, %v7229
      %v7231 = vpop.f32.mrf.mxu0
      %7232 = vmatprep.mubr.bf16.mxu0 0
      %7233 = vmatmul.mubr.bf16.gmra.mxu0 %v6734
      %v7234 = vpop.f32.mrf.mxu0
      %v7235 = vadd.f32 0.0, %v7234
      %v7236 = vpop.f32.mrf.mxu0
      %v7237 = vpop.f32.mrf.mxu0
      %v7238 = vadd.f32 0.0, %v7237
      %v7239 = vpop.f32.mrf.mxu0
      %7240 = vmatprep.mubr.bf16.mxu0 0
      %7241 = vmatmul.mubr.bf16.gmra.mxu0 %v6737
      %v7242 = vpop.f32.mrf.mxu0
      %v7243 = vadd.f32 0.0, %v7242
      %v7244 = vpop.f32.mrf.mxu0
      %v7245 = vpop.f32.mrf.mxu0
      %v7246 = vadd.f32 0.0, %v7245
      %v7247 = vpop.f32.mrf.mxu0
      %7248 = vdwg.mxu0
      %s7249 = scalar_lea.vmem %s10, 64
      %v7250 = vld [vmem:[%s7249] sm:$0xf]
      %v7251 = vld [vmem:[%s7249 + $0x4] sm:$0xf]
      %v7252 = vld [vmem:[%s7249 + $0x8] sm:$0xf]
      %v7253 = vld [vmem:[%s7249 + $0xc] sm:$0xf]
      %v7258 = vunpack.c.l.b16 %v7250
      %v7259 = vunpack.c.l.b16 %v7251
      %v7260 = vunpack.c.l.b16 %v7252
      %v7261 = vunpack.c.l.b16 %v7253
      %v7262 = vpack.c.b16 %v7259, %v7258
      %v7263 = vpack.c.b16 %v7261, %v7260
      %7266 = vmatprep.subr.bf16.mxu0 0
      %7267 = vmatpush1.bf16.msra.mxu0 0
      %7268 = vmatprep.subr.bf16.mxu0 0
      %7269 = vmatpush1.bf16.msra.mxu0 0
      %7270 = vmatprep.subr.bf16.mxu0 0
      %7271 = vmatpush1.bf16.msra.mxu0 0
      %7272 = vmatprep.subr.bf16.mxu0 0
      %7273 = vmatpush1.bf16.msra.mxu0 0
      %7274 = vmatprep.subr.bf16.mxu0 0
      %7275 = vmatpush1.bf16.msra.mxu0 0
      %7276 = vmatprep.subr.bf16.mxu0 0
      %7277 = vmatpush1.bf16.msra.mxu0 0
      %7278 = vmatprep.subr.bf16.mxu0 0
      %7279 = vmatpush1.bf16.msra.mxu0 %v7263
      %7280 = vmatprep.subr.bf16.mxu0 0
      %7281 = vmatpush1.bf16.msra.mxu0 %v7262
      %7282 = vmatprep.subr.bf16.mxu0 0
      %7283 = vmatpush2.bf16.msra.mxu0 0
      %7284 = vmatprep.subr.bf16.mxu0 0
      %7285 = vmatpush2.bf16.msra.mxu0 0
      %7286 = vmatprep.subr.bf16.mxu0 0
      %7287 = vmatpush2.bf16.msra.mxu0 0
      %7288 = vmatprep.subr.bf16.mxu0 0
      %7289 = vmatpush2.bf16.msra.mxu0 0
      %7290 = vmatprep.subr.bf16.mxu0 0
      %7291 = vmatpush2.bf16.msra.mxu0 0
      %7292 = vmatprep.subr.bf16.mxu0 0
      %7293 = vmatpush2.bf16.msra.mxu0 0
      %7294 = vmatprep.subr.bf16.mxu0 0
      %7295 = vmatpush2.bf16.msra.mxu0 0
      %7296 = vmatprep.subr.bf16.mxu0 0
      %7297 = vmatpush2.bf16.msra.mxu0 0
      %7298 = vmatprep.mubr.bf16.mxu0 0
      %7299 = vmatmul.mubr.bf16.gmra.mxu0 %v6731
      %v7300 = vpop.f32.mrf.mxu0
      %v7301 = vadd.f32 0.0, %v7300
      %v7302 = vpop.f32.mrf.mxu0
      %v7303 = vpop.f32.mrf.mxu0
      %v7304 = vadd.f32 0.0, %v7303
      %v7305 = vpop.f32.mrf.mxu0
      %7306 = vmatprep.mubr.bf16.mxu0 0
      %7307 = vmatmul.mubr.bf16.gmra.mxu0 %v6734
      %v7308 = vpop.f32.mrf.mxu0
      %v7309 = vadd.f32 0.0, %v7308
      %v7310 = vpop.f32.mrf.mxu0
      %v7311 = vpop.f32.mrf.mxu0
      %v7312 = vadd.f32 0.0, %v7311
      %v7313 = vpop.f32.mrf.mxu0
      %7314 = vmatprep.mubr.bf16.mxu0 0
      %7315 = vmatmul.mubr.bf16.gmra.mxu0 %v6737
      %v7316 = vpop.f32.mrf.mxu0
      %v7317 = vadd.f32 0.0, %v7316
      %v7318 = vpop.f32.mrf.mxu0
      %v7319 = vpop.f32.mrf.mxu0
      %v7320 = vadd.f32 0.0, %v7319
      %v7321 = vpop.f32.mrf.mxu0
      %7322 = vdwg.mxu0
      %s7323 = scalar_lea.vmem %s10, 80
      %v7324 = vld [vmem:[%s7323] sm:$0xf]
      %v7325 = vld [vmem:[%s7323 + $0x4] sm:$0xf]
      %v7326 = vld [vmem:[%s7323 + $0x8] sm:$0xf]
      %v7327 = vld [vmem:[%s7323 + $0xc] sm:$0xf]
      %v7332 = vunpack.c.l.b16 %v7324
      %v7333 = vunpack.c.l.b16 %v7325
      %v7334 = vunpack.c.l.b16 %v7326
      %v7335 = vunpack.c.l.b16 %v7327
      %v7336 = vpack.c.b16 %v7333, %v7332
      %v7337 = vpack.c.b16 %v7335, %v7334
      %7340 = vmatprep.subr.bf16.mxu0 0
      %7341 = vmatpush1.bf16.msra.mxu0 0
      %7342 = vmatprep.subr.bf16.mxu0 0
      %7343 = vmatpush1.bf16.msra.mxu0 0
      %7344 = vmatprep.subr.bf16.mxu0 0
      %7345 = vmatpush1.bf16.msra.mxu0 0
      %7346 = vmatprep.subr.bf16.mxu0 0
      %7347 = vmatpush1.bf16.msra.mxu0 0
      %7348 = vmatprep.subr.bf16.mxu0 0
      %7349 = vmatpush1.bf16.msra.mxu0 0
      %7350 = vmatprep.subr.bf16.mxu0 0
      %7351 = vmatpush1.bf16.msra.mxu0 0
      %7352 = vmatprep.subr.bf16.mxu0 0
      %7353 = vmatpush1.bf16.msra.mxu0 %v7337
      %7354 = vmatprep.subr.bf16.mxu0 0
      %7355 = vmatpush1.bf16.msra.mxu0 %v7336
      %7356 = vmatprep.subr.bf16.mxu0 0
      %7357 = vmatpush2.bf16.msra.mxu0 0
      %7358 = vmatprep.subr.bf16.mxu0 0
      %7359 = vmatpush2.bf16.msra.mxu0 0
      %7360 = vmatprep.subr.bf16.mxu0 0
      %7361 = vmatpush2.bf16.msra.mxu0 0
      %7362 = vmatprep.subr.bf16.mxu0 0
      %7363 = vmatpush2.bf16.msra.mxu0 0
      %7364 = vmatprep.subr.bf16.mxu0 0
      %7365 = vmatpush2.bf16.msra.mxu0 0
      %7366 = vmatprep.subr.bf16.mxu0 0
      %7367 = vmatpush2.bf16.msra.mxu0 0
      %7368 = vmatprep.subr.bf16.mxu0 0
      %7369 = vmatpush2.bf16.msra.mxu0 0
      %7370 = vmatprep.subr.bf16.mxu0 0
      %7371 = vmatpush2.bf16.msra.mxu0 0
      %7372 = vmatprep.mubr.bf16.mxu0 0
      %7373 = vmatmul.mubr.bf16.gmra.mxu0 %v6731
      %v7374 = vpop.f32.mrf.mxu0
      %v7375 = vadd.f32 0.0, %v7374
      %v7376 = vpop.f32.mrf.mxu0
      %v7377 = vpop.f32.mrf.mxu0
      %v7378 = vadd.f32 0.0, %v7377
      %v7379 = vpop.f32.mrf.mxu0
      %7380 = vmatprep.mubr.bf16.mxu0 0
      %7381 = vmatmul.mubr.bf16.gmra.mxu0 %v6734
      %v7382 = vpop.f32.mrf.mxu0
      %v7383 = vadd.f32 0.0, %v7382
      %v7384 = vpop.f32.mrf.mxu0
      %v7385 = vpop.f32.mrf.mxu0
      %v7386 = vadd.f32 0.0, %v7385
      %v7387 = vpop.f32.mrf.mxu0
      %7388 = vmatprep.mubr.bf16.mxu0 0
      %7389 = vmatmul.mubr.bf16.gmra.mxu0 %v6737
      %v7390 = vpop.f32.mrf.mxu0
      %v7391 = vadd.f32 0.0, %v7390
      %v7392 = vpop.f32.mrf.mxu0
      %v7393 = vpop.f32.mrf.mxu0
      %v7394 = vadd.f32 0.0, %v7393
      %v7395 = vpop.f32.mrf.mxu0
      %7396 = vdwg.mxu0
      %v7397 = vpack.c.bf16 %v7230, %v7227
      %v7398 = vpack.c.bf16 %v7238, %v7235
      %v7399 = vpack.c.bf16 %v7246, %v7243
      %v7400 = vpack.c.bf16 %v7304, %v7301
      %v7401 = vpack.c.bf16 %v7312, %v7309
      %v7402 = vpack.c.bf16 %v7320, %v7317
      %v7404 = vsel %vm3486, %v7397, 0
      %v7407 = vsel %vm3486, %v7398, 0
      %v7410 = vsel %vm3486, %v7399, 0
      %v7413 = vsel %vm3486, %v7400, 0
      %v7416 = vsel %vm3486, %v7401, 0
      %v7419 = vsel %vm3486, %v7402, 0
      %7421 = vmatprep.subr.bf16.mxu0 0
      %7422 = vmatpush1.bf16.xpose.msra.mxu0 0
      %7423 = vmatprep.subr.bf16.mxu0 0
      %7424 = vmatpush1.bf16.xpose.msra.mxu0 0
      %7425 = vmatprep.subr.bf16.mxu0 0
      %7426 = vmatpush1.bf16.xpose.msra.mxu0 0
      %7427 = vmatprep.subr.bf16.mxu0 0
      %7428 = vmatpush1.bf16.xpose.msra.mxu0 0
      %7429 = vmatprep.subr.bf16.mxu0 0
      %7430 = vmatpush1.bf16.xpose.msra.mxu0 0
      %7431 = vmatprep.subr.bf16.mxu0 0
      %7432 = vmatpush1.bf16.xpose.msra.mxu0 %v7419
      %7433 = vmatprep.subr.bf16.mxu0 0
      %7434 = vmatpush1.bf16.xpose.msra.mxu0 %v7416
      %7435 = vmatprep.subr.bf16.mxu0 0
      %7436 = vmatpush1.bf16.xpose.msra.mxu0 %v7413
      %7437 = vmatprep.subr.bf16.mxu0 0
      %7438 = vmatpush2.bf16.xpose.msra.mxu0 0
      %7439 = vmatprep.subr.bf16.mxu0 0
      %7440 = vmatpush2.bf16.xpose.msra.mxu0 0
      %7441 = vmatprep.subr.bf16.mxu0 0
      %7442 = vmatpush2.bf16.xpose.msra.mxu0 0
      %7443 = vmatprep.subr.bf16.mxu0 0
      %7444 = vmatpush2.bf16.xpose.msra.mxu0 0
      %7445 = vmatprep.subr.bf16.mxu0 0
      %7446 = vmatpush2.bf16.xpose.msra.mxu0 0
      %7447 = vmatprep.subr.bf16.mxu0 0
      %7448 = vmatpush2.bf16.xpose.msra.mxu0 0
      %7449 = vmatprep.subr.bf16.mxu0 0
      %7450 = vmatpush2.bf16.xpose.msra.mxu0 0
      %7451 = vmatprep.subr.bf16.mxu0 0
      %7452 = vmatpush2.bf16.xpose.msra.mxu0 0
      %7453 = vmatprep.mubr.bf16.mxu0 0
      %7454 = vmatmul.mubr.bf16.gmra.mxu0 %v7404
      %v7455 = vpop.f32.mrf.mxu0
      %v7456 = vadd.f32 0.0, %v7455
      %v7457 = vpop.f32.mrf.mxu0
      %v7458 = vpop.f32.mrf.mxu0
      %v7459 = vadd.f32 0.0, %v7458
      %v7460 = vpop.f32.mrf.mxu0
      %7461 = vmatprep.mubr.bf16.mxu0 0
      %7462 = vmatmul.mubr.bf16.gmra.mxu0 %v7407
      %v7463 = vpop.f32.mrf.mxu0
      %v7464 = vadd.f32 0.0, %v7463
      %v7465 = vpop.f32.mrf.mxu0
      %v7466 = vpop.f32.mrf.mxu0
      %v7467 = vadd.f32 0.0, %v7466
      %v7468 = vpop.f32.mrf.mxu0
      %7469 = vmatprep.mubr.bf16.mxu0 0
      %7470 = vmatmul.mubr.bf16.gmra.mxu0 %v7410
      %v7471 = vpop.f32.mrf.mxu0
      %v7472 = vadd.f32 0.0, %v7471
      %v7473 = vpop.f32.mrf.mxu0
      %v7474 = vpop.f32.mrf.mxu0
      %v7475 = vadd.f32 0.0, %v7474
      %v7476 = vpop.f32.mrf.mxu0
      %7477 = vdwg.mxu0
      %v7478 = vmul.f32 %v7456, 0.25
      %v7479 = vmul.f32 %v7459, 0.25
      %v7480 = vmul.f32 %v7464, 0.25
      %v7481 = vmul.f32 %v7467, 0.25
      %v7482 = vmul.f32 %v7472, 0.25
      %v7483 = vmul.f32 %v7475, 0.25
      %v7484 = vsel %vm7031, %v7478, -inf
      %7485 = vmax.xlane.f32.xlu0 %v7484
      %v7486 = vpop.xlane.xlu0 %7485
      %v7487 = vsel %vm7031, %v7479, -inf
      %7488 = vmax.xlane.f32.xlu0 %v7487
      %v7489 = vpop.xlane.xlu0 %7488
      %v7490 = vsel %vm7031, %v7480, -inf
      %7491 = vmax.xlane.f32.xlu0 %v7490
      %v7492 = vpop.xlane.xlu0 %7491
      %v7493 = vsel %vm7031, %v7481, -inf
      %7494 = vmax.xlane.f32.xlu0 %v7493
      %v7495 = vpop.xlane.xlu0 %7494
      %v7496 = vsel %vm7031, %v7482, -inf
      %7497 = vmax.xlane.f32.xlu0 %v7496
      %v7498 = vpop.xlane.xlu0 %7497
      %v7499 = vsel %vm7031, %v7483, -inf
      %7500 = vmax.xlane.f32.xlu0 %v7499
      %v7501 = vpop.xlane.xlu0 %7500
      %v7502 = vsub.f32 %v7478, %v7486
      %v7503 = vsub.f32 %v7479, %v7489
      %v7504 = vsub.f32 %v7480, %v7492
      %v7505 = vsub.f32 %v7481, %v7495
      %v7506 = vsub.f32 %v7482, %v7498
      %v7507 = vsub.f32 %v7483, %v7501
      %v7508 = vmul.f32 %v7502, 1.442695
      %v7509 = vpow.pop %v7508
      %v7510 = vmul.f32 %v7503, 1.442695
      %v7511 = vpow.pop %v7510
      %v7512 = vmul.f32 %v7504, 1.442695
      %v7513 = vpow.pop %v7512
      %v7514 = vmul.f32 %v7505, 1.442695
      %v7515 = vpow.pop %v7514
      %v7516 = vmul.f32 %v7506, 1.442695
      %v7517 = vpow.pop %v7516
      %v7518 = vmul.f32 %v7507, 1.442695
      %v7519 = vpow.pop %v7518
      %v7520 = vsel %vm7031, %v7509, 0.0
      %7521 = vadd.xlane.f32.xlu0 %v7520
      %v7522 = vpop.xlane.xlu0 %7521
      %v7523 = vsel %vm7031, %v7511, 0.0
      %7524 = vadd.xlane.f32.xlu0 %v7523
      %v7525 = vpop.xlane.xlu0 %7524
      %v7526 = vsel %vm7031, %v7513, 0.0
      %7527 = vadd.xlane.f32.xlu0 %v7526
      %v7528 = vpop.xlane.xlu0 %7527
      %v7529 = vsel %vm7031, %v7515, 0.0
      %7530 = vadd.xlane.f32.xlu0 %v7529
      %v7531 = vpop.xlane.xlu0 %7530
      %v7532 = vsel %vm7031, %v7517, 0.0
      %7533 = vadd.xlane.f32.xlu0 %v7532
      %v7534 = vpop.xlane.xlu0 %7533
      %v7535 = vsel %vm7031, %v7519, 0.0
      %7536 = vadd.xlane.f32.xlu0 %v7535
      %v7537 = vpop.xlane.xlu0 %7536
      %v7538 = vrcp.pop %v7522
      %v7539 = vrcp.pop %v7525
      %v7540 = vrcp.pop %v7528
      %v7541 = vrcp.pop %v7531
      %v7542 = vrcp.pop %v7534
      %v7543 = vrcp.pop %v7537
      %v7544 = vmul.f32 %v7509, %v7538
      %v7545 = vmul.f32 %v7511, %v7539
      %v7546 = vmul.f32 %v7513, %v7540
      %v7547 = vmul.f32 %v7515, %v7541
      %v7548 = vmul.f32 %v7517, %v7542
      %v7549 = vmul.f32 %v7519, %v7543
      %v7550 = vpack.c.bf16 %v7545, %v7544
      %v7551 = vpack.c.bf16 %v7547, %v7546
      %v7552 = vpack.c.bf16 %v7549, %v7548
      %v7553 = vpack.c.bf16 %v7378, %v7375
      %v7554 = vpack.c.bf16 %v7386, %v7383
      %v7555 = vpack.c.bf16 %v7394, %v7391
      %v7557 = vsel %vm7031, %v7550, 0
      %v7560 = vsel %vm7031, %v7551, 0
      %v7563 = vsel %vm7031, %v7552, 0
      %7565 = vmatprep.subr.bf16.mxu0 0
      %7566 = vmatpush1.bf16.msra.mxu0 0
      %7567 = vmatprep.subr.bf16.mxu0 0
      %7568 = vmatpush1.bf16.msra.mxu0 0
      %7569 = vmatprep.subr.bf16.mxu0 0
      %7570 = vmatpush1.bf16.msra.mxu0 0
      %7571 = vmatprep.subr.bf16.mxu0 0
      %7572 = vmatpush1.bf16.msra.mxu0 0
      %7573 = vmatprep.subr.bf16.mxu0 0
      %7574 = vmatpush1.bf16.msra.mxu0 0
      %7575 = vmatprep.subr.bf16.mxu0 0
      %7576 = vmatpush1.bf16.msra.mxu0 %v7555
      %7577 = vmatprep.subr.bf16.mxu0 0
      %7578 = vmatpush1.bf16.msra.mxu0 %v7554
      %7579 = vmatprep.subr.bf16.mxu0 0
      %7580 = vmatpush1.bf16.msra.mxu0 %v7553
      %7581 = vmatprep.subr.bf16.mxu0 0
      %7582 = vmatpush2.bf16.msra.mxu0 0
      %7583 = vmatprep.subr.bf16.mxu0 0
      %7584 = vmatpush2.bf16.msra.mxu0 0
      %7585 = vmatprep.subr.bf16.mxu0 0
      %7586 = vmatpush2.bf16.msra.mxu0 0
      %7587 = vmatprep.subr.bf16.mxu0 0
      %7588 = vmatpush2.bf16.msra.mxu0 0
      %7589 = vmatprep.subr.bf16.mxu0 0
      %7590 = vmatpush2.bf16.msra.mxu0 0
      %7591 = vmatprep.subr.bf16.mxu0 0
      %7592 = vmatpush2.bf16.msra.mxu0 0
      %7593 = vmatprep.subr.bf16.mxu0 0
      %7594 = vmatpush2.bf16.msra.mxu0 0
      %7595 = vmatprep.subr.bf16.mxu0 0
      %7596 = vmatpush2.bf16.msra.mxu0 0
      %7597 = vmatprep.mubr.bf16.mxu0 0
      %7598 = vmatmul.mubr.bf16.gmra.mxu0 %v7557
      %v7599 = vpop.f32.mrf.mxu0
      %v7600 = vadd.f32 0.0, %v7599
      %v7601 = vpop.f32.mrf.mxu0
      %v7602 = vpop.f32.mrf.mxu0
      %v7603 = vadd.f32 0.0, %v7602
      %v7604 = vpop.f32.mrf.mxu0
      %7605 = vmatprep.mubr.bf16.mxu0 0
      %7606 = vmatmul.mubr.bf16.gmra.mxu0 %v7560
      %v7607 = vpop.f32.mrf.mxu0
      %v7608 = vadd.f32 0.0, %v7607
      %v7609 = vpop.f32.mrf.mxu0
      %v7610 = vpop.f32.mrf.mxu0
      %v7611 = vadd.f32 0.0, %v7610
      %v7612 = vpop.f32.mrf.mxu0
      %7613 = vmatprep.mubr.bf16.mxu0 0
      %7614 = vmatmul.mubr.bf16.gmra.mxu0 %v7563
      %v7615 = vpop.f32.mrf.mxu0
      %v7616 = vadd.f32 0.0, %v7615
      %v7617 = vpop.f32.mrf.mxu0
      %v7618 = vpop.f32.mrf.mxu0
      %v7619 = vadd.f32 0.0, %v7618
      %v7620 = vpop.f32.mrf.mxu0
      %7621 = vdwg.mxu0
      %v7622 = vpack.c.bf16 %v7603, %v7600
      %v7623 = vpack.c.bf16 %v7611, %v7608
      %v7624 = vpack.c.bf16 %v7619, %v7616
      %s7625 = scalar_lea.vmem %s11, 8
      %v7626 = vld [vmem:[%s7625] sm:$0xf]
      %v7627 = vld [vmem:[%s7625 + $0x4] sm:$0xf]
      %v7630 = vunpack.c.l.b16 %v7626
      %v7631 = vunpack.c.l.b16 %v7627
      %v7632 = vpack.c.b16 %v7631, %v7630
      %v7635 = vsel %vm3486, %v7622, 0
      %v7638 = vsel %vm3486, %v7623, 0
      %v7641 = vsel %vm3486, %v7624, 0
      %7643 = vmatprep.subr.bf16.mxu0 0
      %7644 = vmatpush1.bf16.msra.mxu0 0
      %7645 = vmatprep.subr.bf16.mxu0 0
      %7646 = vmatpush1.bf16.msra.mxu0 0
      %7647 = vmatprep.subr.bf16.mxu0 0
      %7648 = vmatpush1.bf16.msra.mxu0 0
      %7649 = vmatprep.subr.bf16.mxu0 0
      %7650 = vmatpush1.bf16.msra.mxu0 0
      %7651 = vmatprep.subr.bf16.mxu0 0
      %7652 = vmatpush1.bf16.msra.mxu0 0
      %7653 = vmatprep.subr.bf16.mxu0 0
      %7654 = vmatpush1.bf16.msra.mxu0 0
      %7655 = vmatprep.subr.bf16.mxu0 0
      %7656 = vmatpush1.bf16.msra.mxu0 0
      %7657 = vmatprep.subr.bf16.mxu0 0
      %7658 = vmatpush1.bf16.msra.mxu0 %v7632
      %7659 = vmatprep.subr.bf16.mxu0 0
      %7660 = vmatpush2.bf16.msra.mxu0 0
      %7661 = vmatprep.subr.bf16.mxu0 0
      %7662 = vmatpush2.bf16.msra.mxu0 0
      %7663 = vmatprep.subr.bf16.mxu0 0
      %7664 = vmatpush2.bf16.msra.mxu0 0
      %7665 = vmatprep.subr.bf16.mxu0 0
      %7666 = vmatpush2.bf16.msra.mxu0 0
      %7667 = vmatprep.subr.bf16.mxu0 0
      %7668 = vmatpush2.bf16.msra.mxu0 0
      %7669 = vmatprep.subr.bf16.mxu0 0
      %7670 = vmatpush2.bf16.msra.mxu0 0
      %7671 = vmatprep.subr.bf16.mxu0 0
      %7672 = vmatpush2.bf16.msra.mxu0 0
      %7673 = vmatprep.subr.bf16.mxu0 0
      %7674 = vmatpush2.bf16.msra.mxu0 0
      %7675 = vmatprep.mubr.bf16.mxu0 0
      %7676 = vmatmul.mubr.bf16.gmra.mxu0 %v7635
      %v7677 = vpop.f32.mrf.mxu0
      %v7678 = vadd.f32 0.0, %v7677
      %v7679 = vpop.f32.mrf.mxu0
      %v7680 = vpop.f32.mrf.mxu0
      %v7681 = vadd.f32 0.0, %v7680
      %v7682 = vpop.f32.mrf.mxu0
      %7683 = vmatprep.mubr.bf16.mxu0 0
      %7684 = vmatmul.mubr.bf16.gmra.mxu0 %v7638
      %v7685 = vpop.f32.mrf.mxu0
      %v7686 = vadd.f32 0.0, %v7685
      %v7687 = vpop.f32.mrf.mxu0
      %v7688 = vpop.f32.mrf.mxu0
      %v7689 = vadd.f32 0.0, %v7688
      %v7690 = vpop.f32.mrf.mxu0
      %7691 = vmatprep.mubr.bf16.mxu0 0
      %7692 = vmatmul.mubr.bf16.gmra.mxu0 %v7641
      %v7693 = vpop.f32.mrf.mxu0
      %v7694 = vadd.f32 0.0, %v7693
      %v7695 = vpop.f32.mrf.mxu0
      %v7696 = vpop.f32.mrf.mxu0
      %v7697 = vadd.f32 0.0, %v7696
      %v7698 = vpop.f32.mrf.mxu0
      %7699 = vdwg.mxu0
      %v7702 = vunpack.c.l.b16 %v7173
      %v7703 = vunpack.c.l.b16 %v7174
      %v7704 = vpack.c.b16 %v7703, %v7702
      %v7707 = vsel %vm3486, %v7170, 0
      %v7710 = vsel %vm3486, %v7171, 0
      %v7713 = vsel %vm3486, %v7172, 0
      %7715 = vmatprep.subr.bf16.mxu0 0
      %7716 = vmatpush1.bf16.msra.mxu0 0
      %7717 = vmatprep.subr.bf16.mxu0 0
      %7718 = vmatpush1.bf16.msra.mxu0 0
      %7719 = vmatprep.subr.bf16.mxu0 0
      %7720 = vmatpush1.bf16.msra.mxu0 0
      %7721 = vmatprep.subr.bf16.mxu0 0
      %7722 = vmatpush1.bf16.msra.mxu0 0
      %7723 = vmatprep.subr.bf16.mxu0 0
      %7724 = vmatpush1.bf16.msra.mxu0 0
      %7725 = vmatprep.subr.bf16.mxu0 0
      %7726 = vmatpush1.bf16.msra.mxu0 0
      %7727 = vmatprep.subr.bf16.mxu0 0
      %7728 = vmatpush1.bf16.msra.mxu0 0
      %7729 = vmatprep.subr.bf16.mxu0 0
      %7730 = vmatpush1.bf16.msra.mxu0 %v7704
      %7731 = vmatprep.subr.bf16.mxu0 0
      %7732 = vmatpush2.bf16.msra.mxu0 0
      %7733 = vmatprep.subr.bf16.mxu0 0
      %7734 = vmatpush2.bf16.msra.mxu0 0
      %7735 = vmatprep.subr.bf16.mxu0 0
      %7736 = vmatpush2.bf16.msra.mxu0 0
      %7737 = vmatprep.subr.bf16.mxu0 0
      %7738 = vmatpush2.bf16.msra.mxu0 0
      %7739 = vmatprep.subr.bf16.mxu0 0
      %7740 = vmatpush2.bf16.msra.mxu0 0
      %7741 = vmatprep.subr.bf16.mxu0 0
      %7742 = vmatpush2.bf16.msra.mxu0 0
      %7743 = vmatprep.subr.bf16.mxu0 0
      %7744 = vmatpush2.bf16.msra.mxu0 0
      %7745 = vmatprep.subr.bf16.mxu0 0
      %7746 = vmatpush2.bf16.msra.mxu0 0
      %7747 = vmatprep.mubr.bf16.mxu0 0
      %7748 = vmatmul.mubr.bf16.gmra.mxu0 %v7707
      %v7749 = vpop.f32.mrf.mxu0
      %v7750 = vadd.f32 %v7678, %v7749
      %v7751 = vpop.f32.mrf.mxu0
      %v7752 = vpop.f32.mrf.mxu0
      %v7753 = vadd.f32 %v7681, %v7752
      %v7754 = vpop.f32.mrf.mxu0
      %7755 = vmatprep.mubr.bf16.mxu0 0
      %7756 = vmatmul.mubr.bf16.gmra.mxu0 %v7710
      %v7757 = vpop.f32.mrf.mxu0
      %v7758 = vadd.f32 %v7686, %v7757
      %v7759 = vpop.f32.mrf.mxu0
      %v7760 = vpop.f32.mrf.mxu0
      %v7761 = vadd.f32 %v7689, %v7760
      %v7762 = vpop.f32.mrf.mxu0
      %7763 = vmatprep.mubr.bf16.mxu0 0
      %7764 = vmatmul.mubr.bf16.gmra.mxu0 %v7713
      %v7765 = vpop.f32.mrf.mxu0
      %v7766 = vadd.f32 %v7694, %v7765
      %v7767 = vpop.f32.mrf.mxu0
      %v7768 = vpop.f32.mrf.mxu0
      %v7769 = vadd.f32 %v7697, %v7768
      %v7770 = vpop.f32.mrf.mxu0
      %7771 = vdwg.mxu0
      %v7772 = vadd.f32 %v6604, %v7750
      %v7773 = vadd.f32 %v6605, %v7753
      %v7774 = vadd.f32 %v6606, %v7758
      %v7775 = vadd.f32 %v6607, %v7761
      %v7776 = vadd.f32 %v6608, %v7766
      %v7777 = vadd.f32 %v6609, %v7769
      %v7778 = vlaneseq
      %v7779 = vshrl.u32 %v7778, 7
      %v7780 = vsub.s32 2, %v7779
      %v7781 = vrot.slane %v6610, %v7780
      %v7782 = vadd.f32 %v7772, %v7781
      %v7783 = vadd.f32 %v7773, %v7781
      %v7784 = vadd.f32 %v7774, %v7781
      %v7785 = vadd.f32 %v7775, %v7781
      %v7786 = vadd.f32 %v7776, %v7781
      %v7787 = vadd.f32 %v7777, %v7781
      %v7788 = vsel %vm6611, %v7782, 0.0
      %7789 = vadd.xlane.f32.xlu0 %v7788
      %v7790 = vpop.xlane.xlu0 %7789
      %v7791 = vsel %vm6611, %v7783, 0.0
      %7792 = vadd.xlane.f32.xlu0 %v7791
      %v7793 = vpop.xlane.xlu0 %7792
      %v7794 = vsel %vm6611, %v7784, 0.0
      %7795 = vadd.xlane.f32.xlu0 %v7794
      %v7796 = vpop.xlane.xlu0 %7795
      %v7797 = vsel %vm6611, %v7785, 0.0
      %7798 = vadd.xlane.f32.xlu0 %v7797
      %v7799 = vpop.xlane.xlu0 %7798
      %v7800 = vsel %vm6611, %v7786, 0.0
      %7801 = vadd.xlane.f32.xlu0 %v7800
      %v7802 = vpop.xlane.xlu0 %7801
      %v7803 = vsel %vm6611, %v7787, 0.0
      %7804 = vadd.xlane.f32.xlu0 %v7803
      %v7805 = vpop.xlane.xlu0 %7804
      %v7806 = vmul.f32 %v7790, %v6630
      %v7807 = vmul.f32 %v7793, %v6630
      %v7808 = vmul.f32 %v7796, %v6630
      %v7809 = vmul.f32 %v7799, %v6630
      %v7810 = vmul.f32 %v7802, %v6630
      %v7811 = vmul.f32 %v7805, %v6630
      %v7812 = vsub.f32 %v7782, %v7806
      %v7813 = vsub.f32 %v7783, %v7807
      %v7814 = vsub.f32 %v7784, %v7808
      %v7815 = vsub.f32 %v7785, %v7809
      %v7816 = vsub.f32 %v7786, %v7810
      %v7817 = vsub.f32 %v7787, %v7811
      %v7818 = vmul.f32 %v7812, %v7812
      %v7819 = vmul.f32 %v7813, %v7813
      %v7820 = vmul.f32 %v7814, %v7814
      %v7821 = vmul.f32 %v7815, %v7815
      %v7822 = vmul.f32 %v7816, %v7816
      %v7823 = vmul.f32 %v7817, %v7817
      %v7824 = vsel %vm6611, %v7818, 0.0
      %7825 = vadd.xlane.f32.xlu0 %v7824
      %v7826 = vpop.xlane.xlu0 %7825
      %v7827 = vsel %vm6611, %v7819, 0.0
      %7828 = vadd.xlane.f32.xlu0 %v7827
      %v7829 = vpop.xlane.xlu0 %7828
      %v7830 = vsel %vm6611, %v7820, 0.0
      %7831 = vadd.xlane.f32.xlu0 %v7830
      %v7832 = vpop.xlane.xlu0 %7831
      %v7833 = vsel %vm6611, %v7821, 0.0
      %7834 = vadd.xlane.f32.xlu0 %v7833
      %v7835 = vpop.xlane.xlu0 %7834
      %v7836 = vsel %vm6611, %v7822, 0.0
      %7837 = vadd.xlane.f32.xlu0 %v7836
      %v7838 = vpop.xlane.xlu0 %7837
      %v7839 = vsel %vm6611, %v7823, 0.0
      %7840 = vadd.xlane.f32.xlu0 %v7839
      %v7841 = vpop.xlane.xlu0 %7840
      %v7842 = vmul.f32 %v7826, %v6630
      %v7843 = vmul.f32 %v7829, %v6630
      %v7844 = vmul.f32 %v7832, %v6630
      %v7845 = vmul.f32 %v7835, %v6630
      %v7846 = vmul.f32 %v7838, %v6630
      %v7847 = vmul.f32 %v7841, %v6630
      %v7848 = vadd.f32 %v7842, 1e-05
      %v7849 = vadd.f32 %v7843, 1e-05
      %v7850 = vadd.f32 %v7844, 1e-05
      %v7851 = vadd.f32 %v7845, 1e-05
      %v7852 = vadd.f32 %v7846, 1e-05
      %v7853 = vadd.f32 %v7847, 1e-05
      %v7854 = vrsqrt.pop %v7848
      %v7855 = vrsqrt.pop %v7849
      %v7856 = vrsqrt.pop %v7850
      %v7857 = vrsqrt.pop %v7851
      %v7858 = vrsqrt.pop %v7852
      %v7859 = vrsqrt.pop %v7853
      %v7860 = vmul.f32 %v7812, %v7854
      %v7861 = vmul.f32 %v7813, %v7855
      %v7862 = vmul.f32 %v7814, %v7856
      %v7863 = vmul.f32 %v7815, %v7857
      %v7864 = vmul.f32 %v7816, %v7858
      %v7865 = vmul.f32 %v7817, %v7859
      %v7866 = vlaneseq
      %v7867 = vshrl.u32 %v7866, 7
      %v7868 = vsub.s32 3, %v7867
      %v7869 = vrot.slane %v6610, %v7868
      %v7870 = vmul.f32 %v7860, %v7869
      %v7871 = vmul.f32 %v7861, %v7869
      %v7872 = vmul.f32 %v7862, %v7869
      %v7873 = vmul.f32 %v7863, %v7869
      %v7874 = vmul.f32 %v7864, %v7869
      %v7875 = vmul.f32 %v7865, %v7869
      %v7876 = vlaneseq
      %v7877 = vshrl.u32 %v7876, 7
      %v7878 = vsub.s32 4, %v7877
      %v7879 = vrot.slane %v6610, %v7878
      %v7880 = vadd.f32 %v7870, %v7879
      %v7881 = vadd.f32 %v7871, %v7879
      %v7882 = vadd.f32 %v7872, %v7879
      %v7883 = vadd.f32 %v7873, %v7879
      %v7884 = vadd.f32 %v7874, %v7879
      %v7885 = vadd.f32 %v7875, %v7879
      %v7886 = vpack.c.bf16 %v7881, %v7880
      %v7887 = vpack.c.bf16 %v7883, %v7882
      %v7888 = vpack.c.bf16 %v7885, %v7884
      %v7889 = vld [vmem:[%s12] sm:$0xf]
      %v7890 = vld [vmem:[%s12 + $0x4] sm:$0xf]
      %v7891 = vld [vmem:[%s12 + $0x8] sm:$0xf]
      %v7892 = vld [vmem:[%s12 + $0xc] sm:$0xf]
      %v7893 = vld [vmem:[%s9] sm:$0x1]
      %v7895 = vlaneseq
      %v7896 = vshrl.u32 %v7895, 7
      %v7897 = vsub.s32 0, %v7896
      %v7898 = vrot.slane %v7893, %v7897
      %v7904 = vunpack.c.l.b16 %v7889
      %v7905 = vunpack.c.l.b16 %v7890
      %v7906 = vunpack.c.l.b16 %v7891
      %v7907 = vunpack.c.l.b16 %v7892
      %v7908 = vpack.c.b16 %v7905, %v7904
      %v7909 = vpack.c.b16 %v7907, %v7906
      %v7913 = vsel %vm6611, %v7886, 0
      %v7916 = vsel %vm6611, %v7887, 0
      %v7919 = vsel %vm6611, %v7888, 0
      %7921 = vmatprep.subr.bf16.mxu0 0
      %7922 = vmatpush1.bf16.msra.mxu0 0
      %7923 = vmatprep.subr.bf16.mxu0 0
      %7924 = vmatpush1.bf16.msra.mxu0 0
      %7925 = vmatprep.subr.bf16.mxu0 0
      %7926 = vmatpush1.bf16.msra.mxu0 0
      %7927 = vmatprep.subr.bf16.mxu0 0
      %7928 = vmatpush1.bf16.msra.mxu0 0
      %7929 = vmatprep.subr.bf16.mxu0 0
      %7930 = vmatpush1.bf16.msra.mxu0 0
      %7931 = vmatprep.subr.bf16.mxu0 0
      %7932 = vmatpush1.bf16.msra.mxu0 0
      %7933 = vmatprep.subr.bf16.mxu0 0
      %7934 = vmatpush1.bf16.msra.mxu0 %v7909
      %7935 = vmatprep.subr.bf16.mxu0 0
      %7936 = vmatpush1.bf16.msra.mxu0 %v7908
      %7937 = vmatprep.subr.bf16.mxu0 0
      %7938 = vmatpush2.bf16.msra.mxu0 0
      %7939 = vmatprep.subr.bf16.mxu0 0
      %7940 = vmatpush2.bf16.msra.mxu0 0
      %7941 = vmatprep.subr.bf16.mxu0 0
      %7942 = vmatpush2.bf16.msra.mxu0 0
      %7943 = vmatprep.subr.bf16.mxu0 0
      %7944 = vmatpush2.bf16.msra.mxu0 0
      %7945 = vmatprep.subr.bf16.mxu0 0
      %7946 = vmatpush2.bf16.msra.mxu0 0
      %7947 = vmatprep.subr.bf16.mxu0 0
      %7948 = vmatpush2.bf16.msra.mxu0 0
      %7949 = vmatprep.subr.bf16.mxu0 0
      %7950 = vmatpush2.bf16.msra.mxu0 0
      %7951 = vmatprep.subr.bf16.mxu0 0
      %7952 = vmatpush2.bf16.msra.mxu0 0
      %7953 = vmatprep.mubr.bf16.mxu0 0
      %7954 = vmatmul.mubr.bf16.gmra.mxu0 %v7913
      %v7955 = vpop.f32.mrf.mxu0
      %v7956 = vadd.f32 %v7898, %v7955
      %v7957 = vpop.f32.mrf.mxu0
      %v7958 = vpop.f32.mrf.mxu0
      %v7959 = vadd.f32 %v7898, %v7958
      %v7960 = vpop.f32.mrf.mxu0
      %7961 = vmatprep.mubr.bf16.mxu0 0
      %7962 = vmatmul.mubr.bf16.gmra.mxu0 %v7916
      %v7963 = vpop.f32.mrf.mxu0
      %v7964 = vadd.f32 %v7898, %v7963
      %v7965 = vpop.f32.mrf.mxu0
      %v7966 = vpop.f32.mrf.mxu0
      %v7967 = vadd.f32 %v7898, %v7966
      %v7968 = vpop.f32.mrf.mxu0
      %7969 = vmatprep.mubr.bf16.mxu0 0
      %7970 = vmatmul.mubr.bf16.gmra.mxu0 %v7919
      %v7971 = vpop.f32.mrf.mxu0
      %v7972 = vadd.f32 %v7898, %v7971
      %v7973 = vpop.f32.mrf.mxu0
      %v7974 = vpop.f32.mrf.mxu0
      %v7975 = vadd.f32 %v7898, %v7974
      %v7976 = vpop.f32.mrf.mxu0
      %7977 = vdwg.mxu0
      %v7978 = vmul.f32 %v7956, %v7956
      %v7979 = vmul.f32 %v7959, %v7959
      %v7980 = vmul.f32 %v7964, %v7964
      %v7981 = vmul.f32 %v7967, %v7967
      %v7982 = vmul.f32 %v7972, %v7972
      %v7983 = vmul.f32 %v7975, %v7975
      %v7984 = vmul.f32 %v7956, %v7978
      %v7985 = vmul.f32 %v7959, %v7979
      %v7986 = vmul.f32 %v7964, %v7980
      %v7987 = vmul.f32 %v7967, %v7981
      %v7988 = vmul.f32 %v7972, %v7982
      %v7989 = vmul.f32 %v7975, %v7983
      %v7990 = vmul.f32 %v7984, 0.044715
      %v7991 = vmul.f32 %v7985, 0.044715
      %v7992 = vmul.f32 %v7986, 0.044715
      %v7993 = vmul.f32 %v7987, 0.044715
      %v7994 = vmul.f32 %v7988, 0.044715
      %v7995 = vmul.f32 %v7989, 0.044715
      %v7996 = vadd.f32 %v7956, %v7990
      %v7997 = vadd.f32 %v7959, %v7991
      %v7998 = vadd.f32 %v7964, %v7992
      %v7999 = vadd.f32 %v7967, %v7993
      %v8000 = vadd.f32 %v7972, %v7994
      %v8001 = vadd.f32 %v7975, %v7995
      %v8002 = vmul.f32 %v7996, 0.7978846
      %v8003 = vmul.f32 %v7997, 0.7978846
      %v8004 = vmul.f32 %v7998, 0.7978846
      %v8005 = vmul.f32 %v7999, 0.7978846
      %v8006 = vmul.f32 %v8000, 0.7978846
      %v8007 = vmul.f32 %v8001, 0.7978846
      %v8008 = vtanh.pop %v8002
      %v8009 = vtanh.pop %v8003
      %v8010 = vtanh.pop %v8004
      %v8011 = vtanh.pop %v8005
      %v8012 = vtanh.pop %v8006
      %v8013 = vtanh.pop %v8007
      %v8014 = vadd.f32 %v8008, 1.0
      %v8015 = vadd.f32 %v8009, 1.0
      %v8016 = vadd.f32 %v8010, 1.0
      %v8017 = vadd.f32 %v8011, 1.0
      %v8018 = vadd.f32 %v8012, 1.0
      %v8019 = vadd.f32 %v8013, 1.0
      %v8020 = vmul.f32 %v8014, 0.5
      %v8021 = vmul.f32 %v8015, 0.5
      %v8022 = vmul.f32 %v8016, 0.5
      %v8023 = vmul.f32 %v8017, 0.5
      %v8024 = vmul.f32 %v8018, 0.5
      %v8025 = vmul.f32 %v8019, 0.5
      %v8026 = vmul.f32 %v7956, %v8020
      %v8027 = vmul.f32 %v7959, %v8021
      %v8028 = vmul.f32 %v7964, %v8022
      %v8029 = vmul.f32 %v7967, %v8023
      %v8030 = vmul.f32 %v7972, %v8024
      %v8031 = vmul.f32 %v7975, %v8025
      %v8032 = vpack.c.bf16 %v8027, %v8026
      %v8033 = vpack.c.bf16 %v8029, %v8028
      %v8034 = vpack.c.bf16 %v8031, %v8030
      %v8035 = vld [vmem:[%s13] sm:$0xf]
      %v8036 = vld [vmem:[%s13 + $0x4] sm:$0xf]
      %v8037 = vld [vmem:[%s13 + $0x8] sm:$0xf]
      %v8038 = vld [vmem:[%s13 + $0xc] sm:$0xf]
      %v8039 = vld [vmem:[%s13 + $0x10] sm:$0xf]
      %v8040 = vld [vmem:[%s13 + $0x14] sm:$0xf]
      %v8041 = vld [vmem:[%s13 + $0x18] sm:$0xf]
      %v8042 = vld [vmem:[%s13 + $0x1c] sm:$0xf]
      %v8043 = vld [vmem:[%s13 + $0x20] sm:$0xf]
      %v8044 = vld [vmem:[%s13 + $0x24] sm:$0xf]
      %v8045 = vld [vmem:[%s13 + $0x28] sm:$0xf]
      %v8046 = vld [vmem:[%s13 + $0x2c] sm:$0xf]
      %v8047 = vld [vmem:[%s13 + $0x30] sm:$0xf]
      %v8048 = vld [vmem:[%s13 + $0x34] sm:$0xf]
      %v8049 = vld [vmem:[%s13 + $0x38] sm:$0xf]
      %v8050 = vld [vmem:[%s13 + $0x3c] sm:$0xf]
      %v8067 = vunpack.c.l.b16 %v8035
      %v8068 = vunpack.c.l.b16 %v8036
      %v8069 = vunpack.c.l.b16 %v8037
      %v8070 = vunpack.c.l.b16 %v8038
      %v8071 = vunpack.c.l.b16 %v8039
      %v8072 = vunpack.c.l.b16 %v8040
      %v8073 = vunpack.c.l.b16 %v8041
      %v8074 = vunpack.c.l.b16 %v8042
      %v8075 = vunpack.c.l.b16 %v8043
      %v8076 = vunpack.c.l.b16 %v8044
      %v8077 = vunpack.c.l.b16 %v8045
      %v8078 = vunpack.c.l.b16 %v8046
      %v8079 = vunpack.c.l.b16 %v8047
      %v8080 = vunpack.c.l.b16 %v8048
      %v8081 = vunpack.c.l.b16 %v8049
      %v8082 = vunpack.c.l.b16 %v8050
      %v8083 = vpack.c.b16 %v8068, %v8067
      %v8084 = vpack.c.b16 %v8070, %v8069
      %v8085 = vpack.c.b16 %v8072, %v8071
      %v8086 = vpack.c.b16 %v8074, %v8073
      %v8087 = vpack.c.b16 %v8076, %v8075
      %v8088 = vpack.c.b16 %v8078, %v8077
      %v8089 = vpack.c.b16 %v8080, %v8079
      %v8090 = vpack.c.b16 %v8082, %v8081
      %8099 = vmatprep.subr.bf16.mxu0 0
      %8100 = vmatpush1.bf16.msra.mxu0 %v8090
      %8101 = vmatprep.subr.bf16.mxu0 0
      %8102 = vmatpush1.bf16.msra.mxu0 %v8089
      %8103 = vmatprep.subr.bf16.mxu0 0
      %8104 = vmatpush1.bf16.msra.mxu0 %v8088
      %8105 = vmatprep.subr.bf16.mxu0 0
      %8106 = vmatpush1.bf16.msra.mxu0 %v8087
      %8107 = vmatprep.subr.bf16.mxu0 0
      %8108 = vmatpush1.bf16.msra.mxu0 %v8086
      %8109 = vmatprep.subr.bf16.mxu0 0
      %8110 = vmatpush1.bf16.msra.mxu0 %v8085
      %8111 = vmatprep.subr.bf16.mxu0 0
      %8112 = vmatpush1.bf16.msra.mxu0 %v8084
      %8113 = vmatprep.subr.bf16.mxu0 0
      %8114 = vmatpush1.bf16.msra.mxu0 %v8083
      %8115 = vmatprep.subr.bf16.mxu0 0
      %8116 = vmatpush2.bf16.msra.mxu0 0
      %8117 = vmatprep.subr.bf16.mxu0 0
      %8118 = vmatpush2.bf16.msra.mxu0 0
      %8119 = vmatprep.subr.bf16.mxu0 0
      %8120 = vmatpush2.bf16.msra.mxu0 0
      %8121 = vmatprep.subr.bf16.mxu0 0
      %8122 = vmatpush2.bf16.msra.mxu0 0
      %8123 = vmatprep.subr.bf16.mxu0 0
      %8124 = vmatpush2.bf16.msra.mxu0 0
      %8125 = vmatprep.subr.bf16.mxu0 0
      %8126 = vmatpush2.bf16.msra.mxu0 0
      %8127 = vmatprep.subr.bf16.mxu0 0
      %8128 = vmatpush2.bf16.msra.mxu0 0
      %8129 = vmatprep.subr.bf16.mxu0 0
      %8130 = vmatpush2.bf16.msra.mxu0 0
      %8131 = vmatprep.mubr.bf16.mxu0 0
      %8132 = vmatmul.mubr.bf16.gmra.mxu0 %v8032
      %v8133 = vpop.f32.mrf.mxu0
      %v8134 = vadd.f32 0.0, %v8133
      %v8135 = vpop.f32.mrf.mxu0
      %v8136 = vpop.f32.mrf.mxu0
      %v8137 = vadd.f32 0.0, %v8136
      %v8138 = vpop.f32.mrf.mxu0
      %8139 = vmatprep.mubr.bf16.mxu0 0
      %8140 = vmatmul.mubr.bf16.gmra.mxu0 %v8033
      %v8141 = vpop.f32.mrf.mxu0
      %v8142 = vadd.f32 0.0, %v8141
      %v8143 = vpop.f32.mrf.mxu0
      %v8144 = vpop.f32.mrf.mxu0
      %v8145 = vadd.f32 0.0, %v8144
      %v8146 = vpop.f32.mrf.mxu0
      %8147 = vmatprep.mubr.bf16.mxu0 0
      %8148 = vmatmul.mubr.bf16.gmra.mxu0 %v8034
      %v8149 = vpop.f32.mrf.mxu0
      %v8150 = vadd.f32 0.0, %v8149
      %v8151 = vpop.f32.mrf.mxu0
      %v8152 = vpop.f32.mrf.mxu0
      %v8153 = vadd.f32 0.0, %v8152
      %v8154 = vpop.f32.mrf.mxu0
      %8155 = vdwg.mxu0
      %v8156 = vadd.f32 %v7782, %v8134
      %v8157 = vadd.f32 %v7783, %v8137
      %v8158 = vadd.f32 %v7784, %v8142
      %v8159 = vadd.f32 %v7785, %v8145
      %v8160 = vadd.f32 %v7786, %v8150
      %v8161 = vadd.f32 %v7787, %v8153
      %v8162 = vlaneseq
      %v8163 = vshrl.u32 %v8162, 7
      %v8164 = vsub.s32 5, %v8163
      %v8165 = vrot.slane %v6610, %v8164
      %v8166 = vadd.f32 %v8156, %v8165
      %v8167 = vadd.f32 %v8157, %v8165
      %v8168 = vadd.f32 %v8158, %v8165
      %v8169 = vadd.f32 %v8159, %v8165
      %v8170 = vadd.f32 %v8160, %v8165
      %v8171 = vadd.f32 %v8161, %v8165
      %s8172 = scalar_lea.vmem %s8, 8
      %v8173 = vld [vmem:[%s8172] sm:$0xff]
      %v8174 = vsel %vm6611, %v8166, 0.0
      %8175 = vadd.xlane.f32.xlu0 %v8174
      %v8176 = vpop.xlane.xlu0 %8175
      %v8177 = vsel %vm6611, %v8167, 0.0
      %8178 = vadd.xlane.f32.xlu0 %v8177
      %v8179 = vpop.xlane.xlu0 %8178
      %v8180 = vsel %vm6611, %v8168, 0.0
      %8181 = vadd.xlane.f32.xlu0 %v8180
      %v8182 = vpop.xlane.xlu0 %8181
      %v8183 = vsel %vm6611, %v8169, 0.0
      %8184 = vadd.xlane.f32.xlu0 %v8183
      %v8185 = vpop.xlane.xlu0 %8184
      %v8186 = vsel %vm6611, %v8170, 0.0
      %8187 = vadd.xlane.f32.xlu0 %v8186
      %v8188 = vpop.xlane.xlu0 %8187
      %v8189 = vsel %vm6611, %v8171, 0.0
      %8190 = vadd.xlane.f32.xlu0 %v8189
      %v8191 = vpop.xlane.xlu0 %8190
      %v8192 = vmul.f32 %v8176, %v6630
      %v8193 = vmul.f32 %v8179, %v6630
      %v8194 = vmul.f32 %v8182, %v6630
      %v8195 = vmul.f32 %v8185, %v6630
      %v8196 = vmul.f32 %v8188, %v6630
      %v8197 = vmul.f32 %v8191, %v6630
      %v8198 = vsub.f32 %v8166, %v8192
      %v8199 = vsub.f32 %v8167, %v8193
      %v8200 = vsub.f32 %v8168, %v8194
      %v8201 = vsub.f32 %v8169, %v8195
      %v8202 = vsub.f32 %v8170, %v8196
      %v8203 = vsub.f32 %v8171, %v8197
      %v8204 = vmul.f32 %v8198, %v8198
      %v8205 = vmul.f32 %v8199, %v8199
      %v8206 = vmul.f32 %v8200, %v8200
      %v8207 = vmul.f32 %v8201, %v8201
      %v8208 = vmul.f32 %v8202, %v8202
      %v8209 = vmul.f32 %v8203, %v8203
      %v8210 = vsel %vm6611, %v8204, 0.0
      %8211 = vadd.xlane.f32.xlu0 %v8210
      %v8212 = vpop.xlane.xlu0 %8211
      %v8213 = vsel %vm6611, %v8205, 0.0
      %8214 = vadd.xlane.f32.xlu0 %v8213
      %v8215 = vpop.xlane.xlu0 %8214
      %v8216 = vsel %vm6611, %v8206, 0.0
      %8217 = vadd.xlane.f32.xlu0 %v8216
      %v8218 = vpop.xlane.xlu0 %8217
      %v8219 = vsel %vm6611, %v8207, 0.0
      %8220 = vadd.xlane.f32.xlu0 %v8219
      %v8221 = vpop.xlane.xlu0 %8220
      %v8222 = vsel %vm6611, %v8208, 0.0
      %8223 = vadd.xlane.f32.xlu0 %v8222
      %v8224 = vpop.xlane.xlu0 %8223
      %v8225 = vsel %vm6611, %v8209, 0.0
      %8226 = vadd.xlane.f32.xlu0 %v8225
      %v8227 = vpop.xlane.xlu0 %8226
      %v8228 = vmul.f32 %v8212, %v6630
      %v8229 = vmul.f32 %v8215, %v6630
      %v8230 = vmul.f32 %v8218, %v6630
      %v8231 = vmul.f32 %v8221, %v6630
      %v8232 = vmul.f32 %v8224, %v6630
      %v8233 = vmul.f32 %v8227, %v6630
      %v8234 = vadd.f32 %v8228, 1e-05
      %v8235 = vadd.f32 %v8229, 1e-05
      %v8236 = vadd.f32 %v8230, 1e-05
      %v8237 = vadd.f32 %v8231, 1e-05
      %v8238 = vadd.f32 %v8232, 1e-05
      %v8239 = vadd.f32 %v8233, 1e-05
      %v8240 = vrsqrt.pop %v8234
      %v8241 = vrsqrt.pop %v8235
      %v8242 = vrsqrt.pop %v8236
      %v8243 = vrsqrt.pop %v8237
      %v8244 = vrsqrt.pop %v8238
      %v8245 = vrsqrt.pop %v8239
      %v8246 = vmul.f32 %v8198, %v8240
      %v8247 = vmul.f32 %v8199, %v8241
      %v8248 = vmul.f32 %v8200, %v8242
      %v8249 = vmul.f32 %v8201, %v8243
      %v8250 = vmul.f32 %v8202, %v8244
      %v8251 = vmul.f32 %v8203, %v8245
      %v8252 = vlaneseq
      %v8253 = vshrl.u32 %v8252, 7
      %v8254 = vsub.s32 0, %v8253
      %v8255 = vrot.slane %v8173, %v8254
      %v8256 = vmul.f32 %v8246, %v8255
      %v8257 = vmul.f32 %v8247, %v8255
      %v8258 = vmul.f32 %v8248, %v8255
      %v8259 = vmul.f32 %v8249, %v8255
      %v8260 = vmul.f32 %v8250, %v8255
      %v8261 = vmul.f32 %v8251, %v8255
      %v8262 = vlaneseq
      %v8263 = vshrl.u32 %v8262, 7
      %v8264 = vsub.s32 1, %v8263
      %v8265 = vrot.slane %v8173, %v8264
      %v8266 = vadd.f32 %v8256, %v8265
      %v8267 = vadd.f32 %v8257, %v8265
      %v8268 = vadd.f32 %v8258, %v8265
      %v8269 = vadd.f32 %v8259, %v8265
      %v8270 = vadd.f32 %v8260, %v8265
      %v8271 = vadd.f32 %v8261, %v8265
      %v8272 = vpack.c.bf16 %v8267, %v8266
      %v8273 = vpack.c.bf16 %v8269, %v8268
      %v8274 = vpack.c.bf16 %v8271, %v8270
      %s8275 = scalar_lea.vmem %s10, 96
      %v8276 = vld [vmem:[%s8275] sm:$0xf]
      %v8277 = vld [vmem:[%s8275 + $0x4] sm:$0xf]
      %v8278 = vld [vmem:[%s8275 + $0x8] sm:$0xf]
      %v8279 = vld [vmem:[%s8275 + $0xc] sm:$0xf]
      %v8284 = vunpack.c.l.b16 %v8276
      %v8285 = vunpack.c.l.b16 %v8277
      %v8286 = vunpack.c.l.b16 %v8278
      %v8287 = vunpack.c.l.b16 %v8279
      %v8288 = vpack.c.b16 %v8285, %v8284
      %v8289 = vpack.c.b16 %v8287, %v8286
      %v8293 = vsel %vm6611, %v8272, 0
      %v8296 = vsel %vm6611, %v8273, 0
      %v8299 = vsel %vm6611, %v8274, 0
      %8301 = vmatprep.subr.bf16.mxu0 0
      %8302 = vmatpush1.bf16.msra.mxu0 0
      %8303 = vmatprep.subr.bf16.mxu0 0
      %8304 = vmatpush1.bf16.msra.mxu0 0
      %8305 = vmatprep.subr.bf16.mxu0 0
      %8306 = vmatpush1.bf16.msra.mxu0 0
      %8307 = vmatprep.subr.bf16.mxu0 0
      %8308 = vmatpush1.bf16.msra.mxu0 0
      %8309 = vmatprep.subr.bf16.mxu0 0
      %8310 = vmatpush1.bf16.msra.mxu0 0
      %8311 = vmatprep.subr.bf16.mxu0 0
      %8312 = vmatpush1.bf16.msra.mxu0 0
      %8313 = vmatprep.subr.bf16.mxu0 0
      %8314 = vmatpush1.bf16.msra.mxu0 %v8289
      %8315 = vmatprep.subr.bf16.mxu0 0
      %8316 = vmatpush1.bf16.msra.mxu0 %v8288
      %8317 = vmatprep.subr.bf16.mxu0 0
      %8318 = vmatpush2.bf16.msra.mxu0 0
      %8319 = vmatprep.subr.bf16.mxu0 0
      %8320 = vmatpush2.bf16.msra.mxu0 0
      %8321 = vmatprep.subr.bf16.mxu0 0
      %8322 = vmatpush2.bf16.msra.mxu0 0
      %8323 = vmatprep.subr.bf16.mxu0 0
      %8324 = vmatpush2.bf16.msra.mxu0 0
      %8325 = vmatprep.subr.bf16.mxu0 0
      %8326 = vmatpush2.bf16.msra.mxu0 0
      %8327 = vmatprep.subr.bf16.mxu0 0
      %8328 = vmatpush2.bf16.msra.mxu0 0
      %8329 = vmatprep.subr.bf16.mxu0 0
      %8330 = vmatpush2.bf16.msra.mxu0 0
      %8331 = vmatprep.subr.bf16.mxu0 0
      %8332 = vmatpush2.bf16.msra.mxu0 0
      %8333 = vmatprep.mubr.bf16.mxu0 0
      %8334 = vmatmul.mubr.bf16.gmra.mxu0 %v8293
      %v8335 = vpop.f32.mrf.mxu0
      %v8336 = vadd.f32 0.0, %v8335
      %v8337 = vpop.f32.mrf.mxu0
      %v8338 = vpop.f32.mrf.mxu0
      %v8339 = vadd.f32 0.0, %v8338
      %v8340 = vpop.f32.mrf.mxu0
      %8341 = vmatprep.mubr.bf16.mxu0 0
      %8342 = vmatmul.mubr.bf16.gmra.mxu0 %v8296
      %v8343 = vpop.f32.mrf.mxu0
      %v8344 = vadd.f32 0.0, %v8343
      %v8345 = vpop.f32.mrf.mxu0
      %v8346 = vpop.f32.mrf.mxu0
      %v8347 = vadd.f32 0.0, %v8346
      %v8348 = vpop.f32.mrf.mxu0
      %8349 = vmatprep.mubr.bf16.mxu0 0
      %8350 = vmatmul.mubr.bf16.gmra.mxu0 %v8299
      %v8351 = vpop.f32.mrf.mxu0
      %v8352 = vadd.f32 0.0, %v8351
      %v8353 = vpop.f32.mrf.mxu0
      %v8354 = vpop.f32.mrf.mxu0
      %v8355 = vadd.f32 0.0, %v8354
      %v8356 = vpop.f32.mrf.mxu0
      %8357 = vdwg.mxu0
      %s8358 = scalar_lea.vmem %s10, 112
      %v8359 = vld [vmem:[%s8358] sm:$0xf]
      %v8360 = vld [vmem:[%s8358 + $0x4] sm:$0xf]
      %v8361 = vld [vmem:[%s8358 + $0x8] sm:$0xf]
      %v8362 = vld [vmem:[%s8358 + $0xc] sm:$0xf]
      %v8367 = vunpack.c.l.b16 %v8359
      %v8368 = vunpack.c.l.b16 %v8360
      %v8369 = vunpack.c.l.b16 %v8361
      %v8370 = vunpack.c.l.b16 %v8362
      %v8371 = vpack.c.b16 %v8368, %v8367
      %v8372 = vpack.c.b16 %v8370, %v8369
      %8375 = vmatprep.subr.bf16.mxu0 0
      %8376 = vmatpush1.bf16.msra.mxu0 0
      %8377 = vmatprep.subr.bf16.mxu0 0
      %8378 = vmatpush1.bf16.msra.mxu0 0
      %8379 = vmatprep.subr.bf16.mxu0 0
      %8380 = vmatpush1.bf16.msra.mxu0 0
      %8381 = vmatprep.subr.bf16.mxu0 0
      %8382 = vmatpush1.bf16.msra.mxu0 0
      %8383 = vmatprep.subr.bf16.mxu0 0
      %8384 = vmatpush1.bf16.msra.mxu0 0
      %8385 = vmatprep.subr.bf16.mxu0 0
      %8386 = vmatpush1.bf16.msra.mxu0 0
      %8387 = vmatprep.subr.bf16.mxu0 0
      %8388 = vmatpush1.bf16.msra.mxu0 %v8372
      %8389 = vmatprep.subr.bf16.mxu0 0
      %8390 = vmatpush1.bf16.msra.mxu0 %v8371
      %8391 = vmatprep.subr.bf16.mxu0 0
      %8392 = vmatpush2.bf16.msra.mxu0 0
      %8393 = vmatprep.subr.bf16.mxu0 0
      %8394 = vmatpush2.bf16.msra.mxu0 0
      %8395 = vmatprep.subr.bf16.mxu0 0
      %8396 = vmatpush2.bf16.msra.mxu0 0
      %8397 = vmatprep.subr.bf16.mxu0 0
      %8398 = vmatpush2.bf16.msra.mxu0 0
      %8399 = vmatprep.subr.bf16.mxu0 0
      %8400 = vmatpush2.bf16.msra.mxu0 0
      %8401 = vmatprep.subr.bf16.mxu0 0
      %8402 = vmatpush2.bf16.msra.mxu0 0
      %8403 = vmatprep.subr.bf16.mxu0 0
      %8404 = vmatpush2.bf16.msra.mxu0 0
      %8405 = vmatprep.subr.bf16.mxu0 0
      %8406 = vmatpush2.bf16.msra.mxu0 0
      %8407 = vmatprep.mubr.bf16.mxu0 0
      %8408 = vmatmul.mubr.bf16.gmra.mxu0 %v8293
      %v8409 = vpop.f32.mrf.mxu0
      %v8410 = vadd.f32 0.0, %v8409
      %v8411 = vpop.f32.mrf.mxu0
      %v8412 = vpop.f32.mrf.mxu0
      %v8413 = vadd.f32 0.0, %v8412
      %v8414 = vpop.f32.mrf.mxu0
      %8415 = vmatprep.mubr.bf16.mxu0 0
      %8416 = vmatmul.mubr.bf16.gmra.mxu0 %v8296
      %v8417 = vpop.f32.mrf.mxu0
      %v8418 = vadd.f32 0.0, %v8417
      %v8419 = vpop.f32.mrf.mxu0
      %v8420 = vpop.f32.mrf.mxu0
      %v8421 = vadd.f32 0.0, %v8420
      %v8422 = vpop.f32.mrf.mxu0
      %8423 = vmatprep.mubr.bf16.mxu0 0
      %8424 = vmatmul.mubr.bf16.gmra.mxu0 %v8299
      %v8425 = vpop.f32.mrf.mxu0
      %v8426 = vadd.f32 0.0, %v8425
      %v8427 = vpop.f32.mrf.mxu0
      %v8428 = vpop.f32.mrf.mxu0
      %v8429 = vadd.f32 0.0, %v8428
      %v8430 = vpop.f32.mrf.mxu0
      %8431 = vdwg.mxu0
      %s8432 = scalar_lea.vmem %s10, 128
      %v8433 = vld [vmem:[%s8432] sm:$0xf]
      %v8434 = vld [vmem:[%s8432 + $0x4] sm:$0xf]
      %v8435 = vld [vmem:[%s8432 + $0x8] sm:$0xf]
      %v8436 = vld [vmem:[%s8432 + $0xc] sm:$0xf]
      %v8441 = vunpack.c.l.b16 %v8433
      %v8442 = vunpack.c.l.b16 %v8434
      %v8443 = vunpack.c.l.b16 %v8435
      %v8444 = vunpack.c.l.b16 %v8436
      %v8445 = vpack.c.b16 %v8442, %v8441
      %v8446 = vpack.c.b16 %v8444, %v8443
      %8449 = vmatprep.subr.bf16.mxu0 0
      %8450 = vmatpush1.bf16.msra.mxu0 0
      %8451 = vmatprep.subr.bf16.mxu0 0
      %8452 = vmatpush1.bf16.msra.mxu0 0
      %8453 = vmatprep.subr.bf16.mxu0 0
      %8454 = vmatpush1.bf16.msra.mxu0 0
      %8455 = vmatprep.subr.bf16.mxu0 0
      %8456 = vmatpush1.bf16.msra.mxu0 0
      %8457 = vmatprep.subr.bf16.mxu0 0
      %8458 = vmatpush1.bf16.msra.mxu0 0
      %8459 = vmatprep.subr.bf16.mxu0 0
      %8460 = vmatpush1.bf16.msra.mxu0 0
      %8461 = vmatprep.subr.bf16.mxu0 0
      %8462 = vmatpush1.bf16.msra.mxu0 %v8446
      %8463 = vmatprep.subr.bf16.mxu0 0
      %8464 = vmatpush1.bf16.msra.mxu0 %v8445
      %8465 = vmatprep.subr.bf16.mxu0 0
      %8466 = vmatpush2.bf16.msra.mxu0 0
      %8467 = vmatprep.subr.bf16.mxu0 0
      %8468 = vmatpush2.bf16.msra.mxu0 0
      %8469 = vmatprep.subr.bf16.mxu0 0
      %8470 = vmatpush2.bf16.msra.mxu0 0
      %8471 = vmatprep.subr.bf16.mxu0 0
      %8472 = vmatpush2.bf16.msra.mxu0 0
      %8473 = vmatprep.subr.bf16.mxu0 0
      %8474 = vmatpush2.bf16.msra.mxu0 0
      %8475 = vmatprep.subr.bf16.mxu0 0
      %8476 = vmatpush2.bf16.msra.mxu0 0
      %8477 = vmatprep.subr.bf16.mxu0 0
      %8478 = vmatpush2.bf16.msra.mxu0 0
      %8479 = vmatprep.subr.bf16.mxu0 0
      %8480 = vmatpush2.bf16.msra.mxu0 0
      %8481 = vmatprep.mubr.bf16.mxu0 0
      %8482 = vmatmul.mubr.bf16.gmra.mxu0 %v8293
      %v8483 = vpop.f32.mrf.mxu0
      %v8484 = vadd.f32 0.0, %v8483
      %v8485 = vpop.f32.mrf.mxu0
      %v8486 = vpop.f32.mrf.mxu0
      %v8487 = vadd.f32 0.0, %v8486
      %v8488 = vpop.f32.mrf.mxu0
      %8489 = vmatprep.mubr.bf16.mxu0 0
      %8490 = vmatmul.mubr.bf16.gmra.mxu0 %v8296
      %v8491 = vpop.f32.mrf.mxu0
      %v8492 = vadd.f32 0.0, %v8491
      %v8493 = vpop.f32.mrf.mxu0
      %v8494 = vpop.f32.mrf.mxu0
      %v8495 = vadd.f32 0.0, %v8494
      %v8496 = vpop.f32.mrf.mxu0
      %8497 = vmatprep.mubr.bf16.mxu0 0
      %8498 = vmatmul.mubr.bf16.gmra.mxu0 %v8299
      %v8499 = vpop.f32.mrf.mxu0
      %v8500 = vadd.f32 0.0, %v8499
      %v8501 = vpop.f32.mrf.mxu0
      %v8502 = vpop.f32.mrf.mxu0
      %v8503 = vadd.f32 0.0, %v8502
      %v8504 = vpop.f32.mrf.mxu0
      %8505 = vdwg.mxu0
      %v8506 = vpack.c.bf16 %v8339, %v8336
      %v8507 = vpack.c.bf16 %v8347, %v8344
      %v8508 = vpack.c.bf16 %v8355, %v8352
      %v8509 = vpack.c.bf16 %v8413, %v8410
      %v8510 = vpack.c.bf16 %v8421, %v8418
      %v8511 = vpack.c.bf16 %v8429, %v8426
      %v8513 = vsel %vm3486, %v8506, 0
      %v8516 = vsel %vm3486, %v8507, 0
      %v8519 = vsel %vm3486, %v8508, 0
      %v8522 = vsel %vm3486, %v8509, 0
      %v8525 = vsel %vm3486, %v8510, 0
      %v8528 = vsel %vm3486, %v8511, 0
      %8530 = vmatprep.subr.bf16.mxu0 0
      %8531 = vmatpush1.bf16.xpose.msra.mxu0 0
      %8532 = vmatprep.subr.bf16.mxu0 0
      %8533 = vmatpush1.bf16.xpose.msra.mxu0 0
      %8534 = vmatprep.subr.bf16.mxu0 0
      %8535 = vmatpush1.bf16.xpose.msra.mxu0 0
      %8536 = vmatprep.subr.bf16.mxu0 0
      %8537 = vmatpush1.bf16.xpose.msra.mxu0 0
      %8538 = vmatprep.subr.bf16.mxu0 0
      %8539 = vmatpush1.bf16.xpose.msra.mxu0 0
      %8540 = vmatprep.subr.bf16.mxu0 0
      %8541 = vmatpush1.bf16.xpose.msra.mxu0 %v8528
      %8542 = vmatprep.subr.bf16.mxu0 0
      %8543 = vmatpush1.bf16.xpose.msra.mxu0 %v8525
      %8544 = vmatprep.subr.bf16.mxu0 0
      %8545 = vmatpush1.bf16.xpose.msra.mxu0 %v8522
      %8546 = vmatprep.subr.bf16.mxu0 0
      %8547 = vmatpush2.bf16.xpose.msra.mxu0 0
      %8548 = vmatprep.subr.bf16.mxu0 0
      %8549 = vmatpush2.bf16.xpose.msra.mxu0 0
      %8550 = vmatprep.subr.bf16.mxu0 0
      %8551 = vmatpush2.bf16.xpose.msra.mxu0 0
      %8552 = vmatprep.subr.bf16.mxu0 0
      %8553 = vmatpush2.bf16.xpose.msra.mxu0 0
      %8554 = vmatprep.subr.bf16.mxu0 0
      %8555 = vmatpush2.bf16.xpose.msra.mxu0 0
      %8556 = vmatprep.subr.bf16.mxu0 0
      %8557 = vmatpush2.bf16.xpose.msra.mxu0 0
      %8558 = vmatprep.subr.bf16.mxu0 0
      %8559 = vmatpush2.bf16.xpose.msra.mxu0 0
      %8560 = vmatprep.subr.bf16.mxu0 0
      %8561 = vmatpush2.bf16.xpose.msra.mxu0 0
      %8562 = vmatprep.mubr.bf16.mxu0 0
      %8563 = vmatmul.mubr.bf16.gmra.mxu0 %v8513
      %v8564 = vpop.f32.mrf.mxu0
      %v8565 = vadd.f32 0.0, %v8564
      %v8566 = vpop.f32.mrf.mxu0
      %v8567 = vpop.f32.mrf.mxu0
      %v8568 = vadd.f32 0.0, %v8567
      %v8569 = vpop.f32.mrf.mxu0
      %8570 = vmatprep.mubr.bf16.mxu0 0
      %8571 = vmatmul.mubr.bf16.gmra.mxu0 %v8516
      %v8572 = vpop.f32.mrf.mxu0
      %v8573 = vadd.f32 0.0, %v8572
      %v8574 = vpop.f32.mrf.mxu0
      %v8575 = vpop.f32.mrf.mxu0
      %v8576 = vadd.f32 0.0, %v8575
      %v8577 = vpop.f32.mrf.mxu0
      %8578 = vmatprep.mubr.bf16.mxu0 0
      %8579 = vmatmul.mubr.bf16.gmra.mxu0 %v8519
      %v8580 = vpop.f32.mrf.mxu0
      %v8581 = vadd.f32 0.0, %v8580
      %v8582 = vpop.f32.mrf.mxu0
      %v8583 = vpop.f32.mrf.mxu0
      %v8584 = vadd.f32 0.0, %v8583
      %v8585 = vpop.f32.mrf.mxu0
      %8586 = vdwg.mxu0
      %v8587 = vmul.f32 %v8565, 0.25
      %v8588 = vmul.f32 %v8568, 0.25
      %v8589 = vmul.f32 %v8573, 0.25
      %v8590 = vmul.f32 %v8576, 0.25
      %v8591 = vmul.f32 %v8581, 0.25
      %v8592 = vmul.f32 %v8584, 0.25
      %v8593 = vsel %vm7031, %v8587, -inf
      %8594 = vmax.xlane.f32.xlu0 %v8593
      %v8595 = vpop.xlane.xlu0 %8594
      %v8596 = vsel %vm7031, %v8588, -inf
      %8597 = vmax.xlane.f32.xlu0 %v8596
      %v8598 = vpop.xlane.xlu0 %8597
      %v8599 = vsel %vm7031, %v8589, -inf
      %8600 = vmax.xlane.f32.xlu0 %v8599
      %v8601 = vpop.xlane.xlu0 %8600
      %v8602 = vsel %vm7031, %v8590, -inf
      %8603 = vmax.xlane.f32.xlu0 %v8602
      %v8604 = vpop.xlane.xlu0 %8603
      %v8605 = vsel %vm7031, %v8591, -inf
      %8606 = vmax.xlane.f32.xlu0 %v8605
      %v8607 = vpop.xlane.xlu0 %8606
      %v8608 = vsel %vm7031, %v8592, -inf
      %8609 = vmax.xlane.f32.xlu0 %v8608
      %v8610 = vpop.xlane.xlu0 %8609
      %v8611 = vsub.f32 %v8587, %v8595
      %v8612 = vsub.f32 %v8588, %v8598
      %v8613 = vsub.f32 %v8589, %v8601
      %v8614 = vsub.f32 %v8590, %v8604
      %v8615 = vsub.f32 %v8591, %v8607
      %v8616 = vsub.f32 %v8592, %v8610
      %v8617 = vmul.f32 %v8611, 1.442695
      %v8618 = vpow.pop %v8617
      %v8619 = vmul.f32 %v8612, 1.442695
      %v8620 = vpow.pop %v8619
      %v8621 = vmul.f32 %v8613, 1.442695
      %v8622 = vpow.pop %v8621
      %v8623 = vmul.f32 %v8614, 1.442695
      %v8624 = vpow.pop %v8623
      %v8625 = vmul.f32 %v8615, 1.442695
      %v8626 = vpow.pop %v8625
      %v8627 = vmul.f32 %v8616, 1.442695
      %v8628 = vpow.pop %v8627
      %v8629 = vsel %vm7031, %v8618, 0.0
      %8630 = vadd.xlane.f32.xlu0 %v8629
      %v8631 = vpop.xlane.xlu0 %8630
      %v8632 = vsel %vm7031, %v8620, 0.0
      %8633 = vadd.xlane.f32.xlu0 %v8632
      %v8634 = vpop.xlane.xlu0 %8633
      %v8635 = vsel %vm7031, %v8622, 0.0
      %8636 = vadd.xlane.f32.xlu0 %v8635
      %v8637 = vpop.xlane.xlu0 %8636
      %v8638 = vsel %vm7031, %v8624, 0.0
      %8639 = vadd.xlane.f32.xlu0 %v8638
      %v8640 = vpop.xlane.xlu0 %8639
      %v8641 = vsel %vm7031, %v8626, 0.0
      %8642 = vadd.xlane.f32.xlu0 %v8641
      %v8643 = vpop.xlane.xlu0 %8642
      %v8644 = vsel %vm7031, %v8628, 0.0
      %8645 = vadd.xlane.f32.xlu0 %v8644
      %v8646 = vpop.xlane.xlu0 %8645
      %v8647 = vrcp.pop %v8631
      %v8648 = vrcp.pop %v8634
      %v8649 = vrcp.pop %v8637
      %v8650 = vrcp.pop %v8640
      %v8651 = vrcp.pop %v8643
      %v8652 = vrcp.pop %v8646
      %v8653 = vmul.f32 %v8618, %v8647
      %v8654 = vmul.f32 %v8620, %v8648
      %v8655 = vmul.f32 %v8622, %v8649
      %v8656 = vmul.f32 %v8624, %v8650
      %v8657 = vmul.f32 %v8626, %v8651
      %v8658 = vmul.f32 %v8628, %v8652
      %v8659 = vpack.c.bf16 %v8654, %v8653
      %v8660 = vpack.c.bf16 %v8656, %v8655
      %v8661 = vpack.c.bf16 %v8658, %v8657
      %v8662 = vpack.c.bf16 %v8487, %v8484
      %v8663 = vpack.c.bf16 %v8495, %v8492
      %v8664 = vpack.c.bf16 %v8503, %v8500
      %v8666 = vsel %vm7031, %v8659, 0
      %v8669 = vsel %vm7031, %v8660, 0
      %v8672 = vsel %vm7031, %v8661, 0
      %8674 = vmatprep.subr.bf16.mxu0 0
      %8675 = vmatpush1.bf16.msra.mxu0 0
      %8676 = vmatprep.subr.bf16.mxu0 0
      %8677 = vmatpush1.bf16.msra.mxu0 0
      %8678 = vmatprep.subr.bf16.mxu0 0
      %8679 = vmatpush1.bf16.msra.mxu0 0
      %8680 = vmatprep.subr.bf16.mxu0 0
      %8681 = vmatpush1.bf16.msra.mxu0 0
      %8682 = vmatprep.subr.bf16.mxu0 0
      %8683 = vmatpush1.bf16.msra.mxu0 0
      %8684 = vmatprep.subr.bf16.mxu0 0
      %8685 = vmatpush1.bf16.msra.mxu0 %v8664
      %8686 = vmatprep.subr.bf16.mxu0 0
      %8687 = vmatpush1.bf16.msra.mxu0 %v8663
      %8688 = vmatprep.subr.bf16.mxu0 0
      %8689 = vmatpush1.bf16.msra.mxu0 %v8662
      %8690 = vmatprep.subr.bf16.mxu0 0
      %8691 = vmatpush2.bf16.msra.mxu0 0
      %8692 = vmatprep.subr.bf16.mxu0 0
      %8693 = vmatpush2.bf16.msra.mxu0 0
      %8694 = vmatprep.subr.bf16.mxu0 0
      %8695 = vmatpush2.bf16.msra.mxu0 0
      %8696 = vmatprep.subr.bf16.mxu0 0
      %8697 = vmatpush2.bf16.msra.mxu0 0
      %8698 = vmatprep.subr.bf16.mxu0 0
      %8699 = vmatpush2.bf16.msra.mxu0 0
      %8700 = vmatprep.subr.bf16.mxu0 0
      %8701 = vmatpush2.bf16.msra.mxu0 0
      %8702 = vmatprep.subr.bf16.mxu0 0
      %8703 = vmatpush2.bf16.msra.mxu0 0
      %8704 = vmatprep.subr.bf16.mxu0 0
      %8705 = vmatpush2.bf16.msra.mxu0 0
      %8706 = vmatprep.mubr.bf16.mxu0 0
      %8707 = vmatmul.mubr.bf16.gmra.mxu0 %v8666
      %v8708 = vpop.f32.mrf.mxu0
      %v8709 = vadd.f32 0.0, %v8708
      %v8710 = vpop.f32.mrf.mxu0
      %v8711 = vpop.f32.mrf.mxu0
      %v8712 = vadd.f32 0.0, %v8711
      %v8713 = vpop.f32.mrf.mxu0
      %8714 = vmatprep.mubr.bf16.mxu0 0
      %8715 = vmatmul.mubr.bf16.gmra.mxu0 %v8669
      %v8716 = vpop.f32.mrf.mxu0
      %v8717 = vadd.f32 0.0, %v8716
      %v8718 = vpop.f32.mrf.mxu0
      %v8719 = vpop.f32.mrf.mxu0
      %v8720 = vadd.f32 0.0, %v8719
      %v8721 = vpop.f32.mrf.mxu0
      %8722 = vmatprep.mubr.bf16.mxu0 0
      %8723 = vmatmul.mubr.bf16.gmra.mxu0 %v8672
      %v8724 = vpop.f32.mrf.mxu0
      %v8725 = vadd.f32 0.0, %v8724
      %v8726 = vpop.f32.mrf.mxu0
      %v8727 = vpop.f32.mrf.mxu0
      %v8728 = vadd.f32 0.0, %v8727
      %v8729 = vpop.f32.mrf.mxu0
      %8730 = vdwg.mxu0
      %v8731 = vpack.c.bf16 %v8712, %v8709
      %v8732 = vpack.c.bf16 %v8720, %v8717
      %v8733 = vpack.c.bf16 %v8728, %v8725
      %s8734 = scalar_lea.vmem %s11, 16
      %v8735 = vld [vmem:[%s8734] sm:$0xf]
      %v8736 = vld [vmem:[%s8734 + $0x4] sm:$0xf]
      %s8737 = scalar_lea.vmem %s10, 144
      %v8738 = vld [vmem:[%s8737] sm:$0xf]
      %v8739 = vld [vmem:[%s8737 + $0x4] sm:$0xf]
      %v8740 = vld [vmem:[%s8737 + $0x8] sm:$0xf]
      %v8741 = vld [vmem:[%s8737 + $0xc] sm:$0xf]
      %v8746 = vunpack.c.l.b16 %v8738
      %v8747 = vunpack.c.l.b16 %v8739
      %v8748 = vunpack.c.l.b16 %v8740
      %v8749 = vunpack.c.l.b16 %v8741
      %v8750 = vpack.c.b16 %v8747, %v8746
      %v8751 = vpack.c.b16 %v8749, %v8748
      %8754 = vmatprep.subr.bf16.mxu0 0
      %8755 = vmatpush1.bf16.msra.mxu0 0
      %8756 = vmatprep.subr.bf16.mxu0 0
      %8757 = vmatpush1.bf16.msra.mxu0 0
      %8758 = vmatprep.subr.bf16.mxu0 0
      %8759 = vmatpush1.bf16.msra.mxu0 0
      %8760 = vmatprep.subr.bf16.mxu0 0
      %8761 = vmatpush1.bf16.msra.mxu0 0
      %8762 = vmatprep.subr.bf16.mxu0 0
      %8763 = vmatpush1.bf16.msra.mxu0 0
      %8764 = vmatprep.subr.bf16.mxu0 0
      %8765 = vmatpush1.bf16.msra.mxu0 0
      %8766 = vmatprep.subr.bf16.mxu0 0
      %8767 = vmatpush1.bf16.msra.mxu0 %v8751
      %8768 = vmatprep.subr.bf16.mxu0 0
      %8769 = vmatpush1.bf16.msra.mxu0 %v8750
      %8770 = vmatprep.subr.bf16.mxu0 0
      %8771 = vmatpush2.bf16.msra.mxu0 0
      %8772 = vmatprep.subr.bf16.mxu0 0
      %8773 = vmatpush2.bf16.msra.mxu0 0
      %8774 = vmatprep.subr.bf16.mxu0 0
      %8775 = vmatpush2.bf16.msra.mxu0 0
      %8776 = vmatprep.subr.bf16.mxu0 0
      %8777 = vmatpush2.bf16.msra.mxu0 0
      %8778 = vmatprep.subr.bf16.mxu0 0
      %8779 = vmatpush2.bf16.msra.mxu0 0
      %8780 = vmatprep.subr.bf16.mxu0 0
      %8781 = vmatpush2.bf16.msra.mxu0 0
      %8782 = vmatprep.subr.bf16.mxu0 0
      %8783 = vmatpush2.bf16.msra.mxu0 0
      %8784 = vmatprep.subr.bf16.mxu0 0
      %8785 = vmatpush2.bf16.msra.mxu0 0
      %8786 = vmatprep.mubr.bf16.mxu0 0
      %8787 = vmatmul.mubr.bf16.gmra.mxu0 %v8293
      %v8788 = vpop.f32.mrf.mxu0
      %v8789 = vadd.f32 0.0, %v8788
      %v8790 = vpop.f32.mrf.mxu0
      %v8791 = vpop.f32.mrf.mxu0
      %v8792 = vadd.f32 0.0, %v8791
      %v8793 = vpop.f32.mrf.mxu0
      %8794 = vmatprep.mubr.bf16.mxu0 0
      %8795 = vmatmul.mubr.bf16.gmra.mxu0 %v8296
      %v8796 = vpop.f32.mrf.mxu0
      %v8797 = vadd.f32 0.0, %v8796
      %v8798 = vpop.f32.mrf.mxu0
      %v8799 = vpop.f32.mrf.mxu0
      %v8800 = vadd.f32 0.0, %v8799
      %v8801 = vpop.f32.mrf.mxu0
      %8802 = vmatprep.mubr.bf16.mxu0 0
      %8803 = vmatmul.mubr.bf16.gmra.mxu0 %v8299
      %v8804 = vpop.f32.mrf.mxu0
      %v8805 = vadd.f32 0.0, %v8804
      %v8806 = vpop.f32.mrf.mxu0
      %v8807 = vpop.f32.mrf.mxu0
      %v8808 = vadd.f32 0.0, %v8807
      %v8809 = vpop.f32.mrf.mxu0
      %8810 = vdwg.mxu0
      %s8811 = scalar_lea.vmem %s10, 160
      %v8812 = vld [vmem:[%s8811] sm:$0xf]
      %v8813 = vld [vmem:[%s8811 + $0x4] sm:$0xf]
      %v8814 = vld [vmem:[%s8811 + $0x8] sm:$0xf]
      %v8815 = vld [vmem:[%s8811 + $0xc] sm:$0xf]
      %v8820 = vunpack.c.l.b16 %v8812
      %v8821 = vunpack.c.l.b16 %v8813
      %v8822 = vunpack.c.l.b16 %v8814
      %v8823 = vunpack.c.l.b16 %v8815
      %v8824 = vpack.c.b16 %v8821, %v8820
      %v8825 = vpack.c.b16 %v8823, %v8822
      %8828 = vmatprep.subr.bf16.mxu0 0
      %8829 = vmatpush1.bf16.msra.mxu0 0
      %8830 = vmatprep.subr.bf16.mxu0 0
      %8831 = vmatpush1.bf16.msra.mxu0 0
      %8832 = vmatprep.subr.bf16.mxu0 0
      %8833 = vmatpush1.bf16.msra.mxu0 0
      %8834 = vmatprep.subr.bf16.mxu0 0
      %8835 = vmatpush1.bf16.msra.mxu0 0
      %8836 = vmatprep.subr.bf16.mxu0 0
      %8837 = vmatpush1.bf16.msra.mxu0 0
      %8838 = vmatprep.subr.bf16.mxu0 0
      %8839 = vmatpush1.bf16.msra.mxu0 0
      %8840 = vmatprep.subr.bf16.mxu0 0
      %8841 = vmatpush1.bf16.msra.mxu0 %v8825
      %8842 = vmatprep.subr.bf16.mxu0 0
      %8843 = vmatpush1.bf16.msra.mxu0 %v8824
      %8844 = vmatprep.subr.bf16.mxu0 0
      %8845 = vmatpush2.bf16.msra.mxu0 0
      %8846 = vmatprep.subr.bf16.mxu0 0
      %8847 = vmatpush2.bf16.msra.mxu0 0
      %8848 = vmatprep.subr.bf16.mxu0 0
      %8849 = vmatpush2.bf16.msra.mxu0 0
      %8850 = vmatprep.subr.bf16.mxu0 0
      %8851 = vmatpush2.bf16.msra.mxu0 0
      %8852 = vmatprep.subr.bf16.mxu0 0
      %8853 = vmatpush2.bf16.msra.mxu0 0
      %8854 = vmatprep.subr.bf16.mxu0 0
      %8855 = vmatpush2.bf16.msra.mxu0 0
      %8856 = vmatprep.subr.bf16.mxu0 0
      %8857 = vmatpush2.bf16.msra.mxu0 0
      %8858 = vmatprep.subr.bf16.mxu0 0
      %8859 = vmatpush2.bf16.msra.mxu0 0
      %8860 = vmatprep.mubr.bf16.mxu0 0
      %8861 = vmatmul.mubr.bf16.gmra.mxu0 %v8293
      %v8862 = vpop.f32.mrf.mxu0
      %v8863 = vadd.f32 0.0, %v8862
      %v8864 = vpop.f32.mrf.mxu0
      %v8865 = vpop.f32.mrf.mxu0
      %v8866 = vadd.f32 0.0, %v8865
      %v8867 = vpop.f32.mrf.mxu0
      %8868 = vmatprep.mubr.bf16.mxu0 0
      %8869 = vmatmul.mubr.bf16.gmra.mxu0 %v8296
      %v8870 = vpop.f32.mrf.mxu0
      %v8871 = vadd.f32 0.0, %v8870
      %v8872 = vpop.f32.mrf.mxu0
      %v8873 = vpop.f32.mrf.mxu0
      %v8874 = vadd.f32 0.0, %v8873
      %v8875 = vpop.f32.mrf.mxu0
      %8876 = vmatprep.mubr.bf16.mxu0 0
      %8877 = vmatmul.mubr.bf16.gmra.mxu0 %v8299
      %v8878 = vpop.f32.mrf.mxu0
      %v8879 = vadd.f32 0.0, %v8878
      %v8880 = vpop.f32.mrf.mxu0
      %v8881 = vpop.f32.mrf.mxu0
      %v8882 = vadd.f32 0.0, %v8881
      %v8883 = vpop.f32.mrf.mxu0
      %8884 = vdwg.mxu0
      %s8885 = scalar_lea.vmem %s10, 176
      %v8886 = vld [vmem:[%s8885] sm:$0xf]
      %v8887 = vld [vmem:[%s8885 + $0x4] sm:$0xf]
      %v8888 = vld [vmem:[%s8885 + $0x8] sm:$0xf]
      %v8889 = vld [vmem:[%s8885 + $0xc] sm:$0xf]
      %v8894 = vunpack.c.l.b16 %v8886
      %v8895 = vunpack.c.l.b16 %v8887
      %v8896 = vunpack.c.l.b16 %v8888
      %v8897 = vunpack.c.l.b16 %v8889
      %v8898 = vpack.c.b16 %v8895, %v8894
      %v8899 = vpack.c.b16 %v8897, %v8896
      %8902 = vmatprep.subr.bf16.mxu0 0
      %8903 = vmatpush1.bf16.msra.mxu0 0
      %8904 = vmatprep.subr.bf16.mxu0 0
      %8905 = vmatpush1.bf16.msra.mxu0 0
      %8906 = vmatprep.subr.bf16.mxu0 0
      %8907 = vmatpush1.bf16.msra.mxu0 0
      %8908 = vmatprep.subr.bf16.mxu0 0
      %8909 = vmatpush1.bf16.msra.mxu0 0
      %8910 = vmatprep.subr.bf16.mxu0 0
      %8911 = vmatpush1.bf16.msra.mxu0 0
      %8912 = vmatprep.subr.bf16.mxu0 0
      %8913 = vmatpush1.bf16.msra.mxu0 0
      %8914 = vmatprep.subr.bf16.mxu0 0
      %8915 = vmatpush1.bf16.msra.mxu0 %v8899
      %8916 = vmatprep.subr.bf16.mxu0 0
      %8917 = vmatpush1.bf16.msra.mxu0 %v8898
      %8918 = vmatprep.subr.bf16.mxu0 0
      %8919 = vmatpush2.bf16.msra.mxu0 0
      %8920 = vmatprep.subr.bf16.mxu0 0
      %8921 = vmatpush2.bf16.msra.mxu0 0
      %8922 = vmatprep.subr.bf16.mxu0 0
      %8923 = vmatpush2.bf16.msra.mxu0 0
      %8924 = vmatprep.subr.bf16.mxu0 0
      %8925 = vmatpush2.bf16.msra.mxu0 0
      %8926 = vmatprep.subr.bf16.mxu0 0
      %8927 = vmatpush2.bf16.msra.mxu0 0
      %8928 = vmatprep.subr.bf16.mxu0 0
      %8929 = vmatpush2.bf16.msra.mxu0 0
      %8930 = vmatprep.subr.bf16.mxu0 0
      %8931 = vmatpush2.bf16.msra.mxu0 0
      %8932 = vmatprep.subr.bf16.mxu0 0
      %8933 = vmatpush2.bf16.msra.mxu0 0
      %8934 = vmatprep.mubr.bf16.mxu0 0
      %8935 = vmatmul.mubr.bf16.gmra.mxu0 %v8293
      %v8936 = vpop.f32.mrf.mxu0
      %v8937 = vadd.f32 0.0, %v8936
      %v8938 = vpop.f32.mrf.mxu0
      %v8939 = vpop.f32.mrf.mxu0
      %v8940 = vadd.f32 0.0, %v8939
      %v8941 = vpop.f32.mrf.mxu0
      %8942 = vmatprep.mubr.bf16.mxu0 0
      %8943 = vmatmul.mubr.bf16.gmra.mxu0 %v8296
      %v8944 = vpop.f32.mrf.mxu0
      %v8945 = vadd.f32 0.0, %v8944
      %v8946 = vpop.f32.mrf.mxu0
      %v8947 = vpop.f32.mrf.mxu0
      %v8948 = vadd.f32 0.0, %v8947
      %v8949 = vpop.f32.mrf.mxu0
      %8950 = vmatprep.mubr.bf16.mxu0 0
      %8951 = vmatmul.mubr.bf16.gmra.mxu0 %v8299
      %v8952 = vpop.f32.mrf.mxu0
      %v8953 = vadd.f32 0.0, %v8952
      %v8954 = vpop.f32.mrf.mxu0
      %v8955 = vpop.f32.mrf.mxu0
      %v8956 = vadd.f32 0.0, %v8955
      %v8957 = vpop.f32.mrf.mxu0
      %8958 = vdwg.mxu0
      %v8959 = vpack.c.bf16 %v8792, %v8789
      %v8960 = vpack.c.bf16 %v8800, %v8797
      %v8961 = vpack.c.bf16 %v8808, %v8805
      %v8962 = vpack.c.bf16 %v8866, %v8863
      %v8963 = vpack.c.bf16 %v8874, %v8871
      %v8964 = vpack.c.bf16 %v8882, %v8879
      %v8966 = vsel %vm3486, %v8959, 0
      %v8969 = vsel %vm3486, %v8960, 0
      %v8972 = vsel %vm3486, %v8961, 0
      %v8975 = vsel %vm3486, %v8962, 0
      %v8978 = vsel %vm3486, %v8963, 0
      %v8981 = vsel %vm3486, %v8964, 0
      %8983 = vmatprep.subr.bf16.mxu0 0
      %8984 = vmatpush1.bf16.xpose.msra.mxu0 0
      %8985 = vmatprep.subr.bf16.mxu0 0
      %8986 = vmatpush1.bf16.xpose.msra.mxu0 0
      %8987 = vmatprep.subr.bf16.mxu0 0
      %8988 = vmatpush1.bf16.xpose.msra.mxu0 0
      %8989 = vmatprep.subr.bf16.mxu0 0
      %8990 = vmatpush1.bf16.xpose.msra.mxu0 0
      %8991 = vmatprep.subr.bf16.mxu0 0
      %8992 = vmatpush1.bf16.xpose.msra.mxu0 0
      %8993 = vmatprep.subr.bf16.mxu0 0
      %8994 = vmatpush1.bf16.xpose.msra.mxu0 %v8981
      %8995 = vmatprep.subr.bf16.mxu0 0
      %8996 = vmatpush1.bf16.xpose.msra.mxu0 %v8978
      %8997 = vmatprep.subr.bf16.mxu0 0
      %8998 = vmatpush1.bf16.xpose.msra.mxu0 %v8975
      %8999 = vmatprep.subr.bf16.mxu0 0
      %9000 = vmatpush2.bf16.xpose.msra.mxu0 0
      %9001 = vmatprep.subr.bf16.mxu0 0
      %9002 = vmatpush2.bf16.xpose.msra.mxu0 0
      %9003 = vmatprep.subr.bf16.mxu0 0
      %9004 = vmatpush2.bf16.xpose.msra.mxu0 0
      %9005 = vmatprep.subr.bf16.mxu0 0
      %9006 = vmatpush2.bf16.xpose.msra.mxu0 0
      %9007 = vmatprep.subr.bf16.mxu0 0
      %9008 = vmatpush2.bf16.xpose.msra.mxu0 0
      %9009 = vmatprep.subr.bf16.mxu0 0
      %9010 = vmatpush2.bf16.xpose.msra.mxu0 0
      %9011 = vmatprep.subr.bf16.mxu0 0
      %9012 = vmatpush2.bf16.xpose.msra.mxu0 0
      %9013 = vmatprep.subr.bf16.mxu0 0
      %9014 = vmatpush2.bf16.xpose.msra.mxu0 0
      %9015 = vmatprep.mubr.bf16.mxu0 0
      %9016 = vmatmul.mubr.bf16.gmra.mxu0 %v8966
      %v9017 = vpop.f32.mrf.mxu0
      %v9018 = vadd.f32 0.0, %v9017
      %v9019 = vpop.f32.mrf.mxu0
      %v9020 = vpop.f32.mrf.mxu0
      %v9021 = vadd.f32 0.0, %v9020
      %v9022 = vpop.f32.mrf.mxu0
      %9023 = vmatprep.mubr.bf16.mxu0 0
      %9024 = vmatmul.mubr.bf16.gmra.mxu0 %v8969
      %v9025 = vpop.f32.mrf.mxu0
      %v9026 = vadd.f32 0.0, %v9025
      %v9027 = vpop.f32.mrf.mxu0
      %v9028 = vpop.f32.mrf.mxu0
      %v9029 = vadd.f32 0.0, %v9028
      %v9030 = vpop.f32.mrf.mxu0
      %9031 = vmatprep.mubr.bf16.mxu0 0
      %9032 = vmatmul.mubr.bf16.gmra.mxu0 %v8972
      %v9033 = vpop.f32.mrf.mxu0
      %v9034 = vadd.f32 0.0, %v9033
      %v9035 = vpop.f32.mrf.mxu0
      %v9036 = vpop.f32.mrf.mxu0
      %v9037 = vadd.f32 0.0, %v9036
      %v9038 = vpop.f32.mrf.mxu0
      %9039 = vdwg.mxu0
      %v9040 = vmul.f32 %v9018, 0.25
      %v9041 = vmul.f32 %v9021, 0.25
      %v9042 = vmul.f32 %v9026, 0.25
      %v9043 = vmul.f32 %v9029, 0.25
      %v9044 = vmul.f32 %v9034, 0.25
      %v9045 = vmul.f32 %v9037, 0.25
      %v9046 = vsel %vm7031, %v9040, -inf
      %9047 = vmax.xlane.f32.xlu0 %v9046
      %v9048 = vpop.xlane.xlu0 %9047
      %v9049 = vsel %vm7031, %v9041, -inf
      %9050 = vmax.xlane.f32.xlu0 %v9049
      %v9051 = vpop.xlane.xlu0 %9050
      %v9052 = vsel %vm7031, %v9042, -inf
      %9053 = vmax.xlane.f32.xlu0 %v9052
      %v9054 = vpop.xlane.xlu0 %9053
      %v9055 = vsel %vm7031, %v9043, -inf
      %9056 = vmax.xlane.f32.xlu0 %v9055
      %v9057 = vpop.xlane.xlu0 %9056
      %v9058 = vsel %vm7031, %v9044, -inf
      %9059 = vmax.xlane.f32.xlu0 %v9058
      %v9060 = vpop.xlane.xlu0 %9059
      %v9061 = vsel %vm7031, %v9045, -inf
      %9062 = vmax.xlane.f32.xlu0 %v9061
      %v9063 = vpop.xlane.xlu0 %9062
      %v9064 = vsub.f32 %v9040, %v9048
      %v9065 = vsub.f32 %v9041, %v9051
      %v9066 = vsub.f32 %v9042, %v9054
      %v9067 = vsub.f32 %v9043, %v9057
      %v9068 = vsub.f32 %v9044, %v9060
      %v9069 = vsub.f32 %v9045, %v9063
      %v9070 = vmul.f32 %v9064, 1.442695
      %v9071 = vpow.pop %v9070
      %v9072 = vmul.f32 %v9065, 1.442695
      %v9073 = vpow.pop %v9072
      %v9074 = vmul.f32 %v9066, 1.442695
      %v9075 = vpow.pop %v9074
      %v9076 = vmul.f32 %v9067, 1.442695
      %v9077 = vpow.pop %v9076
      %v9078 = vmul.f32 %v9068, 1.442695
      %v9079 = vpow.pop %v9078
      %v9080 = vmul.f32 %v9069, 1.442695
      %v9081 = vpow.pop %v9080
      %v9082 = vsel %vm7031, %v9071, 0.0
      %9083 = vadd.xlane.f32.xlu0 %v9082
      %v9084 = vpop.xlane.xlu0 %9083
      %v9085 = vsel %vm7031, %v9073, 0.0
      %9086 = vadd.xlane.f32.xlu0 %v9085
      %v9087 = vpop.xlane.xlu0 %9086
      %v9088 = vsel %vm7031, %v9075, 0.0
      %9089 = vadd.xlane.f32.xlu0 %v9088
      %v9090 = vpop.xlane.xlu0 %9089
      %v9091 = vsel %vm7031, %v9077, 0.0
      %9092 = vadd.xlane.f32.xlu0 %v9091
      %v9093 = vpop.xlane.xlu0 %9092
      %v9094 = vsel %vm7031, %v9079, 0.0
      %9095 = vadd.xlane.f32.xlu0 %v9094
      %v9096 = vpop.xlane.xlu0 %9095
      %v9097 = vsel %vm7031, %v9081, 0.0
      %9098 = vadd.xlane.f32.xlu0 %v9097
      %v9099 = vpop.xlane.xlu0 %9098
      %v9100 = vrcp.pop %v9084
      %v9101 = vrcp.pop %v9087
      %v9102 = vrcp.pop %v9090
      %v9103 = vrcp.pop %v9093
      %v9104 = vrcp.pop %v9096
      %v9105 = vrcp.pop %v9099
      %v9106 = vmul.f32 %v9071, %v9100
      %v9107 = vmul.f32 %v9073, %v9101
      %v9108 = vmul.f32 %v9075, %v9102
      %v9109 = vmul.f32 %v9077, %v9103
      %v9110 = vmul.f32 %v9079, %v9104
      %v9111 = vmul.f32 %v9081, %v9105
      %v9112 = vpack.c.bf16 %v9107, %v9106
      %v9113 = vpack.c.bf16 %v9109, %v9108
      %v9114 = vpack.c.bf16 %v9111, %v9110
      %v9115 = vpack.c.bf16 %v8940, %v8937
      %v9116 = vpack.c.bf16 %v8948, %v8945
      %v9117 = vpack.c.bf16 %v8956, %v8953
      %v9119 = vsel %vm7031, %v9112, 0
      %v9122 = vsel %vm7031, %v9113, 0
      %v9125 = vsel %vm7031, %v9114, 0
      %9127 = vmatprep.subr.bf16.mxu0 0
      %9128 = vmatpush1.bf16.msra.mxu0 0
      %9129 = vmatprep.subr.bf16.mxu0 0
      %9130 = vmatpush1.bf16.msra.mxu0 0
      %9131 = vmatprep.subr.bf16.mxu0 0
      %9132 = vmatpush1.bf16.msra.mxu0 0
      %9133 = vmatprep.subr.bf16.mxu0 0
      %9134 = vmatpush1.bf16.msra.mxu0 0
      %9135 = vmatprep.subr.bf16.mxu0 0
      %9136 = vmatpush1.bf16.msra.mxu0 0
      %9137 = vmatprep.subr.bf16.mxu0 0
      %9138 = vmatpush1.bf16.msra.mxu0 %v9117
      %9139 = vmatprep.subr.bf16.mxu0 0
      %9140 = vmatpush1.bf16.msra.mxu0 %v9116
      %9141 = vmatprep.subr.bf16.mxu0 0
      %9142 = vmatpush1.bf16.msra.mxu0 %v9115
      %9143 = vmatprep.subr.bf16.mxu0 0
      %9144 = vmatpush2.bf16.msra.mxu0 0
      %9145 = vmatprep.subr.bf16.mxu0 0
      %9146 = vmatpush2.bf16.msra.mxu0 0
      %9147 = vmatprep.subr.bf16.mxu0 0
      %9148 = vmatpush2.bf16.msra.mxu0 0
      %9149 = vmatprep.subr.bf16.mxu0 0
      %9150 = vmatpush2.bf16.msra.mxu0 0
      %9151 = vmatprep.subr.bf16.mxu0 0
      %9152 = vmatpush2.bf16.msra.mxu0 0
      %9153 = vmatprep.subr.bf16.mxu0 0
      %9154 = vmatpush2.bf16.msra.mxu0 0
      %9155 = vmatprep.subr.bf16.mxu0 0
      %9156 = vmatpush2.bf16.msra.mxu0 0
      %9157 = vmatprep.subr.bf16.mxu0 0
      %9158 = vmatpush2.bf16.msra.mxu0 0
      %9159 = vmatprep.mubr.bf16.mxu0 0
      %9160 = vmatmul.mubr.bf16.gmra.mxu0 %v9119
      %v9161 = vpop.f32.mrf.mxu0
      %v9162 = vadd.f32 0.0, %v9161
      %v9163 = vpop.f32.mrf.mxu0
      %v9164 = vpop.f32.mrf.mxu0
      %v9165 = vadd.f32 0.0, %v9164
      %v9166 = vpop.f32.mrf.mxu0
      %9167 = vmatprep.mubr.bf16.mxu0 0
      %9168 = vmatmul.mubr.bf16.gmra.mxu0 %v9122
      %v9169 = vpop.f32.mrf.mxu0
      %v9170 = vadd.f32 0.0, %v9169
      %v9171 = vpop.f32.mrf.mxu0
      %v9172 = vpop.f32.mrf.mxu0
      %v9173 = vadd.f32 0.0, %v9172
      %v9174 = vpop.f32.mrf.mxu0
      %9175 = vmatprep.mubr.bf16.mxu0 0
      %9176 = vmatmul.mubr.bf16.gmra.mxu0 %v9125
      %v9177 = vpop.f32.mrf.mxu0
      %v9178 = vadd.f32 0.0, %v9177
      %v9179 = vpop.f32.mrf.mxu0
      %v9180 = vpop.f32.mrf.mxu0
      %v9181 = vadd.f32 0.0, %v9180
      %v9182 = vpop.f32.mrf.mxu0
      %9183 = vdwg.mxu0
      %v9184 = vpack.c.bf16 %v9165, %v9162
      %v9185 = vpack.c.bf16 %v9173, %v9170
      %v9186 = vpack.c.bf16 %v9181, %v9178
      %s9187 = scalar_lea.vmem %s11, 24
      %v9188 = vld [vmem:[%s9187] sm:$0xf]
      %v9189 = vld [vmem:[%s9187 + $0x4] sm:$0xf]
      %v9192 = vunpack.c.l.b16 %v9188
      %v9193 = vunpack.c.l.b16 %v9189
      %v9194 = vpack.c.b16 %v9193, %v9192
      %v9197 = vsel %vm3486, %v9184, 0
      %v9200 = vsel %vm3486, %v9185, 0
      %v9203 = vsel %vm3486, %v9186, 0
      %9205 = vmatprep.subr.bf16.mxu0 0
      %9206 = vmatpush1.bf16.msra.mxu0 0
      %9207 = vmatprep.subr.bf16.mxu0 0
      %9208 = vmatpush1.bf16.msra.mxu0 0
      %9209 = vmatprep.subr.bf16.mxu0 0
      %9210 = vmatpush1.bf16.msra.mxu0 0
      %9211 = vmatprep.subr.bf16.mxu0 0
      %9212 = vmatpush1.bf16.msra.mxu0 0
      %9213 = vmatprep.subr.bf16.mxu0 0
      %9214 = vmatpush1.bf16.msra.mxu0 0
      %9215 = vmatprep.subr.bf16.mxu0 0
      %9216 = vmatpush1.bf16.msra.mxu0 0
      %9217 = vmatprep.subr.bf16.mxu0 0
      %9218 = vmatpush1.bf16.msra.mxu0 0
      %9219 = vmatprep.subr.bf16.mxu0 0
      %9220 = vmatpush1.bf16.msra.mxu0 %v9194
      %9221 = vmatprep.subr.bf16.mxu0 0
      %9222 = vmatpush2.bf16.msra.mxu0 0
      %9223 = vmatprep.subr.bf16.mxu0 0
      %9224 = vmatpush2.bf16.msra.mxu0 0
      %9225 = vmatprep.subr.bf16.mxu0 0
      %9226 = vmatpush2.bf16.msra.mxu0 0
      %9227 = vmatprep.subr.bf16.mxu0 0
      %9228 = vmatpush2.bf16.msra.mxu0 0
      %9229 = vmatprep.subr.bf16.mxu0 0
      %9230 = vmatpush2.bf16.msra.mxu0 0
      %9231 = vmatprep.subr.bf16.mxu0 0
      %9232 = vmatpush2.bf16.msra.mxu0 0
      %9233 = vmatprep.subr.bf16.mxu0 0
      %9234 = vmatpush2.bf16.msra.mxu0 0
      %9235 = vmatprep.subr.bf16.mxu0 0
      %9236 = vmatpush2.bf16.msra.mxu0 0
      %9237 = vmatprep.mubr.bf16.mxu0 0
      %9238 = vmatmul.mubr.bf16.gmra.mxu0 %v9197
      %v9239 = vpop.f32.mrf.mxu0
      %v9240 = vadd.f32 0.0, %v9239
      %v9241 = vpop.f32.mrf.mxu0
      %v9242 = vpop.f32.mrf.mxu0
      %v9243 = vadd.f32 0.0, %v9242
      %v9244 = vpop.f32.mrf.mxu0
      %9245 = vmatprep.mubr.bf16.mxu0 0
      %9246 = vmatmul.mubr.bf16.gmra.mxu0 %v9200
      %v9247 = vpop.f32.mrf.mxu0
      %v9248 = vadd.f32 0.0, %v9247
      %v9249 = vpop.f32.mrf.mxu0
      %v9250 = vpop.f32.mrf.mxu0
      %v9251 = vadd.f32 0.0, %v9250
      %v9252 = vpop.f32.mrf.mxu0
      %9253 = vmatprep.mubr.bf16.mxu0 0
      %9254 = vmatmul.mubr.bf16.gmra.mxu0 %v9203
      %v9255 = vpop.f32.mrf.mxu0
      %v9256 = vadd.f32 0.0, %v9255
      %v9257 = vpop.f32.mrf.mxu0
      %v9258 = vpop.f32.mrf.mxu0
      %v9259 = vadd.f32 0.0, %v9258
      %v9260 = vpop.f32.mrf.mxu0
      %9261 = vdwg.mxu0
      %v9264 = vunpack.c.l.b16 %v8735
      %v9265 = vunpack.c.l.b16 %v8736
      %v9266 = vpack.c.b16 %v9265, %v9264
      %v9269 = vsel %vm3486, %v8731, 0
      %v9272 = vsel %vm3486, %v8732, 0
      %v9275 = vsel %vm3486, %v8733, 0
      %9277 = vmatprep.subr.bf16.mxu0 0
      %9278 = vmatpush1.bf16.msra.mxu0 0
      %9279 = vmatprep.subr.bf16.mxu0 0
      %9280 = vmatpush1.bf16.msra.mxu0 0
      %9281 = vmatprep.subr.bf16.mxu0 0
      %9282 = vmatpush1.bf16.msra.mxu0 0
      %9283 = vmatprep.subr.bf16.mxu0 0
      %9284 = vmatpush1.bf16.msra.mxu0 0
      %9285 = vmatprep.subr.bf16.mxu0 0
      %9286 = vmatpush1.bf16.msra.mxu0 0
      %9287 = vmatprep.subr.bf16.mxu0 0
      %9288 = vmatpush1.bf16.msra.mxu0 0
      %9289 = vmatprep.subr.bf16.mxu0 0
      %9290 = vmatpush1.bf16.msra.mxu0 0
      %9291 = vmatprep.subr.bf16.mxu0 0
      %9292 = vmatpush1.bf16.msra.mxu0 %v9266
      %9293 = vmatprep.subr.bf16.mxu0 0
      %9294 = vmatpush2.bf16.msra.mxu0 0
      %9295 = vmatprep.subr.bf16.mxu0 0
      %9296 = vmatpush2.bf16.msra.mxu0 0
      %9297 = vmatprep.subr.bf16.mxu0 0
      %9298 = vmatpush2.bf16.msra.mxu0 0
      %9299 = vmatprep.subr.bf16.mxu0 0
      %9300 = vmatpush2.bf16.msra.mxu0 0
      %9301 = vmatprep.subr.bf16.mxu0 0
      %9302 = vmatpush2.bf16.msra.mxu0 0
      %9303 = vmatprep.subr.bf16.mxu0 0
      %9304 = vmatpush2.bf16.msra.mxu0 0
      %9305 = vmatprep.subr.bf16.mxu0 0
      %9306 = vmatpush2.bf16.msra.mxu0 0
      %9307 = vmatprep.subr.bf16.mxu0 0
      %9308 = vmatpush2.bf16.msra.mxu0 0
      %9309 = vmatprep.mubr.bf16.mxu0 0
      %9310 = vmatmul.mubr.bf16.gmra.mxu0 %v9269
      %v9311 = vpop.f32.mrf.mxu0
      %v9312 = vadd.f32 %v9240, %v9311
      %v9313 = vpop.f32.mrf.mxu0
      %v9314 = vpop.f32.mrf.mxu0
      %v9315 = vadd.f32 %v9243, %v9314
      %v9316 = vpop.f32.mrf.mxu0
      %9317 = vmatprep.mubr.bf16.mxu0 0
      %9318 = vmatmul.mubr.bf16.gmra.mxu0 %v9272
      %v9319 = vpop.f32.mrf.mxu0
      %v9320 = vadd.f32 %v9248, %v9319
      %v9321 = vpop.f32.mrf.mxu0
      %v9322 = vpop.f32.mrf.mxu0
      %v9323 = vadd.f32 %v9251, %v9322
      %v9324 = vpop.f32.mrf.mxu0
      %9325 = vmatprep.mubr.bf16.mxu0 0
      %9326 = vmatmul.mubr.bf16.gmra.mxu0 %v9275
      %v9327 = vpop.f32.mrf.mxu0
      %v9328 = vadd.f32 %v9256, %v9327
      %v9329 = vpop.f32.mrf.mxu0
      %v9330 = vpop.f32.mrf.mxu0
      %v9331 = vadd.f32 %v9259, %v9330
      %v9332 = vpop.f32.mrf.mxu0
      %9333 = vdwg.mxu0
      %v9334 = vadd.f32 %v8166, %v9312
      %v9335 = vadd.f32 %v8167, %v9315
      %v9336 = vadd.f32 %v8168, %v9320
      %v9337 = vadd.f32 %v8169, %v9323
      %v9338 = vadd.f32 %v8170, %v9328
      %v9339 = vadd.f32 %v8171, %v9331
      %v9340 = vlaneseq
      %v9341 = vshrl.u32 %v9340, 7
      %v9342 = vsub.s32 2, %v9341
      %v9343 = vrot.slane %v8173, %v9342
      %v9344 = vadd.f32 %v9334, %v9343
      %v9345 = vadd.f32 %v9335, %v9343
      %v9346 = vadd.f32 %v9336, %v9343
      %v9347 = vadd.f32 %v9337, %v9343
      %v9348 = vadd.f32 %v9338, %v9343
      %v9349 = vadd.f32 %v9339, %v9343
      %v9350 = vsel %vm6611, %v9344, 0.0
      %9351 = vadd.xlane.f32.xlu0 %v9350
      %v9352 = vpop.xlane.xlu0 %9351
      %v9353 = vsel %vm6611, %v9345, 0.0
      %9354 = vadd.xlane.f32.xlu0 %v9353
      %v9355 = vpop.xlane.xlu0 %9354
      %v9356 = vsel %vm6611, %v9346, 0.0
      %9357 = vadd.xlane.f32.xlu0 %v9356
      %v9358 = vpop.xlane.xlu0 %9357
      %v9359 = vsel %vm6611, %v9347, 0.0
      %9360 = vadd.xlane.f32.xlu0 %v9359
      %v9361 = vpop.xlane.xlu0 %9360
      %v9362 = vsel %vm6611, %v9348, 0.0
      %9363 = vadd.xlane.f32.xlu0 %v9362
      %v9364 = vpop.xlane.xlu0 %9363
      %v9365 = vsel %vm6611, %v9349, 0.0
      %9366 = vadd.xlane.f32.xlu0 %v9365
      %v9367 = vpop.xlane.xlu0 %9366
      %v9368 = vmul.f32 %v9352, %v6630
      %v9369 = vmul.f32 %v9355, %v6630
      %v9370 = vmul.f32 %v9358, %v6630
      %v9371 = vmul.f32 %v9361, %v6630
      %v9372 = vmul.f32 %v9364, %v6630
      %v9373 = vmul.f32 %v9367, %v6630
      %v9374 = vsub.f32 %v9344, %v9368
      %v9375 = vsub.f32 %v9345, %v9369
      %v9376 = vsub.f32 %v9346, %v9370
      %v9377 = vsub.f32 %v9347, %v9371
      %v9378 = vsub.f32 %v9348, %v9372
      %v9379 = vsub.f32 %v9349, %v9373
      %v9380 = vmul.f32 %v9374, %v9374
      %v9381 = vmul.f32 %v9375, %v9375
      %v9382 = vmul.f32 %v9376, %v9376
      %v9383 = vmul.f32 %v9377, %v9377
      %v9384 = vmul.f32 %v9378, %v9378
      %v9385 = vmul.f32 %v9379, %v9379
      %v9386 = vsel %vm6611, %v9380, 0.0
      %9387 = vadd.xlane.f32.xlu0 %v9386
      %v9388 = vpop.xlane.xlu0 %9387
      %v9389 = vsel %vm6611, %v9381, 0.0
      %9390 = vadd.xlane.f32.xlu0 %v9389
      %v9391 = vpop.xlane.xlu0 %9390
      %v9392 = vsel %vm6611, %v9382, 0.0
      %9393 = vadd.xlane.f32.xlu0 %v9392
      %v9394 = vpop.xlane.xlu0 %9393
      %v9395 = vsel %vm6611, %v9383, 0.0
      %9396 = vadd.xlane.f32.xlu0 %v9395
      %v9397 = vpop.xlane.xlu0 %9396
      %v9398 = vsel %vm6611, %v9384, 0.0
      %9399 = vadd.xlane.f32.xlu0 %v9398
      %v9400 = vpop.xlane.xlu0 %9399
      %v9401 = vsel %vm6611, %v9385, 0.0
      %9402 = vadd.xlane.f32.xlu0 %v9401
      %v9403 = vpop.xlane.xlu0 %9402
      %v9404 = vmul.f32 %v9388, %v6630
      %v9405 = vmul.f32 %v9391, %v6630
      %v9406 = vmul.f32 %v9394, %v6630
      %v9407 = vmul.f32 %v9397, %v6630
      %v9408 = vmul.f32 %v9400, %v6630
      %v9409 = vmul.f32 %v9403, %v6630
      %v9410 = vadd.f32 %v9404, 1e-05
      %v9411 = vadd.f32 %v9405, 1e-05
      %v9412 = vadd.f32 %v9406, 1e-05
      %v9413 = vadd.f32 %v9407, 1e-05
      %v9414 = vadd.f32 %v9408, 1e-05
      %v9415 = vadd.f32 %v9409, 1e-05
      %v9416 = vrsqrt.pop %v9410
      %v9417 = vrsqrt.pop %v9411
      %v9418 = vrsqrt.pop %v9412
      %v9419 = vrsqrt.pop %v9413
      %v9420 = vrsqrt.pop %v9414
      %v9421 = vrsqrt.pop %v9415
      %v9422 = vmul.f32 %v9374, %v9416
      %v9423 = vmul.f32 %v9375, %v9417
      %v9424 = vmul.f32 %v9376, %v9418
      %v9425 = vmul.f32 %v9377, %v9419
      %v9426 = vmul.f32 %v9378, %v9420
      %v9427 = vmul.f32 %v9379, %v9421
      %v9428 = vlaneseq
      %v9429 = vshrl.u32 %v9428, 7
      %v9430 = vsub.s32 3, %v9429
      %v9431 = vrot.slane %v8173, %v9430
      %v9432 = vmul.f32 %v9422, %v9431
      %v9433 = vmul.f32 %v9423, %v9431
      %v9434 = vmul.f32 %v9424, %v9431
      %v9435 = vmul.f32 %v9425, %v9431
      %v9436 = vmul.f32 %v9426, %v9431
      %v9437 = vmul.f32 %v9427, %v9431
      %v9438 = vlaneseq
      %v9439 = vshrl.u32 %v9438, 7
      %v9440 = vsub.s32 4, %v9439
      %v9441 = vrot.slane %v8173, %v9440
      %v9442 = vadd.f32 %v9432, %v9441
      %v9443 = vadd.f32 %v9433, %v9441
      %v9444 = vadd.f32 %v9434, %v9441
      %v9445 = vadd.f32 %v9435, %v9441
      %v9446 = vadd.f32 %v9436, %v9441
      %v9447 = vadd.f32 %v9437, %v9441
      %v9448 = vpack.c.bf16 %v9443, %v9442
      %v9449 = vpack.c.bf16 %v9445, %v9444
      %v9450 = vpack.c.bf16 %v9447, %v9446
      %s9451 = scalar_lea.vmem %s12, 16
      %v9452 = vld [vmem:[%s9451] sm:$0xf]
      %v9453 = vld [vmem:[%s9451 + $0x4] sm:$0xf]
      %v9454 = vld [vmem:[%s9451 + $0x8] sm:$0xf]
      %v9455 = vld [vmem:[%s9451 + $0xc] sm:$0xf]
      %s9456 = scalar_lea.vmem %s9, 1
      %v9457 = vld [vmem:[%s9456] sm:$0x1]
      %v9459 = vlaneseq
      %v9460 = vshrl.u32 %v9459, 7
      %v9461 = vsub.s32 0, %v9460
      %v9462 = vrot.slane %v9457, %v9461
      %v9468 = vunpack.c.l.b16 %v9452
      %v9469 = vunpack.c.l.b16 %v9453
      %v9470 = vunpack.c.l.b16 %v9454
      %v9471 = vunpack.c.l.b16 %v9455
      %v9472 = vpack.c.b16 %v9469, %v9468
      %v9473 = vpack.c.b16 %v9471, %v9470
      %v9477 = vsel %vm6611, %v9448, 0
      %v9480 = vsel %vm6611, %v9449, 0
      %v9483 = vsel %vm6611, %v9450, 0
      %9485 = vmatprep.subr.bf16.mxu0 0
      %9486 = vmatpush1.bf16.msra.mxu0 0
      %9487 = vmatprep.subr.bf16.mxu0 0
      %9488 = vmatpush1.bf16.msra.mxu0 0
      %9489 = vmatprep.subr.bf16.mxu0 0
      %9490 = vmatpush1.bf16.msra.mxu0 0
      %9491 = vmatprep.subr.bf16.mxu0 0
      %9492 = vmatpush1.bf16.msra.mxu0 0
      %9493 = vmatprep.subr.bf16.mxu0 0
      %9494 = vmatpush1.bf16.msra.mxu0 0
      %9495 = vmatprep.subr.bf16.mxu0 0
      %9496 = vmatpush1.bf16.msra.mxu0 0
      %9497 = vmatprep.subr.bf16.mxu0 0
      %9498 = vmatpush1.bf16.msra.mxu0 %v9473
      %9499 = vmatprep.subr.bf16.mxu0 0
      %9500 = vmatpush1.bf16.msra.mxu0 %v9472
      %9501 = vmatprep.subr.bf16.mxu0 0
      %9502 = vmatpush2.bf16.msra.mxu0 0
      %9503 = vmatprep.subr.bf16.mxu0 0
      %9504 = vmatpush2.bf16.msra.mxu0 0
      %9505 = vmatprep.subr.bf16.mxu0 0
      %9506 = vmatpush2.bf16.msra.mxu0 0
      %9507 = vmatprep.subr.bf16.mxu0 0
      %9508 = vmatpush2.bf16.msra.mxu0 0
      %9509 = vmatprep.subr.bf16.mxu0 0
      %9510 = vmatpush2.bf16.msra.mxu0 0
      %9511 = vmatprep.subr.bf16.mxu0 0
      %9512 = vmatpush2.bf16.msra.mxu0 0
      %9513 = vmatprep.subr.bf16.mxu0 0
      %9514 = vmatpush2.bf16.msra.mxu0 0
      %9515 = vmatprep.subr.bf16.mxu0 0
      %9516 = vmatpush2.bf16.msra.mxu0 0
      %9517 = vmatprep.mubr.bf16.mxu0 0
      %9518 = vmatmul.mubr.bf16.gmra.mxu0 %v9477
      %v9519 = vpop.f32.mrf.mxu0
      %v9520 = vadd.f32 %v9462, %v9519
      %v9521 = vpop.f32.mrf.mxu0
      %v9522 = vpop.f32.mrf.mxu0
      %v9523 = vadd.f32 %v9462, %v9522
      %v9524 = vpop.f32.mrf.mxu0
      %9525 = vmatprep.mubr.bf16.mxu0 0
      %9526 = vmatmul.mubr.bf16.gmra.mxu0 %v9480
      %v9527 = vpop.f32.mrf.mxu0
      %v9528 = vadd.f32 %v9462, %v9527
      %v9529 = vpop.f32.mrf.mxu0
      %v9530 = vpop.f32.mrf.mxu0
      %v9531 = vadd.f32 %v9462, %v9530
      %v9532 = vpop.f32.mrf.mxu0
      %9533 = vmatprep.mubr.bf16.mxu0 0
      %9534 = vmatmul.mubr.bf16.gmra.mxu0 %v9483
      %v9535 = vpop.f32.mrf.mxu0
      %v9536 = vadd.f32 %v9462, %v9535
      %v9537 = vpop.f32.mrf.mxu0
      %v9538 = vpop.f32.mrf.mxu0
      %v9539 = vadd.f32 %v9462, %v9538
      %v9540 = vpop.f32.mrf.mxu0
      %9541 = vdwg.mxu0
      %v9542 = vmul.f32 %v9520, %v9520
      %v9543 = vmul.f32 %v9523, %v9523
      %v9544 = vmul.f32 %v9528, %v9528
      %v9545 = vmul.f32 %v9531, %v9531
      %v9546 = vmul.f32 %v9536, %v9536
      %v9547 = vmul.f32 %v9539, %v9539
      %v9548 = vmul.f32 %v9520, %v9542
      %v9549 = vmul.f32 %v9523, %v9543
      %v9550 = vmul.f32 %v9528, %v9544
      %v9551 = vmul.f32 %v9531, %v9545
      %v9552 = vmul.f32 %v9536, %v9546
      %v9553 = vmul.f32 %v9539, %v9547
      %v9554 = vmul.f32 %v9548, 0.044715
      %v9555 = vmul.f32 %v9549, 0.044715
      %v9556 = vmul.f32 %v9550, 0.044715
      %v9557 = vmul.f32 %v9551, 0.044715
      %v9558 = vmul.f32 %v9552, 0.044715
      %v9559 = vmul.f32 %v9553, 0.044715
      %v9560 = vadd.f32 %v9520, %v9554
      %v9561 = vadd.f32 %v9523, %v9555
      %v9562 = vadd.f32 %v9528, %v9556
      %v9563 = vadd.f32 %v9531, %v9557
      %v9564 = vadd.f32 %v9536, %v9558
      %v9565 = vadd.f32 %v9539, %v9559
      %v9566 = vmul.f32 %v9560, 0.7978846
      %v9567 = vmul.f32 %v9561, 0.7978846
      %v9568 = vmul.f32 %v9562, 0.7978846
      %v9569 = vmul.f32 %v9563, 0.7978846
      %v9570 = vmul.f32 %v9564, 0.7978846
      %v9571 = vmul.f32 %v9565, 0.7978846
      %v9572 = vtanh.pop %v9566
      %v9573 = vtanh.pop %v9567
      %v9574 = vtanh.pop %v9568
      %v9575 = vtanh.pop %v9569
      %v9576 = vtanh.pop %v9570
      %v9577 = vtanh.pop %v9571
      %v9578 = vadd.f32 %v9572, 1.0
      %v9579 = vadd.f32 %v9573, 1.0
      %v9580 = vadd.f32 %v9574, 1.0
      %v9581 = vadd.f32 %v9575, 1.0
      %v9582 = vadd.f32 %v9576, 1.0
      %v9583 = vadd.f32 %v9577, 1.0
      %v9584 = vmul.f32 %v9578, 0.5
      %v9585 = vmul.f32 %v9579, 0.5
      %v9586 = vmul.f32 %v9580, 0.5
      %v9587 = vmul.f32 %v9581, 0.5
      %v9588 = vmul.f32 %v9582, 0.5
      %v9589 = vmul.f32 %v9583, 0.5
      %v9590 = vmul.f32 %v9520, %v9584
      %v9591 = vmul.f32 %v9523, %v9585
      %v9592 = vmul.f32 %v9528, %v9586
      %v9593 = vmul.f32 %v9531, %v9587
      %v9594 = vmul.f32 %v9536, %v9588
      %v9595 = vmul.f32 %v9539, %v9589
      %v9596 = vpack.c.bf16 %v9591, %v9590
      %v9597 = vpack.c.bf16 %v9593, %v9592
      %v9598 = vpack.c.bf16 %v9595, %v9594
      %s9599 = scalar_lea.vmem %s13, 64
      %v9600 = vld [vmem:[%s9599] sm:$0xf]
      %v9601 = vld [vmem:[%s9599 + $0x4] sm:$0xf]
      %v9602 = vld [vmem:[%s9599 + $0x8] sm:$0xf]
      %v9603 = vld [vmem:[%s9599 + $0xc] sm:$0xf]
      %v9604 = vld [vmem:[%s9599 + $0x10] sm:$0xf]
      %v9605 = vld [vmem:[%s9599 + $0x14] sm:$0xf]
      %v9606 = vld [vmem:[%s9599 + $0x18] sm:$0xf]
      %v9607 = vld [vmem:[%s9599 + $0x1c] sm:$0xf]
      %v9608 = vld [vmem:[%s9599 + $0x20] sm:$0xf]
      %v9609 = vld [vmem:[%s9599 + $0x24] sm:$0xf]
      %v9610 = vld [vmem:[%s9599 + $0x28] sm:$0xf]
      %v9611 = vld [vmem:[%s9599 + $0x2c] sm:$0xf]
      %v9612 = vld [vmem:[%s9599 + $0x30] sm:$0xf]
      %v9613 = vld [vmem:[%s9599 + $0x34] sm:$0xf]
      %v9614 = vld [vmem:[%s9599 + $0x38] sm:$0xf]
      %v9615 = vld [vmem:[%s9599 + $0x3c] sm:$0xf]
      %v9632 = vunpack.c.l.b16 %v9600
      %v9633 = vunpack.c.l.b16 %v9601
      %v9634 = vunpack.c.l.b16 %v9602
      %v9635 = vunpack.c.l.b16 %v9603
      %v9636 = vunpack.c.l.b16 %v9604
      %v9637 = vunpack.c.l.b16 %v9605
      %v9638 = vunpack.c.l.b16 %v9606
      %v9639 = vunpack.c.l.b16 %v9607
      %v9640 = vunpack.c.l.b16 %v9608
      %v9641 = vunpack.c.l.b16 %v9609
      %v9642 = vunpack.c.l.b16 %v9610
      %v9643 = vunpack.c.l.b16 %v9611
      %v9644 = vunpack.c.l.b16 %v9612
      %v9645 = vunpack.c.l.b16 %v9613
      %v9646 = vunpack.c.l.b16 %v9614
      %v9647 = vunpack.c.l.b16 %v9615
      %v9648 = vpack.c.b16 %v9633, %v9632
      %v9649 = vpack.c.b16 %v9635, %v9634
      %v9650 = vpack.c.b16 %v9637, %v9636
      %v9651 = vpack.c.b16 %v9639, %v9638
      %v9652 = vpack.c.b16 %v9641, %v9640
      %v9653 = vpack.c.b16 %v9643, %v9642
      %v9654 = vpack.c.b16 %v9645, %v9644
      %v9655 = vpack.c.b16 %v9647, %v9646
      %9664 = vmatprep.subr.bf16.mxu0 0
      %9665 = vmatpush1.bf16.msra.mxu0 %v9655
      %9666 = vmatprep.subr.bf16.mxu0 0
      %9667 = vmatpush1.bf16.msra.mxu0 %v9654
      %9668 = vmatprep.subr.bf16.mxu0 0
      %9669 = vmatpush1.bf16.msra.mxu0 %v9653
      %9670 = vmatprep.subr.bf16.mxu0 0
      %9671 = vmatpush1.bf16.msra.mxu0 %v9652
      %9672 = vmatprep.subr.bf16.mxu0 0
      %9673 = vmatpush1.bf16.msra.mxu0 %v9651
      %9674 = vmatprep.subr.bf16.mxu0 0
      %9675 = vmatpush1.bf16.msra.mxu0 %v9650
      %9676 = vmatprep.subr.bf16.mxu0 0
      %9677 = vmatpush1.bf16.msra.mxu0 %v9649
      %9678 = vmatprep.subr.bf16.mxu0 0
      %9679 = vmatpush1.bf16.msra.mxu0 %v9648
      %9680 = vmatprep.subr.bf16.mxu0 0
      %9681 = vmatpush2.bf16.msra.mxu0 0
      %9682 = vmatprep.subr.bf16.mxu0 0
      %9683 = vmatpush2.bf16.msra.mxu0 0
      %9684 = vmatprep.subr.bf16.mxu0 0
      %9685 = vmatpush2.bf16.msra.mxu0 0
      %9686 = vmatprep.subr.bf16.mxu0 0
      %9687 = vmatpush2.bf16.msra.mxu0 0
      %9688 = vmatprep.subr.bf16.mxu0 0
      %9689 = vmatpush2.bf16.msra.mxu0 0
      %9690 = vmatprep.subr.bf16.mxu0 0
      %9691 = vmatpush2.bf16.msra.mxu0 0
      %9692 = vmatprep.subr.bf16.mxu0 0
      %9693 = vmatpush2.bf16.msra.mxu0 0
      %9694 = vmatprep.subr.bf16.mxu0 0
      %9695 = vmatpush2.bf16.msra.mxu0 0
      %9696 = vmatprep.mubr.bf16.mxu0 0
      %9697 = vmatmul.mubr.bf16.gmra.mxu0 %v9596
      %v9698 = vpop.f32.mrf.mxu0
      %v9699 = vadd.f32 0.0, %v9698
      %v9700 = vpop.f32.mrf.mxu0
      %v9701 = vpop.f32.mrf.mxu0
      %v9702 = vadd.f32 0.0, %v9701
      %v9703 = vpop.f32.mrf.mxu0
      %9704 = vmatprep.mubr.bf16.mxu0 0
      %9705 = vmatmul.mubr.bf16.gmra.mxu0 %v9597
      %v9706 = vpop.f32.mrf.mxu0
      %v9707 = vadd.f32 0.0, %v9706
      %v9708 = vpop.f32.mrf.mxu0
      %v9709 = vpop.f32.mrf.mxu0
      %v9710 = vadd.f32 0.0, %v9709
      %v9711 = vpop.f32.mrf.mxu0
      %9712 = vmatprep.mubr.bf16.mxu0 0
      %9713 = vmatmul.mubr.bf16.gmra.mxu0 %v9598
      %v9714 = vpop.f32.mrf.mxu0
      %v9715 = vadd.f32 0.0, %v9714
      %v9716 = vpop.f32.mrf.mxu0
      %v9717 = vpop.f32.mrf.mxu0
      %v9718 = vadd.f32 0.0, %v9717
      %v9719 = vpop.f32.mrf.mxu0
      %9720 = vdwg.mxu0
      %v9721 = vadd.f32 %v9344, %v9699
      %v9722 = vadd.f32 %v9345, %v9702
      %v9723 = vadd.f32 %v9346, %v9707
      %v9724 = vadd.f32 %v9347, %v9710
      %v9725 = vadd.f32 %v9348, %v9715
      %v9726 = vadd.f32 %v9349, %v9718
      %v9727 = vlaneseq
      %v9728 = vshrl.u32 %v9727, 7
      %v9729 = vsub.s32 5, %v9728
      %v9730 = vrot.slane %v8173, %v9729
      %v9731 = vadd.f32 %v9721, %v9730
      %v9732 = vadd.f32 %v9722, %v9730
      %v9733 = vadd.f32 %v9723, %v9730
      %v9734 = vadd.f32 %v9724, %v9730
      %v9735 = vadd.f32 %v9725, %v9730
      %v9736 = vadd.f32 %v9726, %v9730
      %v9737 = vpack.c.bf16 %v9732, %v9731
      %v9738 = vpack.c.bf16 %v9734, %v9733
      %v9739 = vpack.c.bf16 %v9736, %v9735
      %v9740 = vld [vmem:[%s5 + $0x20] sm:$0xf]
      %v9741 = vld [vmem:[%s5 + $0x24] sm:$0xf]
      %v9742 = vld [vmem:[%s5 + $0x28] sm:$0xf]
      %v9743 = vld [vmem:[%s5 + $0x2c] sm:$0xf]
      %v9744 = vld [vmem:[%s6 + $0x2] sm:$0x1]
      %v9745 = vlaneseq
      %v9746 = vshrl.u32 %v9745, 7
      %v9747 = vsub.s32 0, %v9746
      %v9748 = vrot.slane %v9744, %v9747
      %v9753 = vunpack.c.l.b16 %v9740
      %v9754 = vunpack.c.l.b16 %v9741
      %v9755 = vunpack.c.l.b16 %v9742
      %v9756 = vunpack.c.l.b16 %v9743
      %v9757 = vpack.c.b16 %v9754, %v9753
      %v9758 = vpack.c.b16 %v9756, %v9755
      %v9762 = vsel %vm6611, %v9737, 0
      %v9765 = vsel %vm6611, %v9738, 0
      %v9768 = vsel %vm6611, %v9739, 0
      %9770 = vmatprep.subr.bf16.mxu0 0
      %9771 = vmatpush1.bf16.msra.mxu0 0
      %9772 = vmatprep.subr.bf16.mxu0 0
      %9773 = vmatpush1.bf16.msra.mxu0 0
      %9774 = vmatprep.subr.bf16.mxu0 0
      %9775 = vmatpush1.bf16.msra.mxu0 0
      %9776 = vmatprep.subr.bf16.mxu0 0
      %9777 = vmatpush1.bf16.msra.mxu0 0
      %9778 = vmatprep.subr.bf16.mxu0 0
      %9779 = vmatpush1.bf16.msra.mxu0 0
      %9780 = vmatprep.subr.bf16.mxu0 0
      %9781 = vmatpush1.bf16.msra.mxu0 0
      %9782 = vmatprep.subr.bf16.mxu0 0
      %9783 = vmatpush1.bf16.msra.mxu0 %v9758
      %9784 = vmatprep.subr.bf16.mxu0 0
      %9785 = vmatpush1.bf16.msra.mxu0 %v9757
      %9786 = vmatprep.subr.bf16.mxu0 0
      %9787 = vmatpush2.bf16.msra.mxu0 0
      %9788 = vmatprep.subr.bf16.mxu0 0
      %9789 = vmatpush2.bf16.msra.mxu0 0
      %9790 = vmatprep.subr.bf16.mxu0 0
      %9791 = vmatpush2.bf16.msra.mxu0 0
      %9792 = vmatprep.subr.bf16.mxu0 0
      %9793 = vmatpush2.bf16.msra.mxu0 0
      %9794 = vmatprep.subr.bf16.mxu0 0
      %9795 = vmatpush2.bf16.msra.mxu0 0
      %9796 = vmatprep.subr.bf16.mxu0 0
      %9797 = vmatpush2.bf16.msra.mxu0 0
      %9798 = vmatprep.subr.bf16.mxu0 0
      %9799 = vmatpush2.bf16.msra.mxu0 0
      %9800 = vmatprep.subr.bf16.mxu0 0
      %9801 = vmatpush2.bf16.msra.mxu0 0
      %9802 = vmatprep.mubr.bf16.mxu0 0
      %9803 = vmatmul.mubr.bf16.gmra.mxu0 %v9762
      %v9804 = vpop.f32.mrf.mxu0
      %v9805 = vadd.f32 %v9748, %v9804
      %v9806 = vpop.f32.mrf.mxu0
      %v9807 = vpop.f32.mrf.mxu0
      %v9808 = vadd.f32 %v9748, %v9807
      %v9809 = vpop.f32.mrf.mxu0
      %9810 = vmatprep.mubr.bf16.mxu0 0
      %9811 = vmatmul.mubr.bf16.gmra.mxu0 %v9765
      %v9812 = vpop.f32.mrf.mxu0
      %v9813 = vadd.f32 %v9748, %v9812
      %v9814 = vpop.f32.mrf.mxu0
      %v9815 = vpop.f32.mrf.mxu0
      %v9816 = vadd.f32 %v9748, %v9815
      %v9817 = vpop.f32.mrf.mxu0
      %9818 = vmatprep.mubr.bf16.mxu0 0
      %9819 = vmatmul.mubr.bf16.gmra.mxu0 %v9768
      %v9820 = vpop.f32.mrf.mxu0
      %v9821 = vadd.f32 %v9748, %v9820
      %v9822 = vpop.f32.mrf.mxu0
      %v9823 = vpop.f32.mrf.mxu0
      %v9824 = vadd.f32 %v9748, %v9823
      %v9825 = vpop.f32.mrf.mxu0
      %9826 = vdwg.mxu0
      %v9827 = vmax.f32 %v9805, 0.0
      %v9828 = vmax.f32 %v9808, 0.0
      %v9829 = vmax.f32 %v9813, 0.0
      %v9830 = vmax.f32 %v9816, 0.0
      %v9831 = vmax.f32 %v9821, 0.0
      %v9832 = vmax.f32 %v9824, 0.0
      %v9833 = vpack.c.bf16 %v9828, %v9827
      %v9834 = vpack.c.bf16 %v9830, %v9829
      %v9835 = vpack.c.bf16 %v9832, %v9831
      %v9836 = vld [vmem:[%s5 + $0x30] sm:$0xf]
      %v9837 = vld [vmem:[%s5 + $0x34] sm:$0xf]
      %v9838 = vld [vmem:[%s6 + $0x3] sm:$0x1]
      %v9839 = vlaneseq
      %v9840 = vshrl.u32 %v9839, 7
      %v9841 = vsub.s32 0, %v9840
      %v9842 = vrot.slane %v9838, %v9841
      %v9845 = vunpack.c.l.b16 %v9836
      %v9846 = vunpack.c.l.b16 %v9837
      %v9847 = vpack.c.b16 %v9846, %v9845
      %v9850 = vsel %vm3486, %v9833, 0
      %v9853 = vsel %vm3486, %v9834, 0
      %v9856 = vsel %vm3486, %v9835, 0
      %9858 = vmatprep.subr.bf16.mxu0 0
      %9859 = vmatpush1.bf16.msra.mxu0 0
      %9860 = vmatprep.subr.bf16.mxu0 0
      %9861 = vmatpush1.bf16.msra.mxu0 0
      %9862 = vmatprep.subr.bf16.mxu0 0
      %9863 = vmatpush1.bf16.msra.mxu0 0
      %9864 = vmatprep.subr.bf16.mxu0 0
      %9865 = vmatpush1.bf16.msra.mxu0 0
      %9866 = vmatprep.subr.bf16.mxu0 0
      %9867 = vmatpush1.bf16.msra.mxu0 0
      %9868 = vmatprep.subr.bf16.mxu0 0
      %9869 = vmatpush1.bf16.msra.mxu0 0
      %9870 = vmatprep.subr.bf16.mxu0 0
      %9871 = vmatpush1.bf16.msra.mxu0 0
      %9872 = vmatprep.subr.bf16.mxu0 0
      %9873 = vmatpush1.bf16.msra.mxu0 %v9847
      %9874 = vmatprep.subr.bf16.mxu0 0
      %9875 = vmatpush2.bf16.msra.mxu0 0
      %9876 = vmatprep.subr.bf16.mxu0 0
      %9877 = vmatpush2.bf16.msra.mxu0 0
      %9878 = vmatprep.subr.bf16.mxu0 0
      %9879 = vmatpush2.bf16.msra.mxu0 0
      %9880 = vmatprep.subr.bf16.mxu0 0
      %9881 = vmatpush2.bf16.msra.mxu0 0
      %9882 = vmatprep.subr.bf16.mxu0 0
      %9883 = vmatpush2.bf16.msra.mxu0 0
      %9884 = vmatprep.subr.bf16.mxu0 0
      %9885 = vmatpush2.bf16.msra.mxu0 0
      %9886 = vmatprep.subr.bf16.mxu0 0
      %9887 = vmatpush2.bf16.msra.mxu0 0
      %9888 = vmatprep.subr.bf16.mxu0 0
      %9889 = vmatpush2.bf16.msra.mxu0 0
      %9890 = vmatprep.mubr.bf16.mxu0 0
      %9891 = vmatmul.mubr.bf16.gmra.mxu0 %v9850
      %v9892 = vpop.f32.mrf.mxu0
      %v9893 = vadd.f32 %v9842, %v9892
      %v9894 = vpop.f32.mrf.mxu0
      %v9895 = vpop.f32.mrf.mxu0
      %v9896 = vadd.f32 %v9842, %v9895
      %v9897 = vpop.f32.mrf.mxu0
      %9898 = vmatprep.mubr.bf16.mxu0 0
      %9899 = vmatmul.mubr.bf16.gmra.mxu0 %v9853
      %v9900 = vpop.f32.mrf.mxu0
      %v9901 = vadd.f32 %v9842, %v9900
      %v9902 = vpop.f32.mrf.mxu0
      %v9903 = vpop.f32.mrf.mxu0
      %v9904 = vadd.f32 %v9842, %v9903
      %v9905 = vpop.f32.mrf.mxu0
      %9906 = vmatprep.mubr.bf16.mxu0 0
      %9907 = vmatmul.mubr.bf16.gmra.mxu0 %v9856
      %v9908 = vpop.f32.mrf.mxu0
      %v9909 = vadd.f32 %v9842, %v9908
      %v9910 = vpop.f32.mrf.mxu0
      %v9911 = vpop.f32.mrf.mxu0
      %v9912 = vadd.f32 %v9842, %v9911
      %v9913 = vpop.f32.mrf.mxu0
      %9914 = vdwg.mxu0
      %9915 = vst.msk [vmem:[%s498] sm:$0xff] %vm3486, %v9893
      %9916 = vst.msk [vmem:[%s498 + $0x8] sm:$0xff] %vm3486, %v9896
      %9917 = vst.msk [vmem:[%s498 + $0x10] sm:$0xff] %vm3486, %v9901
      %9918 = vst.msk [vmem:[%s498 + $0x18] sm:$0xff] %vm3486, %v9904
      %9919 = vst.msk [vmem:[%s498 + $0x20] sm:$0xff] %vm3486, %v9909
      %9920 = vst.msk [vmem:[%s498 + $0x28] sm:$0xff] %vm3486, %v9912
      %p9921 = scmp.lt.s32.totalorder %s25, 1
      %s9922 = scalar_select %p9921, %s25, 1
      %s9923 = smul.addr %s9922, 6
      %s9924 = smul.addr %s9923, 8
      %s9925 = scalar_lea.vmem %s14, %s9924
      // Predicated region
      $region77: #{mvt_forward.1} parent=75 // pred_check
        %p9926 = pneg %p352
      $region78: #{mvt_forward.1} parent=75 // pred_check_branch
        %9928 = sbr.rel (%p9926) target = $region80
      $region79: #{mvt_forward.1} parent=75 // pred_region
        _
      $region80: #{mvt_forward.1} parent=75 // pred_fallthru
        _
    $region76: #{mvt_forward.1} parent=5 // pred_fallthru
      _
    %p9929 = scmp.le.s32.totalorder 2, %s20
    // Predicated region
    $region81: #{mvt_forward.1} parent=5 // pred_check
      %p9930 = pneg %p9929
    $region82: #{mvt_forward.1} parent=5 // pred_check_branch
      %9932 = sbr.rel (%p9930) target = $region84
    $region83: #{mvt_forward.1} parent=5 // pred_region
      %s9933 = ssub.s32 %s20, 2
      // Predicated region
      $region85: #{mvt_forward.1} parent=83 // pred_check
        %p9934 = pneg %p358
      $region86: #{mvt_forward.1} parent=83 // pred_check_branch
        %9936 = sbr.rel (%p9934) target = $region88
      $region87: #{mvt_forward.1} parent=83 // pred_region
        %p9937 = scmp.lt.s32.totalorder %s26, 1
        %s9938 = scalar_select %p9937, %s26, 1
        %s9939 = smul.addr %s9938, 6
        %s9940 = smul.addr %s9939, 8
        %s9941 = scalar_lea.vmem %s14, %s9940
      $region88: #{mvt_forward.1} parent=83 // pred_fallthru
        _
    $region84: #{mvt_forward.1} parent=5 // pred_fallthru
      _
  $region6: #{mvt_forward.1} parent=0 // loop_footer
    %s24 = sadd.s32 1, %s20
  $region7: #{mvt_forward.1} parent=0 // loop_footer_branch
    %19 = sbr.rel target = $region3
  $region8: #{mvt_forward.1} parent=0 // loop_exit
    _

</llo_original>
